<compile_context>
chip_gen: v6e
topology: v6e:2x2x1
jax: 0.10.0
libtpu: 0.0.40
codegen_flags: <defaults>
</compile_context>

<pallas_src>
import functools
import math

import jax
import jax.numpy as jnp
from jax.experimental import pallas as pl
from jax.experimental.pallas import tpu as pltpu


# ---------------------------------------------------------------------------
# In-kernel helpers
# ---------------------------------------------------------------------------

def _layernorm(x, g, b, eps):
    mean = jnp.mean(x, axis=-1, keepdims=True)
    var = jnp.mean((x - mean) ** 2, axis=-1, keepdims=True)
    return (x - mean) * jax.lax.rsqrt(var + eps) * g + b


def _gelu(x):
    # TODO(synk): PyTorch F.gelu default is the exact erf form; tanh
    # approximation is used here for a guaranteed-safe Mosaic lowering.
    c = math.sqrt(2.0 / math.pi)
    return 0.5 * x * (1.0 + jnp.tanh(c * (x + 0.044715 * x * x * x)))


# ---------------------------------------------------------------------------
# Fused forward kernel (one batch element per grid step)
# ---------------------------------------------------------------------------

def _vel_decoder_kernel(
    pose_ref,                                   # [T, d_input]
    pe_ref,                                     # [T-1, d_model]
    plw_ref, plb_ref, plg_ref, plbeta_ref,      # pose_linear + LayerNorm
    inw_ref, inb_ref,                           # [L, d, 3d], [L, 1, 3d]
    outw_ref, outb_ref,                         # [L, d, d],  [L, 1, d]
    ln1g_ref, ln1b_ref,                         # [L, 1, d]
    ff1w_ref, ff1b_ref,                         # [L, d, di], [L, 1, di]
    ff2w_ref, ff2b_ref,                         # [L, di, d], [L, 1, d]
    ln2g_ref, ln2b_ref,                         # [L, 1, d]
    velw_ref, velb_ref,                         # [d, out_dim], [1, out_dim]
    o_ref,                                      # [T, out_dim]
    *, T, d_model, n_heads, enc_layers, dec_layers, causal, eps):
    Tm1 = T - 1
    dh = d_model // n_heads
    scale = 1.0 / math.sqrt(dh)

    # ---- frame residual: pose[1:] - pose[:-1] -------------------------------
    x = pose_ref[...]
    h = x[1:, :] - x[:-1, :]                                    # [Tm1, d_input]

    # ---- pose_linear = Linear -> LayerNorm ----------------------------------
    h = jnp.dot(h, plw_ref[...], preferred_element_type=jnp.float32) + plb_ref[...]
    h = _layernorm(h, plg_ref[...], plbeta_ref[...], eps)

    # ---- sinusoidal positional encoding (dropout = identity) ----------------
    h = h + pe_ref[...]

    # ---- enc_transformer then dec_transformer (post-norm layers) ------------
    n_layers = enc_layers + dec_layers
    for l in range(n_layers):
        use_causal = causal and (l >= enc_layers)

        # self-attention
        qkv = jnp.dot(h, inw_ref[l], preferred_element_type=jnp.float32) + inb_ref[l]
        q = qkv[:, 0:d_model]
        k = qkv[:, d_model:2 * d_model]
        v = qkv[:, 2 * d_model:3 * d_model]

        heads = []
        for hh in range(n_heads):                       # static unroll over heads
            qs = q[:, hh * dh:(hh + 1) * dh]
            ks = k[:, hh * dh:(hh + 1) * dh]
            vs = v[:, hh * dh:(hh + 1) * dh]
            s = jax.lax.dot_general(qs, ks, (((1,), (1,)), ((), ())),
                                    preferred_element_type=jnp.float32) * scale
            if use_causal:
                row = jax.lax.broadcasted_iota(jnp.int32, (Tm1, Tm1), 0)
                col = jax.lax.broadcasted_iota(jnp.int32, (Tm1, Tm1), 1)
                s = jnp.where(col <= row, s, -1e30)
            s = s - jnp.max(s, axis=-1, keepdims=True)
            p = jnp.exp(s)
            p = p * pl.reciprocal(jnp.sum(p, axis=-1, keepdims=True), approx=True)
            heads.append(jnp.dot(p, vs, preferred_element_type=jnp.float32))
        attn = jnp.concatenate(heads, axis=-1)                         # [Tm1, d]
        attn = jnp.dot(attn, outw_ref[l],
                       preferred_element_type=jnp.float32) + outb_ref[l]

        h = _layernorm(h + attn, ln1g_ref[l], ln1b_ref[l], eps)        # norm1

        # feed-forward
        ff = jnp.dot(h, ff1w_ref[l], preferred_element_type=jnp.float32) + ff1b_ref[l]
        ff = _gelu(ff)
        ff = jnp.dot(ff, ff2w_ref[l], preferred_element_type=jnp.float32) + ff2b_ref[l]

        h = _layernorm(h + ff, ln2g_ref[l], ln2b_ref[l], eps)          # norm2

    # ---- vel_linear + prepend zero init-root frame --------------------------
    vel = jnp.dot(h, velw_ref[...], preferred_element_type=jnp.float32) + velb_ref[...]
    out_dim = vel.shape[-1]
    out = jnp.concatenate([jnp.zeros((1, out_dim), jnp.float32), vel], axis=0)
    o_ref[...] = out.astype(o_ref.dtype)


# ---------------------------------------------------------------------------
# Wrapper
# ---------------------------------------------------------------------------

def _const_spec(shape):
    if len(shape) == 2:
        return pl.BlockSpec(shape, lambda b: (0, 0))
    return pl.BlockSpec(shape, lambda b: (0, 0, 0))


def vel_orien_decoder_forward(params, pose_inputs, *, n_heads, enc_n_layers,
                              dec_n_layers, causal_attention=False):
    """pose_inputs: [B, T, d_input] -> [B, T, 6]."""
    B, T, d_input = pose_inputs.shape
    d_model = params["pose_lin_w"].shape[1]
    d_inner = params["ff1_w"].shape[-1]
    L = params["in_proj_w"].shape[0]
    out_dim = params["vel_w"].shape[1]
    Tm1 = T - 1
    pe = params["pe"][:Tm1]

    kernel = functools.partial(
        _vel_decoder_kernel, T=T, d_model=d_model, n_heads=n_heads,
        enc_layers=enc_n_layers, dec_layers=dec_n_layers,
        causal=causal_attention, eps=1e-5)

    in_specs = [
        pl.BlockSpec((None, T, d_input), lambda b: (b, 0, 0)),   # pose (per batch)
        _const_spec((Tm1, d_model)),                             # pe
        _const_spec((d_input, d_model)),                         # pose_lin_w
        _const_spec((1, d_model)),                               # pose_lin_b
        _const_spec((1, d_model)),                               # pose_ln_g
        _const_spec((1, d_model)),                               # pose_ln_b
        _const_spec((L, d_model, 3 * d_model)),                  # in_proj_w
        _const_spec((L, 1, 3 * d_model)),                        # in_proj_b
        _const_spec((L, d_model, d_model)),                      # out_proj_w
        _const_spec((L, 1, d_model)),                            # out_proj_b
        _const_spec((L, 1, d_model)),                            # ln1_g
        _const_spec((L, 1, d_model)),                            # ln1_b
        _const_spec((L, d_model, d_inner)),                      # ff1_w
        _const_spec((L, 1, d_inner)),                            # ff1_b
        _const_spec((L, d_inner, d_model)),                      # ff2_w
        _const_spec((L, 1, d_model)),                            # ff2_b
        _const_spec((L, 1, d_model)),                            # ln2_g
        _const_spec((L, 1, d_model)),                            # ln2_b
        _const_spec((d_model, out_dim)),                         # vel_w
        _const_spec((1, out_dim)),                               # vel_b
    ]
    out_spec = pl.BlockSpec((None, T, out_dim), lambda b: (b, 0, 0))

    return pl.pallas_call(
        kernel,
        out_shape=jax.ShapeDtypeStruct((B, T, out_dim), jnp.float32),
        grid=(B,),
        in_specs=in_specs,
        out_specs=out_spec,
        compiler_params=pltpu.CompilerParams(dimension_semantics=("parallel",)),
    )(pose_inputs, pe,
      params["pose_lin_w"], params["pose_lin_b"],
      params["pose_ln_g"], params["pose_ln_b"],
      params["in_proj_w"], params["in_proj_b"],
      params["out_proj_w"], params["out_proj_b"],
      params["ln1_g"], params["ln1_b"],
      params["ff1_w"], params["ff1_b"],
      params["ff2_w"], params["ff2_b"],
      params["ln2_g"], params["ln2_b"],
      params["vel_w"], params["vel_b"])


# ---------------------------------------------------------------------------
# Deterministic synthetic parameter init
# ---------------------------------------------------------------------------

def _xavier_normal(key, shape):
    fan_in, fan_out = shape[-2], shape[-1]
    std = math.sqrt(2.0 / (fan_in + fan_out))
    return std * jax.random.normal(key, shape, dtype=jnp.float32)


def init_params(key, d_input, d_model, d_inner, n_layers, out_dim=6, max_len=512):
    ks = iter(jax.random.split(key, 32))
    p = {}
    p["pose_lin_w"] = _xavier_normal(next(ks), (d_input, d_model))
    p["pose_lin_b"] = jnp.zeros((1, d_model), jnp.float32)
    p["pose_ln_g"] = jnp.ones((1, d_model), jnp.float32)
    p["pose_ln_b"] = jnp.zeros((1, d_model), jnp.float32)

    p["in_proj_w"] = _xavier_normal(next(ks), (n_layers, d_model, 3 * d_model))
    p["in_proj_b"] = jnp.zeros((n_layers, 1, 3 * d_model), jnp.float32)
    p["out_proj_w"] = _xavier_normal(next(ks), (n_layers, d_model, d_model))
    p["out_proj_b"] = jnp.zeros((n_layers, 1, d_model), jnp.float32)
    p["ln1_g"] = jnp.ones((n_layers, 1, d_model), jnp.float32)
    p["ln1_b"] = jnp.zeros((n_layers, 1, d_model), jnp.float32)
    p["ff1_w"] = _xavier_normal(next(ks), (n_layers, d_model, d_inner))
    p["ff1_b"] = jnp.zeros((n_layers, 1, d_inner), jnp.float32)
    p["ff2_w"] = _xavier_normal(next(ks), (n_layers, d_inner, d_model))
    p["ff2_b"] = jnp.zeros((n_layers, 1, d_model), jnp.float32)
    p["ln2_g"] = jnp.ones((n_layers, 1, d_model), jnp.float32)
    p["ln2_b"] = jnp.zeros((n_layers, 1, d_model), jnp.float32)

    p["vel_w"] = _xavier_normal(next(ks), (d_model, out_dim))
    p["vel_b"] = jnp.zeros((1, out_dim), jnp.float32)

    # Sinusoidal positional encoding table [max_len, d_model].
    pos = jnp.arange(max_len, dtype=jnp.float32)[:, None]
    div = jnp.exp(jnp.arange(0, d_model, 2, dtype=jnp.float32)
                  * (-math.log(10000.0) / d_model))
    pe = jnp.zeros((max_len, d_model), jnp.float32)
    pe = pe.at[:, 0::2].set(jnp.sin(pos * div))
    pe = pe.at[:, 1::2].set(jnp.cos(pos * div))
    p["pe"] = pe
    return p


# ---------------------------------------------------------------------------

if __name__ == "__main__":
    B, T = 2, 17              # output keeps T frames (residual has T-1, zero row prepended)
    D_INPUT = 64
    D_MODEL = 128             # lane-dense activations
    D_INNER = 256
    N_HEADS = 4
    ENC_LAYERS = 2
    DEC_LAYERS = 2

    key = jax.random.PRNGKey(0)
    pkey, xkey = jax.random.split(key)
    params = init_params(pkey, D_INPUT, D_MODEL, D_INNER,
                         ENC_LAYERS + DEC_LAYERS, out_dim=6)
    pose_inputs = jax.random.normal(xkey, (B, T, D_INPUT), dtype=jnp.float32)

    fwd = jax.jit(functools.partial(
        vel_orien_decoder_forward, n_heads=N_HEADS,
        enc_n_layers=ENC_LAYERS, dec_n_layers=DEC_LAYERS,
        causal_attention=False))
    out = jax.block_until_ready(fwd(params, pose_inputs))

    assert out.shape == (B, T, 6), out.shape
    assert bool(jnp.all(jnp.isfinite(out)))
    assert bool(jnp.all(out[:, 0] == 0.0))      # prepended init_root frame
    print("KERNEL_OK")
</pallas_src>

<mosaic_0001>
module attributes {stable_mosaic.version = 11 : i64} {
  func.func @_vel_decoder_kernel(%arg0: i32, %arg1: memref<1x17x64xf32, #tpu.memory_space<vmem>>, %arg2: memref<16x128xf32, #tpu.memory_space<vmem>>, %arg3: memref<64x128xf32, #tpu.memory_space<vmem>>, %arg4: memref<1x128xf32, #tpu.memory_space<vmem>>, %arg5: memref<1x128xf32, #tpu.memory_space<vmem>>, %arg6: memref<1x128xf32, #tpu.memory_space<vmem>>, %arg7: memref<4x128x384xf32, #tpu.memory_space<vmem>>, %arg8: memref<4x1x384xf32, #tpu.memory_space<vmem>>, %arg9: memref<4x128x128xf32, #tpu.memory_space<vmem>>, %arg10: memref<4x1x128xf32, #tpu.memory_space<vmem>>, %arg11: memref<4x1x128xf32, #tpu.memory_space<vmem>>, %arg12: memref<4x1x128xf32, #tpu.memory_space<vmem>>, %arg13: memref<4x128x256xf32, #tpu.memory_space<vmem>>, %arg14: memref<4x1x256xf32, #tpu.memory_space<vmem>>, %arg15: memref<4x256x128xf32, #tpu.memory_space<vmem>>, %arg16: memref<4x1x128xf32, #tpu.memory_space<vmem>>, %arg17: memref<4x1x128xf32, #tpu.memory_space<vmem>>, %arg18: memref<4x1x128xf32, #tpu.memory_space<vmem>>, %arg19: memref<128x6xf32, #tpu.memory_space<vmem>>, %arg20: memref<1x6xf32, #tpu.memory_space<vmem>>, %arg21: memref<1x17x6xf32, #tpu.memory_space<vmem>>) attributes {dimension_semantics = [#tpu.dimension_semantics<parallel>], iteration_bounds = array<i64: 2>, scalar_prefetch = 0 : i64, scratch_operands = 0 : i64, tpu.core_type = #tpu.core_type<tc>, window_params = [{transform_indices = @transform_0, window_bounds = array<i64: 1, 17, 64>}, {pipeline_mode = #tpu.pipeline_mode<synchronous>, transform_indices = @transform_1, window_bounds = array<i64: 16, 128>}, {pipeline_mode = #tpu.pipeline_mode<synchronous>, transform_indices = @transform_2, window_bounds = array<i64: 64, 128>}, {pipeline_mode = #tpu.pipeline_mode<synchronous>, transform_indices = @transform_3, window_bounds = array<i64: 1, 128>}, {pipeline_mode = #tpu.pipeline_mode<synchronous>, transform_indices = @transform_4, window_bounds = array<i64: 1, 128>}, {pipeline_mode = #tpu.pipeline_mode<synchronous>, transform_indices = @transform_5, window_bounds = array<i64: 1, 128>}, {pipeline_mode = #tpu.pipeline_mode<synchronous>, transform_indices = @transform_6, window_bounds = array<i64: 4, 128, 384>}, {pipeline_mode = #tpu.pipeline_mode<synchronous>, transform_indices = @transform_7, window_bounds = array<i64: 4, 1, 384>}, {pipeline_mode = #tpu.pipeline_mode<synchronous>, transform_indices = @transform_8, window_bounds = array<i64: 4, 128, 128>}, {pipeline_mode = #tpu.pipeline_mode<synchronous>, transform_indices = @transform_9, window_bounds = array<i64: 4, 1, 128>}, {pipeline_mode = #tpu.pipeline_mode<synchronous>, transform_indices = @transform_10, window_bounds = array<i64: 4, 1, 128>}, {pipeline_mode = #tpu.pipeline_mode<synchronous>, transform_indices = @transform_11, window_bounds = array<i64: 4, 1, 128>}, {pipeline_mode = #tpu.pipeline_mode<synchronous>, transform_indices = @transform_12, window_bounds = array<i64: 4, 128, 256>}, {pipeline_mode = #tpu.pipeline_mode<synchronous>, transform_indices = @transform_13, window_bounds = array<i64: 4, 1, 256>}, {pipeline_mode = #tpu.pipeline_mode<synchronous>, transform_indices = @transform_14, window_bounds = array<i64: 4, 256, 128>}, {pipeline_mode = #tpu.pipeline_mode<synchronous>, transform_indices = @transform_15, window_bounds = array<i64: 4, 1, 128>}, {pipeline_mode = #tpu.pipeline_mode<synchronous>, transform_indices = @transform_16, window_bounds = array<i64: 4, 1, 128>}, {pipeline_mode = #tpu.pipeline_mode<synchronous>, transform_indices = @transform_17, window_bounds = array<i64: 4, 1, 128>}, {pipeline_mode = #tpu.pipeline_mode<synchronous>, transform_indices = @transform_18, window_bounds = array<i64: 128, 6>}, {pipeline_mode = #tpu.pipeline_mode<synchronous>, transform_indices = @transform_19, window_bounds = array<i64: 1, 6>}, {transform_indices = @transform_20, window_bounds = array<i64: 1, 17, 6>}]} {
    %c0 = arith.constant 0 : index
    %c0_0 = arith.constant 0 : index
    %c0_1 = arith.constant 0 : index
    %0 = vector.load %arg1[%c0, %c0_0, %c0_1] : memref<1x17x64xf32, #tpu.memory_space<vmem>>, vector<1x17x64xf32>
    %1 = vector.shape_cast %0 : vector<1x17x64xf32> to vector<17x64xf32>
    %2 = vector.extract_strided_slice %1 {offsets = [1, 0], sizes = [16, 64], strides = [1, 1]} : vector<17x64xf32> to vector<16x64xf32>
    %3 = vector.extract_strided_slice %1 {offsets = [0, 0], sizes = [16, 64], strides = [1, 1]} : vector<17x64xf32> to vector<16x64xf32>
    %4 = arith.subf %2, %3 : vector<16x64xf32>
    %c0_2 = arith.constant 0 : index
    %c0_3 = arith.constant 0 : index
    %5 = vector.load %arg3[%c0_2, %c0_3] : memref<64x128xf32, #tpu.memory_space<vmem>>, vector<64x128xf32>
    %cst = arith.constant dense<0.000000e+00> : vector<16x128xf32>
    %6 = tpu.matmul %4, %5, %cst {dimension_numbers = #tpu.dot_dimension_numbers<[1], [0], [0], [1], [0, 0, 1, 1], [], []>} : vector<16x64xf32>, vector<64x128xf32>, vector<16x128xf32> -> vector<16x128xf32>
    %c0_4 = arith.constant 0 : index
    %c0_5 = arith.constant 0 : index
    %7 = vector.load %arg4[%c0_4, %c0_5] : memref<1x128xf32, #tpu.memory_space<vmem>>, vector<1x128xf32>
    %8 = vector.broadcast %7 : vector<1x128xf32> to vector<16x128xf32>
    %9 = arith.addf %6, %8 : vector<16x128xf32>
    %c0_6 = arith.constant 0 : index
    %c0_7 = arith.constant 0 : index
    %10 = vector.load %arg5[%c0_6, %c0_7] : memref<1x128xf32, #tpu.memory_space<vmem>>, vector<1x128xf32>
    %c0_8 = arith.constant 0 : index
    %c0_9 = arith.constant 0 : index
    %11 = vector.load %arg6[%c0_8, %c0_9] : memref<1x128xf32, #tpu.memory_space<vmem>>, vector<1x128xf32>
    %cst_10 = arith.constant dense<0.000000e+00> : vector<16xf32>
    %12 = vector.multi_reduction <add>, %9, %cst_10 [1] : vector<16x128xf32> to vector<16xf32>
    %13 = vector.shape_cast %12 : vector<16xf32> to vector<16x1xf32>
    %cst_11 = arith.constant 1.280000e+02 : f32
    %14 = vector.broadcast %cst_11 : f32 to vector<16x1xf32>
    %15 = arith.divf %13, %14 : vector<16x1xf32>
    %16 = vector.broadcast %15 : vector<16x1xf32> to vector<16x128xf32>
    %17 = arith.subf %9, %16 : vector<16x128xf32>
    %18 = arith.mulf %17, %17 : vector<16x128xf32>
    %cst_12 = arith.constant dense<0.000000e+00> : vector<16xf32>
    %19 = vector.multi_reduction <add>, %18, %cst_12 [1] : vector<16x128xf32> to vector<16xf32>
    %20 = vector.shape_cast %19 : vector<16xf32> to vector<16x1xf32>
    %cst_13 = arith.constant 1.280000e+02 : f32
    %21 = vector.broadcast %cst_13 : f32 to vector<16x1xf32>
    %22 = arith.divf %20, %21 : vector<16x1xf32>
    %23 = vector.broadcast %15 : vector<16x1xf32> to vector<16x128xf32>
    %24 = arith.subf %9, %23 : vector<16x128xf32>
    %cst_14 = arith.constant 9.99999974E-6 : f32
    %25 = vector.broadcast %cst_14 : f32 to vector<16x1xf32>
    %26 = arith.addf %22, %25 : vector<16x1xf32>
    %27 = math.rsqrt %26 : vector<16x1xf32>
    %28 = vector.broadcast %27 : vector<16x1xf32> to vector<16x128xf32>
    %29 = arith.mulf %24, %28 : vector<16x128xf32>
    %30 = vector.broadcast %10 : vector<1x128xf32> to vector<16x128xf32>
    %31 = arith.mulf %29, %30 : vector<16x128xf32>
    %32 = vector.broadcast %11 : vector<1x128xf32> to vector<16x128xf32>
    %33 = arith.addf %31, %32 : vector<16x128xf32>
    %c0_15 = arith.constant 0 : index
    %c0_16 = arith.constant 0 : index
    %34 = vector.load %arg2[%c0_15, %c0_16] : memref<16x128xf32, #tpu.memory_space<vmem>>, vector<16x128xf32>
    %35 = arith.addf %33, %34 : vector<16x128xf32>
    %c0_17 = arith.constant 0 : index
    %c0_18 = arith.constant 0 : index
    %c0_19 = arith.constant 0 : index
    %36 = vector.load %arg7[%c0_17, %c0_18, %c0_19] : memref<4x128x384xf32, #tpu.memory_space<vmem>>, vector<1x128x384xf32>
    %37 = vector.shape_cast %36 : vector<1x128x384xf32> to vector<128x384xf32>
    %cst_20 = arith.constant dense<0.000000e+00> : vector<16x384xf32>
    %38 = tpu.matmul %35, %37, %cst_20 {dimension_numbers = #tpu.dot_dimension_numbers<[1], [0], [0], [1], [0, 0, 1, 1], [], []>} : vector<16x128xf32>, vector<128x384xf32>, vector<16x384xf32> -> vector<16x384xf32>
    %c0_21 = arith.constant 0 : index
    %c0_22 = arith.constant 0 : index
    %c0_23 = arith.constant 0 : index
    %39 = vector.load %arg8[%c0_21, %c0_22, %c0_23] : memref<4x1x384xf32, #tpu.memory_space<vmem>>, vector<1x1x384xf32>
    %40 = vector.shape_cast %39 : vector<1x1x384xf32> to vector<1x384xf32>
    %41 = vector.broadcast %40 : vector<1x384xf32> to vector<16x384xf32>
    %42 = arith.addf %38, %41 : vector<16x384xf32>
    %43 = vector.extract_strided_slice %42 {offsets = [0, 0], sizes = [16, 128], strides = [1, 1]} : vector<16x384xf32> to vector<16x128xf32>
    %44 = vector.extract_strided_slice %42 {offsets = [0, 128], sizes = [16, 128], strides = [1, 1]} : vector<16x384xf32> to vector<16x128xf32>
    %45 = vector.extract_strided_slice %42 {offsets = [0, 256], sizes = [16, 128], strides = [1, 1]} : vector<16x384xf32> to vector<16x128xf32>
    %46 = vector.extract_strided_slice %43 {offsets = [0, 0], sizes = [16, 32], strides = [1, 1]} : vector<16x128xf32> to vector<16x32xf32>
    %47 = vector.extract_strided_slice %44 {offsets = [0, 0], sizes = [16, 32], strides = [1, 1]} : vector<16x128xf32> to vector<16x32xf32>
    %48 = vector.extract_strided_slice %45 {offsets = [0, 0], sizes = [16, 32], strides = [1, 1]} : vector<16x128xf32> to vector<16x32xf32>
    %cst_24 = arith.constant dense<0.000000e+00> : vector<16x16xf32>
    %49 = tpu.matmul %46, %47, %cst_24 {dimension_numbers = #tpu.dot_dimension_numbers<[1], [1], [0], [0], [0, 0, 1, 0], [], []>} : vector<16x32xf32>, vector<16x32xf32>, vector<16x16xf32> -> vector<16x16xf32>
    %cst_25 = arith.constant 0.176776692 : f32
    %50 = vector.broadcast %cst_25 : f32 to vector<16x16xf32>
    %51 = arith.mulf %49, %50 : vector<16x16xf32>
    %cst_26 = arith.constant dense<0xFF800000> : vector<16xf32>
    %52 = vector.multi_reduction <maximumf>, %51, %cst_26 [1] : vector<16x16xf32> to vector<16xf32>
    %53 = vector.shape_cast %52 : vector<16xf32> to vector<16x1xf32>
    %54 = vector.broadcast %53 : vector<16x1xf32> to vector<16x16xf32>
    %55 = arith.subf %51, %54 : vector<16x16xf32>
    %56 = math.exp %55 : vector<16x16xf32>
    %cst_27 = arith.constant dense<0.000000e+00> : vector<16xf32>
    %57 = vector.multi_reduction <add>, %56, %cst_27 [1] : vector<16x16xf32> to vector<16xf32>
    %58 = vector.shape_cast %57 : vector<16xf32> to vector<16x1xf32>
    %59 = tpu.reciprocal %58 {approx = true} : vector<16x1xf32> -> vector<16x1xf32>
    %60 = vector.broadcast %59 : vector<16x1xf32> to vector<16x16xf32>
    %61 = arith.mulf %56, %60 : vector<16x16xf32>
    %cst_28 = arith.constant dense<0.000000e+00> : vector<16x32xf32>
    %62 = tpu.matmul %61, %48, %cst_28 {dimension_numbers = #tpu.dot_dimension_numbers<[1], [0], [0], [1], [0, 0, 1, 1], [], []>} : vector<16x16xf32>, vector<16x32xf32>, vector<16x32xf32> -> vector<16x32xf32>
    %63 = vector.extract_strided_slice %43 {offsets = [0, 32], sizes = [16, 32], strides = [1, 1]} : vector<16x128xf32> to vector<16x32xf32>
    %64 = vector.extract_strided_slice %44 {offsets = [0, 32], sizes = [16, 32], strides = [1, 1]} : vector<16x128xf32> to vector<16x32xf32>
    %65 = vector.extract_strided_slice %45 {offsets = [0, 32], sizes = [16, 32], strides = [1, 1]} : vector<16x128xf32> to vector<16x32xf32>
    %cst_29 = arith.constant dense<0.000000e+00> : vector<16x16xf32>
    %66 = tpu.matmul %63, %64, %cst_29 {dimension_numbers = #tpu.dot_dimension_numbers<[1], [1], [0], [0], [0, 0, 1, 0], [], []>} : vector<16x32xf32>, vector<16x32xf32>, vector<16x16xf32> -> vector<16x16xf32>
    %cst_30 = arith.constant 0.176776692 : f32
    %67 = vector.broadcast %cst_30 : f32 to vector<16x16xf32>
    %68 = arith.mulf %66, %67 : vector<16x16xf32>
    %cst_31 = arith.constant dense<0xFF800000> : vector<16xf32>
    %69 = vector.multi_reduction <maximumf>, %68, %cst_31 [1] : vector<16x16xf32> to vector<16xf32>
    %70 = vector.shape_cast %69 : vector<16xf32> to vector<16x1xf32>
    %71 = vector.broadcast %70 : vector<16x1xf32> to vector<16x16xf32>
    %72 = arith.subf %68, %71 : vector<16x16xf32>
    %73 = math.exp %72 : vector<16x16xf32>
    %cst_32 = arith.constant dense<0.000000e+00> : vector<16xf32>
    %74 = vector.multi_reduction <add>, %73, %cst_32 [1] : vector<16x16xf32> to vector<16xf32>
    %75 = vector.shape_cast %74 : vector<16xf32> to vector<16x1xf32>
    %76 = tpu.reciprocal %75 {approx = true} : vector<16x1xf32> -> vector<16x1xf32>
    %77 = vector.broadcast %76 : vector<16x1xf32> to vector<16x16xf32>
    %78 = arith.mulf %73, %77 : vector<16x16xf32>
    %cst_33 = arith.constant dense<0.000000e+00> : vector<16x32xf32>
    %79 = tpu.matmul %78, %65, %cst_33 {dimension_numbers = #tpu.dot_dimension_numbers<[1], [0], [0], [1], [0, 0, 1, 1], [], []>} : vector<16x16xf32>, vector<16x32xf32>, vector<16x32xf32> -> vector<16x32xf32>
    %80 = vector.extract_strided_slice %43 {offsets = [0, 64], sizes = [16, 32], strides = [1, 1]} : vector<16x128xf32> to vector<16x32xf32>
    %81 = vector.extract_strided_slice %44 {offsets = [0, 64], sizes = [16, 32], strides = [1, 1]} : vector<16x128xf32> to vector<16x32xf32>
    %82 = vector.extract_strided_slice %45 {offsets = [0, 64], sizes = [16, 32], strides = [1, 1]} : vector<16x128xf32> to vector<16x32xf32>
    %cst_34 = arith.constant dense<0.000000e+00> : vector<16x16xf32>
    %83 = tpu.matmul %80, %81, %cst_34 {dimension_numbers = #tpu.dot_dimension_numbers<[1], [1], [0], [0], [0, 0, 1, 0], [], []>} : vector<16x32xf32>, vector<16x32xf32>, vector<16x16xf32> -> vector<16x16xf32>
    %cst_35 = arith.constant 0.176776692 : f32
    %84 = vector.broadcast %cst_35 : f32 to vector<16x16xf32>
    %85 = arith.mulf %83, %84 : vector<16x16xf32>
    %cst_36 = arith.constant dense<0xFF800000> : vector<16xf32>
    %86 = vector.multi_reduction <maximumf>, %85, %cst_36 [1] : vector<16x16xf32> to vector<16xf32>
    %87 = vector.shape_cast %86 : vector<16xf32> to vector<16x1xf32>
    %88 = vector.broadcast %87 : vector<16x1xf32> to vector<16x16xf32>
    %89 = arith.subf %85, %88 : vector<16x16xf32>
    %90 = math.exp %89 : vector<16x16xf32>
    %cst_37 = arith.constant dense<0.000000e+00> : vector<16xf32>
    %91 = vector.multi_reduction <add>, %90, %cst_37 [1] : vector<16x16xf32> to vector<16xf32>
    %92 = vector.shape_cast %91 : vector<16xf32> to vector<16x1xf32>
    %93 = tpu.reciprocal %92 {approx = true} : vector<16x1xf32> -> vector<16x1xf32>
    %94 = vector.broadcast %93 : vector<16x1xf32> to vector<16x16xf32>
    %95 = arith.mulf %90, %94 : vector<16x16xf32>
    %cst_38 = arith.constant dense<0.000000e+00> : vector<16x32xf32>
    %96 = tpu.matmul %95, %82, %cst_38 {dimension_numbers = #tpu.dot_dimension_numbers<[1], [0], [0], [1], [0, 0, 1, 1], [], []>} : vector<16x16xf32>, vector<16x32xf32>, vector<16x32xf32> -> vector<16x32xf32>
    %97 = vector.extract_strided_slice %43 {offsets = [0, 96], sizes = [16, 32], strides = [1, 1]} : vector<16x128xf32> to vector<16x32xf32>
    %98 = vector.extract_strided_slice %44 {offsets = [0, 96], sizes = [16, 32], strides = [1, 1]} : vector<16x128xf32> to vector<16x32xf32>
    %99 = vector.extract_strided_slice %45 {offsets = [0, 96], sizes = [16, 32], strides = [1, 1]} : vector<16x128xf32> to vector<16x32xf32>
    %cst_39 = arith.constant dense<0.000000e+00> : vector<16x16xf32>
    %100 = tpu.matmul %97, %98, %cst_39 {dimension_numbers = #tpu.dot_dimension_numbers<[1], [1], [0], [0], [0, 0, 1, 0], [], []>} : vector<16x32xf32>, vector<16x32xf32>, vector<16x16xf32> -> vector<16x16xf32>
    %cst_40 = arith.constant 0.176776692 : f32
    %101 = vector.broadcast %cst_40 : f32 to vector<16x16xf32>
    %102 = arith.mulf %100, %101 : vector<16x16xf32>
    %cst_41 = arith.constant dense<0xFF800000> : vector<16xf32>
    %103 = vector.multi_reduction <maximumf>, %102, %cst_41 [1] : vector<16x16xf32> to vector<16xf32>
    %104 = vector.shape_cast %103 : vector<16xf32> to vector<16x1xf32>
    %105 = vector.broadcast %104 : vector<16x1xf32> to vector<16x16xf32>
    %106 = arith.subf %102, %105 : vector<16x16xf32>
    %107 = math.exp %106 : vector<16x16xf32>
    %cst_42 = arith.constant dense<0.000000e+00> : vector<16xf32>
    %108 = vector.multi_reduction <add>, %107, %cst_42 [1] : vector<16x16xf32> to vector<16xf32>
    %109 = vector.shape_cast %108 : vector<16xf32> to vector<16x1xf32>
    %110 = tpu.reciprocal %109 {approx = true} : vector<16x1xf32> -> vector<16x1xf32>
    %111 = vector.broadcast %110 : vector<16x1xf32> to vector<16x16xf32>
    %112 = arith.mulf %107, %111 : vector<16x16xf32>
    %cst_43 = arith.constant dense<0.000000e+00> : vector<16x32xf32>
    %113 = tpu.matmul %112, %99, %cst_43 {dimension_numbers = #tpu.dot_dimension_numbers<[1], [0], [0], [1], [0, 0, 1, 1], [], []>} : vector<16x16xf32>, vector<16x32xf32>, vector<16x32xf32> -> vector<16x32xf32>
    %114 = tpu.concatenate %62, %79, %96, %113 in 1 : vector<16x32xf32>, vector<16x32xf32>, vector<16x32xf32>, vector<16x32xf32> -> vector<16x128xf32>
    %c0_44 = arith.constant 0 : index
    %c0_45 = arith.constant 0 : index
    %c0_46 = arith.constant 0 : index
    %115 = vector.load %arg9[%c0_44, %c0_45, %c0_46] : memref<4x128x128xf32, #tpu.memory_space<vmem>>, vector<1x128x128xf32>
    %116 = vector.shape_cast %115 : vector<1x128x128xf32> to vector<128x128xf32>
    %cst_47 = arith.constant dense<0.000000e+00> : vector<16x128xf32>
    %117 = tpu.matmul %114, %116, %cst_47 {dimension_numbers = #tpu.dot_dimension_numbers<[1], [0], [0], [1], [0, 0, 1, 1], [], []>} : vector<16x128xf32>, vector<128x128xf32>, vector<16x128xf32> -> vector<16x128xf32>
    %c0_48 = arith.constant 0 : index
    %c0_49 = arith.constant 0 : index
    %c0_50 = arith.constant 0 : index
    %118 = vector.load %arg10[%c0_48, %c0_49, %c0_50] : memref<4x1x128xf32, #tpu.memory_space<vmem>>, vector<1x1x128xf32>
    %119 = vector.shape_cast %118 : vector<1x1x128xf32> to vector<1x128xf32>
    %120 = vector.broadcast %119 : vector<1x128xf32> to vector<16x128xf32>
    %121 = arith.addf %117, %120 : vector<16x128xf32>
    %122 = arith.addf %35, %121 : vector<16x128xf32>
    %c0_51 = arith.constant 0 : index
    %c0_52 = arith.constant 0 : index
    %c0_53 = arith.constant 0 : index
    %123 = vector.load %arg11[%c0_51, %c0_52, %c0_53] : memref<4x1x128xf32, #tpu.memory_space<vmem>>, vector<1x1x128xf32>
    %124 = vector.shape_cast %123 : vector<1x1x128xf32> to vector<1x128xf32>
    %c0_54 = arith.constant 0 : index
    %c0_55 = arith.constant 0 : index
    %c0_56 = arith.constant 0 : index
    %125 = vector.load %arg12[%c0_54, %c0_55, %c0_56] : memref<4x1x128xf32, #tpu.memory_space<vmem>>, vector<1x1x128xf32>
    %126 = vector.shape_cast %125 : vector<1x1x128xf32> to vector<1x128xf32>
    %cst_57 = arith.constant dense<0.000000e+00> : vector<16xf32>
    %127 = vector.multi_reduction <add>, %122, %cst_57 [1] : vector<16x128xf32> to vector<16xf32>
    %128 = vector.shape_cast %127 : vector<16xf32> to vector<16x1xf32>
    %cst_58 = arith.constant 1.280000e+02 : f32
    %129 = vector.broadcast %cst_58 : f32 to vector<16x1xf32>
    %130 = arith.divf %128, %129 : vector<16x1xf32>
    %131 = vector.broadcast %130 : vector<16x1xf32> to vector<16x128xf32>
    %132 = arith.subf %122, %131 : vector<16x128xf32>
    %133 = arith.mulf %132, %132 : vector<16x128xf32>
    %cst_59 = arith.constant dense<0.000000e+00> : vector<16xf32>
    %134 = vector.multi_reduction <add>, %133, %cst_59 [1] : vector<16x128xf32> to vector<16xf32>
    %135 = vector.shape_cast %134 : vector<16xf32> to vector<16x1xf32>
    %cst_60 = arith.constant 1.280000e+02 : f32
    %136 = vector.broadcast %cst_60 : f32 to vector<16x1xf32>
    %137 = arith.divf %135, %136 : vector<16x1xf32>
    %138 = vector.broadcast %130 : vector<16x1xf32> to vector<16x128xf32>
    %139 = arith.subf %122, %138 : vector<16x128xf32>
    %cst_61 = arith.constant 9.99999974E-6 : f32
    %140 = vector.broadcast %cst_61 : f32 to vector<16x1xf32>
    %141 = arith.addf %137, %140 : vector<16x1xf32>
    %142 = math.rsqrt %141 : vector<16x1xf32>
    %143 = vector.broadcast %142 : vector<16x1xf32> to vector<16x128xf32>
    %144 = arith.mulf %139, %143 : vector<16x128xf32>
    %145 = vector.broadcast %124 : vector<1x128xf32> to vector<16x128xf32>
    %146 = arith.mulf %144, %145 : vector<16x128xf32>
    %147 = vector.broadcast %126 : vector<1x128xf32> to vector<16x128xf32>
    %148 = arith.addf %146, %147 : vector<16x128xf32>
    %c0_62 = arith.constant 0 : index
    %c0_63 = arith.constant 0 : index
    %c0_64 = arith.constant 0 : index
    %149 = vector.load %arg13[%c0_62, %c0_63, %c0_64] : memref<4x128x256xf32, #tpu.memory_space<vmem>>, vector<1x128x256xf32>
    %150 = vector.shape_cast %149 : vector<1x128x256xf32> to vector<128x256xf32>
    %cst_65 = arith.constant dense<0.000000e+00> : vector<16x256xf32>
    %151 = tpu.matmul %148, %150, %cst_65 {dimension_numbers = #tpu.dot_dimension_numbers<[1], [0], [0], [1], [0, 0, 1, 1], [], []>} : vector<16x128xf32>, vector<128x256xf32>, vector<16x256xf32> -> vector<16x256xf32>
    %c0_66 = arith.constant 0 : index
    %c0_67 = arith.constant 0 : index
    %c0_68 = arith.constant 0 : index
    %152 = vector.load %arg14[%c0_66, %c0_67, %c0_68] : memref<4x1x256xf32, #tpu.memory_space<vmem>>, vector<1x1x256xf32>
    %153 = vector.shape_cast %152 : vector<1x1x256xf32> to vector<1x256xf32>
    %154 = vector.broadcast %153 : vector<1x256xf32> to vector<16x256xf32>
    %155 = arith.addf %151, %154 : vector<16x256xf32>
    %cst_69 = arith.constant 5.000000e-01 : f32
    %156 = vector.broadcast %cst_69 : f32 to vector<16x256xf32>
    %157 = arith.mulf %156, %155 : vector<16x256xf32>
    %cst_70 = arith.constant 4.471500e-02 : f32
    %158 = vector.broadcast %cst_70 : f32 to vector<16x256xf32>
    %159 = arith.mulf %158, %155 : vector<16x256xf32>
    %160 = arith.mulf %159, %155 : vector<16x256xf32>
    %161 = arith.mulf %160, %155 : vector<16x256xf32>
    %162 = arith.addf %155, %161 : vector<16x256xf32>
    %cst_71 = arith.constant 0.797884583 : f32
    %163 = vector.broadcast %cst_71 : f32 to vector<16x256xf32>
    %164 = arith.mulf %163, %162 : vector<16x256xf32>
    %165 = math.tanh %164 : vector<16x256xf32>
    %cst_72 = arith.constant 1.000000e+00 : f32
    %166 = vector.broadcast %cst_72 : f32 to vector<16x256xf32>
    %167 = arith.addf %166, %165 : vector<16x256xf32>
    %168 = arith.mulf %157, %167 : vector<16x256xf32>
    %c0_73 = arith.constant 0 : index
    %c0_74 = arith.constant 0 : index
    %c0_75 = arith.constant 0 : index
    %169 = vector.load %arg15[%c0_73, %c0_74, %c0_75] : memref<4x256x128xf32, #tpu.memory_space<vmem>>, vector<1x256x128xf32>
    %170 = vector.shape_cast %169 : vector<1x256x128xf32> to vector<256x128xf32>
    %cst_76 = arith.constant dense<0.000000e+00> : vector<16x128xf32>
    %171 = tpu.matmul %168, %170, %cst_76 {dimension_numbers = #tpu.dot_dimension_numbers<[1], [0], [0], [1], [0, 0, 1, 1], [], []>} : vector<16x256xf32>, vector<256x128xf32>, vector<16x128xf32> -> vector<16x128xf32>
    %c0_77 = arith.constant 0 : index
    %c0_78 = arith.constant 0 : index
    %c0_79 = arith.constant 0 : index
    %172 = vector.load %arg16[%c0_77, %c0_78, %c0_79] : memref<4x1x128xf32, #tpu.memory_space<vmem>>, vector<1x1x128xf32>
    %173 = vector.shape_cast %172 : vector<1x1x128xf32> to vector<1x128xf32>
    %174 = vector.broadcast %173 : vector<1x128xf32> to vector<16x128xf32>
    %175 = arith.addf %171, %174 : vector<16x128xf32>
    %176 = arith.addf %148, %175 : vector<16x128xf32>
    %c0_80 = arith.constant 0 : index
    %c0_81 = arith.constant 0 : index
    %c0_82 = arith.constant 0 : index
    %177 = vector.load %arg17[%c0_80, %c0_81, %c0_82] : memref<4x1x128xf32, #tpu.memory_space<vmem>>, vector<1x1x128xf32>
    %178 = vector.shape_cast %177 : vector<1x1x128xf32> to vector<1x128xf32>
    %c0_83 = arith.constant 0 : index
    %c0_84 = arith.constant 0 : index
    %c0_85 = arith.constant 0 : index
    %179 = vector.load %arg18[%c0_83, %c0_84, %c0_85] : memref<4x1x128xf32, #tpu.memory_space<vmem>>, vector<1x1x128xf32>
    %180 = vector.shape_cast %179 : vector<1x1x128xf32> to vector<1x128xf32>
    %cst_86 = arith.constant dense<0.000000e+00> : vector<16xf32>
    %181 = vector.multi_reduction <add>, %176, %cst_86 [1] : vector<16x128xf32> to vector<16xf32>
    %182 = vector.shape_cast %181 : vector<16xf32> to vector<16x1xf32>
    %cst_87 = arith.constant 1.280000e+02 : f32
    %183 = vector.broadcast %cst_87 : f32 to vector<16x1xf32>
    %184 = arith.divf %182, %183 : vector<16x1xf32>
    %185 = vector.broadcast %184 : vector<16x1xf32> to vector<16x128xf32>
    %186 = arith.subf %176, %185 : vector<16x128xf32>
    %187 = arith.mulf %186, %186 : vector<16x128xf32>
    %cst_88 = arith.constant dense<0.000000e+00> : vector<16xf32>
    %188 = vector.multi_reduction <add>, %187, %cst_88 [1] : vector<16x128xf32> to vector<16xf32>
    %189 = vector.shape_cast %188 : vector<16xf32> to vector<16x1xf32>
    %cst_89 = arith.constant 1.280000e+02 : f32
    %190 = vector.broadcast %cst_89 : f32 to vector<16x1xf32>
    %191 = arith.divf %189, %190 : vector<16x1xf32>
    %192 = vector.broadcast %184 : vector<16x1xf32> to vector<16x128xf32>
    %193 = arith.subf %176, %192 : vector<16x128xf32>
    %cst_90 = arith.constant 9.99999974E-6 : f32
    %194 = vector.broadcast %cst_90 : f32 to vector<16x1xf32>
    %195 = arith.addf %191, %194 : vector<16x1xf32>
    %196 = math.rsqrt %195 : vector<16x1xf32>
    %197 = vector.broadcast %196 : vector<16x1xf32> to vector<16x128xf32>
    %198 = arith.mulf %193, %197 : vector<16x128xf32>
    %199 = vector.broadcast %178 : vector<1x128xf32> to vector<16x128xf32>
    %200 = arith.mulf %198, %199 : vector<16x128xf32>
    %201 = vector.broadcast %180 : vector<1x128xf32> to vector<16x128xf32>
    %202 = arith.addf %200, %201 : vector<16x128xf32>
    %c1 = arith.constant 1 : index
    %c0_91 = arith.constant 0 : index
    %c0_92 = arith.constant 0 : index
    %203 = vector.load %arg7[%c1, %c0_91, %c0_92] : memref<4x128x384xf32, #tpu.memory_space<vmem>>, vector<1x128x384xf32>
    %204 = vector.shape_cast %203 : vector<1x128x384xf32> to vector<128x384xf32>
    %cst_93 = arith.constant dense<0.000000e+00> : vector<16x384xf32>
    %205 = tpu.matmul %202, %204, %cst_93 {dimension_numbers = #tpu.dot_dimension_numbers<[1], [0], [0], [1], [0, 0, 1, 1], [], []>} : vector<16x128xf32>, vector<128x384xf32>, vector<16x384xf32> -> vector<16x384xf32>
    %c1_94 = arith.constant 1 : index
    %c0_95 = arith.constant 0 : index
    %c0_96 = arith.constant 0 : index
    %206 = vector.load %arg8[%c1_94, %c0_95, %c0_96] : memref<4x1x384xf32, #tpu.memory_space<vmem>>, vector<1x1x384xf32>
    %207 = vector.shape_cast %206 : vector<1x1x384xf32> to vector<1x384xf32>
    %208 = vector.broadcast %207 : vector<1x384xf32> to vector<16x384xf32>
    %209 = arith.addf %205, %208 : vector<16x384xf32>
    %210 = vector.extract_strided_slice %209 {offsets = [0, 0], sizes = [16, 128], strides = [1, 1]} : vector<16x384xf32> to vector<16x128xf32>
    %211 = vector.extract_strided_slice %209 {offsets = [0, 128], sizes = [16, 128], strides = [1, 1]} : vector<16x384xf32> to vector<16x128xf32>
    %212 = vector.extract_strided_slice %209 {offsets = [0, 256], sizes = [16, 128], strides = [1, 1]} : vector<16x384xf32> to vector<16x128xf32>
    %213 = vector.extract_strided_slice %210 {offsets = [0, 0], sizes = [16, 32], strides = [1, 1]} : vector<16x128xf32> to vector<16x32xf32>
    %214 = vector.extract_strided_slice %211 {offsets = [0, 0], sizes = [16, 32], strides = [1, 1]} : vector<16x128xf32> to vector<16x32xf32>
    %215 = vector.extract_strided_slice %212 {offsets = [0, 0], sizes = [16, 32], strides = [1, 1]} : vector<16x128xf32> to vector<16x32xf32>
    %cst_97 = arith.constant dense<0.000000e+00> : vector<16x16xf32>
    %216 = tpu.matmul %213, %214, %cst_97 {dimension_numbers = #tpu.dot_dimension_numbers<[1], [1], [0], [0], [0, 0, 1, 0], [], []>} : vector<16x32xf32>, vector<16x32xf32>, vector<16x16xf32> -> vector<16x16xf32>
    %cst_98 = arith.constant 0.176776692 : f32
    %217 = vector.broadcast %cst_98 : f32 to vector<16x16xf32>
    %218 = arith.mulf %216, %217 : vector<16x16xf32>
    %cst_99 = arith.constant dense<0xFF800000> : vector<16xf32>
    %219 = vector.multi_reduction <maximumf>, %218, %cst_99 [1] : vector<16x16xf32> to vector<16xf32>
    %220 = vector.shape_cast %219 : vector<16xf32> to vector<16x1xf32>
    %221 = vector.broadcast %220 : vector<16x1xf32> to vector<16x16xf32>
    %222 = arith.subf %218, %221 : vector<16x16xf32>
    %223 = math.exp %222 : vector<16x16xf32>
    %cst_100 = arith.constant dense<0.000000e+00> : vector<16xf32>
    %224 = vector.multi_reduction <add>, %223, %cst_100 [1] : vector<16x16xf32> to vector<16xf32>
    %225 = vector.shape_cast %224 : vector<16xf32> to vector<16x1xf32>
    %226 = tpu.reciprocal %225 {approx = true} : vector<16x1xf32> -> vector<16x1xf32>
    %227 = vector.broadcast %226 : vector<16x1xf32> to vector<16x16xf32>
    %228 = arith.mulf %223, %227 : vector<16x16xf32>
    %cst_101 = arith.constant dense<0.000000e+00> : vector<16x32xf32>
    %229 = tpu.matmul %228, %215, %cst_101 {dimension_numbers = #tpu.dot_dimension_numbers<[1], [0], [0], [1], [0, 0, 1, 1], [], []>} : vector<16x16xf32>, vector<16x32xf32>, vector<16x32xf32> -> vector<16x32xf32>
    %230 = vector.extract_strided_slice %210 {offsets = [0, 32], sizes = [16, 32], strides = [1, 1]} : vector<16x128xf32> to vector<16x32xf32>
    %231 = vector.extract_strided_slice %211 {offsets = [0, 32], sizes = [16, 32], strides = [1, 1]} : vector<16x128xf32> to vector<16x32xf32>
    %232 = vector.extract_strided_slice %212 {offsets = [0, 32], sizes = [16, 32], strides = [1, 1]} : vector<16x128xf32> to vector<16x32xf32>
    %cst_102 = arith.constant dense<0.000000e+00> : vector<16x16xf32>
    %233 = tpu.matmul %230, %231, %cst_102 {dimension_numbers = #tpu.dot_dimension_numbers<[1], [1], [0], [0], [0, 0, 1, 0], [], []>} : vector<16x32xf32>, vector<16x32xf32>, vector<16x16xf32> -> vector<16x16xf32>
    %cst_103 = arith.constant 0.176776692 : f32
    %234 = vector.broadcast %cst_103 : f32 to vector<16x16xf32>
    %235 = arith.mulf %233, %234 : vector<16x16xf32>
    %cst_104 = arith.constant dense<0xFF800000> : vector<16xf32>
    %236 = vector.multi_reduction <maximumf>, %235, %cst_104 [1] : vector<16x16xf32> to vector<16xf32>
    %237 = vector.shape_cast %236 : vector<16xf32> to vector<16x1xf32>
    %238 = vector.broadcast %237 : vector<16x1xf32> to vector<16x16xf32>
    %239 = arith.subf %235, %238 : vector<16x16xf32>
    %240 = math.exp %239 : vector<16x16xf32>
    %cst_105 = arith.constant dense<0.000000e+00> : vector<16xf32>
    %241 = vector.multi_reduction <add>, %240, %cst_105 [1] : vector<16x16xf32> to vector<16xf32>
    %242 = vector.shape_cast %241 : vector<16xf32> to vector<16x1xf32>
    %243 = tpu.reciprocal %242 {approx = true} : vector<16x1xf32> -> vector<16x1xf32>
    %244 = vector.broadcast %243 : vector<16x1xf32> to vector<16x16xf32>
    %245 = arith.mulf %240, %244 : vector<16x16xf32>
    %cst_106 = arith.constant dense<0.000000e+00> : vector<16x32xf32>
    %246 = tpu.matmul %245, %232, %cst_106 {dimension_numbers = #tpu.dot_dimension_numbers<[1], [0], [0], [1], [0, 0, 1, 1], [], []>} : vector<16x16xf32>, vector<16x32xf32>, vector<16x32xf32> -> vector<16x32xf32>
    %247 = vector.extract_strided_slice %210 {offsets = [0, 64], sizes = [16, 32], strides = [1, 1]} : vector<16x128xf32> to vector<16x32xf32>
    %248 = vector.extract_strided_slice %211 {offsets = [0, 64], sizes = [16, 32], strides = [1, 1]} : vector<16x128xf32> to vector<16x32xf32>
    %249 = vector.extract_strided_slice %212 {offsets = [0, 64], sizes = [16, 32], strides = [1, 1]} : vector<16x128xf32> to vector<16x32xf32>
    %cst_107 = arith.constant dense<0.000000e+00> : vector<16x16xf32>
    %250 = tpu.matmul %247, %248, %cst_107 {dimension_numbers = #tpu.dot_dimension_numbers<[1], [1], [0], [0], [0, 0, 1, 0], [], []>} : vector<16x32xf32>, vector<16x32xf32>, vector<16x16xf32> -> vector<16x16xf32>
    %cst_108 = arith.constant 0.176776692 : f32
    %251 = vector.broadcast %cst_108 : f32 to vector<16x16xf32>
    %252 = arith.mulf %250, %251 : vector<16x16xf32>
    %cst_109 = arith.constant dense<0xFF800000> : vector<16xf32>
    %253 = vector.multi_reduction <maximumf>, %252, %cst_109 [1] : vector<16x16xf32> to vector<16xf32>
    %254 = vector.shape_cast %253 : vector<16xf32> to vector<16x1xf32>
    %255 = vector.broadcast %254 : vector<16x1xf32> to vector<16x16xf32>
    %256 = arith.subf %252, %255 : vector<16x16xf32>
    %257 = math.exp %256 : vector<16x16xf32>
    %cst_110 = arith.constant dense<0.000000e+00> : vector<16xf32>
    %258 = vector.multi_reduction <add>, %257, %cst_110 [1] : vector<16x16xf32> to vector<16xf32>
    %259 = vector.shape_cast %258 : vector<16xf32> to vector<16x1xf32>
    %260 = tpu.reciprocal %259 {approx = true} : vector<16x1xf32> -> vector<16x1xf32>
    %261 = vector.broadcast %260 : vector<16x1xf32> to vector<16x16xf32>
    %262 = arith.mulf %257, %261 : vector<16x16xf32>
    %cst_111 = arith.constant dense<0.000000e+00> : vector<16x32xf32>
    %263 = tpu.matmul %262, %249, %cst_111 {dimension_numbers = #tpu.dot_dimension_numbers<[1], [0], [0], [1], [0, 0, 1, 1], [], []>} : vector<16x16xf32>, vector<16x32xf32>, vector<16x32xf32> -> vector<16x32xf32>
    %264 = vector.extract_strided_slice %210 {offsets = [0, 96], sizes = [16, 32], strides = [1, 1]} : vector<16x128xf32> to vector<16x32xf32>
    %265 = vector.extract_strided_slice %211 {offsets = [0, 96], sizes = [16, 32], strides = [1, 1]} : vector<16x128xf32> to vector<16x32xf32>
    %266 = vector.extract_strided_slice %212 {offsets = [0, 96], sizes = [16, 32], strides = [1, 1]} : vector<16x128xf32> to vector<16x32xf32>
    %cst_112 = arith.constant dense<0.000000e+00> : vector<16x16xf32>
    %267 = tpu.matmul %264, %265, %cst_112 {dimension_numbers = #tpu.dot_dimension_numbers<[1], [1], [0], [0], [0, 0, 1, 0], [], []>} : vector<16x32xf32>, vector<16x32xf32>, vector<16x16xf32> -> vector<16x16xf32>
    %cst_113 = arith.constant 0.176776692 : f32
    %268 = vector.broadcast %cst_113 : f32 to vector<16x16xf32>
    %269 = arith.mulf %267, %268 : vector<16x16xf32>
    %cst_114 = arith.constant dense<0xFF800000> : vector<16xf32>
    %270 = vector.multi_reduction <maximumf>, %269, %cst_114 [1] : vector<16x16xf32> to vector<16xf32>
    %271 = vector.shape_cast %270 : vector<16xf32> to vector<16x1xf32>
    %272 = vector.broadcast %271 : vector<16x1xf32> to vector<16x16xf32>
    %273 = arith.subf %269, %272 : vector<16x16xf32>
    %274 = math.exp %273 : vector<16x16xf32>
    %cst_115 = arith.constant dense<0.000000e+00> : vector<16xf32>
    %275 = vector.multi_reduction <add>, %274, %cst_115 [1] : vector<16x16xf32> to vector<16xf32>
    %276 = vector.shape_cast %275 : vector<16xf32> to vector<16x1xf32>
    %277 = tpu.reciprocal %276 {approx = true} : vector<16x1xf32> -> vector<16x1xf32>
    %278 = vector.broadcast %277 : vector<16x1xf32> to vector<16x16xf32>
    %279 = arith.mulf %274, %278 : vector<16x16xf32>
    %cst_116 = arith.constant dense<0.000000e+00> : vector<16x32xf32>
    %280 = tpu.matmul %279, %266, %cst_116 {dimension_numbers = #tpu.dot_dimension_numbers<[1], [0], [0], [1], [0, 0, 1, 1], [], []>} : vector<16x16xf32>, vector<16x32xf32>, vector<16x32xf32> -> vector<16x32xf32>
    %281 = tpu.concatenate %229, %246, %263, %280 in 1 : vector<16x32xf32>, vector<16x32xf32>, vector<16x32xf32>, vector<16x32xf32> -> vector<16x128xf32>
    %c1_117 = arith.constant 1 : index
    %c0_118 = arith.constant 0 : index
    %c0_119 = arith.constant 0 : index
    %282 = vector.load %arg9[%c1_117, %c0_118, %c0_119] : memref<4x128x128xf32, #tpu.memory_space<vmem>>, vector<1x128x128xf32>
    %283 = vector.shape_cast %282 : vector<1x128x128xf32> to vector<128x128xf32>
    %cst_120 = arith.constant dense<0.000000e+00> : vector<16x128xf32>
    %284 = tpu.matmul %281, %283, %cst_120 {dimension_numbers = #tpu.dot_dimension_numbers<[1], [0], [0], [1], [0, 0, 1, 1], [], []>} : vector<16x128xf32>, vector<128x128xf32>, vector<16x128xf32> -> vector<16x128xf32>
    %c1_121 = arith.constant 1 : index
    %c0_122 = arith.constant 0 : index
    %c0_123 = arith.constant 0 : index
    %285 = vector.load %arg10[%c1_121, %c0_122, %c0_123] : memref<4x1x128xf32, #tpu.memory_space<vmem>>, vector<1x1x128xf32>
    %286 = vector.shape_cast %285 : vector<1x1x128xf32> to vector<1x128xf32>
    %287 = vector.broadcast %286 : vector<1x128xf32> to vector<16x128xf32>
    %288 = arith.addf %284, %287 : vector<16x128xf32>
    %289 = arith.addf %202, %288 : vector<16x128xf32>
    %c1_124 = arith.constant 1 : index
    %c0_125 = arith.constant 0 : index
    %c0_126 = arith.constant 0 : index
    %290 = vector.load %arg11[%c1_124, %c0_125, %c0_126] : memref<4x1x128xf32, #tpu.memory_space<vmem>>, vector<1x1x128xf32>
    %291 = vector.shape_cast %290 : vector<1x1x128xf32> to vector<1x128xf32>
    %c1_127 = arith.constant 1 : index
    %c0_128 = arith.constant 0 : index
    %c0_129 = arith.constant 0 : index
    %292 = vector.load %arg12[%c1_127, %c0_128, %c0_129] : memref<4x1x128xf32, #tpu.memory_space<vmem>>, vector<1x1x128xf32>
    %293 = vector.shape_cast %292 : vector<1x1x128xf32> to vector<1x128xf32>
    %cst_130 = arith.constant dense<0.000000e+00> : vector<16xf32>
    %294 = vector.multi_reduction <add>, %289, %cst_130 [1] : vector<16x128xf32> to vector<16xf32>
    %295 = vector.shape_cast %294 : vector<16xf32> to vector<16x1xf32>
    %cst_131 = arith.constant 1.280000e+02 : f32
    %296 = vector.broadcast %cst_131 : f32 to vector<16x1xf32>
    %297 = arith.divf %295, %296 : vector<16x1xf32>
    %298 = vector.broadcast %297 : vector<16x1xf32> to vector<16x128xf32>
    %299 = arith.subf %289, %298 : vector<16x128xf32>
    %300 = arith.mulf %299, %299 : vector<16x128xf32>
    %cst_132 = arith.constant dense<0.000000e+00> : vector<16xf32>
    %301 = vector.multi_reduction <add>, %300, %cst_132 [1] : vector<16x128xf32> to vector<16xf32>
    %302 = vector.shape_cast %301 : vector<16xf32> to vector<16x1xf32>
    %cst_133 = arith.constant 1.280000e+02 : f32
    %303 = vector.broadcast %cst_133 : f32 to vector<16x1xf32>
    %304 = arith.divf %302, %303 : vector<16x1xf32>
    %305 = vector.broadcast %297 : vector<16x1xf32> to vector<16x128xf32>
    %306 = arith.subf %289, %305 : vector<16x128xf32>
    %cst_134 = arith.constant 9.99999974E-6 : f32
    %307 = vector.broadcast %cst_134 : f32 to vector<16x1xf32>
    %308 = arith.addf %304, %307 : vector<16x1xf32>
    %309 = math.rsqrt %308 : vector<16x1xf32>
    %310 = vector.broadcast %309 : vector<16x1xf32> to vector<16x128xf32>
    %311 = arith.mulf %306, %310 : vector<16x128xf32>
    %312 = vector.broadcast %291 : vector<1x128xf32> to vector<16x128xf32>
    %313 = arith.mulf %311, %312 : vector<16x128xf32>
    %314 = vector.broadcast %293 : vector<1x128xf32> to vector<16x128xf32>
    %315 = arith.addf %313, %314 : vector<16x128xf32>
    %c1_135 = arith.constant 1 : index
    %c0_136 = arith.constant 0 : index
    %c0_137 = arith.constant 0 : index
    %316 = vector.load %arg13[%c1_135, %c0_136, %c0_137] : memref<4x128x256xf32, #tpu.memory_space<vmem>>, vector<1x128x256xf32>
    %317 = vector.shape_cast %316 : vector<1x128x256xf32> to vector<128x256xf32>
    %cst_138 = arith.constant dense<0.000000e+00> : vector<16x256xf32>
    %318 = tpu.matmul %315, %317, %cst_138 {dimension_numbers = #tpu.dot_dimension_numbers<[1], [0], [0], [1], [0, 0, 1, 1], [], []>} : vector<16x128xf32>, vector<128x256xf32>, vector<16x256xf32> -> vector<16x256xf32>
    %c1_139 = arith.constant 1 : index
    %c0_140 = arith.constant 0 : index
    %c0_141 = arith.constant 0 : index
    %319 = vector.load %arg14[%c1_139, %c0_140, %c0_141] : memref<4x1x256xf32, #tpu.memory_space<vmem>>, vector<1x1x256xf32>
    %320 = vector.shape_cast %319 : vector<1x1x256xf32> to vector<1x256xf32>
    %321 = vector.broadcast %320 : vector<1x256xf32> to vector<16x256xf32>
    %322 = arith.addf %318, %321 : vector<16x256xf32>
    %cst_142 = arith.constant 5.000000e-01 : f32
    %323 = vector.broadcast %cst_142 : f32 to vector<16x256xf32>
    %324 = arith.mulf %323, %322 : vector<16x256xf32>
    %cst_143 = arith.constant 4.471500e-02 : f32
    %325 = vector.broadcast %cst_143 : f32 to vector<16x256xf32>
    %326 = arith.mulf %325, %322 : vector<16x256xf32>
    %327 = arith.mulf %326, %322 : vector<16x256xf32>
    %328 = arith.mulf %327, %322 : vector<16x256xf32>
    %329 = arith.addf %322, %328 : vector<16x256xf32>
    %cst_144 = arith.constant 0.797884583 : f32
    %330 = vector.broadcast %cst_144 : f32 to vector<16x256xf32>
    %331 = arith.mulf %330, %329 : vector<16x256xf32>
    %332 = math.tanh %331 : vector<16x256xf32>
    %cst_145 = arith.constant 1.000000e+00 : f32
    %333 = vector.broadcast %cst_145 : f32 to vector<16x256xf32>
    %334 = arith.addf %333, %332 : vector<16x256xf32>
    %335 = arith.mulf %324, %334 : vector<16x256xf32>
    %c1_146 = arith.constant 1 : index
    %c0_147 = arith.constant 0 : index
    %c0_148 = arith.constant 0 : index
    %336 = vector.load %arg15[%c1_146, %c0_147, %c0_148] : memref<4x256x128xf32, #tpu.memory_space<vmem>>, vector<1x256x128xf32>
    %337 = vector.shape_cast %336 : vector<1x256x128xf32> to vector<256x128xf32>
    %cst_149 = arith.constant dense<0.000000e+00> : vector<16x128xf32>
    %338 = tpu.matmul %335, %337, %cst_149 {dimension_numbers = #tpu.dot_dimension_numbers<[1], [0], [0], [1], [0, 0, 1, 1], [], []>} : vector<16x256xf32>, vector<256x128xf32>, vector<16x128xf32> -> vector<16x128xf32>
    %c1_150 = arith.constant 1 : index
    %c0_151 = arith.constant 0 : index
    %c0_152 = arith.constant 0 : index
    %339 = vector.load %arg16[%c1_150, %c0_151, %c0_152] : memref<4x1x128xf32, #tpu.memory_space<vmem>>, vector<1x1x128xf32>
    %340 = vector.shape_cast %339 : vector<1x1x128xf32> to vector<1x128xf32>
    %341 = vector.broadcast %340 : vector<1x128xf32> to vector<16x128xf32>
    %342 = arith.addf %338, %341 : vector<16x128xf32>
    %343 = arith.addf %315, %342 : vector<16x128xf32>
    %c1_153 = arith.constant 1 : index
    %c0_154 = arith.constant 0 : index
    %c0_155 = arith.constant 0 : index
    %344 = vector.load %arg17[%c1_153, %c0_154, %c0_155] : memref<4x1x128xf32, #tpu.memory_space<vmem>>, vector<1x1x128xf32>
    %345 = vector.shape_cast %344 : vector<1x1x128xf32> to vector<1x128xf32>
    %c1_156 = arith.constant 1 : index
    %c0_157 = arith.constant 0 : index
    %c0_158 = arith.constant 0 : index
    %346 = vector.load %arg18[%c1_156, %c0_157, %c0_158] : memref<4x1x128xf32, #tpu.memory_space<vmem>>, vector<1x1x128xf32>
    %347 = vector.shape_cast %346 : vector<1x1x128xf32> to vector<1x128xf32>
    %cst_159 = arith.constant dense<0.000000e+00> : vector<16xf32>
    %348 = vector.multi_reduction <add>, %343, %cst_159 [1] : vector<16x128xf32> to vector<16xf32>
    %349 = vector.shape_cast %348 : vector<16xf32> to vector<16x1xf32>
    %cst_160 = arith.constant 1.280000e+02 : f32
    %350 = vector.broadcast %cst_160 : f32 to vector<16x1xf32>
    %351 = arith.divf %349, %350 : vector<16x1xf32>
    %352 = vector.broadcast %351 : vector<16x1xf32> to vector<16x128xf32>
    %353 = arith.subf %343, %352 : vector<16x128xf32>
    %354 = arith.mulf %353, %353 : vector<16x128xf32>
    %cst_161 = arith.constant dense<0.000000e+00> : vector<16xf32>
    %355 = vector.multi_reduction <add>, %354, %cst_161 [1] : vector<16x128xf32> to vector<16xf32>
    %356 = vector.shape_cast %355 : vector<16xf32> to vector<16x1xf32>
    %cst_162 = arith.constant 1.280000e+02 : f32
    %357 = vector.broadcast %cst_162 : f32 to vector<16x1xf32>
    %358 = arith.divf %356, %357 : vector<16x1xf32>
    %359 = vector.broadcast %351 : vector<16x1xf32> to vector<16x128xf32>
    %360 = arith.subf %343, %359 : vector<16x128xf32>
    %cst_163 = arith.constant 9.99999974E-6 : f32
    %361 = vector.broadcast %cst_163 : f32 to vector<16x1xf32>
    %362 = arith.addf %358, %361 : vector<16x1xf32>
    %363 = math.rsqrt %362 : vector<16x1xf32>
    %364 = vector.broadcast %363 : vector<16x1xf32> to vector<16x128xf32>
    %365 = arith.mulf %360, %364 : vector<16x128xf32>
    %366 = vector.broadcast %345 : vector<1x128xf32> to vector<16x128xf32>
    %367 = arith.mulf %365, %366 : vector<16x128xf32>
    %368 = vector.broadcast %347 : vector<1x128xf32> to vector<16x128xf32>
    %369 = arith.addf %367, %368 : vector<16x128xf32>
    %c2 = arith.constant 2 : index
    %c0_164 = arith.constant 0 : index
    %c0_165 = arith.constant 0 : index
    %370 = vector.load %arg7[%c2, %c0_164, %c0_165] : memref<4x128x384xf32, #tpu.memory_space<vmem>>, vector<1x128x384xf32>
    %371 = vector.shape_cast %370 : vector<1x128x384xf32> to vector<128x384xf32>
    %cst_166 = arith.constant dense<0.000000e+00> : vector<16x384xf32>
    %372 = tpu.matmul %369, %371, %cst_166 {dimension_numbers = #tpu.dot_dimension_numbers<[1], [0], [0], [1], [0, 0, 1, 1], [], []>} : vector<16x128xf32>, vector<128x384xf32>, vector<16x384xf32> -> vector<16x384xf32>
    %c2_167 = arith.constant 2 : index
    %c0_168 = arith.constant 0 : index
    %c0_169 = arith.constant 0 : index
    %373 = vector.load %arg8[%c2_167, %c0_168, %c0_169] : memref<4x1x384xf32, #tpu.memory_space<vmem>>, vector<1x1x384xf32>
    %374 = vector.shape_cast %373 : vector<1x1x384xf32> to vector<1x384xf32>
    %375 = vector.broadcast %374 : vector<1x384xf32> to vector<16x384xf32>
    %376 = arith.addf %372, %375 : vector<16x384xf32>
    %377 = vector.extract_strided_slice %376 {offsets = [0, 0], sizes = [16, 128], strides = [1, 1]} : vector<16x384xf32> to vector<16x128xf32>
    %378 = vector.extract_strided_slice %376 {offsets = [0, 128], sizes = [16, 128], strides = [1, 1]} : vector<16x384xf32> to vector<16x128xf32>
    %379 = vector.extract_strided_slice %376 {offsets = [0, 256], sizes = [16, 128], strides = [1, 1]} : vector<16x384xf32> to vector<16x128xf32>
    %380 = vector.extract_strided_slice %377 {offsets = [0, 0], sizes = [16, 32], strides = [1, 1]} : vector<16x128xf32> to vector<16x32xf32>
    %381 = vector.extract_strided_slice %378 {offsets = [0, 0], sizes = [16, 32], strides = [1, 1]} : vector<16x128xf32> to vector<16x32xf32>
    %382 = vector.extract_strided_slice %379 {offsets = [0, 0], sizes = [16, 32], strides = [1, 1]} : vector<16x128xf32> to vector<16x32xf32>
    %cst_170 = arith.constant dense<0.000000e+00> : vector<16x16xf32>
    %383 = tpu.matmul %380, %381, %cst_170 {dimension_numbers = #tpu.dot_dimension_numbers<[1], [1], [0], [0], [0, 0, 1, 0], [], []>} : vector<16x32xf32>, vector<16x32xf32>, vector<16x16xf32> -> vector<16x16xf32>
    %cst_171 = arith.constant 0.176776692 : f32
    %384 = vector.broadcast %cst_171 : f32 to vector<16x16xf32>
    %385 = arith.mulf %383, %384 : vector<16x16xf32>
    %cst_172 = arith.constant dense<0xFF800000> : vector<16xf32>
    %386 = vector.multi_reduction <maximumf>, %385, %cst_172 [1] : vector<16x16xf32> to vector<16xf32>
    %387 = vector.shape_cast %386 : vector<16xf32> to vector<16x1xf32>
    %388 = vector.broadcast %387 : vector<16x1xf32> to vector<16x16xf32>
    %389 = arith.subf %385, %388 : vector<16x16xf32>
    %390 = math.exp %389 : vector<16x16xf32>
    %cst_173 = arith.constant dense<0.000000e+00> : vector<16xf32>
    %391 = vector.multi_reduction <add>, %390, %cst_173 [1] : vector<16x16xf32> to vector<16xf32>
    %392 = vector.shape_cast %391 : vector<16xf32> to vector<16x1xf32>
    %393 = tpu.reciprocal %392 {approx = true} : vector<16x1xf32> -> vector<16x1xf32>
    %394 = vector.broadcast %393 : vector<16x1xf32> to vector<16x16xf32>
    %395 = arith.mulf %390, %394 : vector<16x16xf32>
    %cst_174 = arith.constant dense<0.000000e+00> : vector<16x32xf32>
    %396 = tpu.matmul %395, %382, %cst_174 {dimension_numbers = #tpu.dot_dimension_numbers<[1], [0], [0], [1], [0, 0, 1, 1], [], []>} : vector<16x16xf32>, vector<16x32xf32>, vector<16x32xf32> -> vector<16x32xf32>
    %397 = vector.extract_strided_slice %377 {offsets = [0, 32], sizes = [16, 32], strides = [1, 1]} : vector<16x128xf32> to vector<16x32xf32>
    %398 = vector.extract_strided_slice %378 {offsets = [0, 32], sizes = [16, 32], strides = [1, 1]} : vector<16x128xf32> to vector<16x32xf32>
    %399 = vector.extract_strided_slice %379 {offsets = [0, 32], sizes = [16, 32], strides = [1, 1]} : vector<16x128xf32> to vector<16x32xf32>
    %cst_175 = arith.constant dense<0.000000e+00> : vector<16x16xf32>
    %400 = tpu.matmul %397, %398, %cst_175 {dimension_numbers = #tpu.dot_dimension_numbers<[1], [1], [0], [0], [0, 0, 1, 0], [], []>} : vector<16x32xf32>, vector<16x32xf32>, vector<16x16xf32> -> vector<16x16xf32>
    %cst_176 = arith.constant 0.176776692 : f32
    %401 = vector.broadcast %cst_176 : f32 to vector<16x16xf32>
    %402 = arith.mulf %400, %401 : vector<16x16xf32>
    %cst_177 = arith.constant dense<0xFF800000> : vector<16xf32>
    %403 = vector.multi_reduction <maximumf>, %402, %cst_177 [1] : vector<16x16xf32> to vector<16xf32>
    %404 = vector.shape_cast %403 : vector<16xf32> to vector<16x1xf32>
    %405 = vector.broadcast %404 : vector<16x1xf32> to vector<16x16xf32>
    %406 = arith.subf %402, %405 : vector<16x16xf32>
    %407 = math.exp %406 : vector<16x16xf32>
    %cst_178 = arith.constant dense<0.000000e+00> : vector<16xf32>
    %408 = vector.multi_reduction <add>, %407, %cst_178 [1] : vector<16x16xf32> to vector<16xf32>
    %409 = vector.shape_cast %408 : vector<16xf32> to vector<16x1xf32>
    %410 = tpu.reciprocal %409 {approx = true} : vector<16x1xf32> -> vector<16x1xf32>
    %411 = vector.broadcast %410 : vector<16x1xf32> to vector<16x16xf32>
    %412 = arith.mulf %407, %411 : vector<16x16xf32>
    %cst_179 = arith.constant dense<0.000000e+00> : vector<16x32xf32>
    %413 = tpu.matmul %412, %399, %cst_179 {dimension_numbers = #tpu.dot_dimension_numbers<[1], [0], [0], [1], [0, 0, 1, 1], [], []>} : vector<16x16xf32>, vector<16x32xf32>, vector<16x32xf32> -> vector<16x32xf32>
    %414 = vector.extract_strided_slice %377 {offsets = [0, 64], sizes = [16, 32], strides = [1, 1]} : vector<16x128xf32> to vector<16x32xf32>
    %415 = vector.extract_strided_slice %378 {offsets = [0, 64], sizes = [16, 32], strides = [1, 1]} : vector<16x128xf32> to vector<16x32xf32>
    %416 = vector.extract_strided_slice %379 {offsets = [0, 64], sizes = [16, 32], strides = [1, 1]} : vector<16x128xf32> to vector<16x32xf32>
    %cst_180 = arith.constant dense<0.000000e+00> : vector<16x16xf32>
    %417 = tpu.matmul %414, %415, %cst_180 {dimension_numbers = #tpu.dot_dimension_numbers<[1], [1], [0], [0], [0, 0, 1, 0], [], []>} : vector<16x32xf32>, vector<16x32xf32>, vector<16x16xf32> -> vector<16x16xf32>
    %cst_181 = arith.constant 0.176776692 : f32
    %418 = vector.broadcast %cst_181 : f32 to vector<16x16xf32>
    %419 = arith.mulf %417, %418 : vector<16x16xf32>
    %cst_182 = arith.constant dense<0xFF800000> : vector<16xf32>
    %420 = vector.multi_reduction <maximumf>, %419, %cst_182 [1] : vector<16x16xf32> to vector<16xf32>
    %421 = vector.shape_cast %420 : vector<16xf32> to vector<16x1xf32>
    %422 = vector.broadcast %421 : vector<16x1xf32> to vector<16x16xf32>
    %423 = arith.subf %419, %422 : vector<16x16xf32>
    %424 = math.exp %423 : vector<16x16xf32>
    %cst_183 = arith.constant dense<0.000000e+00> : vector<16xf32>
    %425 = vector.multi_reduction <add>, %424, %cst_183 [1] : vector<16x16xf32> to vector<16xf32>
    %426 = vector.shape_cast %425 : vector<16xf32> to vector<16x1xf32>
    %427 = tpu.reciprocal %426 {approx = true} : vector<16x1xf32> -> vector<16x1xf32>
    %428 = vector.broadcast %427 : vector<16x1xf32> to vector<16x16xf32>
    %429 = arith.mulf %424, %428 : vector<16x16xf32>
    %cst_184 = arith.constant dense<0.000000e+00> : vector<16x32xf32>
    %430 = tpu.matmul %429, %416, %cst_184 {dimension_numbers = #tpu.dot_dimension_numbers<[1], [0], [0], [1], [0, 0, 1, 1], [], []>} : vector<16x16xf32>, vector<16x32xf32>, vector<16x32xf32> -> vector<16x32xf32>
    %431 = vector.extract_strided_slice %377 {offsets = [0, 96], sizes = [16, 32], strides = [1, 1]} : vector<16x128xf32> to vector<16x32xf32>
    %432 = vector.extract_strided_slice %378 {offsets = [0, 96], sizes = [16, 32], strides = [1, 1]} : vector<16x128xf32> to vector<16x32xf32>
    %433 = vector.extract_strided_slice %379 {offsets = [0, 96], sizes = [16, 32], strides = [1, 1]} : vector<16x128xf32> to vector<16x32xf32>
    %cst_185 = arith.constant dense<0.000000e+00> : vector<16x16xf32>
    %434 = tpu.matmul %431, %432, %cst_185 {dimension_numbers = #tpu.dot_dimension_numbers<[1], [1], [0], [0], [0, 0, 1, 0], [], []>} : vector<16x32xf32>, vector<16x32xf32>, vector<16x16xf32> -> vector<16x16xf32>
    %cst_186 = arith.constant 0.176776692 : f32
    %435 = vector.broadcast %cst_186 : f32 to vector<16x16xf32>
    %436 = arith.mulf %434, %435 : vector<16x16xf32>
    %cst_187 = arith.constant dense<0xFF800000> : vector<16xf32>
    %437 = vector.multi_reduction <maximumf>, %436, %cst_187 [1] : vector<16x16xf32> to vector<16xf32>
    %438 = vector.shape_cast %437 : vector<16xf32> to vector<16x1xf32>
    %439 = vector.broadcast %438 : vector<16x1xf32> to vector<16x16xf32>
    %440 = arith.subf %436, %439 : vector<16x16xf32>
    %441 = math.exp %440 : vector<16x16xf32>
    %cst_188 = arith.constant dense<0.000000e+00> : vector<16xf32>
    %442 = vector.multi_reduction <add>, %441, %cst_188 [1] : vector<16x16xf32> to vector<16xf32>
    %443 = vector.shape_cast %442 : vector<16xf32> to vector<16x1xf32>
    %444 = tpu.reciprocal %443 {approx = true} : vector<16x1xf32> -> vector<16x1xf32>
    %445 = vector.broadcast %444 : vector<16x1xf32> to vector<16x16xf32>
    %446 = arith.mulf %441, %445 : vector<16x16xf32>
    %cst_189 = arith.constant dense<0.000000e+00> : vector<16x32xf32>
    %447 = tpu.matmul %446, %433, %cst_189 {dimension_numbers = #tpu.dot_dimension_numbers<[1], [0], [0], [1], [0, 0, 1, 1], [], []>} : vector<16x16xf32>, vector<16x32xf32>, vector<16x32xf32> -> vector<16x32xf32>
    %448 = tpu.concatenate %396, %413, %430, %447 in 1 : vector<16x32xf32>, vector<16x32xf32>, vector<16x32xf32>, vector<16x32xf32> -> vector<16x128xf32>
    %c2_190 = arith.constant 2 : index
    %c0_191 = arith.constant 0 : index
    %c0_192 = arith.constant 0 : index
    %449 = vector.load %arg9[%c2_190, %c0_191, %c0_192] : memref<4x128x128xf32, #tpu.memory_space<vmem>>, vector<1x128x128xf32>
    %450 = vector.shape_cast %449 : vector<1x128x128xf32> to vector<128x128xf32>
    %cst_193 = arith.constant dense<0.000000e+00> : vector<16x128xf32>
    %451 = tpu.matmul %448, %450, %cst_193 {dimension_numbers = #tpu.dot_dimension_numbers<[1], [0], [0], [1], [0, 0, 1, 1], [], []>} : vector<16x128xf32>, vector<128x128xf32>, vector<16x128xf32> -> vector<16x128xf32>
    %c2_194 = arith.constant 2 : index
    %c0_195 = arith.constant 0 : index
    %c0_196 = arith.constant 0 : index
    %452 = vector.load %arg10[%c2_194, %c0_195, %c0_196] : memref<4x1x128xf32, #tpu.memory_space<vmem>>, vector<1x1x128xf32>
    %453 = vector.shape_cast %452 : vector<1x1x128xf32> to vector<1x128xf32>
    %454 = vector.broadcast %453 : vector<1x128xf32> to vector<16x128xf32>
    %455 = arith.addf %451, %454 : vector<16x128xf32>
    %456 = arith.addf %369, %455 : vector<16x128xf32>
    %c2_197 = arith.constant 2 : index
    %c0_198 = arith.constant 0 : index
    %c0_199 = arith.constant 0 : index
    %457 = vector.load %arg11[%c2_197, %c0_198, %c0_199] : memref<4x1x128xf32, #tpu.memory_space<vmem>>, vector<1x1x128xf32>
    %458 = vector.shape_cast %457 : vector<1x1x128xf32> to vector<1x128xf32>
    %c2_200 = arith.constant 2 : index
    %c0_201 = arith.constant 0 : index
    %c0_202 = arith.constant 0 : index
    %459 = vector.load %arg12[%c2_200, %c0_201, %c0_202] : memref<4x1x128xf32, #tpu.memory_space<vmem>>, vector<1x1x128xf32>
    %460 = vector.shape_cast %459 : vector<1x1x128xf32> to vector<1x128xf32>
    %cst_203 = arith.constant dense<0.000000e+00> : vector<16xf32>
    %461 = vector.multi_reduction <add>, %456, %cst_203 [1] : vector<16x128xf32> to vector<16xf32>
    %462 = vector.shape_cast %461 : vector<16xf32> to vector<16x1xf32>
    %cst_204 = arith.constant 1.280000e+02 : f32
    %463 = vector.broadcast %cst_204 : f32 to vector<16x1xf32>
    %464 = arith.divf %462, %463 : vector<16x1xf32>
    %465 = vector.broadcast %464 : vector<16x1xf32> to vector<16x128xf32>
    %466 = arith.subf %456, %465 : vector<16x128xf32>
    %467 = arith.mulf %466, %466 : vector<16x128xf32>
    %cst_205 = arith.constant dense<0.000000e+00> : vector<16xf32>
    %468 = vector.multi_reduction <add>, %467, %cst_205 [1] : vector<16x128xf32> to vector<16xf32>
    %469 = vector.shape_cast %468 : vector<16xf32> to vector<16x1xf32>
    %cst_206 = arith.constant 1.280000e+02 : f32
    %470 = vector.broadcast %cst_206 : f32 to vector<16x1xf32>
    %471 = arith.divf %469, %470 : vector<16x1xf32>
    %472 = vector.broadcast %464 : vector<16x1xf32> to vector<16x128xf32>
    %473 = arith.subf %456, %472 : vector<16x128xf32>
    %cst_207 = arith.constant 9.99999974E-6 : f32
    %474 = vector.broadcast %cst_207 : f32 to vector<16x1xf32>
    %475 = arith.addf %471, %474 : vector<16x1xf32>
    %476 = math.rsqrt %475 : vector<16x1xf32>
    %477 = vector.broadcast %476 : vector<16x1xf32> to vector<16x128xf32>
    %478 = arith.mulf %473, %477 : vector<16x128xf32>
    %479 = vector.broadcast %458 : vector<1x128xf32> to vector<16x128xf32>
    %480 = arith.mulf %478, %479 : vector<16x128xf32>
    %481 = vector.broadcast %460 : vector<1x128xf32> to vector<16x128xf32>
    %482 = arith.addf %480, %481 : vector<16x128xf32>
    %c2_208 = arith.constant 2 : index
    %c0_209 = arith.constant 0 : index
    %c0_210 = arith.constant 0 : index
    %483 = vector.load %arg13[%c2_208, %c0_209, %c0_210] : memref<4x128x256xf32, #tpu.memory_space<vmem>>, vector<1x128x256xf32>
    %484 = vector.shape_cast %483 : vector<1x128x256xf32> to vector<128x256xf32>
    %cst_211 = arith.constant dense<0.000000e+00> : vector<16x256xf32>
    %485 = tpu.matmul %482, %484, %cst_211 {dimension_numbers = #tpu.dot_dimension_numbers<[1], [0], [0], [1], [0, 0, 1, 1], [], []>} : vector<16x128xf32>, vector<128x256xf32>, vector<16x256xf32> -> vector<16x256xf32>
    %c2_212 = arith.constant 2 : index
    %c0_213 = arith.constant 0 : index
    %c0_214 = arith.constant 0 : index
    %486 = vector.load %arg14[%c2_212, %c0_213, %c0_214] : memref<4x1x256xf32, #tpu.memory_space<vmem>>, vector<1x1x256xf32>
    %487 = vector.shape_cast %486 : vector<1x1x256xf32> to vector<1x256xf32>
    %488 = vector.broadcast %487 : vector<1x256xf32> to vector<16x256xf32>
    %489 = arith.addf %485, %488 : vector<16x256xf32>
    %cst_215 = arith.constant 5.000000e-01 : f32
    %490 = vector.broadcast %cst_215 : f32 to vector<16x256xf32>
    %491 = arith.mulf %490, %489 : vector<16x256xf32>
    %cst_216 = arith.constant 4.471500e-02 : f32
    %492 = vector.broadcast %cst_216 : f32 to vector<16x256xf32>
    %493 = arith.mulf %492, %489 : vector<16x256xf32>
    %494 = arith.mulf %493, %489 : vector<16x256xf32>
    %495 = arith.mulf %494, %489 : vector<16x256xf32>
    %496 = arith.addf %489, %495 : vector<16x256xf32>
    %cst_217 = arith.constant 0.797884583 : f32
    %497 = vector.broadcast %cst_217 : f32 to vector<16x256xf32>
    %498 = arith.mulf %497, %496 : vector<16x256xf32>
    %499 = math.tanh %498 : vector<16x256xf32>
    %cst_218 = arith.constant 1.000000e+00 : f32
    %500 = vector.broadcast %cst_218 : f32 to vector<16x256xf32>
    %501 = arith.addf %500, %499 : vector<16x256xf32>
    %502 = arith.mulf %491, %501 : vector<16x256xf32>
    %c2_219 = arith.constant 2 : index
    %c0_220 = arith.constant 0 : index
    %c0_221 = arith.constant 0 : index
    %503 = vector.load %arg15[%c2_219, %c0_220, %c0_221] : memref<4x256x128xf32, #tpu.memory_space<vmem>>, vector<1x256x128xf32>
    %504 = vector.shape_cast %503 : vector<1x256x128xf32> to vector<256x128xf32>
    %cst_222 = arith.constant dense<0.000000e+00> : vector<16x128xf32>
    %505 = tpu.matmul %502, %504, %cst_222 {dimension_numbers = #tpu.dot_dimension_numbers<[1], [0], [0], [1], [0, 0, 1, 1], [], []>} : vector<16x256xf32>, vector<256x128xf32>, vector<16x128xf32> -> vector<16x128xf32>
    %c2_223 = arith.constant 2 : index
    %c0_224 = arith.constant 0 : index
    %c0_225 = arith.constant 0 : index
    %506 = vector.load %arg16[%c2_223, %c0_224, %c0_225] : memref<4x1x128xf32, #tpu.memory_space<vmem>>, vector<1x1x128xf32>
    %507 = vector.shape_cast %506 : vector<1x1x128xf32> to vector<1x128xf32>
    %508 = vector.broadcast %507 : vector<1x128xf32> to vector<16x128xf32>
    %509 = arith.addf %505, %508 : vector<16x128xf32>
    %510 = arith.addf %482, %509 : vector<16x128xf32>
    %c2_226 = arith.constant 2 : index
    %c0_227 = arith.constant 0 : index
    %c0_228 = arith.constant 0 : index
    %511 = vector.load %arg17[%c2_226, %c0_227, %c0_228] : memref<4x1x128xf32, #tpu.memory_space<vmem>>, vector<1x1x128xf32>
    %512 = vector.shape_cast %511 : vector<1x1x128xf32> to vector<1x128xf32>
    %c2_229 = arith.constant 2 : index
    %c0_230 = arith.constant 0 : index
    %c0_231 = arith.constant 0 : index
    %513 = vector.load %arg18[%c2_229, %c0_230, %c0_231] : memref<4x1x128xf32, #tpu.memory_space<vmem>>, vector<1x1x128xf32>
    %514 = vector.shape_cast %513 : vector<1x1x128xf32> to vector<1x128xf32>
    %cst_232 = arith.constant dense<0.000000e+00> : vector<16xf32>
    %515 = vector.multi_reduction <add>, %510, %cst_232 [1] : vector<16x128xf32> to vector<16xf32>
    %516 = vector.shape_cast %515 : vector<16xf32> to vector<16x1xf32>
    %cst_233 = arith.constant 1.280000e+02 : f32
    %517 = vector.broadcast %cst_233 : f32 to vector<16x1xf32>
    %518 = arith.divf %516, %517 : vector<16x1xf32>
    %519 = vector.broadcast %518 : vector<16x1xf32> to vector<16x128xf32>
    %520 = arith.subf %510, %519 : vector<16x128xf32>
    %521 = arith.mulf %520, %520 : vector<16x128xf32>
    %cst_234 = arith.constant dense<0.000000e+00> : vector<16xf32>
    %522 = vector.multi_reduction <add>, %521, %cst_234 [1] : vector<16x128xf32> to vector<16xf32>
    %523 = vector.shape_cast %522 : vector<16xf32> to vector<16x1xf32>
    %cst_235 = arith.constant 1.280000e+02 : f32
    %524 = vector.broadcast %cst_235 : f32 to vector<16x1xf32>
    %525 = arith.divf %523, %524 : vector<16x1xf32>
    %526 = vector.broadcast %518 : vector<16x1xf32> to vector<16x128xf32>
    %527 = arith.subf %510, %526 : vector<16x128xf32>
    %cst_236 = arith.constant 9.99999974E-6 : f32
    %528 = vector.broadcast %cst_236 : f32 to vector<16x1xf32>
    %529 = arith.addf %525, %528 : vector<16x1xf32>
    %530 = math.rsqrt %529 : vector<16x1xf32>
    %531 = vector.broadcast %530 : vector<16x1xf32> to vector<16x128xf32>
    %532 = arith.mulf %527, %531 : vector<16x128xf32>
    %533 = vector.broadcast %512 : vector<1x128xf32> to vector<16x128xf32>
    %534 = arith.mulf %532, %533 : vector<16x128xf32>
    %535 = vector.broadcast %514 : vector<1x128xf32> to vector<16x128xf32>
    %536 = arith.addf %534, %535 : vector<16x128xf32>
    %c3 = arith.constant 3 : index
    %c0_237 = arith.constant 0 : index
    %c0_238 = arith.constant 0 : index
    %537 = vector.load %arg7[%c3, %c0_237, %c0_238] : memref<4x128x384xf32, #tpu.memory_space<vmem>>, vector<1x128x384xf32>
    %538 = vector.shape_cast %537 : vector<1x128x384xf32> to vector<128x384xf32>
    %cst_239 = arith.constant dense<0.000000e+00> : vector<16x384xf32>
    %539 = tpu.matmul %536, %538, %cst_239 {dimension_numbers = #tpu.dot_dimension_numbers<[1], [0], [0], [1], [0, 0, 1, 1], [], []>} : vector<16x128xf32>, vector<128x384xf32>, vector<16x384xf32> -> vector<16x384xf32>
    %c3_240 = arith.constant 3 : index
    %c0_241 = arith.constant 0 : index
    %c0_242 = arith.constant 0 : index
    %540 = vector.load %arg8[%c3_240, %c0_241, %c0_242] : memref<4x1x384xf32, #tpu.memory_space<vmem>>, vector<1x1x384xf32>
    %541 = vector.shape_cast %540 : vector<1x1x384xf32> to vector<1x384xf32>
    %542 = vector.broadcast %541 : vector<1x384xf32> to vector<16x384xf32>
    %543 = arith.addf %539, %542 : vector<16x384xf32>
    %544 = vector.extract_strided_slice %543 {offsets = [0, 0], sizes = [16, 128], strides = [1, 1]} : vector<16x384xf32> to vector<16x128xf32>
    %545 = vector.extract_strided_slice %543 {offsets = [0, 128], sizes = [16, 128], strides = [1, 1]} : vector<16x384xf32> to vector<16x128xf32>
    %546 = vector.extract_strided_slice %543 {offsets = [0, 256], sizes = [16, 128], strides = [1, 1]} : vector<16x384xf32> to vector<16x128xf32>
    %547 = vector.extract_strided_slice %544 {offsets = [0, 0], sizes = [16, 32], strides = [1, 1]} : vector<16x128xf32> to vector<16x32xf32>
    %548 = vector.extract_strided_slice %545 {offsets = [0, 0], sizes = [16, 32], strides = [1, 1]} : vector<16x128xf32> to vector<16x32xf32>
    %549 = vector.extract_strided_slice %546 {offsets = [0, 0], sizes = [16, 32], strides = [1, 1]} : vector<16x128xf32> to vector<16x32xf32>
    %cst_243 = arith.constant dense<0.000000e+00> : vector<16x16xf32>
    %550 = tpu.matmul %547, %548, %cst_243 {dimension_numbers = #tpu.dot_dimension_numbers<[1], [1], [0], [0], [0, 0, 1, 0], [], []>} : vector<16x32xf32>, vector<16x32xf32>, vector<16x16xf32> -> vector<16x16xf32>
    %cst_244 = arith.constant 0.176776692 : f32
    %551 = vector.broadcast %cst_244 : f32 to vector<16x16xf32>
    %552 = arith.mulf %550, %551 : vector<16x16xf32>
    %cst_245 = arith.constant dense<0xFF800000> : vector<16xf32>
    %553 = vector.multi_reduction <maximumf>, %552, %cst_245 [1] : vector<16x16xf32> to vector<16xf32>
    %554 = vector.shape_cast %553 : vector<16xf32> to vector<16x1xf32>
    %555 = vector.broadcast %554 : vector<16x1xf32> to vector<16x16xf32>
    %556 = arith.subf %552, %555 : vector<16x16xf32>
    %557 = math.exp %556 : vector<16x16xf32>
    %cst_246 = arith.constant dense<0.000000e+00> : vector<16xf32>
    %558 = vector.multi_reduction <add>, %557, %cst_246 [1] : vector<16x16xf32> to vector<16xf32>
    %559 = vector.shape_cast %558 : vector<16xf32> to vector<16x1xf32>
    %560 = tpu.reciprocal %559 {approx = true} : vector<16x1xf32> -> vector<16x1xf32>
    %561 = vector.broadcast %560 : vector<16x1xf32> to vector<16x16xf32>
    %562 = arith.mulf %557, %561 : vector<16x16xf32>
    %cst_247 = arith.constant dense<0.000000e+00> : vector<16x32xf32>
    %563 = tpu.matmul %562, %549, %cst_247 {dimension_numbers = #tpu.dot_dimension_numbers<[1], [0], [0], [1], [0, 0, 1, 1], [], []>} : vector<16x16xf32>, vector<16x32xf32>, vector<16x32xf32> -> vector<16x32xf32>
    %564 = vector.extract_strided_slice %544 {offsets = [0, 32], sizes = [16, 32], strides = [1, 1]} : vector<16x128xf32> to vector<16x32xf32>
    %565 = vector.extract_strided_slice %545 {offsets = [0, 32], sizes = [16, 32], strides = [1, 1]} : vector<16x128xf32> to vector<16x32xf32>
    %566 = vector.extract_strided_slice %546 {offsets = [0, 32], sizes = [16, 32], strides = [1, 1]} : vector<16x128xf32> to vector<16x32xf32>
    %cst_248 = arith.constant dense<0.000000e+00> : vector<16x16xf32>
    %567 = tpu.matmul %564, %565, %cst_248 {dimension_numbers = #tpu.dot_dimension_numbers<[1], [1], [0], [0], [0, 0, 1, 0], [], []>} : vector<16x32xf32>, vector<16x32xf32>, vector<16x16xf32> -> vector<16x16xf32>
    %cst_249 = arith.constant 0.176776692 : f32
    %568 = vector.broadcast %cst_249 : f32 to vector<16x16xf32>
    %569 = arith.mulf %567, %568 : vector<16x16xf32>
    %cst_250 = arith.constant dense<0xFF800000> : vector<16xf32>
    %570 = vector.multi_reduction <maximumf>, %569, %cst_250 [1] : vector<16x16xf32> to vector<16xf32>
    %571 = vector.shape_cast %570 : vector<16xf32> to vector<16x1xf32>
    %572 = vector.broadcast %571 : vector<16x1xf32> to vector<16x16xf32>
    %573 = arith.subf %569, %572 : vector<16x16xf32>
    %574 = math.exp %573 : vector<16x16xf32>
    %cst_251 = arith.constant dense<0.000000e+00> : vector<16xf32>
    %575 = vector.multi_reduction <add>, %574, %cst_251 [1] : vector<16x16xf32> to vector<16xf32>
    %576 = vector.shape_cast %575 : vector<16xf32> to vector<16x1xf32>
    %577 = tpu.reciprocal %576 {approx = true} : vector<16x1xf32> -> vector<16x1xf32>
    %578 = vector.broadcast %577 : vector<16x1xf32> to vector<16x16xf32>
    %579 = arith.mulf %574, %578 : vector<16x16xf32>
    %cst_252 = arith.constant dense<0.000000e+00> : vector<16x32xf32>
    %580 = tpu.matmul %579, %566, %cst_252 {dimension_numbers = #tpu.dot_dimension_numbers<[1], [0], [0], [1], [0, 0, 1, 1], [], []>} : vector<16x16xf32>, vector<16x32xf32>, vector<16x32xf32> -> vector<16x32xf32>
    %581 = vector.extract_strided_slice %544 {offsets = [0, 64], sizes = [16, 32], strides = [1, 1]} : vector<16x128xf32> to vector<16x32xf32>
    %582 = vector.extract_strided_slice %545 {offsets = [0, 64], sizes = [16, 32], strides = [1, 1]} : vector<16x128xf32> to vector<16x32xf32>
    %583 = vector.extract_strided_slice %546 {offsets = [0, 64], sizes = [16, 32], strides = [1, 1]} : vector<16x128xf32> to vector<16x32xf32>
    %cst_253 = arith.constant dense<0.000000e+00> : vector<16x16xf32>
    %584 = tpu.matmul %581, %582, %cst_253 {dimension_numbers = #tpu.dot_dimension_numbers<[1], [1], [0], [0], [0, 0, 1, 0], [], []>} : vector<16x32xf32>, vector<16x32xf32>, vector<16x16xf32> -> vector<16x16xf32>
    %cst_254 = arith.constant 0.176776692 : f32
    %585 = vector.broadcast %cst_254 : f32 to vector<16x16xf32>
    %586 = arith.mulf %584, %585 : vector<16x16xf32>
    %cst_255 = arith.constant dense<0xFF800000> : vector<16xf32>
    %587 = vector.multi_reduction <maximumf>, %586, %cst_255 [1] : vector<16x16xf32> to vector<16xf32>
    %588 = vector.shape_cast %587 : vector<16xf32> to vector<16x1xf32>
    %589 = vector.broadcast %588 : vector<16x1xf32> to vector<16x16xf32>
    %590 = arith.subf %586, %589 : vector<16x16xf32>
    %591 = math.exp %590 : vector<16x16xf32>
    %cst_256 = arith.constant dense<0.000000e+00> : vector<16xf32>
    %592 = vector.multi_reduction <add>, %591, %cst_256 [1] : vector<16x16xf32> to vector<16xf32>
    %593 = vector.shape_cast %592 : vector<16xf32> to vector<16x1xf32>
    %594 = tpu.reciprocal %593 {approx = true} : vector<16x1xf32> -> vector<16x1xf32>
    %595 = vector.broadcast %594 : vector<16x1xf32> to vector<16x16xf32>
    %596 = arith.mulf %591, %595 : vector<16x16xf32>
    %cst_257 = arith.constant dense<0.000000e+00> : vector<16x32xf32>
    %597 = tpu.matmul %596, %583, %cst_257 {dimension_numbers = #tpu.dot_dimension_numbers<[1], [0], [0], [1], [0, 0, 1, 1], [], []>} : vector<16x16xf32>, vector<16x32xf32>, vector<16x32xf32> -> vector<16x32xf32>
    %598 = vector.extract_strided_slice %544 {offsets = [0, 96], sizes = [16, 32], strides = [1, 1]} : vector<16x128xf32> to vector<16x32xf32>
    %599 = vector.extract_strided_slice %545 {offsets = [0, 96], sizes = [16, 32], strides = [1, 1]} : vector<16x128xf32> to vector<16x32xf32>
    %600 = vector.extract_strided_slice %546 {offsets = [0, 96], sizes = [16, 32], strides = [1, 1]} : vector<16x128xf32> to vector<16x32xf32>
    %cst_258 = arith.constant dense<0.000000e+00> : vector<16x16xf32>
    %601 = tpu.matmul %598, %599, %cst_258 {dimension_numbers = #tpu.dot_dimension_numbers<[1], [1], [0], [0], [0, 0, 1, 0], [], []>} : vector<16x32xf32>, vector<16x32xf32>, vector<16x16xf32> -> vector<16x16xf32>
    %cst_259 = arith.constant 0.176776692 : f32
    %602 = vector.broadcast %cst_259 : f32 to vector<16x16xf32>
    %603 = arith.mulf %601, %602 : vector<16x16xf32>
    %cst_260 = arith.constant dense<0xFF800000> : vector<16xf32>
    %604 = vector.multi_reduction <maximumf>, %603, %cst_260 [1] : vector<16x16xf32> to vector<16xf32>
    %605 = vector.shape_cast %604 : vector<16xf32> to vector<16x1xf32>
    %606 = vector.broadcast %605 : vector<16x1xf32> to vector<16x16xf32>
    %607 = arith.subf %603, %606 : vector<16x16xf32>
    %608 = math.exp %607 : vector<16x16xf32>
    %cst_261 = arith.constant dense<0.000000e+00> : vector<16xf32>
    %609 = vector.multi_reduction <add>, %608, %cst_261 [1] : vector<16x16xf32> to vector<16xf32>
    %610 = vector.shape_cast %609 : vector<16xf32> to vector<16x1xf32>
    %611 = tpu.reciprocal %610 {approx = true} : vector<16x1xf32> -> vector<16x1xf32>
    %612 = vector.broadcast %611 : vector<16x1xf32> to vector<16x16xf32>
    %613 = arith.mulf %608, %612 : vector<16x16xf32>
    %cst_262 = arith.constant dense<0.000000e+00> : vector<16x32xf32>
    %614 = tpu.matmul %613, %600, %cst_262 {dimension_numbers = #tpu.dot_dimension_numbers<[1], [0], [0], [1], [0, 0, 1, 1], [], []>} : vector<16x16xf32>, vector<16x32xf32>, vector<16x32xf32> -> vector<16x32xf32>
    %615 = tpu.concatenate %563, %580, %597, %614 in 1 : vector<16x32xf32>, vector<16x32xf32>, vector<16x32xf32>, vector<16x32xf32> -> vector<16x128xf32>
    %c3_263 = arith.constant 3 : index
    %c0_264 = arith.constant 0 : index
    %c0_265 = arith.constant 0 : index
    %616 = vector.load %arg9[%c3_263, %c0_264, %c0_265] : memref<4x128x128xf32, #tpu.memory_space<vmem>>, vector<1x128x128xf32>
    %617 = vector.shape_cast %616 : vector<1x128x128xf32> to vector<128x128xf32>
    %cst_266 = arith.constant dense<0.000000e+00> : vector<16x128xf32>
    %618 = tpu.matmul %615, %617, %cst_266 {dimension_numbers = #tpu.dot_dimension_numbers<[1], [0], [0], [1], [0, 0, 1, 1], [], []>} : vector<16x128xf32>, vector<128x128xf32>, vector<16x128xf32> -> vector<16x128xf32>
    %c3_267 = arith.constant 3 : index
    %c0_268 = arith.constant 0 : index
    %c0_269 = arith.constant 0 : index
    %619 = vector.load %arg10[%c3_267, %c0_268, %c0_269] : memref<4x1x128xf32, #tpu.memory_space<vmem>>, vector<1x1x128xf32>
    %620 = vector.shape_cast %619 : vector<1x1x128xf32> to vector<1x128xf32>
    %621 = vector.broadcast %620 : vector<1x128xf32> to vector<16x128xf32>
    %622 = arith.addf %618, %621 : vector<16x128xf32>
    %623 = arith.addf %536, %622 : vector<16x128xf32>
    %c3_270 = arith.constant 3 : index
    %c0_271 = arith.constant 0 : index
    %c0_272 = arith.constant 0 : index
    %624 = vector.load %arg11[%c3_270, %c0_271, %c0_272] : memref<4x1x128xf32, #tpu.memory_space<vmem>>, vector<1x1x128xf32>
    %625 = vector.shape_cast %624 : vector<1x1x128xf32> to vector<1x128xf32>
    %c3_273 = arith.constant 3 : index
    %c0_274 = arith.constant 0 : index
    %c0_275 = arith.constant 0 : index
    %626 = vector.load %arg12[%c3_273, %c0_274, %c0_275] : memref<4x1x128xf32, #tpu.memory_space<vmem>>, vector<1x1x128xf32>
    %627 = vector.shape_cast %626 : vector<1x1x128xf32> to vector<1x128xf32>
    %cst_276 = arith.constant dense<0.000000e+00> : vector<16xf32>
    %628 = vector.multi_reduction <add>, %623, %cst_276 [1] : vector<16x128xf32> to vector<16xf32>
    %629 = vector.shape_cast %628 : vector<16xf32> to vector<16x1xf32>
    %cst_277 = arith.constant 1.280000e+02 : f32
    %630 = vector.broadcast %cst_277 : f32 to vector<16x1xf32>
    %631 = arith.divf %629, %630 : vector<16x1xf32>
    %632 = vector.broadcast %631 : vector<16x1xf32> to vector<16x128xf32>
    %633 = arith.subf %623, %632 : vector<16x128xf32>
    %634 = arith.mulf %633, %633 : vector<16x128xf32>
    %cst_278 = arith.constant dense<0.000000e+00> : vector<16xf32>
    %635 = vector.multi_reduction <add>, %634, %cst_278 [1] : vector<16x128xf32> to vector<16xf32>
    %636 = vector.shape_cast %635 : vector<16xf32> to vector<16x1xf32>
    %cst_279 = arith.constant 1.280000e+02 : f32
    %637 = vector.broadcast %cst_279 : f32 to vector<16x1xf32>
    %638 = arith.divf %636, %637 : vector<16x1xf32>
    %639 = vector.broadcast %631 : vector<16x1xf32> to vector<16x128xf32>
    %640 = arith.subf %623, %639 : vector<16x128xf32>
    %cst_280 = arith.constant 9.99999974E-6 : f32
    %641 = vector.broadcast %cst_280 : f32 to vector<16x1xf32>
    %642 = arith.addf %638, %641 : vector<16x1xf32>
    %643 = math.rsqrt %642 : vector<16x1xf32>
    %644 = vector.broadcast %643 : vector<16x1xf32> to vector<16x128xf32>
    %645 = arith.mulf %640, %644 : vector<16x128xf32>
    %646 = vector.broadcast %625 : vector<1x128xf32> to vector<16x128xf32>
    %647 = arith.mulf %645, %646 : vector<16x128xf32>
    %648 = vector.broadcast %627 : vector<1x128xf32> to vector<16x128xf32>
    %649 = arith.addf %647, %648 : vector<16x128xf32>
    %c3_281 = arith.constant 3 : index
    %c0_282 = arith.constant 0 : index
    %c0_283 = arith.constant 0 : index
    %650 = vector.load %arg13[%c3_281, %c0_282, %c0_283] : memref<4x128x256xf32, #tpu.memory_space<vmem>>, vector<1x128x256xf32>
    %651 = vector.shape_cast %650 : vector<1x128x256xf32> to vector<128x256xf32>
    %cst_284 = arith.constant dense<0.000000e+00> : vector<16x256xf32>
    %652 = tpu.matmul %649, %651, %cst_284 {dimension_numbers = #tpu.dot_dimension_numbers<[1], [0], [0], [1], [0, 0, 1, 1], [], []>} : vector<16x128xf32>, vector<128x256xf32>, vector<16x256xf32> -> vector<16x256xf32>
    %c3_285 = arith.constant 3 : index
    %c0_286 = arith.constant 0 : index
    %c0_287 = arith.constant 0 : index
    %653 = vector.load %arg14[%c3_285, %c0_286, %c0_287] : memref<4x1x256xf32, #tpu.memory_space<vmem>>, vector<1x1x256xf32>
    %654 = vector.shape_cast %653 : vector<1x1x256xf32> to vector<1x256xf32>
    %655 = vector.broadcast %654 : vector<1x256xf32> to vector<16x256xf32>
    %656 = arith.addf %652, %655 : vector<16x256xf32>
    %cst_288 = arith.constant 5.000000e-01 : f32
    %657 = vector.broadcast %cst_288 : f32 to vector<16x256xf32>
    %658 = arith.mulf %657, %656 : vector<16x256xf32>
    %cst_289 = arith.constant 4.471500e-02 : f32
    %659 = vector.broadcast %cst_289 : f32 to vector<16x256xf32>
    %660 = arith.mulf %659, %656 : vector<16x256xf32>
    %661 = arith.mulf %660, %656 : vector<16x256xf32>
    %662 = arith.mulf %661, %656 : vector<16x256xf32>
    %663 = arith.addf %656, %662 : vector<16x256xf32>
    %cst_290 = arith.constant 0.797884583 : f32
    %664 = vector.broadcast %cst_290 : f32 to vector<16x256xf32>
    %665 = arith.mulf %664, %663 : vector<16x256xf32>
    %666 = math.tanh %665 : vector<16x256xf32>
    %cst_291 = arith.constant 1.000000e+00 : f32
    %667 = vector.broadcast %cst_291 : f32 to vector<16x256xf32>
    %668 = arith.addf %667, %666 : vector<16x256xf32>
    %669 = arith.mulf %658, %668 : vector<16x256xf32>
    %c3_292 = arith.constant 3 : index
    %c0_293 = arith.constant 0 : index
    %c0_294 = arith.constant 0 : index
    %670 = vector.load %arg15[%c3_292, %c0_293, %c0_294] : memref<4x256x128xf32, #tpu.memory_space<vmem>>, vector<1x256x128xf32>
    %671 = vector.shape_cast %670 : vector<1x256x128xf32> to vector<256x128xf32>
    %cst_295 = arith.constant dense<0.000000e+00> : vector<16x128xf32>
    %672 = tpu.matmul %669, %671, %cst_295 {dimension_numbers = #tpu.dot_dimension_numbers<[1], [0], [0], [1], [0, 0, 1, 1], [], []>} : vector<16x256xf32>, vector<256x128xf32>, vector<16x128xf32> -> vector<16x128xf32>
    %c3_296 = arith.constant 3 : index
    %c0_297 = arith.constant 0 : index
    %c0_298 = arith.constant 0 : index
    %673 = vector.load %arg16[%c3_296, %c0_297, %c0_298] : memref<4x1x128xf32, #tpu.memory_space<vmem>>, vector<1x1x128xf32>
    %674 = vector.shape_cast %673 : vector<1x1x128xf32> to vector<1x128xf32>
    %675 = vector.broadcast %674 : vector<1x128xf32> to vector<16x128xf32>
    %676 = arith.addf %672, %675 : vector<16x128xf32>
    %677 = arith.addf %649, %676 : vector<16x128xf32>
    %c3_299 = arith.constant 3 : index
    %c0_300 = arith.constant 0 : index
    %c0_301 = arith.constant 0 : index
    %678 = vector.load %arg17[%c3_299, %c0_300, %c0_301] : memref<4x1x128xf32, #tpu.memory_space<vmem>>, vector<1x1x128xf32>
    %679 = vector.shape_cast %678 : vector<1x1x128xf32> to vector<1x128xf32>
    %c3_302 = arith.constant 3 : index
    %c0_303 = arith.constant 0 : index
    %c0_304 = arith.constant 0 : index
    %680 = vector.load %arg18[%c3_302, %c0_303, %c0_304] : memref<4x1x128xf32, #tpu.memory_space<vmem>>, vector<1x1x128xf32>
    %681 = vector.shape_cast %680 : vector<1x1x128xf32> to vector<1x128xf32>
    %cst_305 = arith.constant dense<0.000000e+00> : vector<16xf32>
    %682 = vector.multi_reduction <add>, %677, %cst_305 [1] : vector<16x128xf32> to vector<16xf32>
    %683 = vector.shape_cast %682 : vector<16xf32> to vector<16x1xf32>
    %cst_306 = arith.constant 1.280000e+02 : f32
    %684 = vector.broadcast %cst_306 : f32 to vector<16x1xf32>
    %685 = arith.divf %683, %684 : vector<16x1xf32>
    %686 = vector.broadcast %685 : vector<16x1xf32> to vector<16x128xf32>
    %687 = arith.subf %677, %686 : vector<16x128xf32>
    %688 = arith.mulf %687, %687 : vector<16x128xf32>
    %cst_307 = arith.constant dense<0.000000e+00> : vector<16xf32>
    %689 = vector.multi_reduction <add>, %688, %cst_307 [1] : vector<16x128xf32> to vector<16xf32>
    %690 = vector.shape_cast %689 : vector<16xf32> to vector<16x1xf32>
    %cst_308 = arith.constant 1.280000e+02 : f32
    %691 = vector.broadcast %cst_308 : f32 to vector<16x1xf32>
    %692 = arith.divf %690, %691 : vector<16x1xf32>
    %693 = vector.broadcast %685 : vector<16x1xf32> to vector<16x128xf32>
    %694 = arith.subf %677, %693 : vector<16x128xf32>
    %cst_309 = arith.constant 9.99999974E-6 : f32
    %695 = vector.broadcast %cst_309 : f32 to vector<16x1xf32>
    %696 = arith.addf %692, %695 : vector<16x1xf32>
    %697 = math.rsqrt %696 : vector<16x1xf32>
    %698 = vector.broadcast %697 : vector<16x1xf32> to vector<16x128xf32>
    %699 = arith.mulf %694, %698 : vector<16x128xf32>
    %700 = vector.broadcast %679 : vector<1x128xf32> to vector<16x128xf32>
    %701 = arith.mulf %699, %700 : vector<16x128xf32>
    %702 = vector.broadcast %681 : vector<1x128xf32> to vector<16x128xf32>
    %703 = arith.addf %701, %702 : vector<16x128xf32>
    %c0_310 = arith.constant 0 : index
    %c0_311 = arith.constant 0 : index
    %704 = vector.load %arg19[%c0_310, %c0_311] : memref<128x6xf32, #tpu.memory_space<vmem>>, vector<128x6xf32>
    %cst_312 = arith.constant dense<0.000000e+00> : vector<16x6xf32>
    %705 = tpu.matmul %703, %704, %cst_312 {dimension_numbers = #tpu.dot_dimension_numbers<[1], [0], [0], [1], [0, 0, 1, 1], [], []>} : vector<16x128xf32>, vector<128x6xf32>, vector<16x6xf32> -> vector<16x6xf32>
    %c0_313 = arith.constant 0 : index
    %c0_314 = arith.constant 0 : index
    %706 = vector.load %arg20[%c0_313, %c0_314] : memref<1x6xf32, #tpu.memory_space<vmem>>, vector<1x6xf32>
    %707 = vector.broadcast %706 : vector<1x6xf32> to vector<16x6xf32>
    %708 = arith.addf %705, %707 : vector<16x6xf32>
    %cst_315 = arith.constant 0.000000e+00 : f32
    %709 = vector.broadcast %cst_315 : f32 to vector<1x6xf32>
    %710 = tpu.concatenate %709, %708 in 0 : vector<1x6xf32>, vector<16x6xf32> -> vector<17x6xf32>
    %c0_316 = arith.constant 0 : index
    %c0_317 = arith.constant 0 : index
    %c0_318 = arith.constant 0 : index
    %711 = vector.load %arg21[%c0_316, %c0_317, %c0_318] : memref<1x17x6xf32, #tpu.memory_space<vmem>>, vector<1x17x6xf32>
    %712 = vector.shape_cast %711 : vector<1x17x6xf32> to vector<17x6xf32>
    %713 = vector.shape_cast %710 : vector<17x6xf32> to vector<1x17x6xf32>
    tpu.vector_store %arg21[%c0_316, %c0_317, %c0_318], %713 {strides = array<i32>} : memref<1x17x6xf32, #tpu.memory_space<vmem>>, vector<1x17x6xf32>,
    return
  }
  func.func @transform_0(%arg0: i32) -> (i32, i32, i32) {
    %c0_i32 = arith.constant 0 : i32
    %c0_i32_0 = arith.constant 0 : i32
    %c0_i32_1 = arith.constant 0 : i32
    return %arg0, %c0_i32, %c0_i32_0 : i32, i32, i32
  }
  func.func @transform_1(%arg0: i32) -> (i32, i32) {
    %c0_i32 = arith.constant 0 : i32
    %c0_i32_0 = arith.constant 0 : i32
    %c0_i32_1 = arith.constant 0 : i32
    return %c0_i32, %c0_i32_0 : i32, i32
  }
  func.func @transform_2(%arg0: i32) -> (i32, i32) {
    %c0_i32 = arith.constant 0 : i32
    %c0_i32_0 = arith.constant 0 : i32
    %c0_i32_1 = arith.constant 0 : i32
    return %c0_i32, %c0_i32_0 : i32, i32
  }
  func.func @transform_3(%arg0: i32) -> (i32, i32) {
    %c0_i32 = arith.constant 0 : i32
    %c0_i32_0 = arith.constant 0 : i32
    %c0_i32_1 = arith.constant 0 : i32
    return %c0_i32, %c0_i32_0 : i32, i32
  }
  func.func @transform_4(%arg0: i32) -> (i32, i32) {
    %c0_i32 = arith.constant 0 : i32
    %c0_i32_0 = arith.constant 0 : i32
    %c0_i32_1 = arith.constant 0 : i32
    return %c0_i32, %c0_i32_0 : i32, i32
  }
  func.func @transform_5(%arg0: i32) -> (i32, i32) {
    %c0_i32 = arith.constant 0 : i32
    %c0_i32_0 = arith.constant 0 : i32
    %c0_i32_1 = arith.constant 0 : i32
    return %c0_i32, %c0_i32_0 : i32, i32
  }
  func.func @transform_6(%arg0: i32) -> (i32, i32, i32) {
    %c0_i32 = arith.constant 0 : i32
    %c0_i32_0 = arith.constant 0 : i32
    %c0_i32_1 = arith.constant 0 : i32
    %c0_i32_2 = arith.constant 0 : i32
    return %c0_i32, %c0_i32_0, %c0_i32_1 : i32, i32, i32
  }
  func.func @transform_7(%arg0: i32) -> (i32, i32, i32) {
    %c0_i32 = arith.constant 0 : i32
    %c0_i32_0 = arith.constant 0 : i32
    %c0_i32_1 = arith.constant 0 : i32
    %c0_i32_2 = arith.constant 0 : i32
    return %c0_i32, %c0_i32_0, %c0_i32_1 : i32, i32, i32
  }
  func.func @transform_8(%arg0: i32) -> (i32, i32, i32) {
    %c0_i32 = arith.constant 0 : i32
    %c0_i32_0 = arith.constant 0 : i32
    %c0_i32_1 = arith.constant 0 : i32
    %c0_i32_2 = arith.constant 0 : i32
    return %c0_i32, %c0_i32_0, %c0_i32_1 : i32, i32, i32
  }
  func.func @transform_9(%arg0: i32) -> (i32, i32, i32) {
    %c0_i32 = arith.constant 0 : i32
    %c0_i32_0 = arith.constant 0 : i32
    %c0_i32_1 = arith.constant 0 : i32
    %c0_i32_2 = arith.constant 0 : i32
    return %c0_i32, %c0_i32_0, %c0_i32_1 : i32, i32, i32
  }
  func.func @transform_10(%arg0: i32) -> (i32, i32, i32) {
    %c0_i32 = arith.constant 0 : i32
    %c0_i32_0 = arith.constant 0 : i32
    %c0_i32_1 = arith.constant 0 : i32
    %c0_i32_2 = arith.constant 0 : i32
    return %c0_i32, %c0_i32_0, %c0_i32_1 : i32, i32, i32
  }
  func.func @transform_11(%arg0: i32) -> (i32, i32, i32) {
    %c0_i32 = arith.constant 0 : i32
    %c0_i32_0 = arith.constant 0 : i32
    %c0_i32_1 = arith.constant 0 : i32
    %c0_i32_2 = arith.constant 0 : i32
    return %c0_i32, %c0_i32_0, %c0_i32_1 : i32, i32, i32
  }
  func.func @transform_12(%arg0: i32) -> (i32, i32, i32) {
    %c0_i32 = arith.constant 0 : i32
    %c0_i32_0 = arith.constant 0 : i32
    %c0_i32_1 = arith.constant 0 : i32
    %c0_i32_2 = arith.constant 0 : i32
    return %c0_i32, %c0_i32_0, %c0_i32_1 : i32, i32, i32
  }
  func.func @transform_13(%arg0: i32) -> (i32, i32, i32) {
    %c0_i32 = arith.constant 0 : i32
    %c0_i32_0 = arith.constant 0 : i32
    %c0_i32_1 = arith.constant 0 : i32
    %c0_i32_2 = arith.constant 0 : i32
    return %c0_i32, %c0_i32_0, %c0_i32_1 : i32, i32, i32
  }
  func.func @transform_14(%arg0: i32) -> (i32, i32, i32) {
    %c0_i32 = arith.constant 0 : i32
    %c0_i32_0 = arith.constant 0 : i32
    %c0_i32_1 = arith.constant 0 : i32
    %c0_i32_2 = arith.constant 0 : i32
    return %c0_i32, %c0_i32_0, %c0_i32_1 : i32, i32, i32
  }
  func.func @transform_15(%arg0: i32) -> (i32, i32, i32) {
    %c0_i32 = arith.constant 0 : i32
    %c0_i32_0 = arith.constant 0 : i32
    %c0_i32_1 = arith.constant 0 : i32
    %c0_i32_2 = arith.constant 0 : i32
    return %c0_i32, %c0_i32_0, %c0_i32_1 : i32, i32, i32
  }
  func.func @transform_16(%arg0: i32) -> (i32, i32, i32) {
    %c0_i32 = arith.constant 0 : i32
    %c0_i32_0 = arith.constant 0 : i32
    %c0_i32_1 = arith.constant 0 : i32
    %c0_i32_2 = arith.constant 0 : i32
    return %c0_i32, %c0_i32_0, %c0_i32_1 : i32, i32, i32
  }
  func.func @transform_17(%arg0: i32) -> (i32, i32, i32) {
    %c0_i32 = arith.constant 0 : i32
    %c0_i32_0 = arith.constant 0 : i32
    %c0_i32_1 = arith.constant 0 : i32
    %c0_i32_2 = arith.constant 0 : i32
    return %c0_i32, %c0_i32_0, %c0_i32_1 : i32, i32, i32
  }
  func.func @transform_18(%arg0: i32) -> (i32, i32) {
    %c0_i32 = arith.constant 0 : i32
    %c0_i32_0 = arith.constant 0 : i32
    %c0_i32_1 = arith.constant 0 : i32
    return %c0_i32, %c0_i32_0 : i32, i32
  }
  func.func @transform_19(%arg0: i32) -> (i32, i32) {
    %c0_i32 = arith.constant 0 : i32
    %c0_i32_0 = arith.constant 0 : i32
    %c0_i32_1 = arith.constant 0 : i32
    return %c0_i32, %c0_i32_0 : i32, i32
  }
  func.func @transform_20(%arg0: i32) -> (i32, i32, i32) {
    %c0_i32 = arith.constant 0 : i32
    %c0_i32_0 = arith.constant 0 : i32
    %c0_i32_1 = arith.constant 0 : i32
    return %arg0, %c0_i32, %c0_i32_0 : i32, i32, i32
  }
}

</mosaic_0001>

<llo_original>
// kernel: vel_orien_decoder_forward.1
$region0: #{vel_orien_decoder_forward.1}
  #allocation0 [shape = 'u32[]', space=smem, size = 0x4, offset = 0x4, fixed_abs, tag = 'smem constant byte address 0x4 - core index']
  #allocation1 [shape = 'u32[144,128]{1,0:T(1,128)}', space=vmem, size = 0x12000, scoped, tag = 'internal scratch']
  %s0 = inlined_call_operand.vmem [shape: f32[2,17,64], index: 0, kind: input, shape index: {}]
  %s1 = inlined_call_operand.vmem [shape: f32[16,128], index: 1, kind: input, shape index: {}]
  %s2 = inlined_call_operand.vmem [shape: f32[64,128], index: 2, kind: input, shape index: {}]
  %s3 = inlined_call_operand.vmem [shape: f32[1,128], index: 3, kind: input, shape index: {}]
  %s4 = inlined_call_operand.vmem [shape: f32[1,128], index: 4, kind: input, shape index: {}]
  %s5 = inlined_call_operand.vmem [shape: f32[1,128], index: 5, kind: input, shape index: {}]
  %s6 = inlined_call_operand.hbm [shape: f32[4,128,384], index: 6, kind: input, shape index: {}]
  %s7 = inlined_call_operand.vmem [shape: f32[4,1,384], index: 7, kind: input, shape index: {}]
  %s8 = inlined_call_operand.hbm [shape: f32[4,128,128], index: 8, kind: input, shape index: {}]
  %s9 = inlined_call_operand.vmem [shape: f32[4,1,128], index: 9, kind: input, shape index: {}]
  %s10 = inlined_call_operand.vmem [shape: f32[4,1,128], index: 10, kind: input, shape index: {}]
  %s11 = inlined_call_operand.vmem [shape: f32[4,1,128], index: 11, kind: input, shape index: {}]
  %s12 = inlined_call_operand.hbm [shape: f32[4,128,256], index: 12, kind: input, shape index: {}]
  %s13 = inlined_call_operand.vmem [shape: f32[4,1,256], index: 13, kind: input, shape index: {}]
  %s14 = inlined_call_operand.hbm [shape: f32[4,256,128], index: 14, kind: input, shape index: {}]
  %s15 = inlined_call_operand.vmem [shape: f32[4,1,128], index: 15, kind: input, shape index: {}]
  %s16 = inlined_call_operand.vmem [shape: f32[4,1,128], index: 16, kind: input, shape index: {}]
  %s17 = inlined_call_operand.vmem [shape: f32[4,1,128], index: 17, kind: input, shape index: {}]
  %s18 = inlined_call_operand.vmem [shape: f32[128,6], index: 18, kind: input, shape index: {}]
  %s19 = inlined_call_operand.vmem [shape: f32[1,6], index: 19, kind: input, shape index: {}]
  %s20 = inlined_call_operand.vmem [shape: f32[2,17,6], index: 20, kind: output, shape index: {}]
  %s21 = sld [smem:[#allocation0]]
  $region129: #{vel_orien_decoder_forward.1} parent=0
    _
  %s23 = ssub.s32 1, %s21
  %s24 = scalar_select 0, %s23, %s21
  $region1: #{vel_orien_decoder_forward.1} parent=0
    #allocation2 [shape = 'u8[786432]{0}', space=vmem, size = 0xc0000, scoped, tag = 'input window, operand 6, single buffered']
    #allocation3 [shape = 's32[2]{0}', space=sflag, size = 0x8, scoped, tag = 'scoped memory for vel_orien_decoder_forward.1']
    #allocation4 [shape = 'u8[262144]{0}', space=vmem, size = 0x40000, scoped, tag = 'input window, operand 8, single buffered']
    #allocation5 [shape = 's32[1]{0}', space=sflag, size = 0x4, scoped, tag = 'scoped memory for vel_orien_decoder_forward.1']
    #allocation6 [shape = 'u8[524288]{0}', space=vmem, size = 0x80000, scoped, tag = 'input window, operand 12, single buffered']
    #allocation7 [shape = 'u8[524288]{0}', space=vmem, size = 0x80000, scoped, tag = 'input window, operand 14, single buffered']
    #allocation8 [shape = 's32[1]{0}', space=sflag, size = 0x4, scoped, tag = 'scoped memory for vel_orien_decoder_forward.1']
    %25 = vsyncpa [#allocation3], 0
    %26 = vsyncpa [#allocation5], 0
    %27 = vsyncpa [#allocation8], 0
    loop: start=0, step=1, limit=4
    $region2: #{vel_orien_decoder_forward.1} parent=1 // loop_pre_header
      _
    $region3: #{vel_orien_decoder_forward.1} parent=1 // loop_header
      %s29 = sphi 0, %s33
      %p30 = scmp.ge.s32.totalorder %s29, 4
      %s39 = sphi 0, %s41
      %s42 = sphi 0, %s39
      %s43 = sphi 0, %s42
      %s59 = sphi 0, %s43
      %s63 = sphi 0, %s63
      %s65 = sphi 0, %s63
      %s66 = sphi 0, %s65
      %s80 = sphi 0, %s66
      %s84 = sphi 0, %s84
      %s86 = sphi 0, %s84
      %s87 = sphi 0, %s86
      %s101 = sphi 0, %s87
      %s105 = sphi 0, %s105
      %s107 = sphi 0, %s105
      %s108 = sphi 0, %s107
      %s122 = sphi 0, %s108
      %s126 = sphi 0, %s126
      %s128 = sphi 0, %s126
      %s129 = sphi 0, %s128
      %s143 = sphi 0, %s129
      %s147 = sphi 0, %s147
      %s149 = sphi 0, %s147
      %s150 = sphi 0, %s149
      %s164 = sphi 0, %s150
      %s168 = sphi 0, %s168
      %s170 = sphi 0, %s168
      %s171 = sphi 0, %s170
      %s185 = sphi 0, %s171
      %s189 = sphi 0, %s189
      %s191 = sphi 0, %s189
      %s192 = sphi 0, %s191
      %s206 = sphi 0, %s192
      %s210 = sphi 0, %s210
      %s212 = sphi 0, %s210
      %s213 = sphi 0, %s212
      %s227 = sphi 0, %s213
      %s231 = sphi 0, %s231
      %s233 = sphi 0, %s231
      %s234 = sphi 0, %s233
      %s248 = sphi 0, %s234
      %s252 = sphi 0, %s252
      %s254 = sphi 0, %s252
      %s255 = sphi 0, %s254
      %s269 = sphi 0, %s255
      %s273 = sphi 0, %s273
      %s275 = sphi 0, %s273
      %s276 = sphi 0, %s275
      %s290 = sphi 0, %s276
      %s294 = sphi 0, %s294
      %s296 = sphi 0, %s294
      %s297 = sphi 0, %s296
      %s311 = sphi 0, %s297
      %s315 = sphi 0, %s315
      %s317 = sphi 0, %s315
      %s318 = sphi 0, %s317
      %s332 = sphi 0, %s318
      %s336 = sphi 0, %s336
      %s338 = sphi 0, %s336
      %s339 = sphi 0, %s338
      %s353 = sphi 0, %s339
      %s357 = sphi 0, %s357
      %s359 = sphi 0, %s357
      %s360 = sphi 0, %s359
      %s374 = sphi 0, %s360
      %s378 = sphi 0, %s378
      %s380 = sphi 0, %s378
      %s381 = sphi 0, %s380
      %s395 = sphi 0, %s381
      %s399 = sphi 0, %s399
      %s401 = sphi 0, %s399
      %s402 = sphi 0, %s401
      %s416 = sphi 0, %s402
      %s420 = sphi 0, %s420
      %s422 = sphi 0, %s420
      %s423 = sphi 0, %s422
      %s437 = sphi 0, %s423
      %s441 = sphi 0, %s441
      %s443 = sphi 0, %s441
      %s444 = sphi 0, %s443
      %s458 = sphi 0, %s444
      %s464 = sphi 0, %s466
      %s467 = sphi 0, %s464
      %s468 = sphi 0, %s467
      %s484 = sphi 0, %s468
    $region4: #{vel_orien_decoder_forward.1} parent=1 // loop_header_branch
      %32 = sbr.rel (%p30) target = $region8
    $region5: #{vel_orien_decoder_forward.1} parent=1 // loop_body
      %s34 = ssub.s32 %s29, 1
      %s35 = ssub.s32 %s29, 2
      %s36 = sadd.s32 %s29, 1
      %s37 = ssub.s32 %s29, %s36
      %p38 = scmp.eq.s32.totalorder %s37, 0
      %s40 = sadd.s32 %s39, 1
      %s41 = scalar_select %p38, %s39, %s40
      %p44 = pneg %p38
      %p45 = scmp.eq.s32.totalorder %s29, 1
      %p46 = por %p44, %p45
      %p47 = scmp.ne.s32.totalorder %s39, %s42
      %p48 = scmp.eq.s32.totalorder %s29, 0
      %p49 = por %p47, %p48
      %p50 = scmp.ne.s32.totalorder %s39, %s42
      %p51 = scmp.eq.s32.totalorder %s34, 1
      %p52 = por %p50, %p51
      %p53 = scmp.ne.s32.totalorder %s42, %s43
      %p54 = scmp.eq.s32.totalorder %s34, 0
      %p55 = por %p53, %p54
      %p56 = scmp.ne.s32.totalorder %s42, %s43
      %p57 = scmp.eq.s32.totalorder %s35, 1
      %p58 = por %p56, %p57
      %p60 = scmp.ne.s32.totalorder %s43, %s59
      %p61 = scmp.eq.s32.totalorder %s35, 0
      %p62 = por %p60, %p61
      %s64 = sadd.s32 %s63, 1
      %p67 = scmp.eq.s32.totalorder %s29, 1
      %p68 = scmp.ne.s32.totalorder %s63, %s65
      %p69 = scmp.eq.s32.totalorder %s29, 0
      %p70 = por %p68, %p69
      %p71 = scmp.ne.s32.totalorder %s63, %s65
      %p72 = scmp.eq.s32.totalorder %s34, 1
      %p73 = por %p71, %p72
      %p74 = scmp.ne.s32.totalorder %s65, %s66
      %p75 = scmp.eq.s32.totalorder %s34, 0
      %p76 = por %p74, %p75
      %p77 = scmp.ne.s32.totalorder %s65, %s66
      %p78 = scmp.eq.s32.totalorder %s35, 1
      %p79 = por %p77, %p78
      %p81 = scmp.ne.s32.totalorder %s66, %s80
      %p82 = scmp.eq.s32.totalorder %s35, 0
      %p83 = por %p81, %p82
      %s85 = sadd.s32 %s84, 1
      %p88 = scmp.eq.s32.totalorder %s29, 1
      %p89 = scmp.ne.s32.totalorder %s84, %s86
      %p90 = scmp.eq.s32.totalorder %s29, 0
      %p91 = por %p89, %p90
      %p92 = scmp.ne.s32.totalorder %s84, %s86
      %p93 = scmp.eq.s32.totalorder %s34, 1
      %p94 = por %p92, %p93
      %p95 = scmp.ne.s32.totalorder %s86, %s87
      %p96 = scmp.eq.s32.totalorder %s34, 0
      %p97 = por %p95, %p96
      %p98 = scmp.ne.s32.totalorder %s86, %s87
      %p99 = scmp.eq.s32.totalorder %s35, 1
      %p100 = por %p98, %p99
      %p102 = scmp.ne.s32.totalorder %s87, %s101
      %p103 = scmp.eq.s32.totalorder %s35, 0
      %p104 = por %p102, %p103
      %s106 = sadd.s32 %s105, 1
      %p109 = scmp.eq.s32.totalorder %s29, 1
      %p110 = scmp.ne.s32.totalorder %s105, %s107
      %p111 = scmp.eq.s32.totalorder %s29, 0
      %p112 = por %p110, %p111
      %p113 = scmp.ne.s32.totalorder %s105, %s107
      %p114 = scmp.eq.s32.totalorder %s34, 1
      %p115 = por %p113, %p114
      %p116 = scmp.ne.s32.totalorder %s107, %s108
      %p117 = scmp.eq.s32.totalorder %s34, 0
      %p118 = por %p116, %p117
      %p119 = scmp.ne.s32.totalorder %s107, %s108
      %p120 = scmp.eq.s32.totalorder %s35, 1
      %p121 = por %p119, %p120
      %p123 = scmp.ne.s32.totalorder %s108, %s122
      %p124 = scmp.eq.s32.totalorder %s35, 0
      %p125 = por %p123, %p124
      %s127 = sadd.s32 %s126, 1
      %p130 = scmp.eq.s32.totalorder %s29, 1
      %p131 = scmp.ne.s32.totalorder %s126, %s128
      %p132 = scmp.eq.s32.totalorder %s29, 0
      %p133 = por %p131, %p132
      %p134 = scmp.ne.s32.totalorder %s126, %s128
      %p135 = scmp.eq.s32.totalorder %s34, 1
      %p136 = por %p134, %p135
      %p137 = scmp.ne.s32.totalorder %s128, %s129
      %p138 = scmp.eq.s32.totalorder %s34, 0
      %p139 = por %p137, %p138
      %p140 = scmp.ne.s32.totalorder %s128, %s129
      %p141 = scmp.eq.s32.totalorder %s35, 1
      %p142 = por %p140, %p141
      %p144 = scmp.ne.s32.totalorder %s129, %s143
      %p145 = scmp.eq.s32.totalorder %s35, 0
      %p146 = por %p144, %p145
      %s148 = sadd.s32 %s147, 1
      %p151 = scmp.eq.s32.totalorder %s29, 1
      %p152 = scmp.ne.s32.totalorder %s147, %s149
      %p153 = scmp.eq.s32.totalorder %s29, 0
      %p154 = por %p152, %p153
      %p155 = scmp.ne.s32.totalorder %s147, %s149
      %p156 = scmp.eq.s32.totalorder %s34, 1
      %p157 = por %p155, %p156
      %p158 = scmp.ne.s32.totalorder %s149, %s150
      %p159 = scmp.eq.s32.totalorder %s34, 0
      %p160 = por %p158, %p159
      %p161 = scmp.ne.s32.totalorder %s149, %s150
      %p162 = scmp.eq.s32.totalorder %s35, 1
      %p163 = por %p161, %p162
      %p165 = scmp.ne.s32.totalorder %s150, %s164
      %p166 = scmp.eq.s32.totalorder %s35, 0
      %p167 = por %p165, %p166
      %s169 = sadd.s32 %s168, 1
      %p172 = scmp.eq.s32.totalorder %s29, 1
      %p173 = scmp.ne.s32.totalorder %s168, %s170
      %p174 = scmp.eq.s32.totalorder %s29, 0
      %p175 = por %p173, %p174
      %p176 = scmp.ne.s32.totalorder %s168, %s170
      %p177 = scmp.eq.s32.totalorder %s34, 1
      %p178 = por %p176, %p177
      %p179 = scmp.ne.s32.totalorder %s170, %s171
      %p180 = scmp.eq.s32.totalorder %s34, 0
      %p181 = por %p179, %p180
      %p182 = scmp.ne.s32.totalorder %s170, %s171
      %p183 = scmp.eq.s32.totalorder %s35, 1
      %p184 = por %p182, %p183
      %p186 = scmp.ne.s32.totalorder %s171, %s185
      %p187 = scmp.eq.s32.totalorder %s35, 0
      %p188 = por %p186, %p187
      %s190 = sadd.s32 %s189, 1
      %p193 = scmp.eq.s32.totalorder %s29, 1
      %p194 = scmp.ne.s32.totalorder %s189, %s191
      %p195 = scmp.eq.s32.totalorder %s29, 0
      %p196 = por %p194, %p195
      %p197 = scmp.ne.s32.totalorder %s189, %s191
      %p198 = scmp.eq.s32.totalorder %s34, 1
      %p199 = por %p197, %p198
      %p200 = scmp.ne.s32.totalorder %s191, %s192
      %p201 = scmp.eq.s32.totalorder %s34, 0
      %p202 = por %p200, %p201
      %p203 = scmp.ne.s32.totalorder %s191, %s192
      %p204 = scmp.eq.s32.totalorder %s35, 1
      %p205 = por %p203, %p204
      %p207 = scmp.ne.s32.totalorder %s192, %s206
      %p208 = scmp.eq.s32.totalorder %s35, 0
      %p209 = por %p207, %p208
      %s211 = sadd.s32 %s210, 1
      %p214 = scmp.eq.s32.totalorder %s29, 1
      %p215 = scmp.ne.s32.totalorder %s210, %s212
      %p216 = scmp.eq.s32.totalorder %s29, 0
      %p217 = por %p215, %p216
      %p218 = scmp.ne.s32.totalorder %s210, %s212
      %p219 = scmp.eq.s32.totalorder %s34, 1
      %p220 = por %p218, %p219
      %p221 = scmp.ne.s32.totalorder %s212, %s213
      %p222 = scmp.eq.s32.totalorder %s34, 0
      %p223 = por %p221, %p222
      %p224 = scmp.ne.s32.totalorder %s212, %s213
      %p225 = scmp.eq.s32.totalorder %s35, 1
      %p226 = por %p224, %p225
      %p228 = scmp.ne.s32.totalorder %s213, %s227
      %p229 = scmp.eq.s32.totalorder %s35, 0
      %p230 = por %p228, %p229
      %s232 = sadd.s32 %s231, 1
      %p235 = scmp.eq.s32.totalorder %s29, 1
      %p236 = scmp.ne.s32.totalorder %s231, %s233
      %p237 = scmp.eq.s32.totalorder %s29, 0
      %p238 = por %p236, %p237
      %p239 = scmp.ne.s32.totalorder %s231, %s233
      %p240 = scmp.eq.s32.totalorder %s34, 1
      %p241 = por %p239, %p240
      %p242 = scmp.ne.s32.totalorder %s233, %s234
      %p243 = scmp.eq.s32.totalorder %s34, 0
      %p244 = por %p242, %p243
      %p245 = scmp.ne.s32.totalorder %s233, %s234
      %p246 = scmp.eq.s32.totalorder %s35, 1
      %p247 = por %p245, %p246
      %p249 = scmp.ne.s32.totalorder %s234, %s248
      %p250 = scmp.eq.s32.totalorder %s35, 0
      %p251 = por %p249, %p250
      %s253 = sadd.s32 %s252, 1
      %p256 = scmp.eq.s32.totalorder %s29, 1
      %p257 = scmp.ne.s32.totalorder %s252, %s254
      %p258 = scmp.eq.s32.totalorder %s29, 0
      %p259 = por %p257, %p258
      %p260 = scmp.ne.s32.totalorder %s252, %s254
      %p261 = scmp.eq.s32.totalorder %s34, 1
      %p262 = por %p260, %p261
      %p263 = scmp.ne.s32.totalorder %s254, %s255
      %p264 = scmp.eq.s32.totalorder %s34, 0
      %p265 = por %p263, %p264
      %p266 = scmp.ne.s32.totalorder %s254, %s255
      %p267 = scmp.eq.s32.totalorder %s35, 1
      %p268 = por %p266, %p267
      %p270 = scmp.ne.s32.totalorder %s255, %s269
      %p271 = scmp.eq.s32.totalorder %s35, 0
      %p272 = por %p270, %p271
      %s274 = sadd.s32 %s273, 1
      %p277 = scmp.eq.s32.totalorder %s29, 1
      %p278 = scmp.ne.s32.totalorder %s273, %s275
      %p279 = scmp.eq.s32.totalorder %s29, 0
      %p280 = por %p278, %p279
      %p281 = scmp.ne.s32.totalorder %s273, %s275
      %p282 = scmp.eq.s32.totalorder %s34, 1
      %p283 = por %p281, %p282
      %p284 = scmp.ne.s32.totalorder %s275, %s276
      %p285 = scmp.eq.s32.totalorder %s34, 0
      %p286 = por %p284, %p285
      %p287 = scmp.ne.s32.totalorder %s275, %s276
      %p288 = scmp.eq.s32.totalorder %s35, 1
      %p289 = por %p287, %p288
      %p291 = scmp.ne.s32.totalorder %s276, %s290
      %p292 = scmp.eq.s32.totalorder %s35, 0
      %p293 = por %p291, %p292
      %s295 = sadd.s32 %s294, 1
      %p298 = scmp.eq.s32.totalorder %s29, 1
      %p299 = scmp.ne.s32.totalorder %s294, %s296
      %p300 = scmp.eq.s32.totalorder %s29, 0
      %p301 = por %p299, %p300
      %p302 = scmp.ne.s32.totalorder %s294, %s296
      %p303 = scmp.eq.s32.totalorder %s34, 1
      %p304 = por %p302, %p303
      %p305 = scmp.ne.s32.totalorder %s296, %s297
      %p306 = scmp.eq.s32.totalorder %s34, 0
      %p307 = por %p305, %p306
      %p308 = scmp.ne.s32.totalorder %s296, %s297
      %p309 = scmp.eq.s32.totalorder %s35, 1
      %p310 = por %p308, %p309
      %p312 = scmp.ne.s32.totalorder %s297, %s311
      %p313 = scmp.eq.s32.totalorder %s35, 0
      %p314 = por %p312, %p313
      %s316 = sadd.s32 %s315, 1
      %p319 = scmp.eq.s32.totalorder %s29, 1
      %p320 = scmp.ne.s32.totalorder %s315, %s317
      %p321 = scmp.eq.s32.totalorder %s29, 0
      %p322 = por %p320, %p321
      %p323 = scmp.ne.s32.totalorder %s315, %s317
      %p324 = scmp.eq.s32.totalorder %s34, 1
      %p325 = por %p323, %p324
      %p326 = scmp.ne.s32.totalorder %s317, %s318
      %p327 = scmp.eq.s32.totalorder %s34, 0
      %p328 = por %p326, %p327
      %p329 = scmp.ne.s32.totalorder %s317, %s318
      %p330 = scmp.eq.s32.totalorder %s35, 1
      %p331 = por %p329, %p330
      %p333 = scmp.ne.s32.totalorder %s318, %s332
      %p334 = scmp.eq.s32.totalorder %s35, 0
      %p335 = por %p333, %p334
      %s337 = sadd.s32 %s336, 1
      %p340 = scmp.eq.s32.totalorder %s29, 1
      %p341 = scmp.ne.s32.totalorder %s336, %s338
      %p342 = scmp.eq.s32.totalorder %s29, 0
      %p343 = por %p341, %p342
      %p344 = scmp.ne.s32.totalorder %s336, %s338
      %p345 = scmp.eq.s32.totalorder %s34, 1
      %p346 = por %p344, %p345
      %p347 = scmp.ne.s32.totalorder %s338, %s339
      %p348 = scmp.eq.s32.totalorder %s34, 0
      %p349 = por %p347, %p348
      %p350 = scmp.ne.s32.totalorder %s338, %s339
      %p351 = scmp.eq.s32.totalorder %s35, 1
      %p352 = por %p350, %p351
      %p354 = scmp.ne.s32.totalorder %s339, %s353
      %p355 = scmp.eq.s32.totalorder %s35, 0
      %p356 = por %p354, %p355
      %s358 = sadd.s32 %s357, 1
      %p361 = scmp.eq.s32.totalorder %s29, 1
      %p362 = scmp.ne.s32.totalorder %s357, %s359
      %p363 = scmp.eq.s32.totalorder %s29, 0
      %p364 = por %p362, %p363
      %p365 = scmp.ne.s32.totalorder %s357, %s359
      %p366 = scmp.eq.s32.totalorder %s34, 1
      %p367 = por %p365, %p366
      %p368 = scmp.ne.s32.totalorder %s359, %s360
      %p369 = scmp.eq.s32.totalorder %s34, 0
      %p370 = por %p368, %p369
      %p371 = scmp.ne.s32.totalorder %s359, %s360
      %p372 = scmp.eq.s32.totalorder %s35, 1
      %p373 = por %p371, %p372
      %p375 = scmp.ne.s32.totalorder %s360, %s374
      %p376 = scmp.eq.s32.totalorder %s35, 0
      %p377 = por %p375, %p376
      %s379 = sadd.s32 %s378, 1
      %p382 = scmp.eq.s32.totalorder %s29, 1
      %p383 = scmp.ne.s32.totalorder %s378, %s380
      %p384 = scmp.eq.s32.totalorder %s29, 0
      %p385 = por %p383, %p384
      %p386 = scmp.ne.s32.totalorder %s378, %s380
      %p387 = scmp.eq.s32.totalorder %s34, 1
      %p388 = por %p386, %p387
      %p389 = scmp.ne.s32.totalorder %s380, %s381
      %p390 = scmp.eq.s32.totalorder %s34, 0
      %p391 = por %p389, %p390
      %p392 = scmp.ne.s32.totalorder %s380, %s381
      %p393 = scmp.eq.s32.totalorder %s35, 1
      %p394 = por %p392, %p393
      %p396 = scmp.ne.s32.totalorder %s381, %s395
      %p397 = scmp.eq.s32.totalorder %s35, 0
      %p398 = por %p396, %p397
      %s400 = sadd.s32 %s399, 1
      %p403 = scmp.eq.s32.totalorder %s29, 1
      %p404 = scmp.ne.s32.totalorder %s399, %s401
      %p405 = scmp.eq.s32.totalorder %s29, 0
      %p406 = por %p404, %p405
      %p407 = scmp.ne.s32.totalorder %s399, %s401
      %p408 = scmp.eq.s32.totalorder %s34, 1
      %p409 = por %p407, %p408
      %p410 = scmp.ne.s32.totalorder %s401, %s402
      %p411 = scmp.eq.s32.totalorder %s34, 0
      %p412 = por %p410, %p411
      %p413 = scmp.ne.s32.totalorder %s401, %s402
      %p414 = scmp.eq.s32.totalorder %s35, 1
      %p415 = por %p413, %p414
      %p417 = scmp.ne.s32.totalorder %s402, %s416
      %p418 = scmp.eq.s32.totalorder %s35, 0
      %p419 = por %p417, %p418
      %s421 = sadd.s32 %s420, 1
      %p424 = scmp.eq.s32.totalorder %s29, 1
      %p425 = scmp.ne.s32.totalorder %s420, %s422
      %p426 = scmp.eq.s32.totalorder %s29, 0
      %p427 = por %p425, %p426
      %p428 = scmp.ne.s32.totalorder %s420, %s422
      %p429 = scmp.eq.s32.totalorder %s34, 1
      %p430 = por %p428, %p429
      %p431 = scmp.ne.s32.totalorder %s422, %s423
      %p432 = scmp.eq.s32.totalorder %s34, 0
      %p433 = por %p431, %p432
      %p434 = scmp.ne.s32.totalorder %s422, %s423
      %p435 = scmp.eq.s32.totalorder %s35, 1
      %p436 = por %p434, %p435
      %p438 = scmp.ne.s32.totalorder %s423, %s437
      %p439 = scmp.eq.s32.totalorder %s35, 0
      %p440 = por %p438, %p439
      %s442 = sadd.s32 %s441, 1
      %p445 = scmp.eq.s32.totalorder %s29, 1
      %p446 = scmp.ne.s32.totalorder %s441, %s443
      %p447 = scmp.eq.s32.totalorder %s29, 0
      %p448 = por %p446, %p447
      %p449 = scmp.ne.s32.totalorder %s441, %s443
      %p450 = scmp.eq.s32.totalorder %s34, 1
      %p451 = por %p449, %p450
      %p452 = scmp.ne.s32.totalorder %s443, %s444
      %p453 = scmp.eq.s32.totalorder %s34, 0
      %p454 = por %p452, %p453
      %p455 = scmp.ne.s32.totalorder %s443, %s444
      %p456 = scmp.eq.s32.totalorder %s35, 1
      %p457 = por %p455, %p456
      %p459 = scmp.ne.s32.totalorder %s444, %s458
      %p460 = scmp.eq.s32.totalorder %s35, 0
      %p461 = por %p459, %p460
      %s462 = ssub.s32 %s29, %s36
      %p463 = scmp.eq.s32.totalorder %s462, 0
      %s465 = sadd.s32 %s464, 1
      %s466 = scalar_select %p463, %s464, %s465
      %p469 = pneg %p463
      %p470 = scmp.eq.s32.totalorder %s29, 1
      %p471 = por %p469, %p470
      %p472 = scmp.ne.s32.totalorder %s464, %s467
      %p473 = scmp.eq.s32.totalorder %s29, 0
      %p474 = por %p472, %p473
      %p475 = scmp.ne.s32.totalorder %s464, %s467
      %p476 = scmp.eq.s32.totalorder %s34, 1
      %p477 = por %p475, %p476
      %p478 = scmp.ne.s32.totalorder %s467, %s468
      %p479 = scmp.eq.s32.totalorder %s34, 0
      %p480 = por %p478, %p479
      %p481 = scmp.ne.s32.totalorder %s467, %s468
      %p482 = scmp.eq.s32.totalorder %s35, 1
      %p483 = por %p481, %p482
      %p485 = scmp.ne.s32.totalorder %s468, %s484
      %p486 = scmp.eq.s32.totalorder %s35, 0
      %p487 = por %p485, %p486
      %p488 = scmp.le.s32.totalorder 1, %s29
      %p489 = scmp.lt.s32.totalorder %s29, 3
      %p490 = pnand %p488, %p489
      %p491 = pneg %p490
      // Predicated region
      $region9: #{vel_orien_decoder_forward.1} parent=5 // pred_check
        _
      $region10: #{vel_orien_decoder_forward.1} parent=5 // pred_check_branch
        %493 = sbr.rel (%p490) target = $region12
      $region11: #{vel_orien_decoder_forward.1} parent=5 // pred_region
        %s494 = ssub.s32 %s29, 1
        // Predicated region
        $region13: #{vel_orien_decoder_forward.1} parent=11 // pred_check
          %p495 = pneg %p76
        $region14: #{vel_orien_decoder_forward.1} parent=11 // pred_check_branch
          %497 = sbr.rel (%p495) target = $region16
        $region15: #{vel_orien_decoder_forward.1} parent=11 // pred_region
          _
        $region16: #{vel_orien_decoder_forward.1} parent=11 // pred_fallthru
          _
        // Predicated region
        $region17: #{vel_orien_decoder_forward.1} parent=11 // pred_check
          %p498 = pneg %p97
        $region18: #{vel_orien_decoder_forward.1} parent=11 // pred_check_branch
          %500 = sbr.rel (%p498) target = $region20
        $region19: #{vel_orien_decoder_forward.1} parent=11 // pred_region
          _
        $region20: #{vel_orien_decoder_forward.1} parent=11 // pred_fallthru
          _
        // Predicated region
        $region21: #{vel_orien_decoder_forward.1} parent=11 // pred_check
          %p501 = pneg %p118
        $region22: #{vel_orien_decoder_forward.1} parent=11 // pred_check_branch
          %503 = sbr.rel (%p501) target = $region24
        $region23: #{vel_orien_decoder_forward.1} parent=11 // pred_region
          _
        $region24: #{vel_orien_decoder_forward.1} parent=11 // pred_fallthru
          _
        // Predicated region
        $region25: #{vel_orien_decoder_forward.1} parent=11 // pred_check
          %p504 = pneg %p139
        $region26: #{vel_orien_decoder_forward.1} parent=11 // pred_check_branch
          %506 = sbr.rel (%p504) target = $region28
        $region27: #{vel_orien_decoder_forward.1} parent=11 // pred_region
          _
        $region28: #{vel_orien_decoder_forward.1} parent=11 // pred_fallthru
          _
        // Predicated region
        $region29: #{vel_orien_decoder_forward.1} parent=11 // pred_check
          %p507 = pneg %p160
        $region30: #{vel_orien_decoder_forward.1} parent=11 // pred_check_branch
          %509 = sbr.rel (%p507) target = $region32
        $region31: #{vel_orien_decoder_forward.1} parent=11 // pred_region
          _
        $region32: #{vel_orien_decoder_forward.1} parent=11 // pred_fallthru
          _
        // Predicated region
        $region33: #{vel_orien_decoder_forward.1} parent=11 // pred_check
          %p510 = pneg %p181
        $region34: #{vel_orien_decoder_forward.1} parent=11 // pred_check_branch
          %512 = sbr.rel (%p510) target = $region36
        $region35: #{vel_orien_decoder_forward.1} parent=11 // pred_region
          %s514 = ssub.s32 24576, 24576
          %515 = vsyncadd [#allocation3], %s514
          %s516 = sshll.u32 [#allocation2], 4
          %s517 = int_to_ptr.vmem [resolvable:$true] %s516
          %522 = dma.hbm_to_vmem [thread:$0]  %s6, 24576, %s517, [#allocation3], 384, 384, 24
        $region36: #{vel_orien_decoder_forward.1} parent=11 // pred_fallthru
          _
        // Predicated region
        $region37: #{vel_orien_decoder_forward.1} parent=11 // pred_check
          %p523 = pneg %p202
        $region38: #{vel_orien_decoder_forward.1} parent=11 // pred_check_branch
          %525 = sbr.rel (%p523) target = $region40
        $region39: #{vel_orien_decoder_forward.1} parent=11 // pred_region
          _
        $region40: #{vel_orien_decoder_forward.1} parent=11 // pred_fallthru
          _
        // Predicated region
        $region41: #{vel_orien_decoder_forward.1} parent=11 // pred_check
          %p526 = pneg %p223
        $region42: #{vel_orien_decoder_forward.1} parent=11 // pred_check_branch
          %528 = sbr.rel (%p526) target = $region44
        $region43: #{vel_orien_decoder_forward.1} parent=11 // pred_region
          %s530 = ssub.s32 8192, 8192
          %531 = vsyncadd [#allocation5], %s530
          %s532 = sshll.u32 [#allocation4], 4
          %s533 = int_to_ptr.vmem [resolvable:$true] %s532
          %538 = dma.hbm_to_vmem [thread:$0]  %s8, 8192, %s533, [#allocation5], 128, 128, 8
        $region44: #{vel_orien_decoder_forward.1} parent=11 // pred_fallthru
          _
        // Predicated region
        $region45: #{vel_orien_decoder_forward.1} parent=11 // pred_check
          %p539 = pneg %p244
        $region46: #{vel_orien_decoder_forward.1} parent=11 // pred_check_branch
          %541 = sbr.rel (%p539) target = $region48
        $region47: #{vel_orien_decoder_forward.1} parent=11 // pred_region
          _
        $region48: #{vel_orien_decoder_forward.1} parent=11 // pred_fallthru
          _
        // Predicated region
        $region49: #{vel_orien_decoder_forward.1} parent=11 // pred_check
          %p542 = pneg %p265
        $region50: #{vel_orien_decoder_forward.1} parent=11 // pred_check_branch
          %544 = sbr.rel (%p542) target = $region52
        $region51: #{vel_orien_decoder_forward.1} parent=11 // pred_region
          _
        $region52: #{vel_orien_decoder_forward.1} parent=11 // pred_fallthru
          _
        // Predicated region
        $region53: #{vel_orien_decoder_forward.1} parent=11 // pred_check
          %p545 = pneg %p286
        $region54: #{vel_orien_decoder_forward.1} parent=11 // pred_check_branch
          %547 = sbr.rel (%p545) target = $region56
        $region55: #{vel_orien_decoder_forward.1} parent=11 // pred_region
          _
        $region56: #{vel_orien_decoder_forward.1} parent=11 // pred_fallthru
          _
        // Predicated region
        $region57: #{vel_orien_decoder_forward.1} parent=11 // pred_check
          %p548 = pneg %p307
        $region58: #{vel_orien_decoder_forward.1} parent=11 // pred_check_branch
          %550 = sbr.rel (%p548) target = $region60
        $region59: #{vel_orien_decoder_forward.1} parent=11 // pred_region
          %s552 = ssub.s32 16384, 16384
          %553 = vsyncadd [#allocation5], %s552
          %s554 = sshll.u32 [#allocation6], 4
          %s555 = int_to_ptr.vmem [resolvable:$true] %s554
          %560 = dma.hbm_to_vmem [thread:$0]  %s12, 16384, %s555, [#allocation5], 256, 256, 16
        $region60: #{vel_orien_decoder_forward.1} parent=11 // pred_fallthru
          _
        // Predicated region
        $region61: #{vel_orien_decoder_forward.1} parent=11 // pred_check
          %p561 = pneg %p328
        $region62: #{vel_orien_decoder_forward.1} parent=11 // pred_check_branch
          %563 = sbr.rel (%p561) target = $region64
        $region63: #{vel_orien_decoder_forward.1} parent=11 // pred_region
          _
        $region64: #{vel_orien_decoder_forward.1} parent=11 // pred_fallthru
          _
        // Predicated region
        $region65: #{vel_orien_decoder_forward.1} parent=11 // pred_check
          %p564 = pneg %p349
        $region66: #{vel_orien_decoder_forward.1} parent=11 // pred_check_branch
          %566 = sbr.rel (%p564) target = $region68
        $region67: #{vel_orien_decoder_forward.1} parent=11 // pred_region
          %s568 = ssub.s32 16384, 16384
          %569 = vsyncadd [#allocation8], %s568
          %s570 = sshll.u32 [#allocation7], 4
          %s571 = int_to_ptr.vmem [resolvable:$true] %s570
          %576 = dma.hbm_to_vmem [thread:$0]  %s14, 16384, %s571, [#allocation8], 128, 128, 8
        $region68: #{vel_orien_decoder_forward.1} parent=11 // pred_fallthru
          _
        // Predicated region
        $region69: #{vel_orien_decoder_forward.1} parent=11 // pred_check
          %p577 = pneg %p370
        $region70: #{vel_orien_decoder_forward.1} parent=11 // pred_check_branch
          %579 = sbr.rel (%p577) target = $region72
        $region71: #{vel_orien_decoder_forward.1} parent=11 // pred_region
          _
        $region72: #{vel_orien_decoder_forward.1} parent=11 // pred_fallthru
          _
        // Predicated region
        $region73: #{vel_orien_decoder_forward.1} parent=11 // pred_check
          %p580 = pneg %p391
        $region74: #{vel_orien_decoder_forward.1} parent=11 // pred_check_branch
          %582 = sbr.rel (%p580) target = $region76
        $region75: #{vel_orien_decoder_forward.1} parent=11 // pred_region
          _
        $region76: #{vel_orien_decoder_forward.1} parent=11 // pred_fallthru
          _
        // Predicated region
        $region77: #{vel_orien_decoder_forward.1} parent=11 // pred_check
          %p583 = pneg %p412
        $region78: #{vel_orien_decoder_forward.1} parent=11 // pred_check_branch
          %585 = sbr.rel (%p583) target = $region80
        $region79: #{vel_orien_decoder_forward.1} parent=11 // pred_region
          _
        $region80: #{vel_orien_decoder_forward.1} parent=11 // pred_fallthru
          _
        // Predicated region
        $region81: #{vel_orien_decoder_forward.1} parent=11 // pred_check
          %p586 = pneg %p433
        $region82: #{vel_orien_decoder_forward.1} parent=11 // pred_check_branch
          %588 = sbr.rel (%p586) target = $region84
        $region83: #{vel_orien_decoder_forward.1} parent=11 // pred_region
          _
        $region84: #{vel_orien_decoder_forward.1} parent=11 // pred_fallthru
          _
        // Predicated region
        $region85: #{vel_orien_decoder_forward.1} parent=11 // pred_check
          %p589 = pneg %p454
        $region86: #{vel_orien_decoder_forward.1} parent=11 // pred_check_branch
          %591 = sbr.rel (%p589) target = $region88
        $region87: #{vel_orien_decoder_forward.1} parent=11 // pred_region
          _
        $region88: #{vel_orien_decoder_forward.1} parent=11 // pred_fallthru
          _
      $region12: #{vel_orien_decoder_forward.1} parent=5 // pred_fallthru
        _
      %p592 = scmp.lt.s32.totalorder %s29, 2
      // Predicated region
      $region89: #{vel_orien_decoder_forward.1} parent=5 // pred_check
        %p593 = pneg %p592
      $region90: #{vel_orien_decoder_forward.1} parent=5 // pred_check_branch
        %595 = sbr.rel (%p593) target = $region92
      $region91: #{vel_orien_decoder_forward.1} parent=5 // pred_region
        // Predicated region
        $region93: #{vel_orien_decoder_forward.1} parent=91 // pred_check
          %p596 = pneg %p49
        $region94: #{vel_orien_decoder_forward.1} parent=91 // pred_check_branch
          %598 = sbr.rel (%p596) target = $region96
        $region95: #{vel_orien_decoder_forward.1} parent=91 // pred_region
          %p599 = scmp.lt.s32.totalorder %s29, 1
          %s600 = scalar_select %p599, %s29, 1
          %s601 = smul.addr %s600, 3
          %s602 = smul.addr %s601, 8
          %s603 = scalar_lea.vmem %s0, %s602
        $region96: #{vel_orien_decoder_forward.1} parent=91 // pred_fallthru
          _
      $region92: #{vel_orien_decoder_forward.1} parent=5 // pred_fallthru
        _
      %p604 = scmp.le.s32.totalorder 1, %s29
      %p605 = scmp.lt.s32.totalorder %s29, 3
      %p606 = pnand %p604, %p605
      %p607 = pneg %p606
      // Predicated region
      $region97: #{vel_orien_decoder_forward.1} parent=5 // pred_check
        _
      $region98: #{vel_orien_decoder_forward.1} parent=5 // pred_check_branch
        %609 = sbr.rel (%p606) target = $region100
      $region99: #{vel_orien_decoder_forward.1} parent=5 // pred_region
        %s610 = ssub.s32 %s29, 1
        // Predicated region
        $region101: #{vel_orien_decoder_forward.1} parent=99 // pred_check
          %p611 = pneg %p181
        $region102: #{vel_orien_decoder_forward.1} parent=99 // pred_check_branch
          %613 = sbr.rel (%p611) target = $region104
        $region103: #{vel_orien_decoder_forward.1} parent=99 // pred_region
          %614 = dma.done [#allocation3], 24576
        $region104: #{vel_orien_decoder_forward.1} parent=99 // pred_fallthru
          _
        // Predicated region
        $region105: #{vel_orien_decoder_forward.1} parent=99 // pred_check
          %p615 = pneg %p223
        $region106: #{vel_orien_decoder_forward.1} parent=99 // pred_check_branch
          %617 = sbr.rel (%p615) target = $region108
        $region107: #{vel_orien_decoder_forward.1} parent=99 // pred_region
          %618 = dma.done [#allocation5], 8192
        $region108: #{vel_orien_decoder_forward.1} parent=99 // pred_fallthru
          _
        // Predicated region
        $region109: #{vel_orien_decoder_forward.1} parent=99 // pred_check
          %p619 = pneg %p307
        $region110: #{vel_orien_decoder_forward.1} parent=99 // pred_check_branch
          %621 = sbr.rel (%p619) target = $region112
        $region111: #{vel_orien_decoder_forward.1} parent=99 // pred_region
          %622 = dma.done [#allocation5], 16384
        $region112: #{vel_orien_decoder_forward.1} parent=99 // pred_fallthru
          _
        // Predicated region
        $region113: #{vel_orien_decoder_forward.1} parent=99 // pred_check
          %p623 = pneg %p349
        $region114: #{vel_orien_decoder_forward.1} parent=99 // pred_check_branch
          %625 = sbr.rel (%p623) target = $region116
        $region115: #{vel_orien_decoder_forward.1} parent=99 // pred_region
          %626 = dma.done [#allocation8], 16384
        $region116: #{vel_orien_decoder_forward.1} parent=99 // pred_fallthru
          _
        %p627 = scmp.lt.s32.totalorder %s34, 1
        %s628 = scalar_select %p627, %s34, 1
        %s629 = smul.addr %s628, 3
        %s630 = smul.addr %s629, 8
        %s631 = scalar_lea.vmem %s0, %s630
        %p632 = pneg %p55
        %p633 = pneg %p52
        %p634 = pneg %p76
        %p635 = pneg %p73
        %p636 = pneg %p97
        %p637 = pneg %p94
        %p638 = pneg %p118
        %p639 = pneg %p115
        %p640 = pneg %p139
        %p641 = pneg %p136
        %p642 = pneg %p160
        %p643 = pneg %p157
        %p644 = pneg %p181
        %p645 = pneg %p178
        %p646 = pneg %p202
        %p647 = pneg %p199
        %p648 = pneg %p223
        %p649 = pneg %p220
        %p650 = pneg %p244
        %p651 = pneg %p241
        %p652 = pneg %p265
        %p653 = pneg %p262
        %p654 = pneg %p286
        %p655 = pneg %p283
        %p656 = pneg %p307
        %p657 = pneg %p304
        %p658 = pneg %p328
        %p659 = pneg %p325
        %p660 = pneg %p349
        %p661 = pneg %p346
        %p662 = pneg %p370
        %p663 = pneg %p367
        %p664 = pneg %p391
        %p665 = pneg %p388
        %p666 = pneg %p412
        %p667 = pneg %p409
        %p668 = pneg %p433
        %p669 = pneg %p430
        %p670 = pneg %p454
        %p671 = pneg %p451
        %p672 = pneg %p480
        %p673 = pneg %p477
        %p674 = scmp.lt.s32.totalorder %s34, 1
        %s675 = scalar_select %p674, %s34, 1
        %s676 = smul.addr %s675, 3
        %s677 = smul.addr %s676, 8
        %s678 = scalar_lea.vmem %s20, %s677
        %p679 = scmp.lt.s32.totalorder %s34, 1
        %s680 = scalar_select %p679, %s34, 1
        %s681 = smul.addr %s680, 3
        %s682 = smul.addr %s681, 8
        %s683 = scalar_lea.vmem %s0, %s682
        %p684 = scmp.lt.s32.totalorder %s34, 1
        %s685 = scalar_select %p684, %s34, 1
        %s686 = smul.addr %s685, 3
        %s687 = smul.addr %s686, 8
        %s688 = scalar_lea.vmem %s20, %s687
        %v689 = vld [vmem:[%s683] sm:$0xff]
        %v690 = vld [vmem:[%s683 + $0x8] sm:$0xff]
        %v691 = vld [vmem:[%s683 + $0x10] sm:$0x1]
        %vm694 = vcmask 1040384
        %v695 = vrot.slane %v689, 7
        %v696 = vrot.slane %v690, 7
        %v697 = vsel %vm694, %v695, %v696
        %v701 = vsub.f32 %v689, %v695
        %v702 = vsub.f32 %v690, %v697
        %v703 = vsub.f32 %v691, %v696
        %v704 = vld [vmem:[%s2] sm:$0xff]
        %v705 = vld [vmem:[%s2 + $0x8] sm:$0xff]
        %v706 = vld [vmem:[%s2 + $0x10] sm:$0xff]
        %v707 = vld [vmem:[%s2 + $0x18] sm:$0xff]
        %v708 = vld [vmem:[%s2 + $0x20] sm:$0xff]
        %v709 = vld [vmem:[%s2 + $0x28] sm:$0xff]
        %v710 = vld [vmem:[%s2 + $0x30] sm:$0xff]
        %v711 = vld [vmem:[%s2 + $0x38] sm:$0xff]
        %v712 = vld [vmem:[%s3] sm:$0x1]
        %v714 = vlaneseq
        %v715 = vshrl.u32 %v714, 7
        %v716 = vsub.s32 0, %v715
        %v717 = vrot.slane %v712, %v716
        %vm722 = vcmask 1046528
        %v723 = vrot.slane %v701, 1
        %v724 = vrot.slane %v702, 1
        %v725 = vsel %vm722, %v723, %v724
        %v726 = vrot.slane %v703, 1
        %v727 = vsel %vm722, %v724, %v726
        %vm728 = vcmask 523264
        %v729 = vsel %vm728, %v725, 0
        %v731 = vsel %vm728, %v727, 0
        %733 = vmatprep.subr.mxu0 0.0
        %734 = vmatpush1.msra.mxu0 0.0
        %735 = vmatprep.subr.mxu0 0.0
        %736 = vmatpush1.msra.mxu0 0.0
        %737 = vmatprep.subr.mxu0 0.0
        %738 = vmatpush1.msra.mxu0 0.0
        %739 = vmatprep.subr.mxu0 0.0
        %740 = vmatpush1.msra.mxu0 0.0
        %741 = vmatprep.subr.mxu0 0.0
        %742 = vmatpush1.msra.mxu0 0.0
        %743 = vmatprep.subr.mxu0 0.0
        %744 = vmatpush1.msra.mxu0 0.0
        %745 = vmatprep.subr.mxu0 0.0
        %746 = vmatpush1.msra.mxu0 0.0
        %747 = vmatprep.subr.mxu0 0.0
        %748 = vmatpush1.msra.mxu0 0.0
        %749 = vmatprep.subr.mxu0 0.0
        %750 = vmatpush1.msra.mxu0 %v711
        %751 = vmatprep.subr.mxu0 0.0
        %752 = vmatpush1.msra.mxu0 %v710
        %753 = vmatprep.subr.mxu0 0.0
        %754 = vmatpush1.msra.mxu0 %v709
        %755 = vmatprep.subr.mxu0 0.0
        %756 = vmatpush1.msra.mxu0 %v708
        %757 = vmatprep.subr.mxu0 0.0
        %758 = vmatpush1.msra.mxu0 %v707
        %759 = vmatprep.subr.mxu0 0.0
        %760 = vmatpush1.msra.mxu0 %v706
        %761 = vmatprep.subr.mxu0 0.0
        %762 = vmatpush1.msra.mxu0 %v705
        %763 = vmatprep.subr.mxu0 0.0
        %764 = vmatpush1.msra.mxu0 %v704
        %765 = vmatprep.subr.mxu0 0.0
        %766 = vmatpush2.msra.mxu0 0.0
        %767 = vmatprep.subr.mxu0 0.0
        %768 = vmatpush2.msra.mxu0 0.0
        %769 = vmatprep.subr.mxu0 0.0
        %770 = vmatpush2.msra.mxu0 0.0
        %771 = vmatprep.subr.mxu0 0.0
        %772 = vmatpush2.msra.mxu0 0.0
        %773 = vmatprep.subr.mxu0 0.0
        %774 = vmatpush2.msra.mxu0 0.0
        %775 = vmatprep.subr.mxu0 0.0
        %776 = vmatpush2.msra.mxu0 0.0
        %777 = vmatprep.subr.mxu0 0.0
        %778 = vmatpush2.msra.mxu0 0.0
        %779 = vmatprep.subr.mxu0 0.0
        %780 = vmatpush2.msra.mxu0 0.0
        %781 = vmatprep.subr.mxu0 0.0
        %782 = vmatpush2.msra.mxu0 0.0
        %783 = vmatprep.subr.mxu0 0.0
        %784 = vmatpush2.msra.mxu0 0.0
        %785 = vmatprep.subr.mxu0 0.0
        %786 = vmatpush2.msra.mxu0 0.0
        %787 = vmatprep.subr.mxu0 0.0
        %788 = vmatpush2.msra.mxu0 0.0
        %789 = vmatprep.subr.mxu0 0.0
        %790 = vmatpush2.msra.mxu0 0.0
        %791 = vmatprep.subr.mxu0 0.0
        %792 = vmatpush2.msra.mxu0 0.0
        %793 = vmatprep.subr.mxu0 0.0
        %794 = vmatpush2.msra.mxu0 0.0
        %795 = vmatprep.subr.mxu0 0.0
        %796 = vmatpush2.msra.mxu0 0.0
        %797 = vmatprep.mubr.f32.mxu0 0.0
        %798 = vmatmul.mubr.f32.gmra.mxu0 %v729
        %v799 = vpop.f32.mrf.mxu0
        %v800 = vadd.f32 %v717, %v799
        %v801 = vpop.f32.mrf.mxu0
        %802 = vmatprep.mubr.f32.mxu0 0.0
        %803 = vmatmul.mubr.f32.gmra.mxu0 %v731
        %v804 = vpop.f32.mrf.mxu0
        %v805 = vadd.f32 %v717, %v804
        %v806 = vpop.f32.mrf.mxu0
        %807 = vdwg.mxu0
        %v808 = vld [vmem:[%s4] sm:$0x1]
        %v809 = vld [vmem:[%s5] sm:$0x1]
        %810 = vadd.xlane.f32.xlu0 %v800
        %v811 = vpop.xlane.xlu0 %810
        %812 = vadd.xlane.f32.xlu0 %v805
        %v813 = vpop.xlane.xlu0 %812
        %v814 = vrcp.pop 128.0
        %v815 = vmul.f32 %v811, %v814
        %v816 = vmul.f32 %v813, %v814
        %v817 = vsub.f32 %v800, %v815
        %v818 = vsub.f32 %v805, %v816
        %v819 = vmul.f32 %v817, %v817
        %v820 = vmul.f32 %v818, %v818
        %821 = vadd.xlane.f32.xlu0 %v819
        %v822 = vpop.xlane.xlu0 %821
        %823 = vadd.xlane.f32.xlu0 %v820
        %v824 = vpop.xlane.xlu0 %823
        %v825 = vmul.f32 %v822, %v814
        %v826 = vmul.f32 %v824, %v814
        %v827 = vadd.f32 %v825, 1e-05
        %v828 = vadd.f32 %v826, 1e-05
        %v829 = vrsqrt.pop %v827
        %v830 = vrsqrt.pop %v828
        %v831 = vmul.f32 %v817, %v829
        %v832 = vmul.f32 %v818, %v830
        %v834 = vlaneseq
        %v835 = vshrl.u32 %v834, 7
        %v836 = vsub.s32 0, %v835
        %v837 = vrot.slane %v808, %v836
        %v839 = vmul.f32 %v831, %v837
        %v840 = vmul.f32 %v832, %v837
        %v842 = vlaneseq
        %v843 = vshrl.u32 %v842, 7
        %v844 = vsub.s32 0, %v843
        %v845 = vrot.slane %v809, %v844
        %v847 = vadd.f32 %v839, %v845
        %v848 = vadd.f32 %v840, %v845
        %v849 = vld [vmem:[%s1] sm:$0xff]
        %v850 = vld [vmem:[%s1 + $0x8] sm:$0xff]
        %v851 = vadd.f32 %v847, %v849
        %v852 = vadd.f32 %v848, %v850
        %v853 = vld [vmem:[#allocation2] sm:$0xff]
        %v854 = vld [vmem:[#allocation2 + $0x8] sm:$0xff]
        %v855 = vld [vmem:[#allocation2 + $0x10] sm:$0xff]
        %v856 = vld [vmem:[#allocation2 + $0x18] sm:$0xff]
        %v857 = vld [vmem:[#allocation2 + $0x20] sm:$0xff]
        %v858 = vld [vmem:[#allocation2 + $0x28] sm:$0xff]
        %v859 = vld [vmem:[#allocation2 + $0x30] sm:$0xff]
        %v860 = vld [vmem:[#allocation2 + $0x38] sm:$0xff]
        %v861 = vld [vmem:[#allocation2 + $0x40] sm:$0xff]
        %v862 = vld [vmem:[#allocation2 + $0x48] sm:$0xff]
        %v863 = vld [vmem:[#allocation2 + $0x50] sm:$0xff]
        %v864 = vld [vmem:[#allocation2 + $0x58] sm:$0xff]
        %v865 = vld [vmem:[#allocation2 + $0x60] sm:$0xff]
        %v866 = vld [vmem:[#allocation2 + $0x68] sm:$0xff]
        %v867 = vld [vmem:[#allocation2 + $0x70] sm:$0xff]
        %v868 = vld [vmem:[#allocation2 + $0x78] sm:$0xff]
        %v869 = vld [vmem:[#allocation2 + $0x80] sm:$0xff]
        %v870 = vld [vmem:[#allocation2 + $0x88] sm:$0xff]
        %v871 = vld [vmem:[#allocation2 + $0x90] sm:$0xff]
        %v872 = vld [vmem:[#allocation2 + $0x98] sm:$0xff]
        %v873 = vld [vmem:[#allocation2 + $0xa0] sm:$0xff]
        %v874 = vld [vmem:[#allocation2 + $0xa8] sm:$0xff]
        %v875 = vld [vmem:[#allocation2 + $0xb0] sm:$0xff]
        %v876 = vld [vmem:[#allocation2 + $0xb8] sm:$0xff]
        %v877 = vld [vmem:[#allocation2 + $0xc0] sm:$0xff]
        %v878 = vld [vmem:[#allocation2 + $0xc8] sm:$0xff]
        %v879 = vld [vmem:[#allocation2 + $0xd0] sm:$0xff]
        %v880 = vld [vmem:[#allocation2 + $0xd8] sm:$0xff]
        %v881 = vld [vmem:[#allocation2 + $0xe0] sm:$0xff]
        %v882 = vld [vmem:[#allocation2 + $0xe8] sm:$0xff]
        %v883 = vld [vmem:[#allocation2 + $0xf0] sm:$0xff]
        %v884 = vld [vmem:[#allocation2 + $0xf8] sm:$0xff]
        %v885 = vld [vmem:[#allocation2 + $0x100] sm:$0xff]
        %v886 = vld [vmem:[#allocation2 + $0x108] sm:$0xff]
        %v887 = vld [vmem:[#allocation2 + $0x110] sm:$0xff]
        %v888 = vld [vmem:[#allocation2 + $0x118] sm:$0xff]
        %v889 = vld [vmem:[#allocation2 + $0x120] sm:$0xff]
        %v890 = vld [vmem:[#allocation2 + $0x128] sm:$0xff]
        %v891 = vld [vmem:[#allocation2 + $0x130] sm:$0xff]
        %v892 = vld [vmem:[#allocation2 + $0x138] sm:$0xff]
        %v893 = vld [vmem:[#allocation2 + $0x140] sm:$0xff]
        %v894 = vld [vmem:[#allocation2 + $0x148] sm:$0xff]
        %v895 = vld [vmem:[#allocation2 + $0x150] sm:$0xff]
        %v896 = vld [vmem:[#allocation2 + $0x158] sm:$0xff]
        %v897 = vld [vmem:[#allocation2 + $0x160] sm:$0xff]
        %v898 = vld [vmem:[#allocation2 + $0x168] sm:$0xff]
        %v899 = vld [vmem:[#allocation2 + $0x170] sm:$0xff]
        %v900 = vld [vmem:[#allocation2 + $0x178] sm:$0xff]
        %v901 = vld [vmem:[%s7] sm:$0x7]
        %v903 = vlaneseq
        %v904 = vshrl.u32 %v903, 7
        %v905 = vsub.s32 0, %v904
        %v906 = vrot.slane %v901, %v905
        %v907 = vlaneseq
        %v908 = vshrl.u32 %v907, 7
        %v909 = vsub.s32 1, %v908
        %v910 = vrot.slane %v901, %v909
        %v911 = vlaneseq
        %v912 = vshrl.u32 %v911, 7
        %v913 = vsub.s32 2, %v912
        %v914 = vrot.slane %v901, %v913
        %918 = vmatprep.subr.mxu0 %v899
        %919 = vmatpush1.msra.mxu0 %v898
        %920 = vmatprep.subr.mxu0 %v896
        %921 = vmatpush1.msra.mxu0 %v895
        %922 = vmatprep.subr.mxu0 %v893
        %923 = vmatpush1.msra.mxu0 %v892
        %924 = vmatprep.subr.mxu0 %v890
        %925 = vmatpush1.msra.mxu0 %v889
        %926 = vmatprep.subr.mxu0 %v887
        %927 = vmatpush1.msra.mxu0 %v886
        %928 = vmatprep.subr.mxu0 %v884
        %929 = vmatpush1.msra.mxu0 %v883
        %930 = vmatprep.subr.mxu0 %v881
        %931 = vmatpush1.msra.mxu0 %v880
        %932 = vmatprep.subr.mxu0 %v878
        %933 = vmatpush1.msra.mxu0 %v877
        %934 = vmatprep.subr.mxu0 %v875
        %935 = vmatpush1.msra.mxu0 %v874
        %936 = vmatprep.subr.mxu0 %v872
        %937 = vmatpush1.msra.mxu0 %v871
        %938 = vmatprep.subr.mxu0 %v869
        %939 = vmatpush1.msra.mxu0 %v868
        %940 = vmatprep.subr.mxu0 %v866
        %941 = vmatpush1.msra.mxu0 %v865
        %942 = vmatprep.subr.mxu0 %v863
        %943 = vmatpush1.msra.mxu0 %v862
        %944 = vmatprep.subr.mxu0 %v860
        %945 = vmatpush1.msra.mxu0 %v859
        %946 = vmatprep.subr.mxu0 %v857
        %947 = vmatpush1.msra.mxu0 %v856
        %948 = vmatprep.subr.mxu0 %v854
        %949 = vmatpush1.msra.mxu0 %v853
        %950 = vmatprep.subr.mxu0 0.0
        %951 = vmatpush2.msra.mxu0 0.0
        %952 = vmatprep.subr.mxu0 0.0
        %953 = vmatpush2.msra.mxu0 0.0
        %954 = vmatprep.subr.mxu0 0.0
        %955 = vmatpush2.msra.mxu0 0.0
        %956 = vmatprep.subr.mxu0 0.0
        %957 = vmatpush2.msra.mxu0 0.0
        %958 = vmatprep.subr.mxu0 0.0
        %959 = vmatpush2.msra.mxu0 0.0
        %960 = vmatprep.subr.mxu0 0.0
        %961 = vmatpush2.msra.mxu0 0.0
        %962 = vmatprep.subr.mxu0 0.0
        %963 = vmatpush2.msra.mxu0 0.0
        %964 = vmatprep.subr.mxu0 0.0
        %965 = vmatpush2.msra.mxu0 0.0
        %966 = vmatprep.subr.mxu0 0.0
        %967 = vmatpush2.msra.mxu0 0.0
        %968 = vmatprep.subr.mxu0 0.0
        %969 = vmatpush2.msra.mxu0 0.0
        %970 = vmatprep.subr.mxu0 0.0
        %971 = vmatpush2.msra.mxu0 0.0
        %972 = vmatprep.subr.mxu0 0.0
        %973 = vmatpush2.msra.mxu0 0.0
        %974 = vmatprep.subr.mxu0 0.0
        %975 = vmatpush2.msra.mxu0 0.0
        %976 = vmatprep.subr.mxu0 0.0
        %977 = vmatpush2.msra.mxu0 0.0
        %978 = vmatprep.subr.mxu0 0.0
        %979 = vmatpush2.msra.mxu0 0.0
        %980 = vmatprep.subr.mxu0 0.0
        %981 = vmatpush2.msra.mxu0 0.0
        %982 = vmatprep.mubr.f32.mxu0 0.0
        %983 = vmatmul.mubr.f32.gmra.mxu0 %v851
        %v984 = vpop.f32.mrf.mxu0
        %v985 = vadd.f32 %v906, %v984
        %v986 = vpop.f32.mrf.mxu0
        %v987 = vadd.f32 %v910, %v986
        %988 = vmatprep.mubr.f32.mxu0 0.0
        %989 = vmatmul.mubr.f32.gmra.mxu0 %v852
        %v990 = vpop.f32.mrf.mxu0
        %v991 = vadd.f32 %v906, %v990
        %v992 = vpop.f32.mrf.mxu0
        %v993 = vadd.f32 %v910, %v992
        %994 = vdwg.mxu0
        %995 = vmatprep.subr.mxu0 0.0
        %996 = vmatpush1.msra.mxu0 %v900
        %997 = vmatprep.subr.mxu0 0.0
        %998 = vmatpush1.msra.mxu0 %v897
        %999 = vmatprep.subr.mxu0 0.0
        %1000 = vmatpush1.msra.mxu0 %v894
        %1001 = vmatprep.subr.mxu0 0.0
        %1002 = vmatpush1.msra.mxu0 %v891
        %1003 = vmatprep.subr.mxu0 0.0
        %1004 = vmatpush1.msra.mxu0 %v888
        %1005 = vmatprep.subr.mxu0 0.0
        %1006 = vmatpush1.msra.mxu0 %v885
        %1007 = vmatprep.subr.mxu0 0.0
        %1008 = vmatpush1.msra.mxu0 %v882
        %1009 = vmatprep.subr.mxu0 0.0
        %1010 = vmatpush1.msra.mxu0 %v879
        %1011 = vmatprep.subr.mxu0 0.0
        %1012 = vmatpush1.msra.mxu0 %v876
        %1013 = vmatprep.subr.mxu0 0.0
        %1014 = vmatpush1.msra.mxu0 %v873
        %1015 = vmatprep.subr.mxu0 0.0
        %1016 = vmatpush1.msra.mxu0 %v870
        %1017 = vmatprep.subr.mxu0 0.0
        %1018 = vmatpush1.msra.mxu0 %v867
        %1019 = vmatprep.subr.mxu0 0.0
        %1020 = vmatpush1.msra.mxu0 %v864
        %1021 = vmatprep.subr.mxu0 0.0
        %1022 = vmatpush1.msra.mxu0 %v861
        %1023 = vmatprep.subr.mxu0 0.0
        %1024 = vmatpush1.msra.mxu0 %v858
        %1025 = vmatprep.subr.mxu0 0.0
        %1026 = vmatpush1.msra.mxu0 %v855
        %1027 = vmatprep.subr.mxu0 0.0
        %1028 = vmatpush2.msra.mxu0 0.0
        %1029 = vmatprep.subr.mxu0 0.0
        %1030 = vmatpush2.msra.mxu0 0.0
        %1031 = vmatprep.subr.mxu0 0.0
        %1032 = vmatpush2.msra.mxu0 0.0
        %1033 = vmatprep.subr.mxu0 0.0
        %1034 = vmatpush2.msra.mxu0 0.0
        %1035 = vmatprep.subr.mxu0 0.0
        %1036 = vmatpush2.msra.mxu0 0.0
        %1037 = vmatprep.subr.mxu0 0.0
        %1038 = vmatpush2.msra.mxu0 0.0
        %1039 = vmatprep.subr.mxu0 0.0
        %1040 = vmatpush2.msra.mxu0 0.0
        %1041 = vmatprep.subr.mxu0 0.0
        %1042 = vmatpush2.msra.mxu0 0.0
        %1043 = vmatprep.subr.mxu0 0.0
        %1044 = vmatpush2.msra.mxu0 0.0
        %1045 = vmatprep.subr.mxu0 0.0
        %1046 = vmatpush2.msra.mxu0 0.0
        %1047 = vmatprep.subr.mxu0 0.0
        %1048 = vmatpush2.msra.mxu0 0.0
        %1049 = vmatprep.subr.mxu0 0.0
        %1050 = vmatpush2.msra.mxu0 0.0
        %1051 = vmatprep.subr.mxu0 0.0
        %1052 = vmatpush2.msra.mxu0 0.0
        %1053 = vmatprep.subr.mxu0 0.0
        %1054 = vmatpush2.msra.mxu0 0.0
        %1055 = vmatprep.subr.mxu0 0.0
        %1056 = vmatpush2.msra.mxu0 0.0
        %1057 = vmatprep.subr.mxu0 0.0
        %1058 = vmatpush2.msra.mxu0 0.0
        %1059 = vmatprep.mubr.f32.mxu0 0.0
        %1060 = vmatmul.mubr.f32.gmra.mxu0 %v851
        %v1061 = vpop.f32.mrf.mxu0
        %v1062 = vadd.f32 %v914, %v1061
        %v1063 = vpop.f32.mrf.mxu0
        %1064 = vmatprep.mubr.f32.mxu0 0.0
        %1065 = vmatmul.mubr.f32.gmra.mxu0 %v852
        %v1066 = vpop.f32.mrf.mxu0
        %v1067 = vadd.f32 %v914, %v1066
        %v1068 = vpop.f32.mrf.mxu0
        %1069 = vdwg.mxu0
        %vm1070 = vcmask 261120
        %v1072 = vsel %vm1070, %v985, 0
        %v1075 = vsel %vm1070, %v991, 0
        %v1078 = vsel %vm1070, %v987, 0
        %v1081 = vsel %vm1070, %v993, 0
        %1083 = vmatprep.subr.mxu0 0.0
        %1084 = vmatpush1.xpose.msra.mxu0 0.0
        %1085 = vmatprep.subr.mxu0 0.0
        %1086 = vmatpush1.xpose.msra.mxu0 0.0
        %1087 = vmatprep.subr.mxu0 0.0
        %1088 = vmatpush1.xpose.msra.mxu0 0.0
        %1089 = vmatprep.subr.mxu0 0.0
        %1090 = vmatpush1.xpose.msra.mxu0 0.0
        %1091 = vmatprep.subr.mxu0 0.0
        %1092 = vmatpush1.xpose.msra.mxu0 0.0
        %1093 = vmatprep.subr.mxu0 0.0
        %1094 = vmatpush1.xpose.msra.mxu0 0.0
        %1095 = vmatprep.subr.mxu0 0.0
        %1096 = vmatpush1.xpose.msra.mxu0 0.0
        %1097 = vmatprep.subr.mxu0 0.0
        %1098 = vmatpush1.xpose.msra.mxu0 0.0
        %1099 = vmatprep.subr.mxu0 0.0
        %1100 = vmatpush1.xpose.msra.mxu0 0.0
        %1101 = vmatprep.subr.mxu0 0.0
        %1102 = vmatpush1.xpose.msra.mxu0 0.0
        %1103 = vmatprep.subr.mxu0 0.0
        %1104 = vmatpush1.xpose.msra.mxu0 0.0
        %1105 = vmatprep.subr.mxu0 0.0
        %1106 = vmatpush1.xpose.msra.mxu0 0.0
        %1107 = vmatprep.subr.mxu0 0.0
        %1108 = vmatpush1.xpose.msra.mxu0 0.0
        %1109 = vmatprep.subr.mxu0 0.0
        %1110 = vmatpush1.xpose.msra.mxu0 0.0
        %1111 = vmatprep.subr.mxu0 0.0
        %1112 = vmatpush1.xpose.msra.mxu0 %v1081
        %1113 = vmatprep.subr.mxu0 0.0
        %1114 = vmatpush1.xpose.msra.mxu0 %v1078
        %1115 = vmatprep.subr.mxu0 0.0
        %1116 = vmatpush2.xpose.msra.mxu0 0.0
        %1117 = vmatprep.subr.mxu0 0.0
        %1118 = vmatpush2.xpose.msra.mxu0 0.0
        %1119 = vmatprep.subr.mxu0 0.0
        %1120 = vmatpush2.xpose.msra.mxu0 0.0
        %1121 = vmatprep.subr.mxu0 0.0
        %1122 = vmatpush2.xpose.msra.mxu0 0.0
        %1123 = vmatprep.subr.mxu0 0.0
        %1124 = vmatpush2.xpose.msra.mxu0 0.0
        %1125 = vmatprep.subr.mxu0 0.0
        %1126 = vmatpush2.xpose.msra.mxu0 0.0
        %1127 = vmatprep.subr.mxu0 0.0
        %1128 = vmatpush2.xpose.msra.mxu0 0.0
        %1129 = vmatprep.subr.mxu0 0.0
        %1130 = vmatpush2.xpose.msra.mxu0 0.0
        %1131 = vmatprep.subr.mxu0 0.0
        %1132 = vmatpush2.xpose.msra.mxu0 0.0
        %1133 = vmatprep.subr.mxu0 0.0
        %1134 = vmatpush2.xpose.msra.mxu0 0.0
        %1135 = vmatprep.subr.mxu0 0.0
        %1136 = vmatpush2.xpose.msra.mxu0 0.0
        %1137 = vmatprep.subr.mxu0 0.0
        %1138 = vmatpush2.xpose.msra.mxu0 0.0
        %1139 = vmatprep.subr.mxu0 0.0
        %1140 = vmatpush2.xpose.msra.mxu0 0.0
        %1141 = vmatprep.subr.mxu0 0.0
        %1142 = vmatpush2.xpose.msra.mxu0 0.0
        %1143 = vmatprep.subr.mxu0 0.0
        %1144 = vmatpush2.xpose.msra.mxu0 0.0
        %1145 = vmatprep.subr.mxu0 0.0
        %1146 = vmatpush2.xpose.msra.mxu0 0.0
        %1147 = vmatprep.mubr.f32.mxu0 0.0
        %1148 = vmatmul.mubr.f32.gmra.mxu0 %v1072
        %v1149 = vpop.f32.mrf.mxu0
        %v1150 = vadd.f32 0.0, %v1149
        %v1151 = vpop.f32.mrf.mxu0
        %1152 = vmatprep.mubr.f32.mxu0 0.0
        %1153 = vmatmul.mubr.f32.gmra.mxu0 %v1075
        %v1154 = vpop.f32.mrf.mxu0
        %v1155 = vadd.f32 0.0, %v1154
        %v1156 = vpop.f32.mrf.mxu0
        %1157 = vdwg.mxu0
        %v1158 = vmul.f32 %v1150, 0.17677669
        %v1159 = vmul.f32 %v1155, 0.17677669
        %vm1160 = vcmask 130048
        %v1161 = vsel %vm1160, %v1158, -inf
        %1162 = vmax.xlane.f32.xlu0 %v1161
        %v1163 = vpop.xlane.xlu0 %1162
        %v1164 = vsel %vm1160, %v1159, -inf
        %1165 = vmax.xlane.f32.xlu0 %v1164
        %v1166 = vpop.xlane.xlu0 %1165
        %v1167 = vsub.f32 %v1158, %v1163
        %v1168 = vsub.f32 %v1159, %v1166
        %v1169 = vmul.f32 %v1167, 1.442695
        %v1170 = vpow.pop %v1169
        %v1171 = vmul.f32 %v1168, 1.442695
        %v1172 = vpow.pop %v1171
        %v1173 = vsel %vm1160, %v1170, 0.0
        %1174 = vadd.xlane.f32.xlu0 %v1173
        %v1175 = vpop.xlane.xlu0 %1174
        %v1176 = vsel %vm1160, %v1172, 0.0
        %1177 = vadd.xlane.f32.xlu0 %v1176
        %v1178 = vpop.xlane.xlu0 %1177
        %v1179 = vrcp.pop %v1175
        %v1180 = vrcp.pop %v1178
        %v1181 = vmul.f32 %v1170, %v1179
        %v1182 = vmul.f32 %v1172, %v1180
        %v1184 = vsel %vm1160, %v1181, 0
        %v1187 = vsel %vm1160, %v1182, 0
        %1189 = vmatprep.subr.mxu0 0.0
        %1190 = vmatpush1.msra.mxu0 0.0
        %1191 = vmatprep.subr.mxu0 0.0
        %1192 = vmatpush1.msra.mxu0 0.0
        %1193 = vmatprep.subr.mxu0 0.0
        %1194 = vmatpush1.msra.mxu0 0.0
        %1195 = vmatprep.subr.mxu0 0.0
        %1196 = vmatpush1.msra.mxu0 0.0
        %1197 = vmatprep.subr.mxu0 0.0
        %1198 = vmatpush1.msra.mxu0 0.0
        %1199 = vmatprep.subr.mxu0 0.0
        %1200 = vmatpush1.msra.mxu0 0.0
        %1201 = vmatprep.subr.mxu0 0.0
        %1202 = vmatpush1.msra.mxu0 0.0
        %1203 = vmatprep.subr.mxu0 0.0
        %1204 = vmatpush1.msra.mxu0 0.0
        %1205 = vmatprep.subr.mxu0 0.0
        %1206 = vmatpush1.msra.mxu0 0.0
        %1207 = vmatprep.subr.mxu0 0.0
        %1208 = vmatpush1.msra.mxu0 0.0
        %1209 = vmatprep.subr.mxu0 0.0
        %1210 = vmatpush1.msra.mxu0 0.0
        %1211 = vmatprep.subr.mxu0 0.0
        %1212 = vmatpush1.msra.mxu0 0.0
        %1213 = vmatprep.subr.mxu0 0.0
        %1214 = vmatpush1.msra.mxu0 0.0
        %1215 = vmatprep.subr.mxu0 0.0
        %1216 = vmatpush1.msra.mxu0 0.0
        %1217 = vmatprep.subr.mxu0 0.0
        %1218 = vmatpush1.msra.mxu0 %v1067
        %1219 = vmatprep.subr.mxu0 0.0
        %1220 = vmatpush1.msra.mxu0 %v1062
        %1221 = vmatprep.subr.mxu0 0.0
        %1222 = vmatpush2.msra.mxu0 0.0
        %1223 = vmatprep.subr.mxu0 0.0
        %1224 = vmatpush2.msra.mxu0 0.0
        %1225 = vmatprep.subr.mxu0 0.0
        %1226 = vmatpush2.msra.mxu0 0.0
        %1227 = vmatprep.subr.mxu0 0.0
        %1228 = vmatpush2.msra.mxu0 0.0
        %1229 = vmatprep.subr.mxu0 0.0
        %1230 = vmatpush2.msra.mxu0 0.0
        %1231 = vmatprep.subr.mxu0 0.0
        %1232 = vmatpush2.msra.mxu0 0.0
        %1233 = vmatprep.subr.mxu0 0.0
        %1234 = vmatpush2.msra.mxu0 0.0
        %1235 = vmatprep.subr.mxu0 0.0
        %1236 = vmatpush2.msra.mxu0 0.0
        %1237 = vmatprep.subr.mxu0 0.0
        %1238 = vmatpush2.msra.mxu0 0.0
        %1239 = vmatprep.subr.mxu0 0.0
        %1240 = vmatpush2.msra.mxu0 0.0
        %1241 = vmatprep.subr.mxu0 0.0
        %1242 = vmatpush2.msra.mxu0 0.0
        %1243 = vmatprep.subr.mxu0 0.0
        %1244 = vmatpush2.msra.mxu0 0.0
        %1245 = vmatprep.subr.mxu0 0.0
        %1246 = vmatpush2.msra.mxu0 0.0
        %1247 = vmatprep.subr.mxu0 0.0
        %1248 = vmatpush2.msra.mxu0 0.0
        %1249 = vmatprep.subr.mxu0 0.0
        %1250 = vmatpush2.msra.mxu0 0.0
        %1251 = vmatprep.subr.mxu0 0.0
        %1252 = vmatpush2.msra.mxu0 0.0
        %1253 = vmatprep.mubr.f32.mxu0 0.0
        %1254 = vmatmul.mubr.f32.gmra.mxu0 %v1184
        %v1255 = vpop.f32.mrf.mxu0
        %v1256 = vadd.f32 0.0, %v1255
        %v1257 = vpop.f32.mrf.mxu0
        %1258 = vmatprep.mubr.f32.mxu0 0.0
        %1259 = vmatmul.mubr.f32.gmra.mxu0 %v1187
        %v1260 = vpop.f32.mrf.mxu0
        %v1261 = vadd.f32 0.0, %v1260
        %v1262 = vpop.f32.mrf.mxu0
        %1263 = vdwg.mxu0
        %1264 = vrot.lane.b32.xlu0 %v985, 96
        %v1265 = vpop.permute.xlu0 %1264
        %1266 = vrot.lane.b32.xlu0 %v991, 96
        %v1267 = vpop.permute.xlu0 %1266
        %1268 = vrot.lane.b32.xlu0 %v987, 96
        %v1269 = vpop.permute.xlu0 %1268
        %1270 = vrot.lane.b32.xlu0 %v993, 96
        %v1271 = vpop.permute.xlu0 %1270
        %v1272 = vsel %vm1070, %v1265, 0
        %v1274 = vsel %vm1070, %v1267, 0
        %v1276 = vsel %vm1070, %v1269, 0
        %v1278 = vsel %vm1070, %v1271, 0
        %1280 = vmatprep.subr.mxu0 0.0
        %1281 = vmatpush1.xpose.msra.mxu0 0.0
        %1282 = vmatprep.subr.mxu0 0.0
        %1283 = vmatpush1.xpose.msra.mxu0 0.0
        %1284 = vmatprep.subr.mxu0 0.0
        %1285 = vmatpush1.xpose.msra.mxu0 0.0
        %1286 = vmatprep.subr.mxu0 0.0
        %1287 = vmatpush1.xpose.msra.mxu0 0.0
        %1288 = vmatprep.subr.mxu0 0.0
        %1289 = vmatpush1.xpose.msra.mxu0 0.0
        %1290 = vmatprep.subr.mxu0 0.0
        %1291 = vmatpush1.xpose.msra.mxu0 0.0
        %1292 = vmatprep.subr.mxu0 0.0
        %1293 = vmatpush1.xpose.msra.mxu0 0.0
        %1294 = vmatprep.subr.mxu0 0.0
        %1295 = vmatpush1.xpose.msra.mxu0 0.0
        %1296 = vmatprep.subr.mxu0 0.0
        %1297 = vmatpush1.xpose.msra.mxu0 0.0
        %1298 = vmatprep.subr.mxu0 0.0
        %1299 = vmatpush1.xpose.msra.mxu0 0.0
        %1300 = vmatprep.subr.mxu0 0.0
        %1301 = vmatpush1.xpose.msra.mxu0 0.0
        %1302 = vmatprep.subr.mxu0 0.0
        %1303 = vmatpush1.xpose.msra.mxu0 0.0
        %1304 = vmatprep.subr.mxu0 0.0
        %1305 = vmatpush1.xpose.msra.mxu0 0.0
        %1306 = vmatprep.subr.mxu0 0.0
        %1307 = vmatpush1.xpose.msra.mxu0 0.0
        %1308 = vmatprep.subr.mxu0 0.0
        %1309 = vmatpush1.xpose.msra.mxu0 %v1278
        %1310 = vmatprep.subr.mxu0 0.0
        %1311 = vmatpush1.xpose.msra.mxu0 %v1276
        %1312 = vmatprep.subr.mxu0 0.0
        %1313 = vmatpush2.xpose.msra.mxu0 0.0
        %1314 = vmatprep.subr.mxu0 0.0
        %1315 = vmatpush2.xpose.msra.mxu0 0.0
        %1316 = vmatprep.subr.mxu0 0.0
        %1317 = vmatpush2.xpose.msra.mxu0 0.0
        %1318 = vmatprep.subr.mxu0 0.0
        %1319 = vmatpush2.xpose.msra.mxu0 0.0
        %1320 = vmatprep.subr.mxu0 0.0
        %1321 = vmatpush2.xpose.msra.mxu0 0.0
        %1322 = vmatprep.subr.mxu0 0.0
        %1323 = vmatpush2.xpose.msra.mxu0 0.0
        %1324 = vmatprep.subr.mxu0 0.0
        %1325 = vmatpush2.xpose.msra.mxu0 0.0
        %1326 = vmatprep.subr.mxu0 0.0
        %1327 = vmatpush2.xpose.msra.mxu0 0.0
        %1328 = vmatprep.subr.mxu0 0.0
        %1329 = vmatpush2.xpose.msra.mxu0 0.0
        %1330 = vmatprep.subr.mxu0 0.0
        %1331 = vmatpush2.xpose.msra.mxu0 0.0
        %1332 = vmatprep.subr.mxu0 0.0
        %1333 = vmatpush2.xpose.msra.mxu0 0.0
        %1334 = vmatprep.subr.mxu0 0.0
        %1335 = vmatpush2.xpose.msra.mxu0 0.0
        %1336 = vmatprep.subr.mxu0 0.0
        %1337 = vmatpush2.xpose.msra.mxu0 0.0
        %1338 = vmatprep.subr.mxu0 0.0
        %1339 = vmatpush2.xpose.msra.mxu0 0.0
        %1340 = vmatprep.subr.mxu0 0.0
        %1341 = vmatpush2.xpose.msra.mxu0 0.0
        %1342 = vmatprep.subr.mxu0 0.0
        %1343 = vmatpush2.xpose.msra.mxu0 0.0
        %1344 = vmatprep.mubr.f32.mxu0 0.0
        %1345 = vmatmul.mubr.f32.gmra.mxu0 %v1272
        %v1346 = vpop.f32.mrf.mxu0
        %v1347 = vadd.f32 0.0, %v1346
        %v1348 = vpop.f32.mrf.mxu0
        %1349 = vmatprep.mubr.f32.mxu0 0.0
        %1350 = vmatmul.mubr.f32.gmra.mxu0 %v1274
        %v1351 = vpop.f32.mrf.mxu0
        %v1352 = vadd.f32 0.0, %v1351
        %v1353 = vpop.f32.mrf.mxu0
        %1354 = vdwg.mxu0
        %v1355 = vmul.f32 %v1347, 0.17677669
        %v1356 = vmul.f32 %v1352, 0.17677669
        %v1357 = vsel %vm1160, %v1355, -inf
        %1358 = vmax.xlane.f32.xlu0 %v1357
        %v1359 = vpop.xlane.xlu0 %1358
        %v1360 = vsel %vm1160, %v1356, -inf
        %1361 = vmax.xlane.f32.xlu0 %v1360
        %v1362 = vpop.xlane.xlu0 %1361
        %v1363 = vsub.f32 %v1355, %v1359
        %v1364 = vsub.f32 %v1356, %v1362
        %v1365 = vmul.f32 %v1363, 1.442695
        %v1366 = vpow.pop %v1365
        %v1367 = vmul.f32 %v1364, 1.442695
        %v1368 = vpow.pop %v1367
        %v1369 = vsel %vm1160, %v1366, 0.0
        %1370 = vadd.xlane.f32.xlu0 %v1369
        %v1371 = vpop.xlane.xlu0 %1370
        %v1372 = vsel %vm1160, %v1368, 0.0
        %1373 = vadd.xlane.f32.xlu0 %v1372
        %v1374 = vpop.xlane.xlu0 %1373
        %v1375 = vrcp.pop %v1371
        %v1376 = vrcp.pop %v1374
        %v1377 = vmul.f32 %v1366, %v1375
        %v1378 = vmul.f32 %v1368, %v1376
        %1381 = vrot.lane.b32.xlu0 %v1062, 96
        %v1382 = vpop.permute.xlu0 %1381
        %1383 = vrot.lane.b32.xlu0 %v1067, 96
        %v1384 = vpop.permute.xlu0 %1383
        %v1388 = vsel %vm1160, %v1377, 0
        %v1391 = vsel %vm1160, %v1378, 0
        %1393 = vmatprep.subr.mxu0 0.0
        %1394 = vmatpush1.msra.mxu0 0.0
        %1395 = vmatprep.subr.mxu0 0.0
        %1396 = vmatpush1.msra.mxu0 0.0
        %1397 = vmatprep.subr.mxu0 0.0
        %1398 = vmatpush1.msra.mxu0 0.0
        %1399 = vmatprep.subr.mxu0 0.0
        %1400 = vmatpush1.msra.mxu0 0.0
        %1401 = vmatprep.subr.mxu0 0.0
        %1402 = vmatpush1.msra.mxu0 0.0
        %1403 = vmatprep.subr.mxu0 0.0
        %1404 = vmatpush1.msra.mxu0 0.0
        %1405 = vmatprep.subr.mxu0 0.0
        %1406 = vmatpush1.msra.mxu0 0.0
        %1407 = vmatprep.subr.mxu0 0.0
        %1408 = vmatpush1.msra.mxu0 0.0
        %1409 = vmatprep.subr.mxu0 0.0
        %1410 = vmatpush1.msra.mxu0 0.0
        %1411 = vmatprep.subr.mxu0 0.0
        %1412 = vmatpush1.msra.mxu0 0.0
        %1413 = vmatprep.subr.mxu0 0.0
        %1414 = vmatpush1.msra.mxu0 0.0
        %1415 = vmatprep.subr.mxu0 0.0
        %1416 = vmatpush1.msra.mxu0 0.0
        %1417 = vmatprep.subr.mxu0 0.0
        %1418 = vmatpush1.msra.mxu0 0.0
        %1419 = vmatprep.subr.mxu0 0.0
        %1420 = vmatpush1.msra.mxu0 0.0
        %1421 = vmatprep.subr.mxu0 0.0
        %1422 = vmatpush1.msra.mxu0 %v1384
        %1423 = vmatprep.subr.mxu0 0.0
        %1424 = vmatpush1.msra.mxu0 %v1382
        %1425 = vmatprep.subr.mxu0 0.0
        %1426 = vmatpush2.msra.mxu0 0.0
        %1427 = vmatprep.subr.mxu0 0.0
        %1428 = vmatpush2.msra.mxu0 0.0
        %1429 = vmatprep.subr.mxu0 0.0
        %1430 = vmatpush2.msra.mxu0 0.0
        %1431 = vmatprep.subr.mxu0 0.0
        %1432 = vmatpush2.msra.mxu0 0.0
        %1433 = vmatprep.subr.mxu0 0.0
        %1434 = vmatpush2.msra.mxu0 0.0
        %1435 = vmatprep.subr.mxu0 0.0
        %1436 = vmatpush2.msra.mxu0 0.0
        %1437 = vmatprep.subr.mxu0 0.0
        %1438 = vmatpush2.msra.mxu0 0.0
        %1439 = vmatprep.subr.mxu0 0.0
        %1440 = vmatpush2.msra.mxu0 0.0
        %1441 = vmatprep.subr.mxu0 0.0
        %1442 = vmatpush2.msra.mxu0 0.0
        %1443 = vmatprep.subr.mxu0 0.0
        %1444 = vmatpush2.msra.mxu0 0.0
        %1445 = vmatprep.subr.mxu0 0.0
        %1446 = vmatpush2.msra.mxu0 0.0
        %1447 = vmatprep.subr.mxu0 0.0
        %1448 = vmatpush2.msra.mxu0 0.0
        %1449 = vmatprep.subr.mxu0 0.0
        %1450 = vmatpush2.msra.mxu0 0.0
        %1451 = vmatprep.subr.mxu0 0.0
        %1452 = vmatpush2.msra.mxu0 0.0
        %1453 = vmatprep.subr.mxu0 0.0
        %1454 = vmatpush2.msra.mxu0 0.0
        %1455 = vmatprep.subr.mxu0 0.0
        %1456 = vmatpush2.msra.mxu0 0.0
        %1457 = vmatprep.mubr.f32.mxu0 0.0
        %1458 = vmatmul.mubr.f32.gmra.mxu0 %v1388
        %v1459 = vpop.f32.mrf.mxu0
        %v1460 = vadd.f32 0.0, %v1459
        %v1461 = vpop.f32.mrf.mxu0
        %1462 = vmatprep.mubr.f32.mxu0 0.0
        %1463 = vmatmul.mubr.f32.gmra.mxu0 %v1391
        %v1464 = vpop.f32.mrf.mxu0
        %v1465 = vadd.f32 0.0, %v1464
        %v1466 = vpop.f32.mrf.mxu0
        %1467 = vdwg.mxu0
        %1468 = vrot.lane.b32.xlu0 %v985, 64
        %v1469 = vpop.permute.xlu0 %1468
        %1470 = vrot.lane.b32.xlu0 %v991, 64
        %v1471 = vpop.permute.xlu0 %1470
        %1472 = vrot.lane.b32.xlu0 %v987, 64
        %v1473 = vpop.permute.xlu0 %1472
        %1474 = vrot.lane.b32.xlu0 %v993, 64
        %v1475 = vpop.permute.xlu0 %1474
        %v1476 = vsel %vm1070, %v1469, 0
        %v1478 = vsel %vm1070, %v1471, 0
        %v1480 = vsel %vm1070, %v1473, 0
        %v1482 = vsel %vm1070, %v1475, 0
        %1484 = vmatprep.subr.mxu0 0.0
        %1485 = vmatpush1.xpose.msra.mxu0 0.0
        %1486 = vmatprep.subr.mxu0 0.0
        %1487 = vmatpush1.xpose.msra.mxu0 0.0
        %1488 = vmatprep.subr.mxu0 0.0
        %1489 = vmatpush1.xpose.msra.mxu0 0.0
        %1490 = vmatprep.subr.mxu0 0.0
        %1491 = vmatpush1.xpose.msra.mxu0 0.0
        %1492 = vmatprep.subr.mxu0 0.0
        %1493 = vmatpush1.xpose.msra.mxu0 0.0
        %1494 = vmatprep.subr.mxu0 0.0
        %1495 = vmatpush1.xpose.msra.mxu0 0.0
        %1496 = vmatprep.subr.mxu0 0.0
        %1497 = vmatpush1.xpose.msra.mxu0 0.0
        %1498 = vmatprep.subr.mxu0 0.0
        %1499 = vmatpush1.xpose.msra.mxu0 0.0
        %1500 = vmatprep.subr.mxu0 0.0
        %1501 = vmatpush1.xpose.msra.mxu0 0.0
        %1502 = vmatprep.subr.mxu0 0.0
        %1503 = vmatpush1.xpose.msra.mxu0 0.0
        %1504 = vmatprep.subr.mxu0 0.0
        %1505 = vmatpush1.xpose.msra.mxu0 0.0
        %1506 = vmatprep.subr.mxu0 0.0
        %1507 = vmatpush1.xpose.msra.mxu0 0.0
        %1508 = vmatprep.subr.mxu0 0.0
        %1509 = vmatpush1.xpose.msra.mxu0 0.0
        %1510 = vmatprep.subr.mxu0 0.0
        %1511 = vmatpush1.xpose.msra.mxu0 0.0
        %1512 = vmatprep.subr.mxu0 0.0
        %1513 = vmatpush1.xpose.msra.mxu0 %v1482
        %1514 = vmatprep.subr.mxu0 0.0
        %1515 = vmatpush1.xpose.msra.mxu0 %v1480
        %1516 = vmatprep.subr.mxu0 0.0
        %1517 = vmatpush2.xpose.msra.mxu0 0.0
        %1518 = vmatprep.subr.mxu0 0.0
        %1519 = vmatpush2.xpose.msra.mxu0 0.0
        %1520 = vmatprep.subr.mxu0 0.0
        %1521 = vmatpush2.xpose.msra.mxu0 0.0
        %1522 = vmatprep.subr.mxu0 0.0
        %1523 = vmatpush2.xpose.msra.mxu0 0.0
        %1524 = vmatprep.subr.mxu0 0.0
        %1525 = vmatpush2.xpose.msra.mxu0 0.0
        %1526 = vmatprep.subr.mxu0 0.0
        %1527 = vmatpush2.xpose.msra.mxu0 0.0
        %1528 = vmatprep.subr.mxu0 0.0
        %1529 = vmatpush2.xpose.msra.mxu0 0.0
        %1530 = vmatprep.subr.mxu0 0.0
        %1531 = vmatpush2.xpose.msra.mxu0 0.0
        %1532 = vmatprep.subr.mxu0 0.0
        %1533 = vmatpush2.xpose.msra.mxu0 0.0
        %1534 = vmatprep.subr.mxu0 0.0
        %1535 = vmatpush2.xpose.msra.mxu0 0.0
        %1536 = vmatprep.subr.mxu0 0.0
        %1537 = vmatpush2.xpose.msra.mxu0 0.0
        %1538 = vmatprep.subr.mxu0 0.0
        %1539 = vmatpush2.xpose.msra.mxu0 0.0
        %1540 = vmatprep.subr.mxu0 0.0
        %1541 = vmatpush2.xpose.msra.mxu0 0.0
        %1542 = vmatprep.subr.mxu0 0.0
        %1543 = vmatpush2.xpose.msra.mxu0 0.0
        %1544 = vmatprep.subr.mxu0 0.0
        %1545 = vmatpush2.xpose.msra.mxu0 0.0
        %1546 = vmatprep.subr.mxu0 0.0
        %1547 = vmatpush2.xpose.msra.mxu0 0.0
        %1548 = vmatprep.mubr.f32.mxu0 0.0
        %1549 = vmatmul.mubr.f32.gmra.mxu0 %v1476
        %v1550 = vpop.f32.mrf.mxu0
        %v1551 = vadd.f32 0.0, %v1550
        %v1552 = vpop.f32.mrf.mxu0
        %1553 = vmatprep.mubr.f32.mxu0 0.0
        %1554 = vmatmul.mubr.f32.gmra.mxu0 %v1478
        %v1555 = vpop.f32.mrf.mxu0
        %v1556 = vadd.f32 0.0, %v1555
        %v1557 = vpop.f32.mrf.mxu0
        %1558 = vdwg.mxu0
        %v1559 = vmul.f32 %v1551, 0.17677669
        %v1560 = vmul.f32 %v1556, 0.17677669
        %v1561 = vsel %vm1160, %v1559, -inf
        %1562 = vmax.xlane.f32.xlu0 %v1561
        %v1563 = vpop.xlane.xlu0 %1562
        %v1564 = vsel %vm1160, %v1560, -inf
        %1565 = vmax.xlane.f32.xlu0 %v1564
        %v1566 = vpop.xlane.xlu0 %1565
        %v1567 = vsub.f32 %v1559, %v1563
        %v1568 = vsub.f32 %v1560, %v1566
        %v1569 = vmul.f32 %v1567, 1.442695
        %v1570 = vpow.pop %v1569
        %v1571 = vmul.f32 %v1568, 1.442695
        %v1572 = vpow.pop %v1571
        %v1573 = vsel %vm1160, %v1570, 0.0
        %1574 = vadd.xlane.f32.xlu0 %v1573
        %v1575 = vpop.xlane.xlu0 %1574
        %v1576 = vsel %vm1160, %v1572, 0.0
        %1577 = vadd.xlane.f32.xlu0 %v1576
        %v1578 = vpop.xlane.xlu0 %1577
        %v1579 = vrcp.pop %v1575
        %v1580 = vrcp.pop %v1578
        %v1581 = vmul.f32 %v1570, %v1579
        %v1582 = vmul.f32 %v1572, %v1580
        %1583 = vrot.lane.b32.xlu0 %v1062, 64
        %v1584 = vpop.permute.xlu0 %1583
        %1585 = vrot.lane.b32.xlu0 %v1067, 64
        %v1586 = vpop.permute.xlu0 %1585
        %v1590 = vsel %vm1160, %v1581, 0
        %v1593 = vsel %vm1160, %v1582, 0
        %1595 = vmatprep.subr.mxu0 0.0
        %1596 = vmatpush1.msra.mxu0 0.0
        %1597 = vmatprep.subr.mxu0 0.0
        %1598 = vmatpush1.msra.mxu0 0.0
        %1599 = vmatprep.subr.mxu0 0.0
        %1600 = vmatpush1.msra.mxu0 0.0
        %1601 = vmatprep.subr.mxu0 0.0
        %1602 = vmatpush1.msra.mxu0 0.0
        %1603 = vmatprep.subr.mxu0 0.0
        %1604 = vmatpush1.msra.mxu0 0.0
        %1605 = vmatprep.subr.mxu0 0.0
        %1606 = vmatpush1.msra.mxu0 0.0
        %1607 = vmatprep.subr.mxu0 0.0
        %1608 = vmatpush1.msra.mxu0 0.0
        %1609 = vmatprep.subr.mxu0 0.0
        %1610 = vmatpush1.msra.mxu0 0.0
        %1611 = vmatprep.subr.mxu0 0.0
        %1612 = vmatpush1.msra.mxu0 0.0
        %1613 = vmatprep.subr.mxu0 0.0
        %1614 = vmatpush1.msra.mxu0 0.0
        %1615 = vmatprep.subr.mxu0 0.0
        %1616 = vmatpush1.msra.mxu0 0.0
        %1617 = vmatprep.subr.mxu0 0.0
        %1618 = vmatpush1.msra.mxu0 0.0
        %1619 = vmatprep.subr.mxu0 0.0
        %1620 = vmatpush1.msra.mxu0 0.0
        %1621 = vmatprep.subr.mxu0 0.0
        %1622 = vmatpush1.msra.mxu0 0.0
        %1623 = vmatprep.subr.mxu0 0.0
        %1624 = vmatpush1.msra.mxu0 %v1586
        %1625 = vmatprep.subr.mxu0 0.0
        %1626 = vmatpush1.msra.mxu0 %v1584
        %1627 = vmatprep.subr.mxu0 0.0
        %1628 = vmatpush2.msra.mxu0 0.0
        %1629 = vmatprep.subr.mxu0 0.0
        %1630 = vmatpush2.msra.mxu0 0.0
        %1631 = vmatprep.subr.mxu0 0.0
        %1632 = vmatpush2.msra.mxu0 0.0
        %1633 = vmatprep.subr.mxu0 0.0
        %1634 = vmatpush2.msra.mxu0 0.0
        %1635 = vmatprep.subr.mxu0 0.0
        %1636 = vmatpush2.msra.mxu0 0.0
        %1637 = vmatprep.subr.mxu0 0.0
        %1638 = vmatpush2.msra.mxu0 0.0
        %1639 = vmatprep.subr.mxu0 0.0
        %1640 = vmatpush2.msra.mxu0 0.0
        %1641 = vmatprep.subr.mxu0 0.0
        %1642 = vmatpush2.msra.mxu0 0.0
        %1643 = vmatprep.subr.mxu0 0.0
        %1644 = vmatpush2.msra.mxu0 0.0
        %1645 = vmatprep.subr.mxu0 0.0
        %1646 = vmatpush2.msra.mxu0 0.0
        %1647 = vmatprep.subr.mxu0 0.0
        %1648 = vmatpush2.msra.mxu0 0.0
        %1649 = vmatprep.subr.mxu0 0.0
        %1650 = vmatpush2.msra.mxu0 0.0
        %1651 = vmatprep.subr.mxu0 0.0
        %1652 = vmatpush2.msra.mxu0 0.0
        %1653 = vmatprep.subr.mxu0 0.0
        %1654 = vmatpush2.msra.mxu0 0.0
        %1655 = vmatprep.subr.mxu0 0.0
        %1656 = vmatpush2.msra.mxu0 0.0
        %1657 = vmatprep.subr.mxu0 0.0
        %1658 = vmatpush2.msra.mxu0 0.0
        %1659 = vmatprep.mubr.f32.mxu0 0.0
        %1660 = vmatmul.mubr.f32.gmra.mxu0 %v1590
        %v1661 = vpop.f32.mrf.mxu0
        %v1662 = vadd.f32 0.0, %v1661
        %v1663 = vpop.f32.mrf.mxu0
        %1664 = vmatprep.mubr.f32.mxu0 0.0
        %1665 = vmatmul.mubr.f32.gmra.mxu0 %v1593
        %v1666 = vpop.f32.mrf.mxu0
        %v1667 = vadd.f32 0.0, %v1666
        %v1668 = vpop.f32.mrf.mxu0
        %1669 = vdwg.mxu0
        %1670 = vrot.lane.b32.xlu0 %v985, 32
        %v1671 = vpop.permute.xlu0 %1670
        %1672 = vrot.lane.b32.xlu0 %v991, 32
        %v1673 = vpop.permute.xlu0 %1672
        %1674 = vrot.lane.b32.xlu0 %v987, 32
        %v1675 = vpop.permute.xlu0 %1674
        %1676 = vrot.lane.b32.xlu0 %v993, 32
        %v1677 = vpop.permute.xlu0 %1676
        %v1678 = vsel %vm1070, %v1671, 0
        %v1680 = vsel %vm1070, %v1673, 0
        %v1682 = vsel %vm1070, %v1675, 0
        %v1684 = vsel %vm1070, %v1677, 0
        %1686 = vmatprep.subr.mxu0 0.0
        %1687 = vmatpush1.xpose.msra.mxu0 0.0
        %1688 = vmatprep.subr.mxu0 0.0
        %1689 = vmatpush1.xpose.msra.mxu0 0.0
        %1690 = vmatprep.subr.mxu0 0.0
        %1691 = vmatpush1.xpose.msra.mxu0 0.0
        %1692 = vmatprep.subr.mxu0 0.0
        %1693 = vmatpush1.xpose.msra.mxu0 0.0
        %1694 = vmatprep.subr.mxu0 0.0
        %1695 = vmatpush1.xpose.msra.mxu0 0.0
        %1696 = vmatprep.subr.mxu0 0.0
        %1697 = vmatpush1.xpose.msra.mxu0 0.0
        %1698 = vmatprep.subr.mxu0 0.0
        %1699 = vmatpush1.xpose.msra.mxu0 0.0
        %1700 = vmatprep.subr.mxu0 0.0
        %1701 = vmatpush1.xpose.msra.mxu0 0.0
        %1702 = vmatprep.subr.mxu0 0.0
        %1703 = vmatpush1.xpose.msra.mxu0 0.0
        %1704 = vmatprep.subr.mxu0 0.0
        %1705 = vmatpush1.xpose.msra.mxu0 0.0
        %1706 = vmatprep.subr.mxu0 0.0
        %1707 = vmatpush1.xpose.msra.mxu0 0.0
        %1708 = vmatprep.subr.mxu0 0.0
        %1709 = vmatpush1.xpose.msra.mxu0 0.0
        %1710 = vmatprep.subr.mxu0 0.0
        %1711 = vmatpush1.xpose.msra.mxu0 0.0
        %1712 = vmatprep.subr.mxu0 0.0
        %1713 = vmatpush1.xpose.msra.mxu0 0.0
        %1714 = vmatprep.subr.mxu0 0.0
        %1715 = vmatpush1.xpose.msra.mxu0 %v1684
        %1716 = vmatprep.subr.mxu0 0.0
        %1717 = vmatpush1.xpose.msra.mxu0 %v1682
        %1718 = vmatprep.subr.mxu0 0.0
        %1719 = vmatpush2.xpose.msra.mxu0 0.0
        %1720 = vmatprep.subr.mxu0 0.0
        %1721 = vmatpush2.xpose.msra.mxu0 0.0
        %1722 = vmatprep.subr.mxu0 0.0
        %1723 = vmatpush2.xpose.msra.mxu0 0.0
        %1724 = vmatprep.subr.mxu0 0.0
        %1725 = vmatpush2.xpose.msra.mxu0 0.0
        %1726 = vmatprep.subr.mxu0 0.0
        %1727 = vmatpush2.xpose.msra.mxu0 0.0
        %1728 = vmatprep.subr.mxu0 0.0
        %1729 = vmatpush2.xpose.msra.mxu0 0.0
        %1730 = vmatprep.subr.mxu0 0.0
        %1731 = vmatpush2.xpose.msra.mxu0 0.0
        %1732 = vmatprep.subr.mxu0 0.0
        %1733 = vmatpush2.xpose.msra.mxu0 0.0
        %1734 = vmatprep.subr.mxu0 0.0
        %1735 = vmatpush2.xpose.msra.mxu0 0.0
        %1736 = vmatprep.subr.mxu0 0.0
        %1737 = vmatpush2.xpose.msra.mxu0 0.0
        %1738 = vmatprep.subr.mxu0 0.0
        %1739 = vmatpush2.xpose.msra.mxu0 0.0
        %1740 = vmatprep.subr.mxu0 0.0
        %1741 = vmatpush2.xpose.msra.mxu0 0.0
        %1742 = vmatprep.subr.mxu0 0.0
        %1743 = vmatpush2.xpose.msra.mxu0 0.0
        %1744 = vmatprep.subr.mxu0 0.0
        %1745 = vmatpush2.xpose.msra.mxu0 0.0
        %1746 = vmatprep.subr.mxu0 0.0
        %1747 = vmatpush2.xpose.msra.mxu0 0.0
        %1748 = vmatprep.subr.mxu0 0.0
        %1749 = vmatpush2.xpose.msra.mxu0 0.0
        %1750 = vmatprep.mubr.f32.mxu0 0.0
        %1751 = vmatmul.mubr.f32.gmra.mxu0 %v1678
        %v1752 = vpop.f32.mrf.mxu0
        %v1753 = vadd.f32 0.0, %v1752
        %v1754 = vpop.f32.mrf.mxu0
        %1755 = vmatprep.mubr.f32.mxu0 0.0
        %1756 = vmatmul.mubr.f32.gmra.mxu0 %v1680
        %v1757 = vpop.f32.mrf.mxu0
        %v1758 = vadd.f32 0.0, %v1757
        %v1759 = vpop.f32.mrf.mxu0
        %1760 = vdwg.mxu0
        %v1761 = vmul.f32 %v1753, 0.17677669
        %v1762 = vmul.f32 %v1758, 0.17677669
        %v1763 = vsel %vm1160, %v1761, -inf
        %1764 = vmax.xlane.f32.xlu0 %v1763
        %v1765 = vpop.xlane.xlu0 %1764
        %v1766 = vsel %vm1160, %v1762, -inf
        %1767 = vmax.xlane.f32.xlu0 %v1766
        %v1768 = vpop.xlane.xlu0 %1767
        %v1769 = vsub.f32 %v1761, %v1765
        %v1770 = vsub.f32 %v1762, %v1768
        %v1771 = vmul.f32 %v1769, 1.442695
        %v1772 = vpow.pop %v1771
        %v1773 = vmul.f32 %v1770, 1.442695
        %v1774 = vpow.pop %v1773
        %v1775 = vsel %vm1160, %v1772, 0.0
        %1776 = vadd.xlane.f32.xlu0 %v1775
        %v1777 = vpop.xlane.xlu0 %1776
        %v1778 = vsel %vm1160, %v1774, 0.0
        %1779 = vadd.xlane.f32.xlu0 %v1778
        %v1780 = vpop.xlane.xlu0 %1779
        %v1781 = vrcp.pop %v1777
        %v1782 = vrcp.pop %v1780
        %v1783 = vmul.f32 %v1772, %v1781
        %v1784 = vmul.f32 %v1774, %v1782
        %1785 = vrot.lane.b32.xlu0 %v1062, 32
        %v1786 = vpop.permute.xlu0 %1785
        %1787 = vrot.lane.b32.xlu0 %v1067, 32
        %v1788 = vpop.permute.xlu0 %1787
        %v1792 = vsel %vm1160, %v1783, 0
        %v1795 = vsel %vm1160, %v1784, 0
        %1797 = vmatprep.subr.mxu0 0.0
        %1798 = vmatpush1.msra.mxu0 0.0
        %1799 = vmatprep.subr.mxu0 0.0
        %1800 = vmatpush1.msra.mxu0 0.0
        %1801 = vmatprep.subr.mxu0 0.0
        %1802 = vmatpush1.msra.mxu0 0.0
        %1803 = vmatprep.subr.mxu0 0.0
        %1804 = vmatpush1.msra.mxu0 0.0
        %1805 = vmatprep.subr.mxu0 0.0
        %1806 = vmatpush1.msra.mxu0 0.0
        %1807 = vmatprep.subr.mxu0 0.0
        %1808 = vmatpush1.msra.mxu0 0.0
        %1809 = vmatprep.subr.mxu0 0.0
        %1810 = vmatpush1.msra.mxu0 0.0
        %1811 = vmatprep.subr.mxu0 0.0
        %1812 = vmatpush1.msra.mxu0 0.0
        %1813 = vmatprep.subr.mxu0 0.0
        %1814 = vmatpush1.msra.mxu0 0.0
        %1815 = vmatprep.subr.mxu0 0.0
        %1816 = vmatpush1.msra.mxu0 0.0
        %1817 = vmatprep.subr.mxu0 0.0
        %1818 = vmatpush1.msra.mxu0 0.0
        %1819 = vmatprep.subr.mxu0 0.0
        %1820 = vmatpush1.msra.mxu0 0.0
        %1821 = vmatprep.subr.mxu0 0.0
        %1822 = vmatpush1.msra.mxu0 0.0
        %1823 = vmatprep.subr.mxu0 0.0
        %1824 = vmatpush1.msra.mxu0 0.0
        %1825 = vmatprep.subr.mxu0 0.0
        %1826 = vmatpush1.msra.mxu0 %v1788
        %1827 = vmatprep.subr.mxu0 0.0
        %1828 = vmatpush1.msra.mxu0 %v1786
        %1829 = vmatprep.subr.mxu0 0.0
        %1830 = vmatpush2.msra.mxu0 0.0
        %1831 = vmatprep.subr.mxu0 0.0
        %1832 = vmatpush2.msra.mxu0 0.0
        %1833 = vmatprep.subr.mxu0 0.0
        %1834 = vmatpush2.msra.mxu0 0.0
        %1835 = vmatprep.subr.mxu0 0.0
        %1836 = vmatpush2.msra.mxu0 0.0
        %1837 = vmatprep.subr.mxu0 0.0
        %1838 = vmatpush2.msra.mxu0 0.0
        %1839 = vmatprep.subr.mxu0 0.0
        %1840 = vmatpush2.msra.mxu0 0.0
        %1841 = vmatprep.subr.mxu0 0.0
        %1842 = vmatpush2.msra.mxu0 0.0
        %1843 = vmatprep.subr.mxu0 0.0
        %1844 = vmatpush2.msra.mxu0 0.0
        %1845 = vmatprep.subr.mxu0 0.0
        %1846 = vmatpush2.msra.mxu0 0.0
        %1847 = vmatprep.subr.mxu0 0.0
        %1848 = vmatpush2.msra.mxu0 0.0
        %1849 = vmatprep.subr.mxu0 0.0
        %1850 = vmatpush2.msra.mxu0 0.0
        %1851 = vmatprep.subr.mxu0 0.0
        %1852 = vmatpush2.msra.mxu0 0.0
        %1853 = vmatprep.subr.mxu0 0.0
        %1854 = vmatpush2.msra.mxu0 0.0
        %1855 = vmatprep.subr.mxu0 0.0
        %1856 = vmatpush2.msra.mxu0 0.0
        %1857 = vmatprep.subr.mxu0 0.0
        %1858 = vmatpush2.msra.mxu0 0.0
        %1859 = vmatprep.subr.mxu0 0.0
        %1860 = vmatpush2.msra.mxu0 0.0
        %1861 = vmatprep.mubr.f32.mxu0 0.0
        %1862 = vmatmul.mubr.f32.gmra.mxu0 %v1792
        %v1863 = vpop.f32.mrf.mxu0
        %v1864 = vadd.f32 0.0, %v1863
        %v1865 = vpop.f32.mrf.mxu0
        %1866 = vmatprep.mubr.f32.mxu0 0.0
        %1867 = vmatmul.mubr.f32.gmra.mxu0 %v1795
        %v1868 = vpop.f32.mrf.mxu0
        %v1869 = vadd.f32 0.0, %v1868
        %v1870 = vpop.f32.mrf.mxu0
        %1871 = vdwg.mxu0
        %1874 = vrot.lane.b32.xlu0 %v1460, 32
        %v1875 = vpop.permute.xlu0 %1874
        %1876 = vrot.lane.b32.xlu0 %v1465, 32
        %v1877 = vpop.permute.xlu0 %1876
        %1882 = vrot.lane.b32.xlu0 %v1662, 64
        %v1883 = vpop.permute.xlu0 %1882
        %1884 = vrot.lane.b32.xlu0 %v1667, 64
        %v1885 = vpop.permute.xlu0 %1884
        %1890 = vrot.lane.b32.xlu0 %v1864, 96
        %v1891 = vpop.permute.xlu0 %1890
        %1892 = vrot.lane.b32.xlu0 %v1869, 96
        %v1893 = vpop.permute.xlu0 %1892
        %v1896 = vsel %vm1070, %v1256, %v1875
        %v1897 = vsel %vm1070, %v1261, %v1877
        %v1898 = vsel %vm728, %v1896, %v1883
        %v1899 = vsel %vm728, %v1897, %v1885
        %vm1900 = vcmask 785408
        %v1901 = vsel %vm1900, %v1898, %v1891
        %v1902 = vsel %vm1900, %v1899, %v1893
        %v1903 = vld [vmem:[#allocation4] sm:$0xff]
        %v1904 = vld [vmem:[#allocation4 + $0x8] sm:$0xff]
        %v1905 = vld [vmem:[#allocation4 + $0x10] sm:$0xff]
        %v1906 = vld [vmem:[#allocation4 + $0x18] sm:$0xff]
        %v1907 = vld [vmem:[#allocation4 + $0x20] sm:$0xff]
        %v1908 = vld [vmem:[#allocation4 + $0x28] sm:$0xff]
        %v1909 = vld [vmem:[#allocation4 + $0x30] sm:$0xff]
        %v1910 = vld [vmem:[#allocation4 + $0x38] sm:$0xff]
        %v1911 = vld [vmem:[#allocation4 + $0x40] sm:$0xff]
        %v1912 = vld [vmem:[#allocation4 + $0x48] sm:$0xff]
        %v1913 = vld [vmem:[#allocation4 + $0x50] sm:$0xff]
        %v1914 = vld [vmem:[#allocation4 + $0x58] sm:$0xff]
        %v1915 = vld [vmem:[#allocation4 + $0x60] sm:$0xff]
        %v1916 = vld [vmem:[#allocation4 + $0x68] sm:$0xff]
        %v1917 = vld [vmem:[#allocation4 + $0x70] sm:$0xff]
        %v1918 = vld [vmem:[#allocation4 + $0x78] sm:$0xff]
        %v1919 = vld [vmem:[%s9] sm:$0x1]
        %v1921 = vlaneseq
        %v1922 = vshrl.u32 %v1921, 7
        %v1923 = vsub.s32 0, %v1922
        %v1924 = vrot.slane %v1919, %v1923
        %1926 = vmatprep.subr.mxu0 0.0
        %1927 = vmatpush1.msra.mxu0 %v1918
        %1928 = vmatprep.subr.mxu0 0.0
        %1929 = vmatpush1.msra.mxu0 %v1917
        %1930 = vmatprep.subr.mxu0 0.0
        %1931 = vmatpush1.msra.mxu0 %v1916
        %1932 = vmatprep.subr.mxu0 0.0
        %1933 = vmatpush1.msra.mxu0 %v1915
        %1934 = vmatprep.subr.mxu0 0.0
        %1935 = vmatpush1.msra.mxu0 %v1914
        %1936 = vmatprep.subr.mxu0 0.0
        %1937 = vmatpush1.msra.mxu0 %v1913
        %1938 = vmatprep.subr.mxu0 0.0
        %1939 = vmatpush1.msra.mxu0 %v1912
        %1940 = vmatprep.subr.mxu0 0.0
        %1941 = vmatpush1.msra.mxu0 %v1911
        %1942 = vmatprep.subr.mxu0 0.0
        %1943 = vmatpush1.msra.mxu0 %v1910
        %1944 = vmatprep.subr.mxu0 0.0
        %1945 = vmatpush1.msra.mxu0 %v1909
        %1946 = vmatprep.subr.mxu0 0.0
        %1947 = vmatpush1.msra.mxu0 %v1908
        %1948 = vmatprep.subr.mxu0 0.0
        %1949 = vmatpush1.msra.mxu0 %v1907
        %1950 = vmatprep.subr.mxu0 0.0
        %1951 = vmatpush1.msra.mxu0 %v1906
        %1952 = vmatprep.subr.mxu0 0.0
        %1953 = vmatpush1.msra.mxu0 %v1905
        %1954 = vmatprep.subr.mxu0 0.0
        %1955 = vmatpush1.msra.mxu0 %v1904
        %1956 = vmatprep.subr.mxu0 0.0
        %1957 = vmatpush1.msra.mxu0 %v1903
        %1958 = vmatprep.subr.mxu0 0.0
        %1959 = vmatpush2.msra.mxu0 0.0
        %1960 = vmatprep.subr.mxu0 0.0
        %1961 = vmatpush2.msra.mxu0 0.0
        %1962 = vmatprep.subr.mxu0 0.0
        %1963 = vmatpush2.msra.mxu0 0.0
        %1964 = vmatprep.subr.mxu0 0.0
        %1965 = vmatpush2.msra.mxu0 0.0
        %1966 = vmatprep.subr.mxu0 0.0
        %1967 = vmatpush2.msra.mxu0 0.0
        %1968 = vmatprep.subr.mxu0 0.0
        %1969 = vmatpush2.msra.mxu0 0.0
        %1970 = vmatprep.subr.mxu0 0.0
        %1971 = vmatpush2.msra.mxu0 0.0
        %1972 = vmatprep.subr.mxu0 0.0
        %1973 = vmatpush2.msra.mxu0 0.0
        %1974 = vmatprep.subr.mxu0 0.0
        %1975 = vmatpush2.msra.mxu0 0.0
        %1976 = vmatprep.subr.mxu0 0.0
        %1977 = vmatpush2.msra.mxu0 0.0
        %1978 = vmatprep.subr.mxu0 0.0
        %1979 = vmatpush2.msra.mxu0 0.0
        %1980 = vmatprep.subr.mxu0 0.0
        %1981 = vmatpush2.msra.mxu0 0.0
        %1982 = vmatprep.subr.mxu0 0.0
        %1983 = vmatpush2.msra.mxu0 0.0
        %1984 = vmatprep.subr.mxu0 0.0
        %1985 = vmatpush2.msra.mxu0 0.0
        %1986 = vmatprep.subr.mxu0 0.0
        %1987 = vmatpush2.msra.mxu0 0.0
        %1988 = vmatprep.subr.mxu0 0.0
        %1989 = vmatpush2.msra.mxu0 0.0
        %1990 = vmatprep.mubr.f32.mxu0 0.0
        %1991 = vmatmul.mubr.f32.gmra.mxu0 %v1901
        %v1992 = vpop.f32.mrf.mxu0
        %v1993 = vadd.f32 %v1924, %v1992
        %v1994 = vpop.f32.mrf.mxu0
        %1995 = vmatprep.mubr.f32.mxu0 0.0
        %1996 = vmatmul.mubr.f32.gmra.mxu0 %v1902
        %v1997 = vpop.f32.mrf.mxu0
        %v1998 = vadd.f32 %v1924, %v1997
        %v1999 = vpop.f32.mrf.mxu0
        %2000 = vdwg.mxu0
        %v2001 = vadd.f32 %v851, %v1993
        %v2002 = vadd.f32 %v852, %v1998
        %v2003 = vld [vmem:[%s10] sm:$0x1]
        %v2004 = vld [vmem:[%s11] sm:$0x1]
        %2005 = vadd.xlane.f32.xlu0 %v2001
        %v2006 = vpop.xlane.xlu0 %2005
        %2007 = vadd.xlane.f32.xlu0 %v2002
        %v2008 = vpop.xlane.xlu0 %2007
        %v2009 = vmul.f32 %v2006, %v814
        %v2010 = vmul.f32 %v2008, %v814
        %v2011 = vsub.f32 %v2001, %v2009
        %v2012 = vsub.f32 %v2002, %v2010
        %v2013 = vmul.f32 %v2011, %v2011
        %v2014 = vmul.f32 %v2012, %v2012
        %2015 = vadd.xlane.f32.xlu0 %v2013
        %v2016 = vpop.xlane.xlu0 %2015
        %2017 = vadd.xlane.f32.xlu0 %v2014
        %v2018 = vpop.xlane.xlu0 %2017
        %v2019 = vmul.f32 %v2016, %v814
        %v2020 = vmul.f32 %v2018, %v814
        %v2021 = vadd.f32 %v2019, 1e-05
        %v2022 = vadd.f32 %v2020, 1e-05
        %v2023 = vrsqrt.pop %v2021
        %v2024 = vrsqrt.pop %v2022
        %v2025 = vmul.f32 %v2011, %v2023
        %v2026 = vmul.f32 %v2012, %v2024
        %v2028 = vlaneseq
        %v2029 = vshrl.u32 %v2028, 7
        %v2030 = vsub.s32 0, %v2029
        %v2031 = vrot.slane %v2003, %v2030
        %v2033 = vmul.f32 %v2025, %v2031
        %v2034 = vmul.f32 %v2026, %v2031
        %v2036 = vlaneseq
        %v2037 = vshrl.u32 %v2036, 7
        %v2038 = vsub.s32 0, %v2037
        %v2039 = vrot.slane %v2004, %v2038
        %v2041 = vadd.f32 %v2033, %v2039
        %v2042 = vadd.f32 %v2034, %v2039
        %v2043 = vld [vmem:[#allocation6] sm:$0xff]
        %v2044 = vld [vmem:[#allocation6 + $0x8] sm:$0xff]
        %v2045 = vld [vmem:[#allocation6 + $0x10] sm:$0xff]
        %v2046 = vld [vmem:[#allocation6 + $0x18] sm:$0xff]
        %v2047 = vld [vmem:[#allocation6 + $0x20] sm:$0xff]
        %v2048 = vld [vmem:[#allocation6 + $0x28] sm:$0xff]
        %v2049 = vld [vmem:[#allocation6 + $0x30] sm:$0xff]
        %v2050 = vld [vmem:[#allocation6 + $0x38] sm:$0xff]
        %v2051 = vld [vmem:[#allocation6 + $0x40] sm:$0xff]
        %v2052 = vld [vmem:[#allocation6 + $0x48] sm:$0xff]
        %v2053 = vld [vmem:[#allocation6 + $0x50] sm:$0xff]
        %v2054 = vld [vmem:[#allocation6 + $0x58] sm:$0xff]
        %v2055 = vld [vmem:[#allocation6 + $0x60] sm:$0xff]
        %v2056 = vld [vmem:[#allocation6 + $0x68] sm:$0xff]
        %v2057 = vld [vmem:[#allocation6 + $0x70] sm:$0xff]
        %v2058 = vld [vmem:[#allocation6 + $0x78] sm:$0xff]
        %v2059 = vld [vmem:[#allocation6 + $0x80] sm:$0xff]
        %v2060 = vld [vmem:[#allocation6 + $0x88] sm:$0xff]
        %v2061 = vld [vmem:[#allocation6 + $0x90] sm:$0xff]
        %v2062 = vld [vmem:[#allocation6 + $0x98] sm:$0xff]
        %v2063 = vld [vmem:[#allocation6 + $0xa0] sm:$0xff]
        %v2064 = vld [vmem:[#allocation6 + $0xa8] sm:$0xff]
        %v2065 = vld [vmem:[#allocation6 + $0xb0] sm:$0xff]
        %v2066 = vld [vmem:[#allocation6 + $0xb8] sm:$0xff]
        %v2067 = vld [vmem:[#allocation6 + $0xc0] sm:$0xff]
        %v2068 = vld [vmem:[#allocation6 + $0xc8] sm:$0xff]
        %v2069 = vld [vmem:[#allocation6 + $0xd0] sm:$0xff]
        %v2070 = vld [vmem:[#allocation6 + $0xd8] sm:$0xff]
        %v2071 = vld [vmem:[#allocation6 + $0xe0] sm:$0xff]
        %v2072 = vld [vmem:[#allocation6 + $0xe8] sm:$0xff]
        %v2073 = vld [vmem:[#allocation6 + $0xf0] sm:$0xff]
        %v2074 = vld [vmem:[#allocation6 + $0xf8] sm:$0xff]
        %v2075 = vld [vmem:[%s13] sm:$0x3]
        %v2077 = vlaneseq
        %v2078 = vshrl.u32 %v2077, 7
        %v2079 = vsub.s32 0, %v2078
        %v2080 = vrot.slane %v2075, %v2079
        %v2081 = vlaneseq
        %v2082 = vshrl.u32 %v2081, 7
        %v2083 = vsub.s32 1, %v2082
        %v2084 = vrot.slane %v2075, %v2083
        %2087 = vmatprep.subr.mxu0 %v2074
        %2088 = vmatpush1.msra.mxu0 %v2073
        %2089 = vmatprep.subr.mxu0 %v2072
        %2090 = vmatpush1.msra.mxu0 %v2071
        %2091 = vmatprep.subr.mxu0 %v2070
        %2092 = vmatpush1.msra.mxu0 %v2069
        %2093 = vmatprep.subr.mxu0 %v2068
        %2094 = vmatpush1.msra.mxu0 %v2067
        %2095 = vmatprep.subr.mxu0 %v2066
        %2096 = vmatpush1.msra.mxu0 %v2065
        %2097 = vmatprep.subr.mxu0 %v2064
        %2098 = vmatpush1.msra.mxu0 %v2063
        %2099 = vmatprep.subr.mxu0 %v2062
        %2100 = vmatpush1.msra.mxu0 %v2061
        %2101 = vmatprep.subr.mxu0 %v2060
        %2102 = vmatpush1.msra.mxu0 %v2059
        %2103 = vmatprep.subr.mxu0 %v2058
        %2104 = vmatpush1.msra.mxu0 %v2057
        %2105 = vmatprep.subr.mxu0 %v2056
        %2106 = vmatpush1.msra.mxu0 %v2055
        %2107 = vmatprep.subr.mxu0 %v2054
        %2108 = vmatpush1.msra.mxu0 %v2053
        %2109 = vmatprep.subr.mxu0 %v2052
        %2110 = vmatpush1.msra.mxu0 %v2051
        %2111 = vmatprep.subr.mxu0 %v2050
        %2112 = vmatpush1.msra.mxu0 %v2049
        %2113 = vmatprep.subr.mxu0 %v2048
        %2114 = vmatpush1.msra.mxu0 %v2047
        %2115 = vmatprep.subr.mxu0 %v2046
        %2116 = vmatpush1.msra.mxu0 %v2045
        %2117 = vmatprep.subr.mxu0 %v2044
        %2118 = vmatpush1.msra.mxu0 %v2043
        %2119 = vmatprep.subr.mxu0 0.0
        %2120 = vmatpush2.msra.mxu0 0.0
        %2121 = vmatprep.subr.mxu0 0.0
        %2122 = vmatpush2.msra.mxu0 0.0
        %2123 = vmatprep.subr.mxu0 0.0
        %2124 = vmatpush2.msra.mxu0 0.0
        %2125 = vmatprep.subr.mxu0 0.0
        %2126 = vmatpush2.msra.mxu0 0.0
        %2127 = vmatprep.subr.mxu0 0.0
        %2128 = vmatpush2.msra.mxu0 0.0
        %2129 = vmatprep.subr.mxu0 0.0
        %2130 = vmatpush2.msra.mxu0 0.0
        %2131 = vmatprep.subr.mxu0 0.0
        %2132 = vmatpush2.msra.mxu0 0.0
        %2133 = vmatprep.subr.mxu0 0.0
        %2134 = vmatpush2.msra.mxu0 0.0
        %2135 = vmatprep.subr.mxu0 0.0
        %2136 = vmatpush2.msra.mxu0 0.0
        %2137 = vmatprep.subr.mxu0 0.0
        %2138 = vmatpush2.msra.mxu0 0.0
        %2139 = vmatprep.subr.mxu0 0.0
        %2140 = vmatpush2.msra.mxu0 0.0
        %2141 = vmatprep.subr.mxu0 0.0
        %2142 = vmatpush2.msra.mxu0 0.0
        %2143 = vmatprep.subr.mxu0 0.0
        %2144 = vmatpush2.msra.mxu0 0.0
        %2145 = vmatprep.subr.mxu0 0.0
        %2146 = vmatpush2.msra.mxu0 0.0
        %2147 = vmatprep.subr.mxu0 0.0
        %2148 = vmatpush2.msra.mxu0 0.0
        %2149 = vmatprep.subr.mxu0 0.0
        %2150 = vmatpush2.msra.mxu0 0.0
        %2151 = vmatprep.mubr.f32.mxu0 0.0
        %2152 = vmatmul.mubr.f32.gmra.mxu0 %v2041
        %v2153 = vpop.f32.mrf.mxu0
        %v2154 = vadd.f32 %v2080, %v2153
        %v2155 = vpop.f32.mrf.mxu0
        %v2156 = vadd.f32 %v2084, %v2155
        %2157 = vmatprep.mubr.f32.mxu0 0.0
        %2158 = vmatmul.mubr.f32.gmra.mxu0 %v2042
        %v2159 = vpop.f32.mrf.mxu0
        %v2160 = vadd.f32 %v2080, %v2159
        %v2161 = vpop.f32.mrf.mxu0
        %v2162 = vadd.f32 %v2084, %v2161
        %2163 = vdwg.mxu0
        %v2164 = vmul.f32 %v2154, 0.5
        %v2165 = vmul.f32 %v2156, 0.5
        %v2166 = vmul.f32 %v2160, 0.5
        %v2167 = vmul.f32 %v2162, 0.5
        %v2168 = vmul.f32 %v2154, 0.044715
        %v2169 = vmul.f32 %v2156, 0.044715
        %v2170 = vmul.f32 %v2160, 0.044715
        %v2171 = vmul.f32 %v2162, 0.044715
        %v2172 = vmul.f32 %v2168, %v2154
        %v2173 = vmul.f32 %v2169, %v2156
        %v2174 = vmul.f32 %v2170, %v2160
        %v2175 = vmul.f32 %v2171, %v2162
        %v2176 = vmul.f32 %v2172, %v2154
        %v2177 = vmul.f32 %v2173, %v2156
        %v2178 = vmul.f32 %v2174, %v2160
        %v2179 = vmul.f32 %v2175, %v2162
        %v2180 = vadd.f32 %v2154, %v2176
        %v2181 = vadd.f32 %v2156, %v2177
        %v2182 = vadd.f32 %v2160, %v2178
        %v2183 = vadd.f32 %v2162, %v2179
        %v2184 = vmul.f32 %v2180, 0.7978846
        %v2185 = vmul.f32 %v2181, 0.7978846
        %v2186 = vmul.f32 %v2182, 0.7978846
        %v2187 = vmul.f32 %v2183, 0.7978846
        %v2188 = vtanh.pop %v2184
        %v2189 = vtanh.pop %v2185
        %v2190 = vtanh.pop %v2186
        %v2191 = vtanh.pop %v2187
        %v2192 = vadd.f32 %v2188, 1.0
        %v2193 = vadd.f32 %v2189, 1.0
        %v2194 = vadd.f32 %v2190, 1.0
        %v2195 = vadd.f32 %v2191, 1.0
        %v2196 = vmul.f32 %v2164, %v2192
        %v2197 = vmul.f32 %v2165, %v2193
        %v2198 = vmul.f32 %v2166, %v2194
        %v2199 = vmul.f32 %v2167, %v2195
        %v2200 = vld [vmem:[#allocation7] sm:$0xff]
        %v2201 = vld [vmem:[#allocation7 + $0x8] sm:$0xff]
        %v2202 = vld [vmem:[#allocation7 + $0x10] sm:$0xff]
        %v2203 = vld [vmem:[#allocation7 + $0x18] sm:$0xff]
        %v2204 = vld [vmem:[#allocation7 + $0x20] sm:$0xff]
        %v2205 = vld [vmem:[#allocation7 + $0x28] sm:$0xff]
        %v2206 = vld [vmem:[#allocation7 + $0x30] sm:$0xff]
        %v2207 = vld [vmem:[#allocation7 + $0x38] sm:$0xff]
        %v2208 = vld [vmem:[#allocation7 + $0x40] sm:$0xff]
        %v2209 = vld [vmem:[#allocation7 + $0x48] sm:$0xff]
        %v2210 = vld [vmem:[#allocation7 + $0x50] sm:$0xff]
        %v2211 = vld [vmem:[#allocation7 + $0x58] sm:$0xff]
        %v2212 = vld [vmem:[#allocation7 + $0x60] sm:$0xff]
        %v2213 = vld [vmem:[#allocation7 + $0x68] sm:$0xff]
        %v2214 = vld [vmem:[#allocation7 + $0x70] sm:$0xff]
        %v2215 = vld [vmem:[#allocation7 + $0x78] sm:$0xff]
        %v2216 = vld [vmem:[#allocation7 + $0x80] sm:$0xff]
        %v2217 = vld [vmem:[#allocation7 + $0x88] sm:$0xff]
        %v2218 = vld [vmem:[#allocation7 + $0x90] sm:$0xff]
        %v2219 = vld [vmem:[#allocation7 + $0x98] sm:$0xff]
        %v2220 = vld [vmem:[#allocation7 + $0xa0] sm:$0xff]
        %v2221 = vld [vmem:[#allocation7 + $0xa8] sm:$0xff]
        %v2222 = vld [vmem:[#allocation7 + $0xb0] sm:$0xff]
        %v2223 = vld [vmem:[#allocation7 + $0xb8] sm:$0xff]
        %v2224 = vld [vmem:[#allocation7 + $0xc0] sm:$0xff]
        %v2225 = vld [vmem:[#allocation7 + $0xc8] sm:$0xff]
        %v2226 = vld [vmem:[#allocation7 + $0xd0] sm:$0xff]
        %v2227 = vld [vmem:[#allocation7 + $0xd8] sm:$0xff]
        %v2228 = vld [vmem:[#allocation7 + $0xe0] sm:$0xff]
        %v2229 = vld [vmem:[#allocation7 + $0xe8] sm:$0xff]
        %v2230 = vld [vmem:[#allocation7 + $0xf0] sm:$0xff]
        %v2231 = vld [vmem:[#allocation7 + $0xf8] sm:$0xff]
        %v2232 = vld [vmem:[%s15] sm:$0x1]
        %v2234 = vlaneseq
        %v2235 = vshrl.u32 %v2234, 7
        %v2236 = vsub.s32 0, %v2235
        %v2237 = vrot.slane %v2232, %v2236
        %2239 = vmatprep.subr.mxu0 0.0
        %2240 = vmatpush1.msra.mxu0 %v2215
        %2241 = vmatprep.subr.mxu0 0.0
        %2242 = vmatpush1.msra.mxu0 %v2214
        %2243 = vmatprep.subr.mxu0 0.0
        %2244 = vmatpush1.msra.mxu0 %v2213
        %2245 = vmatprep.subr.mxu0 0.0
        %2246 = vmatpush1.msra.mxu0 %v2212
        %2247 = vmatprep.subr.mxu0 0.0
        %2248 = vmatpush1.msra.mxu0 %v2211
        %2249 = vmatprep.subr.mxu0 0.0
        %2250 = vmatpush1.msra.mxu0 %v2210
        %2251 = vmatprep.subr.mxu0 0.0
        %2252 = vmatpush1.msra.mxu0 %v2209
        %2253 = vmatprep.subr.mxu0 0.0
        %2254 = vmatpush1.msra.mxu0 %v2208
        %2255 = vmatprep.subr.mxu0 0.0
        %2256 = vmatpush1.msra.mxu0 %v2207
        %2257 = vmatprep.subr.mxu0 0.0
        %2258 = vmatpush1.msra.mxu0 %v2206
        %2259 = vmatprep.subr.mxu0 0.0
        %2260 = vmatpush1.msra.mxu0 %v2205
        %2261 = vmatprep.subr.mxu0 0.0
        %2262 = vmatpush1.msra.mxu0 %v2204
        %2263 = vmatprep.subr.mxu0 0.0
        %2264 = vmatpush1.msra.mxu0 %v2203
        %2265 = vmatprep.subr.mxu0 0.0
        %2266 = vmatpush1.msra.mxu0 %v2202
        %2267 = vmatprep.subr.mxu0 0.0
        %2268 = vmatpush1.msra.mxu0 %v2201
        %2269 = vmatprep.subr.mxu0 0.0
        %2270 = vmatpush1.msra.mxu0 %v2200
        %2271 = vmatprep.subr.mxu0 0.0
        %2272 = vmatpush2.msra.mxu0 %v2231
        %2273 = vmatprep.subr.mxu0 0.0
        %2274 = vmatpush2.msra.mxu0 %v2230
        %2275 = vmatprep.subr.mxu0 0.0
        %2276 = vmatpush2.msra.mxu0 %v2229
        %2277 = vmatprep.subr.mxu0 0.0
        %2278 = vmatpush2.msra.mxu0 %v2228
        %2279 = vmatprep.subr.mxu0 0.0
        %2280 = vmatpush2.msra.mxu0 %v2227
        %2281 = vmatprep.subr.mxu0 0.0
        %2282 = vmatpush2.msra.mxu0 %v2226
        %2283 = vmatprep.subr.mxu0 0.0
        %2284 = vmatpush2.msra.mxu0 %v2225
        %2285 = vmatprep.subr.mxu0 0.0
        %2286 = vmatpush2.msra.mxu0 %v2224
        %2287 = vmatprep.subr.mxu0 0.0
        %2288 = vmatpush2.msra.mxu0 %v2223
        %2289 = vmatprep.subr.mxu0 0.0
        %2290 = vmatpush2.msra.mxu0 %v2222
        %2291 = vmatprep.subr.mxu0 0.0
        %2292 = vmatpush2.msra.mxu0 %v2221
        %2293 = vmatprep.subr.mxu0 0.0
        %2294 = vmatpush2.msra.mxu0 %v2220
        %2295 = vmatprep.subr.mxu0 0.0
        %2296 = vmatpush2.msra.mxu0 %v2219
        %2297 = vmatprep.subr.mxu0 0.0
        %2298 = vmatpush2.msra.mxu0 %v2218
        %2299 = vmatprep.subr.mxu0 0.0
        %2300 = vmatpush2.msra.mxu0 %v2217
        %2301 = vmatprep.subr.mxu0 0.0
        %2302 = vmatpush2.msra.mxu0 %v2216
        %2303 = vmatprep.mubr.f32.mxu0 %v2197
        %2304 = vmatmul.mubr.f32.gmra.mxu0 %v2196
        %v2305 = vpop.f32.mrf.mxu0
        %v2306 = vadd.f32 %v2237, %v2305
        %v2307 = vpop.f32.mrf.mxu0
        %2308 = vmatprep.mubr.f32.mxu0 %v2199
        %2309 = vmatmul.mubr.f32.gmra.mxu0 %v2198
        %v2310 = vpop.f32.mrf.mxu0
        %v2311 = vadd.f32 %v2237, %v2310
        %v2312 = vpop.f32.mrf.mxu0
        %2313 = vdwg.mxu0
        %v2314 = vadd.f32 %v2041, %v2306
        %v2315 = vadd.f32 %v2042, %v2311
        %v2316 = vld [vmem:[%s16] sm:$0x1]
        %v2317 = vld [vmem:[%s17] sm:$0x1]
        %2318 = vadd.xlane.f32.xlu0 %v2314
        %v2319 = vpop.xlane.xlu0 %2318
        %2320 = vadd.xlane.f32.xlu0 %v2315
        %v2321 = vpop.xlane.xlu0 %2320
        %v2322 = vmul.f32 %v2319, %v814
        %v2323 = vmul.f32 %v2321, %v814
        %v2324 = vsub.f32 %v2314, %v2322
        %v2325 = vsub.f32 %v2315, %v2323
        %v2326 = vmul.f32 %v2324, %v2324
        %v2327 = vmul.f32 %v2325, %v2325
        %2328 = vadd.xlane.f32.xlu0 %v2326
        %v2329 = vpop.xlane.xlu0 %2328
        %2330 = vadd.xlane.f32.xlu0 %v2327
        %v2331 = vpop.xlane.xlu0 %2330
        %v2332 = vmul.f32 %v2329, %v814
        %v2333 = vmul.f32 %v2331, %v814
        %v2334 = vadd.f32 %v2332, 1e-05
        %v2335 = vadd.f32 %v2333, 1e-05
        %v2336 = vrsqrt.pop %v2334
        %v2337 = vrsqrt.pop %v2335
        %v2338 = vmul.f32 %v2324, %v2336
        %v2339 = vmul.f32 %v2325, %v2337
        %v2341 = vlaneseq
        %v2342 = vshrl.u32 %v2341, 7
        %v2343 = vsub.s32 0, %v2342
        %v2344 = vrot.slane %v2316, %v2343
        %v2346 = vmul.f32 %v2338, %v2344
        %v2347 = vmul.f32 %v2339, %v2344
        %v2349 = vlaneseq
        %v2350 = vshrl.u32 %v2349, 7
        %v2351 = vsub.s32 0, %v2350
        %v2352 = vrot.slane %v2317, %v2351
        %v2354 = vadd.f32 %v2346, %v2352
        %v2355 = vadd.f32 %v2347, %v2352
        %s2356 = scalar_lea.vmem [#allocation2], 384
        %v2357 = vld [vmem:[%s2356] sm:$0xff]
        %v2358 = vld [vmem:[%s2356 + $0x8] sm:$0xff]
        %v2359 = vld [vmem:[%s2356 + $0x10] sm:$0xff]
        %v2360 = vld [vmem:[%s2356 + $0x18] sm:$0xff]
        %v2361 = vld [vmem:[%s2356 + $0x20] sm:$0xff]
        %v2362 = vld [vmem:[%s2356 + $0x28] sm:$0xff]
        %v2363 = vld [vmem:[%s2356 + $0x30] sm:$0xff]
        %v2364 = vld [vmem:[%s2356 + $0x38] sm:$0xff]
        %v2365 = vld [vmem:[%s2356 + $0x40] sm:$0xff]
        %v2366 = vld [vmem:[%s2356 + $0x48] sm:$0xff]
        %v2367 = vld [vmem:[%s2356 + $0x50] sm:$0xff]
        %v2368 = vld [vmem:[%s2356 + $0x58] sm:$0xff]
        %v2369 = vld [vmem:[%s2356 + $0x60] sm:$0xff]
        %v2370 = vld [vmem:[%s2356 + $0x68] sm:$0xff]
        %v2371 = vld [vmem:[%s2356 + $0x70] sm:$0xff]
        %v2372 = vld [vmem:[%s2356 + $0x78] sm:$0xff]
        %v2373 = vld [vmem:[%s2356 + $0x80] sm:$0xff]
        %v2374 = vld [vmem:[%s2356 + $0x88] sm:$0xff]
        %v2375 = vld [vmem:[%s2356 + $0x90] sm:$0xff]
        %v2376 = vld [vmem:[%s2356 + $0x98] sm:$0xff]
        %v2377 = vld [vmem:[%s2356 + $0xa0] sm:$0xff]
        %v2378 = vld [vmem:[%s2356 + $0xa8] sm:$0xff]
        %v2379 = vld [vmem:[%s2356 + $0xb0] sm:$0xff]
        %v2380 = vld [vmem:[%s2356 + $0xb8] sm:$0xff]
        %v2381 = vld [vmem:[%s2356 + $0xc0] sm:$0xff]
        %v2382 = vld [vmem:[%s2356 + $0xc8] sm:$0xff]
        %v2383 = vld [vmem:[%s2356 + $0xd0] sm:$0xff]
        %v2384 = vld [vmem:[%s2356 + $0xd8] sm:$0xff]
        %v2385 = vld [vmem:[%s2356 + $0xe0] sm:$0xff]
        %v2386 = vld [vmem:[%s2356 + $0xe8] sm:$0xff]
        %v2387 = vld [vmem:[%s2356 + $0xf0] sm:$0xff]
        %v2388 = vld [vmem:[%s2356 + $0xf8] sm:$0xff]
        %v2389 = vld [vmem:[%s2356 + $0x100] sm:$0xff]
        %v2390 = vld [vmem:[%s2356 + $0x108] sm:$0xff]
        %v2391 = vld [vmem:[%s2356 + $0x110] sm:$0xff]
        %v2392 = vld [vmem:[%s2356 + $0x118] sm:$0xff]
        %v2393 = vld [vmem:[%s2356 + $0x120] sm:$0xff]
        %v2394 = vld [vmem:[%s2356 + $0x128] sm:$0xff]
        %v2395 = vld [vmem:[%s2356 + $0x130] sm:$0xff]
        %v2396 = vld [vmem:[%s2356 + $0x138] sm:$0xff]
        %v2397 = vld [vmem:[%s2356 + $0x140] sm:$0xff]
        %v2398 = vld [vmem:[%s2356 + $0x148] sm:$0xff]
        %v2399 = vld [vmem:[%s2356 + $0x150] sm:$0xff]
        %v2400 = vld [vmem:[%s2356 + $0x158] sm:$0xff]
        %v2401 = vld [vmem:[%s2356 + $0x160] sm:$0xff]
        %v2402 = vld [vmem:[%s2356 + $0x168] sm:$0xff]
        %v2403 = vld [vmem:[%s2356 + $0x170] sm:$0xff]
        %v2404 = vld [vmem:[%s2356 + $0x178] sm:$0xff]
        %s2405 = scalar_lea.vmem %s7, 3
        %v2406 = vld [vmem:[%s2405] sm:$0x7]
        %v2408 = vlaneseq
        %v2409 = vshrl.u32 %v2408, 7
        %v2410 = vsub.s32 0, %v2409
        %v2411 = vrot.slane %v2406, %v2410
        %v2412 = vlaneseq
        %v2413 = vshrl.u32 %v2412, 7
        %v2414 = vsub.s32 1, %v2413
        %v2415 = vrot.slane %v2406, %v2414
        %v2416 = vlaneseq
        %v2417 = vshrl.u32 %v2416, 7
        %v2418 = vsub.s32 2, %v2417
        %v2419 = vrot.slane %v2406, %v2418
        %2423 = vmatprep.subr.mxu0 %v2403
        %2424 = vmatpush1.msra.mxu0 %v2402
        %2425 = vmatprep.subr.mxu0 %v2400
        %2426 = vmatpush1.msra.mxu0 %v2399
        %2427 = vmatprep.subr.mxu0 %v2397
        %2428 = vmatpush1.msra.mxu0 %v2396
        %2429 = vmatprep.subr.mxu0 %v2394
        %2430 = vmatpush1.msra.mxu0 %v2393
        %2431 = vmatprep.subr.mxu0 %v2391
        %2432 = vmatpush1.msra.mxu0 %v2390
        %2433 = vmatprep.subr.mxu0 %v2388
        %2434 = vmatpush1.msra.mxu0 %v2387
        %2435 = vmatprep.subr.mxu0 %v2385
        %2436 = vmatpush1.msra.mxu0 %v2384
        %2437 = vmatprep.subr.mxu0 %v2382
        %2438 = vmatpush1.msra.mxu0 %v2381
        %2439 = vmatprep.subr.mxu0 %v2379
        %2440 = vmatpush1.msra.mxu0 %v2378
        %2441 = vmatprep.subr.mxu0 %v2376
        %2442 = vmatpush1.msra.mxu0 %v2375
        %2443 = vmatprep.subr.mxu0 %v2373
        %2444 = vmatpush1.msra.mxu0 %v2372
        %2445 = vmatprep.subr.mxu0 %v2370
        %2446 = vmatpush1.msra.mxu0 %v2369
        %2447 = vmatprep.subr.mxu0 %v2367
        %2448 = vmatpush1.msra.mxu0 %v2366
        %2449 = vmatprep.subr.mxu0 %v2364
        %2450 = vmatpush1.msra.mxu0 %v2363
        %2451 = vmatprep.subr.mxu0 %v2361
        %2452 = vmatpush1.msra.mxu0 %v2360
        %2453 = vmatprep.subr.mxu0 %v2358
        %2454 = vmatpush1.msra.mxu0 %v2357
        %2455 = vmatprep.subr.mxu0 0.0
        %2456 = vmatpush2.msra.mxu0 0.0
        %2457 = vmatprep.subr.mxu0 0.0
        %2458 = vmatpush2.msra.mxu0 0.0
        %2459 = vmatprep.subr.mxu0 0.0
        %2460 = vmatpush2.msra.mxu0 0.0
        %2461 = vmatprep.subr.mxu0 0.0
        %2462 = vmatpush2.msra.mxu0 0.0
        %2463 = vmatprep.subr.mxu0 0.0
        %2464 = vmatpush2.msra.mxu0 0.0
        %2465 = vmatprep.subr.mxu0 0.0
        %2466 = vmatpush2.msra.mxu0 0.0
        %2467 = vmatprep.subr.mxu0 0.0
        %2468 = vmatpush2.msra.mxu0 0.0
        %2469 = vmatprep.subr.mxu0 0.0
        %2470 = vmatpush2.msra.mxu0 0.0
        %2471 = vmatprep.subr.mxu0 0.0
        %2472 = vmatpush2.msra.mxu0 0.0
        %2473 = vmatprep.subr.mxu0 0.0
        %2474 = vmatpush2.msra.mxu0 0.0
        %2475 = vmatprep.subr.mxu0 0.0
        %2476 = vmatpush2.msra.mxu0 0.0
        %2477 = vmatprep.subr.mxu0 0.0
        %2478 = vmatpush2.msra.mxu0 0.0
        %2479 = vmatprep.subr.mxu0 0.0
        %2480 = vmatpush2.msra.mxu0 0.0
        %2481 = vmatprep.subr.mxu0 0.0
        %2482 = vmatpush2.msra.mxu0 0.0
        %2483 = vmatprep.subr.mxu0 0.0
        %2484 = vmatpush2.msra.mxu0 0.0
        %2485 = vmatprep.subr.mxu0 0.0
        %2486 = vmatpush2.msra.mxu0 0.0
        %2487 = vmatprep.mubr.f32.mxu0 0.0
        %2488 = vmatmul.mubr.f32.gmra.mxu0 %v2354
        %v2489 = vpop.f32.mrf.mxu0
        %v2490 = vadd.f32 %v2411, %v2489
        %v2491 = vpop.f32.mrf.mxu0
        %v2492 = vadd.f32 %v2415, %v2491
        %2493 = vmatprep.mubr.f32.mxu0 0.0
        %2494 = vmatmul.mubr.f32.gmra.mxu0 %v2355
        %v2495 = vpop.f32.mrf.mxu0
        %v2496 = vadd.f32 %v2411, %v2495
        %v2497 = vpop.f32.mrf.mxu0
        %v2498 = vadd.f32 %v2415, %v2497
        %2499 = vdwg.mxu0
        %2500 = vmatprep.subr.mxu0 0.0
        %2501 = vmatpush1.msra.mxu0 %v2404
        %2502 = vmatprep.subr.mxu0 0.0
        %2503 = vmatpush1.msra.mxu0 %v2401
        %2504 = vmatprep.subr.mxu0 0.0
        %2505 = vmatpush1.msra.mxu0 %v2398
        %2506 = vmatprep.subr.mxu0 0.0
        %2507 = vmatpush1.msra.mxu0 %v2395
        %2508 = vmatprep.subr.mxu0 0.0
        %2509 = vmatpush1.msra.mxu0 %v2392
        %2510 = vmatprep.subr.mxu0 0.0
        %2511 = vmatpush1.msra.mxu0 %v2389
        %2512 = vmatprep.subr.mxu0 0.0
        %2513 = vmatpush1.msra.mxu0 %v2386
        %2514 = vmatprep.subr.mxu0 0.0
        %2515 = vmatpush1.msra.mxu0 %v2383
        %2516 = vmatprep.subr.mxu0 0.0
        %2517 = vmatpush1.msra.mxu0 %v2380
        %2518 = vmatprep.subr.mxu0 0.0
        %2519 = vmatpush1.msra.mxu0 %v2377
        %2520 = vmatprep.subr.mxu0 0.0
        %2521 = vmatpush1.msra.mxu0 %v2374
        %2522 = vmatprep.subr.mxu0 0.0
        %2523 = vmatpush1.msra.mxu0 %v2371
        %2524 = vmatprep.subr.mxu0 0.0
        %2525 = vmatpush1.msra.mxu0 %v2368
        %2526 = vmatprep.subr.mxu0 0.0
        %2527 = vmatpush1.msra.mxu0 %v2365
        %2528 = vmatprep.subr.mxu0 0.0
        %2529 = vmatpush1.msra.mxu0 %v2362
        %2530 = vmatprep.subr.mxu0 0.0
        %2531 = vmatpush1.msra.mxu0 %v2359
        %2532 = vmatprep.subr.mxu0 0.0
        %2533 = vmatpush2.msra.mxu0 0.0
        %2534 = vmatprep.subr.mxu0 0.0
        %2535 = vmatpush2.msra.mxu0 0.0
        %2536 = vmatprep.subr.mxu0 0.0
        %2537 = vmatpush2.msra.mxu0 0.0
        %2538 = vmatprep.subr.mxu0 0.0
        %2539 = vmatpush2.msra.mxu0 0.0
        %2540 = vmatprep.subr.mxu0 0.0
        %2541 = vmatpush2.msra.mxu0 0.0
        %2542 = vmatprep.subr.mxu0 0.0
        %2543 = vmatpush2.msra.mxu0 0.0
        %2544 = vmatprep.subr.mxu0 0.0
        %2545 = vmatpush2.msra.mxu0 0.0
        %2546 = vmatprep.subr.mxu0 0.0
        %2547 = vmatpush2.msra.mxu0 0.0
        %2548 = vmatprep.subr.mxu0 0.0
        %2549 = vmatpush2.msra.mxu0 0.0
        %2550 = vmatprep.subr.mxu0 0.0
        %2551 = vmatpush2.msra.mxu0 0.0
        %2552 = vmatprep.subr.mxu0 0.0
        %2553 = vmatpush2.msra.mxu0 0.0
        %2554 = vmatprep.subr.mxu0 0.0
        %2555 = vmatpush2.msra.mxu0 0.0
        %2556 = vmatprep.subr.mxu0 0.0
        %2557 = vmatpush2.msra.mxu0 0.0
        %2558 = vmatprep.subr.mxu0 0.0
        %2559 = vmatpush2.msra.mxu0 0.0
        %2560 = vmatprep.subr.mxu0 0.0
        %2561 = vmatpush2.msra.mxu0 0.0
        %2562 = vmatprep.subr.mxu0 0.0
        %2563 = vmatpush2.msra.mxu0 0.0
        %2564 = vmatprep.mubr.f32.mxu0 0.0
        %2565 = vmatmul.mubr.f32.gmra.mxu0 %v2354
        %v2566 = vpop.f32.mrf.mxu0
        %v2567 = vadd.f32 %v2419, %v2566
        %v2568 = vpop.f32.mrf.mxu0
        %2569 = vmatprep.mubr.f32.mxu0 0.0
        %2570 = vmatmul.mubr.f32.gmra.mxu0 %v2355
        %v2571 = vpop.f32.mrf.mxu0
        %v2572 = vadd.f32 %v2419, %v2571
        %v2573 = vpop.f32.mrf.mxu0
        %2574 = vdwg.mxu0
        %v2576 = vsel %vm1070, %v2490, 0
        %v2579 = vsel %vm1070, %v2496, 0
        %v2582 = vsel %vm1070, %v2492, 0
        %v2585 = vsel %vm1070, %v2498, 0
        %2587 = vmatprep.subr.mxu0 0.0
        %2588 = vmatpush1.xpose.msra.mxu0 0.0
        %2589 = vmatprep.subr.mxu0 0.0
        %2590 = vmatpush1.xpose.msra.mxu0 0.0
        %2591 = vmatprep.subr.mxu0 0.0
        %2592 = vmatpush1.xpose.msra.mxu0 0.0
        %2593 = vmatprep.subr.mxu0 0.0
        %2594 = vmatpush1.xpose.msra.mxu0 0.0
        %2595 = vmatprep.subr.mxu0 0.0
        %2596 = vmatpush1.xpose.msra.mxu0 0.0
        %2597 = vmatprep.subr.mxu0 0.0
        %2598 = vmatpush1.xpose.msra.mxu0 0.0
        %2599 = vmatprep.subr.mxu0 0.0
        %2600 = vmatpush1.xpose.msra.mxu0 0.0
        %2601 = vmatprep.subr.mxu0 0.0
        %2602 = vmatpush1.xpose.msra.mxu0 0.0
        %2603 = vmatprep.subr.mxu0 0.0
        %2604 = vmatpush1.xpose.msra.mxu0 0.0
        %2605 = vmatprep.subr.mxu0 0.0
        %2606 = vmatpush1.xpose.msra.mxu0 0.0
        %2607 = vmatprep.subr.mxu0 0.0
        %2608 = vmatpush1.xpose.msra.mxu0 0.0
        %2609 = vmatprep.subr.mxu0 0.0
        %2610 = vmatpush1.xpose.msra.mxu0 0.0
        %2611 = vmatprep.subr.mxu0 0.0
        %2612 = vmatpush1.xpose.msra.mxu0 0.0
        %2613 = vmatprep.subr.mxu0 0.0
        %2614 = vmatpush1.xpose.msra.mxu0 0.0
        %2615 = vmatprep.subr.mxu0 0.0
        %2616 = vmatpush1.xpose.msra.mxu0 %v2585
        %2617 = vmatprep.subr.mxu0 0.0
        %2618 = vmatpush1.xpose.msra.mxu0 %v2582
        %2619 = vmatprep.subr.mxu0 0.0
        %2620 = vmatpush2.xpose.msra.mxu0 0.0
        %2621 = vmatprep.subr.mxu0 0.0
        %2622 = vmatpush2.xpose.msra.mxu0 0.0
        %2623 = vmatprep.subr.mxu0 0.0
        %2624 = vmatpush2.xpose.msra.mxu0 0.0
        %2625 = vmatprep.subr.mxu0 0.0
        %2626 = vmatpush2.xpose.msra.mxu0 0.0
        %2627 = vmatprep.subr.mxu0 0.0
        %2628 = vmatpush2.xpose.msra.mxu0 0.0
        %2629 = vmatprep.subr.mxu0 0.0
        %2630 = vmatpush2.xpose.msra.mxu0 0.0
        %2631 = vmatprep.subr.mxu0 0.0
        %2632 = vmatpush2.xpose.msra.mxu0 0.0
        %2633 = vmatprep.subr.mxu0 0.0
        %2634 = vmatpush2.xpose.msra.mxu0 0.0
        %2635 = vmatprep.subr.mxu0 0.0
        %2636 = vmatpush2.xpose.msra.mxu0 0.0
        %2637 = vmatprep.subr.mxu0 0.0
        %2638 = vmatpush2.xpose.msra.mxu0 0.0
        %2639 = vmatprep.subr.mxu0 0.0
        %2640 = vmatpush2.xpose.msra.mxu0 0.0
        %2641 = vmatprep.subr.mxu0 0.0
        %2642 = vmatpush2.xpose.msra.mxu0 0.0
        %2643 = vmatprep.subr.mxu0 0.0
        %2644 = vmatpush2.xpose.msra.mxu0 0.0
        %2645 = vmatprep.subr.mxu0 0.0
        %2646 = vmatpush2.xpose.msra.mxu0 0.0
        %2647 = vmatprep.subr.mxu0 0.0
        %2648 = vmatpush2.xpose.msra.mxu0 0.0
        %2649 = vmatprep.subr.mxu0 0.0
        %2650 = vmatpush2.xpose.msra.mxu0 0.0
        %2651 = vmatprep.mubr.f32.mxu0 0.0
        %2652 = vmatmul.mubr.f32.gmra.mxu0 %v2576
        %v2653 = vpop.f32.mrf.mxu0
        %v2654 = vadd.f32 0.0, %v2653
        %v2655 = vpop.f32.mrf.mxu0
        %2656 = vmatprep.mubr.f32.mxu0 0.0
        %2657 = vmatmul.mubr.f32.gmra.mxu0 %v2579
        %v2658 = vpop.f32.mrf.mxu0
        %v2659 = vadd.f32 0.0, %v2658
        %v2660 = vpop.f32.mrf.mxu0
        %2661 = vdwg.mxu0
        %v2662 = vmul.f32 %v2654, 0.17677669
        %v2663 = vmul.f32 %v2659, 0.17677669
        %v2664 = vsel %vm1160, %v2662, -inf
        %2665 = vmax.xlane.f32.xlu0 %v2664
        %v2666 = vpop.xlane.xlu0 %2665
        %v2667 = vsel %vm1160, %v2663, -inf
        %2668 = vmax.xlane.f32.xlu0 %v2667
        %v2669 = vpop.xlane.xlu0 %2668
        %v2670 = vsub.f32 %v2662, %v2666
        %v2671 = vsub.f32 %v2663, %v2669
        %v2672 = vmul.f32 %v2670, 1.442695
        %v2673 = vpow.pop %v2672
        %v2674 = vmul.f32 %v2671, 1.442695
        %v2675 = vpow.pop %v2674
        %v2676 = vsel %vm1160, %v2673, 0.0
        %2677 = vadd.xlane.f32.xlu0 %v2676
        %v2678 = vpop.xlane.xlu0 %2677
        %v2679 = vsel %vm1160, %v2675, 0.0
        %2680 = vadd.xlane.f32.xlu0 %v2679
        %v2681 = vpop.xlane.xlu0 %2680
        %v2682 = vrcp.pop %v2678
        %v2683 = vrcp.pop %v2681
        %v2684 = vmul.f32 %v2673, %v2682
        %v2685 = vmul.f32 %v2675, %v2683
        %v2687 = vsel %vm1160, %v2684, 0
        %v2690 = vsel %vm1160, %v2685, 0
        %2692 = vmatprep.subr.mxu0 0.0
        %2693 = vmatpush1.msra.mxu0 0.0
        %2694 = vmatprep.subr.mxu0 0.0
        %2695 = vmatpush1.msra.mxu0 0.0
        %2696 = vmatprep.subr.mxu0 0.0
        %2697 = vmatpush1.msra.mxu0 0.0
        %2698 = vmatprep.subr.mxu0 0.0
        %2699 = vmatpush1.msra.mxu0 0.0
        %2700 = vmatprep.subr.mxu0 0.0
        %2701 = vmatpush1.msra.mxu0 0.0
        %2702 = vmatprep.subr.mxu0 0.0
        %2703 = vmatpush1.msra.mxu0 0.0
        %2704 = vmatprep.subr.mxu0 0.0
        %2705 = vmatpush1.msra.mxu0 0.0
        %2706 = vmatprep.subr.mxu0 0.0
        %2707 = vmatpush1.msra.mxu0 0.0
        %2708 = vmatprep.subr.mxu0 0.0
        %2709 = vmatpush1.msra.mxu0 0.0
        %2710 = vmatprep.subr.mxu0 0.0
        %2711 = vmatpush1.msra.mxu0 0.0
        %2712 = vmatprep.subr.mxu0 0.0
        %2713 = vmatpush1.msra.mxu0 0.0
        %2714 = vmatprep.subr.mxu0 0.0
        %2715 = vmatpush1.msra.mxu0 0.0
        %2716 = vmatprep.subr.mxu0 0.0
        %2717 = vmatpush1.msra.mxu0 0.0
        %2718 = vmatprep.subr.mxu0 0.0
        %2719 = vmatpush1.msra.mxu0 0.0
        %2720 = vmatprep.subr.mxu0 0.0
        %2721 = vmatpush1.msra.mxu0 %v2572
        %2722 = vmatprep.subr.mxu0 0.0
        %2723 = vmatpush1.msra.mxu0 %v2567
        %2724 = vmatprep.subr.mxu0 0.0
        %2725 = vmatpush2.msra.mxu0 0.0
        %2726 = vmatprep.subr.mxu0 0.0
        %2727 = vmatpush2.msra.mxu0 0.0
        %2728 = vmatprep.subr.mxu0 0.0
        %2729 = vmatpush2.msra.mxu0 0.0
        %2730 = vmatprep.subr.mxu0 0.0
        %2731 = vmatpush2.msra.mxu0 0.0
        %2732 = vmatprep.subr.mxu0 0.0
        %2733 = vmatpush2.msra.mxu0 0.0
        %2734 = vmatprep.subr.mxu0 0.0
        %2735 = vmatpush2.msra.mxu0 0.0
        %2736 = vmatprep.subr.mxu0 0.0
        %2737 = vmatpush2.msra.mxu0 0.0
        %2738 = vmatprep.subr.mxu0 0.0
        %2739 = vmatpush2.msra.mxu0 0.0
        %2740 = vmatprep.subr.mxu0 0.0
        %2741 = vmatpush2.msra.mxu0 0.0
        %2742 = vmatprep.subr.mxu0 0.0
        %2743 = vmatpush2.msra.mxu0 0.0
        %2744 = vmatprep.subr.mxu0 0.0
        %2745 = vmatpush2.msra.mxu0 0.0
        %2746 = vmatprep.subr.mxu0 0.0
        %2747 = vmatpush2.msra.mxu0 0.0
        %2748 = vmatprep.subr.mxu0 0.0
        %2749 = vmatpush2.msra.mxu0 0.0
        %2750 = vmatprep.subr.mxu0 0.0
        %2751 = vmatpush2.msra.mxu0 0.0
        %2752 = vmatprep.subr.mxu0 0.0
        %2753 = vmatpush2.msra.mxu0 0.0
        %2754 = vmatprep.subr.mxu0 0.0
        %2755 = vmatpush2.msra.mxu0 0.0
        %2756 = vmatprep.mubr.f32.mxu0 0.0
        %2757 = vmatmul.mubr.f32.gmra.mxu0 %v2687
        %v2758 = vpop.f32.mrf.mxu0
        %v2759 = vadd.f32 0.0, %v2758
        %v2760 = vpop.f32.mrf.mxu0
        %2761 = vmatprep.mubr.f32.mxu0 0.0
        %2762 = vmatmul.mubr.f32.gmra.mxu0 %v2690
        %v2763 = vpop.f32.mrf.mxu0
        %v2764 = vadd.f32 0.0, %v2763
        %v2765 = vpop.f32.mrf.mxu0
        %2766 = vdwg.mxu0
        %2767 = vrot.lane.b32.xlu0 %v2490, 96
        %v2768 = vpop.permute.xlu0 %2767
        %2769 = vrot.lane.b32.xlu0 %v2496, 96
        %v2770 = vpop.permute.xlu0 %2769
        %2771 = vrot.lane.b32.xlu0 %v2492, 96
        %v2772 = vpop.permute.xlu0 %2771
        %2773 = vrot.lane.b32.xlu0 %v2498, 96
        %v2774 = vpop.permute.xlu0 %2773
        %v2775 = vsel %vm1070, %v2768, 0
        %v2777 = vsel %vm1070, %v2770, 0
        %v2779 = vsel %vm1070, %v2772, 0
        %v2781 = vsel %vm1070, %v2774, 0
        %2783 = vmatprep.subr.mxu0 0.0
        %2784 = vmatpush1.xpose.msra.mxu0 0.0
        %2785 = vmatprep.subr.mxu0 0.0
        %2786 = vmatpush1.xpose.msra.mxu0 0.0
        %2787 = vmatprep.subr.mxu0 0.0
        %2788 = vmatpush1.xpose.msra.mxu0 0.0
        %2789 = vmatprep.subr.mxu0 0.0
        %2790 = vmatpush1.xpose.msra.mxu0 0.0
        %2791 = vmatprep.subr.mxu0 0.0
        %2792 = vmatpush1.xpose.msra.mxu0 0.0
        %2793 = vmatprep.subr.mxu0 0.0
        %2794 = vmatpush1.xpose.msra.mxu0 0.0
        %2795 = vmatprep.subr.mxu0 0.0
        %2796 = vmatpush1.xpose.msra.mxu0 0.0
        %2797 = vmatprep.subr.mxu0 0.0
        %2798 = vmatpush1.xpose.msra.mxu0 0.0
        %2799 = vmatprep.subr.mxu0 0.0
        %2800 = vmatpush1.xpose.msra.mxu0 0.0
        %2801 = vmatprep.subr.mxu0 0.0
        %2802 = vmatpush1.xpose.msra.mxu0 0.0
        %2803 = vmatprep.subr.mxu0 0.0
        %2804 = vmatpush1.xpose.msra.mxu0 0.0
        %2805 = vmatprep.subr.mxu0 0.0
        %2806 = vmatpush1.xpose.msra.mxu0 0.0
        %2807 = vmatprep.subr.mxu0 0.0
        %2808 = vmatpush1.xpose.msra.mxu0 0.0
        %2809 = vmatprep.subr.mxu0 0.0
        %2810 = vmatpush1.xpose.msra.mxu0 0.0
        %2811 = vmatprep.subr.mxu0 0.0
        %2812 = vmatpush1.xpose.msra.mxu0 %v2781
        %2813 = vmatprep.subr.mxu0 0.0
        %2814 = vmatpush1.xpose.msra.mxu0 %v2779
        %2815 = vmatprep.subr.mxu0 0.0
        %2816 = vmatpush2.xpose.msra.mxu0 0.0
        %2817 = vmatprep.subr.mxu0 0.0
        %2818 = vmatpush2.xpose.msra.mxu0 0.0
        %2819 = vmatprep.subr.mxu0 0.0
        %2820 = vmatpush2.xpose.msra.mxu0 0.0
        %2821 = vmatprep.subr.mxu0 0.0
        %2822 = vmatpush2.xpose.msra.mxu0 0.0
        %2823 = vmatprep.subr.mxu0 0.0
        %2824 = vmatpush2.xpose.msra.mxu0 0.0
        %2825 = vmatprep.subr.mxu0 0.0
        %2826 = vmatpush2.xpose.msra.mxu0 0.0
        %2827 = vmatprep.subr.mxu0 0.0
        %2828 = vmatpush2.xpose.msra.mxu0 0.0
        %2829 = vmatprep.subr.mxu0 0.0
        %2830 = vmatpush2.xpose.msra.mxu0 0.0
        %2831 = vmatprep.subr.mxu0 0.0
        %2832 = vmatpush2.xpose.msra.mxu0 0.0
        %2833 = vmatprep.subr.mxu0 0.0
        %2834 = vmatpush2.xpose.msra.mxu0 0.0
        %2835 = vmatprep.subr.mxu0 0.0
        %2836 = vmatpush2.xpose.msra.mxu0 0.0
        %2837 = vmatprep.subr.mxu0 0.0
        %2838 = vmatpush2.xpose.msra.mxu0 0.0
        %2839 = vmatprep.subr.mxu0 0.0
        %2840 = vmatpush2.xpose.msra.mxu0 0.0
        %2841 = vmatprep.subr.mxu0 0.0
        %2842 = vmatpush2.xpose.msra.mxu0 0.0
        %2843 = vmatprep.subr.mxu0 0.0
        %2844 = vmatpush2.xpose.msra.mxu0 0.0
        %2845 = vmatprep.subr.mxu0 0.0
        %2846 = vmatpush2.xpose.msra.mxu0 0.0
        %2847 = vmatprep.mubr.f32.mxu0 0.0
        %2848 = vmatmul.mubr.f32.gmra.mxu0 %v2775
        %v2849 = vpop.f32.mrf.mxu0
        %v2850 = vadd.f32 0.0, %v2849
        %v2851 = vpop.f32.mrf.mxu0
        %2852 = vmatprep.mubr.f32.mxu0 0.0
        %2853 = vmatmul.mubr.f32.gmra.mxu0 %v2777
        %v2854 = vpop.f32.mrf.mxu0
        %v2855 = vadd.f32 0.0, %v2854
        %v2856 = vpop.f32.mrf.mxu0
        %2857 = vdwg.mxu0
        %v2858 = vmul.f32 %v2850, 0.17677669
        %v2859 = vmul.f32 %v2855, 0.17677669
        %v2860 = vsel %vm1160, %v2858, -inf
        %2861 = vmax.xlane.f32.xlu0 %v2860
        %v2862 = vpop.xlane.xlu0 %2861
        %v2863 = vsel %vm1160, %v2859, -inf
        %2864 = vmax.xlane.f32.xlu0 %v2863
        %v2865 = vpop.xlane.xlu0 %2864
        %v2866 = vsub.f32 %v2858, %v2862
        %v2867 = vsub.f32 %v2859, %v2865
        %v2868 = vmul.f32 %v2866, 1.442695
        %v2869 = vpow.pop %v2868
        %v2870 = vmul.f32 %v2867, 1.442695
        %v2871 = vpow.pop %v2870
        %v2872 = vsel %vm1160, %v2869, 0.0
        %2873 = vadd.xlane.f32.xlu0 %v2872
        %v2874 = vpop.xlane.xlu0 %2873
        %v2875 = vsel %vm1160, %v2871, 0.0
        %2876 = vadd.xlane.f32.xlu0 %v2875
        %v2877 = vpop.xlane.xlu0 %2876
        %v2878 = vrcp.pop %v2874
        %v2879 = vrcp.pop %v2877
        %v2880 = vmul.f32 %v2869, %v2878
        %v2881 = vmul.f32 %v2871, %v2879
        %2884 = vrot.lane.b32.xlu0 %v2567, 96
        %v2885 = vpop.permute.xlu0 %2884
        %2886 = vrot.lane.b32.xlu0 %v2572, 96
        %v2887 = vpop.permute.xlu0 %2886
        %v2891 = vsel %vm1160, %v2880, 0
        %v2894 = vsel %vm1160, %v2881, 0
        %2896 = vmatprep.subr.mxu0 0.0
        %2897 = vmatpush1.msra.mxu0 0.0
        %2898 = vmatprep.subr.mxu0 0.0
        %2899 = vmatpush1.msra.mxu0 0.0
        %2900 = vmatprep.subr.mxu0 0.0
        %2901 = vmatpush1.msra.mxu0 0.0
        %2902 = vmatprep.subr.mxu0 0.0
        %2903 = vmatpush1.msra.mxu0 0.0
        %2904 = vmatprep.subr.mxu0 0.0
        %2905 = vmatpush1.msra.mxu0 0.0
        %2906 = vmatprep.subr.mxu0 0.0
        %2907 = vmatpush1.msra.mxu0 0.0
        %2908 = vmatprep.subr.mxu0 0.0
        %2909 = vmatpush1.msra.mxu0 0.0
        %2910 = vmatprep.subr.mxu0 0.0
        %2911 = vmatpush1.msra.mxu0 0.0
        %2912 = vmatprep.subr.mxu0 0.0
        %2913 = vmatpush1.msra.mxu0 0.0
        %2914 = vmatprep.subr.mxu0 0.0
        %2915 = vmatpush1.msra.mxu0 0.0
        %2916 = vmatprep.subr.mxu0 0.0
        %2917 = vmatpush1.msra.mxu0 0.0
        %2918 = vmatprep.subr.mxu0 0.0
        %2919 = vmatpush1.msra.mxu0 0.0
        %2920 = vmatprep.subr.mxu0 0.0
        %2921 = vmatpush1.msra.mxu0 0.0
        %2922 = vmatprep.subr.mxu0 0.0
        %2923 = vmatpush1.msra.mxu0 0.0
        %2924 = vmatprep.subr.mxu0 0.0
        %2925 = vmatpush1.msra.mxu0 %v2887
        %2926 = vmatprep.subr.mxu0 0.0
        %2927 = vmatpush1.msra.mxu0 %v2885
        %2928 = vmatprep.subr.mxu0 0.0
        %2929 = vmatpush2.msra.mxu0 0.0
        %2930 = vmatprep.subr.mxu0 0.0
        %2931 = vmatpush2.msra.mxu0 0.0
        %2932 = vmatprep.subr.mxu0 0.0
        %2933 = vmatpush2.msra.mxu0 0.0
        %2934 = vmatprep.subr.mxu0 0.0
        %2935 = vmatpush2.msra.mxu0 0.0
        %2936 = vmatprep.subr.mxu0 0.0
        %2937 = vmatpush2.msra.mxu0 0.0
        %2938 = vmatprep.subr.mxu0 0.0
        %2939 = vmatpush2.msra.mxu0 0.0
        %2940 = vmatprep.subr.mxu0 0.0
        %2941 = vmatpush2.msra.mxu0 0.0
        %2942 = vmatprep.subr.mxu0 0.0
        %2943 = vmatpush2.msra.mxu0 0.0
        %2944 = vmatprep.subr.mxu0 0.0
        %2945 = vmatpush2.msra.mxu0 0.0
        %2946 = vmatprep.subr.mxu0 0.0
        %2947 = vmatpush2.msra.mxu0 0.0
        %2948 = vmatprep.subr.mxu0 0.0
        %2949 = vmatpush2.msra.mxu0 0.0
        %2950 = vmatprep.subr.mxu0 0.0
        %2951 = vmatpush2.msra.mxu0 0.0
        %2952 = vmatprep.subr.mxu0 0.0
        %2953 = vmatpush2.msra.mxu0 0.0
        %2954 = vmatprep.subr.mxu0 0.0
        %2955 = vmatpush2.msra.mxu0 0.0
        %2956 = vmatprep.subr.mxu0 0.0
        %2957 = vmatpush2.msra.mxu0 0.0
        %2958 = vmatprep.subr.mxu0 0.0
        %2959 = vmatpush2.msra.mxu0 0.0
        %2960 = vmatprep.mubr.f32.mxu0 0.0
        %2961 = vmatmul.mubr.f32.gmra.mxu0 %v2891
        %v2962 = vpop.f32.mrf.mxu0
        %v2963 = vadd.f32 0.0, %v2962
        %v2964 = vpop.f32.mrf.mxu0
        %2965 = vmatprep.mubr.f32.mxu0 0.0
        %2966 = vmatmul.mubr.f32.gmra.mxu0 %v2894
        %v2967 = vpop.f32.mrf.mxu0
        %v2968 = vadd.f32 0.0, %v2967
        %v2969 = vpop.f32.mrf.mxu0
        %2970 = vdwg.mxu0
        %2971 = vrot.lane.b32.xlu0 %v2490, 64
        %v2972 = vpop.permute.xlu0 %2971
        %2973 = vrot.lane.b32.xlu0 %v2496, 64
        %v2974 = vpop.permute.xlu0 %2973
        %2975 = vrot.lane.b32.xlu0 %v2492, 64
        %v2976 = vpop.permute.xlu0 %2975
        %2977 = vrot.lane.b32.xlu0 %v2498, 64
        %v2978 = vpop.permute.xlu0 %2977
        %v2979 = vsel %vm1070, %v2972, 0
        %v2981 = vsel %vm1070, %v2974, 0
        %v2983 = vsel %vm1070, %v2976, 0
        %v2985 = vsel %vm1070, %v2978, 0
        %2987 = vmatprep.subr.mxu0 0.0
        %2988 = vmatpush1.xpose.msra.mxu0 0.0
        %2989 = vmatprep.subr.mxu0 0.0
        %2990 = vmatpush1.xpose.msra.mxu0 0.0
        %2991 = vmatprep.subr.mxu0 0.0
        %2992 = vmatpush1.xpose.msra.mxu0 0.0
        %2993 = vmatprep.subr.mxu0 0.0
        %2994 = vmatpush1.xpose.msra.mxu0 0.0
        %2995 = vmatprep.subr.mxu0 0.0
        %2996 = vmatpush1.xpose.msra.mxu0 0.0
        %2997 = vmatprep.subr.mxu0 0.0
        %2998 = vmatpush1.xpose.msra.mxu0 0.0
        %2999 = vmatprep.subr.mxu0 0.0
        %3000 = vmatpush1.xpose.msra.mxu0 0.0
        %3001 = vmatprep.subr.mxu0 0.0
        %3002 = vmatpush1.xpose.msra.mxu0 0.0
        %3003 = vmatprep.subr.mxu0 0.0
        %3004 = vmatpush1.xpose.msra.mxu0 0.0
        %3005 = vmatprep.subr.mxu0 0.0
        %3006 = vmatpush1.xpose.msra.mxu0 0.0
        %3007 = vmatprep.subr.mxu0 0.0
        %3008 = vmatpush1.xpose.msra.mxu0 0.0
        %3009 = vmatprep.subr.mxu0 0.0
        %3010 = vmatpush1.xpose.msra.mxu0 0.0
        %3011 = vmatprep.subr.mxu0 0.0
        %3012 = vmatpush1.xpose.msra.mxu0 0.0
        %3013 = vmatprep.subr.mxu0 0.0
        %3014 = vmatpush1.xpose.msra.mxu0 0.0
        %3015 = vmatprep.subr.mxu0 0.0
        %3016 = vmatpush1.xpose.msra.mxu0 %v2985
        %3017 = vmatprep.subr.mxu0 0.0
        %3018 = vmatpush1.xpose.msra.mxu0 %v2983
        %3019 = vmatprep.subr.mxu0 0.0
        %3020 = vmatpush2.xpose.msra.mxu0 0.0
        %3021 = vmatprep.subr.mxu0 0.0
        %3022 = vmatpush2.xpose.msra.mxu0 0.0
        %3023 = vmatprep.subr.mxu0 0.0
        %3024 = vmatpush2.xpose.msra.mxu0 0.0
        %3025 = vmatprep.subr.mxu0 0.0
        %3026 = vmatpush2.xpose.msra.mxu0 0.0
        %3027 = vmatprep.subr.mxu0 0.0
        %3028 = vmatpush2.xpose.msra.mxu0 0.0
        %3029 = vmatprep.subr.mxu0 0.0
        %3030 = vmatpush2.xpose.msra.mxu0 0.0
        %3031 = vmatprep.subr.mxu0 0.0
        %3032 = vmatpush2.xpose.msra.mxu0 0.0
        %3033 = vmatprep.subr.mxu0 0.0
        %3034 = vmatpush2.xpose.msra.mxu0 0.0
        %3035 = vmatprep.subr.mxu0 0.0
        %3036 = vmatpush2.xpose.msra.mxu0 0.0
        %3037 = vmatprep.subr.mxu0 0.0
        %3038 = vmatpush2.xpose.msra.mxu0 0.0
        %3039 = vmatprep.subr.mxu0 0.0
        %3040 = vmatpush2.xpose.msra.mxu0 0.0
        %3041 = vmatprep.subr.mxu0 0.0
        %3042 = vmatpush2.xpose.msra.mxu0 0.0
        %3043 = vmatprep.subr.mxu0 0.0
        %3044 = vmatpush2.xpose.msra.mxu0 0.0
        %3045 = vmatprep.subr.mxu0 0.0
        %3046 = vmatpush2.xpose.msra.mxu0 0.0
        %3047 = vmatprep.subr.mxu0 0.0
        %3048 = vmatpush2.xpose.msra.mxu0 0.0
        %3049 = vmatprep.subr.mxu0 0.0
        %3050 = vmatpush2.xpose.msra.mxu0 0.0
        %3051 = vmatprep.mubr.f32.mxu0 0.0
        %3052 = vmatmul.mubr.f32.gmra.mxu0 %v2979
        %v3053 = vpop.f32.mrf.mxu0
        %v3054 = vadd.f32 0.0, %v3053
        %v3055 = vpop.f32.mrf.mxu0
        %3056 = vmatprep.mubr.f32.mxu0 0.0
        %3057 = vmatmul.mubr.f32.gmra.mxu0 %v2981
        %v3058 = vpop.f32.mrf.mxu0
        %v3059 = vadd.f32 0.0, %v3058
        %v3060 = vpop.f32.mrf.mxu0
        %3061 = vdwg.mxu0
        %v3062 = vmul.f32 %v3054, 0.17677669
        %v3063 = vmul.f32 %v3059, 0.17677669
        %v3064 = vsel %vm1160, %v3062, -inf
        %3065 = vmax.xlane.f32.xlu0 %v3064
        %v3066 = vpop.xlane.xlu0 %3065
        %v3067 = vsel %vm1160, %v3063, -inf
        %3068 = vmax.xlane.f32.xlu0 %v3067
        %v3069 = vpop.xlane.xlu0 %3068
        %v3070 = vsub.f32 %v3062, %v3066
        %v3071 = vsub.f32 %v3063, %v3069
        %v3072 = vmul.f32 %v3070, 1.442695
        %v3073 = vpow.pop %v3072
        %v3074 = vmul.f32 %v3071, 1.442695
        %v3075 = vpow.pop %v3074
        %v3076 = vsel %vm1160, %v3073, 0.0
        %3077 = vadd.xlane.f32.xlu0 %v3076
        %v3078 = vpop.xlane.xlu0 %3077
        %v3079 = vsel %vm1160, %v3075, 0.0
        %3080 = vadd.xlane.f32.xlu0 %v3079
        %v3081 = vpop.xlane.xlu0 %3080
        %v3082 = vrcp.pop %v3078
        %v3083 = vrcp.pop %v3081
        %v3084 = vmul.f32 %v3073, %v3082
        %v3085 = vmul.f32 %v3075, %v3083
        %3086 = vrot.lane.b32.xlu0 %v2567, 64
        %v3087 = vpop.permute.xlu0 %3086
        %3088 = vrot.lane.b32.xlu0 %v2572, 64
        %v3089 = vpop.permute.xlu0 %3088
        %v3093 = vsel %vm1160, %v3084, 0
        %v3096 = vsel %vm1160, %v3085, 0
        %3098 = vmatprep.subr.mxu0 0.0
        %3099 = vmatpush1.msra.mxu0 0.0
        %3100 = vmatprep.subr.mxu0 0.0
        %3101 = vmatpush1.msra.mxu0 0.0
        %3102 = vmatprep.subr.mxu0 0.0
        %3103 = vmatpush1.msra.mxu0 0.0
        %3104 = vmatprep.subr.mxu0 0.0
        %3105 = vmatpush1.msra.mxu0 0.0
        %3106 = vmatprep.subr.mxu0 0.0
        %3107 = vmatpush1.msra.mxu0 0.0
        %3108 = vmatprep.subr.mxu0 0.0
        %3109 = vmatpush1.msra.mxu0 0.0
        %3110 = vmatprep.subr.mxu0 0.0
        %3111 = vmatpush1.msra.mxu0 0.0
        %3112 = vmatprep.subr.mxu0 0.0
        %3113 = vmatpush1.msra.mxu0 0.0
        %3114 = vmatprep.subr.mxu0 0.0
        %3115 = vmatpush1.msra.mxu0 0.0
        %3116 = vmatprep.subr.mxu0 0.0
        %3117 = vmatpush1.msra.mxu0 0.0
        %3118 = vmatprep.subr.mxu0 0.0
        %3119 = vmatpush1.msra.mxu0 0.0
        %3120 = vmatprep.subr.mxu0 0.0
        %3121 = vmatpush1.msra.mxu0 0.0
        %3122 = vmatprep.subr.mxu0 0.0
        %3123 = vmatpush1.msra.mxu0 0.0
        %3124 = vmatprep.subr.mxu0 0.0
        %3125 = vmatpush1.msra.mxu0 0.0
        %3126 = vmatprep.subr.mxu0 0.0
        %3127 = vmatpush1.msra.mxu0 %v3089
        %3128 = vmatprep.subr.mxu0 0.0
        %3129 = vmatpush1.msra.mxu0 %v3087
        %3130 = vmatprep.subr.mxu0 0.0
        %3131 = vmatpush2.msra.mxu0 0.0
        %3132 = vmatprep.subr.mxu0 0.0
        %3133 = vmatpush2.msra.mxu0 0.0
        %3134 = vmatprep.subr.mxu0 0.0
        %3135 = vmatpush2.msra.mxu0 0.0
        %3136 = vmatprep.subr.mxu0 0.0
        %3137 = vmatpush2.msra.mxu0 0.0
        %3138 = vmatprep.subr.mxu0 0.0
        %3139 = vmatpush2.msra.mxu0 0.0
        %3140 = vmatprep.subr.mxu0 0.0
        %3141 = vmatpush2.msra.mxu0 0.0
        %3142 = vmatprep.subr.mxu0 0.0
        %3143 = vmatpush2.msra.mxu0 0.0
        %3144 = vmatprep.subr.mxu0 0.0
        %3145 = vmatpush2.msra.mxu0 0.0
        %3146 = vmatprep.subr.mxu0 0.0
        %3147 = vmatpush2.msra.mxu0 0.0
        %3148 = vmatprep.subr.mxu0 0.0
        %3149 = vmatpush2.msra.mxu0 0.0
        %3150 = vmatprep.subr.mxu0 0.0
        %3151 = vmatpush2.msra.mxu0 0.0
        %3152 = vmatprep.subr.mxu0 0.0
        %3153 = vmatpush2.msra.mxu0 0.0
        %3154 = vmatprep.subr.mxu0 0.0
        %3155 = vmatpush2.msra.mxu0 0.0
        %3156 = vmatprep.subr.mxu0 0.0
        %3157 = vmatpush2.msra.mxu0 0.0
        %3158 = vmatprep.subr.mxu0 0.0
        %3159 = vmatpush2.msra.mxu0 0.0
        %3160 = vmatprep.subr.mxu0 0.0
        %3161 = vmatpush2.msra.mxu0 0.0
        %3162 = vmatprep.mubr.f32.mxu0 0.0
        %3163 = vmatmul.mubr.f32.gmra.mxu0 %v3093
        %v3164 = vpop.f32.mrf.mxu0
        %v3165 = vadd.f32 0.0, %v3164
        %v3166 = vpop.f32.mrf.mxu0
        %3167 = vmatprep.mubr.f32.mxu0 0.0
        %3168 = vmatmul.mubr.f32.gmra.mxu0 %v3096
        %v3169 = vpop.f32.mrf.mxu0
        %v3170 = vadd.f32 0.0, %v3169
        %v3171 = vpop.f32.mrf.mxu0
        %3172 = vdwg.mxu0
        %3173 = vrot.lane.b32.xlu0 %v2490, 32
        %v3174 = vpop.permute.xlu0 %3173
        %3175 = vrot.lane.b32.xlu0 %v2496, 32
        %v3176 = vpop.permute.xlu0 %3175
        %3177 = vrot.lane.b32.xlu0 %v2492, 32
        %v3178 = vpop.permute.xlu0 %3177
        %3179 = vrot.lane.b32.xlu0 %v2498, 32
        %v3180 = vpop.permute.xlu0 %3179
        %v3181 = vsel %vm1070, %v3174, 0
        %v3183 = vsel %vm1070, %v3176, 0
        %v3185 = vsel %vm1070, %v3178, 0
        %v3187 = vsel %vm1070, %v3180, 0
        %3189 = vmatprep.subr.mxu0 0.0
        %3190 = vmatpush1.xpose.msra.mxu0 0.0
        %3191 = vmatprep.subr.mxu0 0.0
        %3192 = vmatpush1.xpose.msra.mxu0 0.0
        %3193 = vmatprep.subr.mxu0 0.0
        %3194 = vmatpush1.xpose.msra.mxu0 0.0
        %3195 = vmatprep.subr.mxu0 0.0
        %3196 = vmatpush1.xpose.msra.mxu0 0.0
        %3197 = vmatprep.subr.mxu0 0.0
        %3198 = vmatpush1.xpose.msra.mxu0 0.0
        %3199 = vmatprep.subr.mxu0 0.0
        %3200 = vmatpush1.xpose.msra.mxu0 0.0
        %3201 = vmatprep.subr.mxu0 0.0
        %3202 = vmatpush1.xpose.msra.mxu0 0.0
        %3203 = vmatprep.subr.mxu0 0.0
        %3204 = vmatpush1.xpose.msra.mxu0 0.0
        %3205 = vmatprep.subr.mxu0 0.0
        %3206 = vmatpush1.xpose.msra.mxu0 0.0
        %3207 = vmatprep.subr.mxu0 0.0
        %3208 = vmatpush1.xpose.msra.mxu0 0.0
        %3209 = vmatprep.subr.mxu0 0.0
        %3210 = vmatpush1.xpose.msra.mxu0 0.0
        %3211 = vmatprep.subr.mxu0 0.0
        %3212 = vmatpush1.xpose.msra.mxu0 0.0
        %3213 = vmatprep.subr.mxu0 0.0
        %3214 = vmatpush1.xpose.msra.mxu0 0.0
        %3215 = vmatprep.subr.mxu0 0.0
        %3216 = vmatpush1.xpose.msra.mxu0 0.0
        %3217 = vmatprep.subr.mxu0 0.0
        %3218 = vmatpush1.xpose.msra.mxu0 %v3187
        %3219 = vmatprep.subr.mxu0 0.0
        %3220 = vmatpush1.xpose.msra.mxu0 %v3185
        %3221 = vmatprep.subr.mxu0 0.0
        %3222 = vmatpush2.xpose.msra.mxu0 0.0
        %3223 = vmatprep.subr.mxu0 0.0
        %3224 = vmatpush2.xpose.msra.mxu0 0.0
        %3225 = vmatprep.subr.mxu0 0.0
        %3226 = vmatpush2.xpose.msra.mxu0 0.0
        %3227 = vmatprep.subr.mxu0 0.0
        %3228 = vmatpush2.xpose.msra.mxu0 0.0
        %3229 = vmatprep.subr.mxu0 0.0
        %3230 = vmatpush2.xpose.msra.mxu0 0.0
        %3231 = vmatprep.subr.mxu0 0.0
        %3232 = vmatpush2.xpose.msra.mxu0 0.0
        %3233 = vmatprep.subr.mxu0 0.0
        %3234 = vmatpush2.xpose.msra.mxu0 0.0
        %3235 = vmatprep.subr.mxu0 0.0
        %3236 = vmatpush2.xpose.msra.mxu0 0.0
        %3237 = vmatprep.subr.mxu0 0.0
        %3238 = vmatpush2.xpose.msra.mxu0 0.0
        %3239 = vmatprep.subr.mxu0 0.0
        %3240 = vmatpush2.xpose.msra.mxu0 0.0
        %3241 = vmatprep.subr.mxu0 0.0
        %3242 = vmatpush2.xpose.msra.mxu0 0.0
        %3243 = vmatprep.subr.mxu0 0.0
        %3244 = vmatpush2.xpose.msra.mxu0 0.0
        %3245 = vmatprep.subr.mxu0 0.0
        %3246 = vmatpush2.xpose.msra.mxu0 0.0
        %3247 = vmatprep.subr.mxu0 0.0
        %3248 = vmatpush2.xpose.msra.mxu0 0.0
        %3249 = vmatprep.subr.mxu0 0.0
        %3250 = vmatpush2.xpose.msra.mxu0 0.0
        %3251 = vmatprep.subr.mxu0 0.0
        %3252 = vmatpush2.xpose.msra.mxu0 0.0
        %3253 = vmatprep.mubr.f32.mxu0 0.0
        %3254 = vmatmul.mubr.f32.gmra.mxu0 %v3181
        %v3255 = vpop.f32.mrf.mxu0
        %v3256 = vadd.f32 0.0, %v3255
        %v3257 = vpop.f32.mrf.mxu0
        %3258 = vmatprep.mubr.f32.mxu0 0.0
        %3259 = vmatmul.mubr.f32.gmra.mxu0 %v3183
        %v3260 = vpop.f32.mrf.mxu0
        %v3261 = vadd.f32 0.0, %v3260
        %v3262 = vpop.f32.mrf.mxu0
        %3263 = vdwg.mxu0
        %v3264 = vmul.f32 %v3256, 0.17677669
        %v3265 = vmul.f32 %v3261, 0.17677669
        %v3266 = vsel %vm1160, %v3264, -inf
        %3267 = vmax.xlane.f32.xlu0 %v3266
        %v3268 = vpop.xlane.xlu0 %3267
        %v3269 = vsel %vm1160, %v3265, -inf
        %3270 = vmax.xlane.f32.xlu0 %v3269
        %v3271 = vpop.xlane.xlu0 %3270
        %v3272 = vsub.f32 %v3264, %v3268
        %v3273 = vsub.f32 %v3265, %v3271
        %v3274 = vmul.f32 %v3272, 1.442695
        %v3275 = vpow.pop %v3274
        %v3276 = vmul.f32 %v3273, 1.442695
        %v3277 = vpow.pop %v3276
        %v3278 = vsel %vm1160, %v3275, 0.0
        %3279 = vadd.xlane.f32.xlu0 %v3278
        %v3280 = vpop.xlane.xlu0 %3279
        %v3281 = vsel %vm1160, %v3277, 0.0
        %3282 = vadd.xlane.f32.xlu0 %v3281
        %v3283 = vpop.xlane.xlu0 %3282
        %v3284 = vrcp.pop %v3280
        %v3285 = vrcp.pop %v3283
        %v3286 = vmul.f32 %v3275, %v3284
        %v3287 = vmul.f32 %v3277, %v3285
        %3288 = vrot.lane.b32.xlu0 %v2567, 32
        %v3289 = vpop.permute.xlu0 %3288
        %3290 = vrot.lane.b32.xlu0 %v2572, 32
        %v3291 = vpop.permute.xlu0 %3290
        %v3295 = vsel %vm1160, %v3286, 0
        %v3298 = vsel %vm1160, %v3287, 0
        %3300 = vmatprep.subr.mxu0 0.0
        %3301 = vmatpush1.msra.mxu0 0.0
        %3302 = vmatprep.subr.mxu0 0.0
        %3303 = vmatpush1.msra.mxu0 0.0
        %3304 = vmatprep.subr.mxu0 0.0
        %3305 = vmatpush1.msra.mxu0 0.0
        %3306 = vmatprep.subr.mxu0 0.0
        %3307 = vmatpush1.msra.mxu0 0.0
        %3308 = vmatprep.subr.mxu0 0.0
        %3309 = vmatpush1.msra.mxu0 0.0
        %3310 = vmatprep.subr.mxu0 0.0
        %3311 = vmatpush1.msra.mxu0 0.0
        %3312 = vmatprep.subr.mxu0 0.0
        %3313 = vmatpush1.msra.mxu0 0.0
        %3314 = vmatprep.subr.mxu0 0.0
        %3315 = vmatpush1.msra.mxu0 0.0
        %3316 = vmatprep.subr.mxu0 0.0
        %3317 = vmatpush1.msra.mxu0 0.0
        %3318 = vmatprep.subr.mxu0 0.0
        %3319 = vmatpush1.msra.mxu0 0.0
        %3320 = vmatprep.subr.mxu0 0.0
        %3321 = vmatpush1.msra.mxu0 0.0
        %3322 = vmatprep.subr.mxu0 0.0
        %3323 = vmatpush1.msra.mxu0 0.0
        %3324 = vmatprep.subr.mxu0 0.0
        %3325 = vmatpush1.msra.mxu0 0.0
        %3326 = vmatprep.subr.mxu0 0.0
        %3327 = vmatpush1.msra.mxu0 0.0
        %3328 = vmatprep.subr.mxu0 0.0
        %3329 = vmatpush1.msra.mxu0 %v3291
        %3330 = vmatprep.subr.mxu0 0.0
        %3331 = vmatpush1.msra.mxu0 %v3289
        %3332 = vmatprep.subr.mxu0 0.0
        %3333 = vmatpush2.msra.mxu0 0.0
        %3334 = vmatprep.subr.mxu0 0.0
        %3335 = vmatpush2.msra.mxu0 0.0
        %3336 = vmatprep.subr.mxu0 0.0
        %3337 = vmatpush2.msra.mxu0 0.0
        %3338 = vmatprep.subr.mxu0 0.0
        %3339 = vmatpush2.msra.mxu0 0.0
        %3340 = vmatprep.subr.mxu0 0.0
        %3341 = vmatpush2.msra.mxu0 0.0
        %3342 = vmatprep.subr.mxu0 0.0
        %3343 = vmatpush2.msra.mxu0 0.0
        %3344 = vmatprep.subr.mxu0 0.0
        %3345 = vmatpush2.msra.mxu0 0.0
        %3346 = vmatprep.subr.mxu0 0.0
        %3347 = vmatpush2.msra.mxu0 0.0
        %3348 = vmatprep.subr.mxu0 0.0
        %3349 = vmatpush2.msra.mxu0 0.0
        %3350 = vmatprep.subr.mxu0 0.0
        %3351 = vmatpush2.msra.mxu0 0.0
        %3352 = vmatprep.subr.mxu0 0.0
        %3353 = vmatpush2.msra.mxu0 0.0
        %3354 = vmatprep.subr.mxu0 0.0
        %3355 = vmatpush2.msra.mxu0 0.0
        %3356 = vmatprep.subr.mxu0 0.0
        %3357 = vmatpush2.msra.mxu0 0.0
        %3358 = vmatprep.subr.mxu0 0.0
        %3359 = vmatpush2.msra.mxu0 0.0
        %3360 = vmatprep.subr.mxu0 0.0
        %3361 = vmatpush2.msra.mxu0 0.0
        %3362 = vmatprep.subr.mxu0 0.0
        %3363 = vmatpush2.msra.mxu0 0.0
        %3364 = vmatprep.mubr.f32.mxu0 0.0
        %3365 = vmatmul.mubr.f32.gmra.mxu0 %v3295
        %v3366 = vpop.f32.mrf.mxu0
        %v3367 = vadd.f32 0.0, %v3366
        %v3368 = vpop.f32.mrf.mxu0
        %3369 = vmatprep.mubr.f32.mxu0 0.0
        %3370 = vmatmul.mubr.f32.gmra.mxu0 %v3298
        %v3371 = vpop.f32.mrf.mxu0
        %v3372 = vadd.f32 0.0, %v3371
        %v3373 = vpop.f32.mrf.mxu0
        %3374 = vdwg.mxu0
        %3377 = vrot.lane.b32.xlu0 %v2963, 32
        %v3378 = vpop.permute.xlu0 %3377
        %3379 = vrot.lane.b32.xlu0 %v2968, 32
        %v3380 = vpop.permute.xlu0 %3379
        %3385 = vrot.lane.b32.xlu0 %v3165, 64
        %v3386 = vpop.permute.xlu0 %3385
        %3387 = vrot.lane.b32.xlu0 %v3170, 64
        %v3388 = vpop.permute.xlu0 %3387
        %3393 = vrot.lane.b32.xlu0 %v3367, 96
        %v3394 = vpop.permute.xlu0 %3393
        %3395 = vrot.lane.b32.xlu0 %v3372, 96
        %v3396 = vpop.permute.xlu0 %3395
        %v3399 = vsel %vm1070, %v2759, %v3378
        %v3400 = vsel %vm1070, %v2764, %v3380
        %v3401 = vsel %vm728, %v3399, %v3386
        %v3402 = vsel %vm728, %v3400, %v3388
        %v3403 = vsel %vm1900, %v3401, %v3394
        %v3404 = vsel %vm1900, %v3402, %v3396
        %s3405 = scalar_lea.vmem [#allocation4], 128
        %v3406 = vld [vmem:[%s3405] sm:$0xff]
        %v3407 = vld [vmem:[%s3405 + $0x8] sm:$0xff]
        %v3408 = vld [vmem:[%s3405 + $0x10] sm:$0xff]
        %v3409 = vld [vmem:[%s3405 + $0x18] sm:$0xff]
        %v3410 = vld [vmem:[%s3405 + $0x20] sm:$0xff]
        %v3411 = vld [vmem:[%s3405 + $0x28] sm:$0xff]
        %v3412 = vld [vmem:[%s3405 + $0x30] sm:$0xff]
        %v3413 = vld [vmem:[%s3405 + $0x38] sm:$0xff]
        %v3414 = vld [vmem:[%s3405 + $0x40] sm:$0xff]
        %v3415 = vld [vmem:[%s3405 + $0x48] sm:$0xff]
        %v3416 = vld [vmem:[%s3405 + $0x50] sm:$0xff]
        %v3417 = vld [vmem:[%s3405 + $0x58] sm:$0xff]
        %v3418 = vld [vmem:[%s3405 + $0x60] sm:$0xff]
        %v3419 = vld [vmem:[%s3405 + $0x68] sm:$0xff]
        %v3420 = vld [vmem:[%s3405 + $0x70] sm:$0xff]
        %v3421 = vld [vmem:[%s3405 + $0x78] sm:$0xff]
        %s3422 = scalar_lea.vmem %s9, 1
        %v3423 = vld [vmem:[%s3422] sm:$0x1]
        %v3425 = vlaneseq
        %v3426 = vshrl.u32 %v3425, 7
        %v3427 = vsub.s32 0, %v3426
        %v3428 = vrot.slane %v3423, %v3427
        %3430 = vmatprep.subr.mxu0 0.0
        %3431 = vmatpush1.msra.mxu0 %v3421
        %3432 = vmatprep.subr.mxu0 0.0
        %3433 = vmatpush1.msra.mxu0 %v3420
        %3434 = vmatprep.subr.mxu0 0.0
        %3435 = vmatpush1.msra.mxu0 %v3419
        %3436 = vmatprep.subr.mxu0 0.0
        %3437 = vmatpush1.msra.mxu0 %v3418
        %3438 = vmatprep.subr.mxu0 0.0
        %3439 = vmatpush1.msra.mxu0 %v3417
        %3440 = vmatprep.subr.mxu0 0.0
        %3441 = vmatpush1.msra.mxu0 %v3416
        %3442 = vmatprep.subr.mxu0 0.0
        %3443 = vmatpush1.msra.mxu0 %v3415
        %3444 = vmatprep.subr.mxu0 0.0
        %3445 = vmatpush1.msra.mxu0 %v3414
        %3446 = vmatprep.subr.mxu0 0.0
        %3447 = vmatpush1.msra.mxu0 %v3413
        %3448 = vmatprep.subr.mxu0 0.0
        %3449 = vmatpush1.msra.mxu0 %v3412
        %3450 = vmatprep.subr.mxu0 0.0
        %3451 = vmatpush1.msra.mxu0 %v3411
        %3452 = vmatprep.subr.mxu0 0.0
        %3453 = vmatpush1.msra.mxu0 %v3410
        %3454 = vmatprep.subr.mxu0 0.0
        %3455 = vmatpush1.msra.mxu0 %v3409
        %3456 = vmatprep.subr.mxu0 0.0
        %3457 = vmatpush1.msra.mxu0 %v3408
        %3458 = vmatprep.subr.mxu0 0.0
        %3459 = vmatpush1.msra.mxu0 %v3407
        %3460 = vmatprep.subr.mxu0 0.0
        %3461 = vmatpush1.msra.mxu0 %v3406
        %3462 = vmatprep.subr.mxu0 0.0
        %3463 = vmatpush2.msra.mxu0 0.0
        %3464 = vmatprep.subr.mxu0 0.0
        %3465 = vmatpush2.msra.mxu0 0.0
        %3466 = vmatprep.subr.mxu0 0.0
        %3467 = vmatpush2.msra.mxu0 0.0
        %3468 = vmatprep.subr.mxu0 0.0
        %3469 = vmatpush2.msra.mxu0 0.0
        %3470 = vmatprep.subr.mxu0 0.0
        %3471 = vmatpush2.msra.mxu0 0.0
        %3472 = vmatprep.subr.mxu0 0.0
        %3473 = vmatpush2.msra.mxu0 0.0
        %3474 = vmatprep.subr.mxu0 0.0
        %3475 = vmatpush2.msra.mxu0 0.0
        %3476 = vmatprep.subr.mxu0 0.0
        %3477 = vmatpush2.msra.mxu0 0.0
        %3478 = vmatprep.subr.mxu0 0.0
        %3479 = vmatpush2.msra.mxu0 0.0
        %3480 = vmatprep.subr.mxu0 0.0
        %3481 = vmatpush2.msra.mxu0 0.0
        %3482 = vmatprep.subr.mxu0 0.0
        %3483 = vmatpush2.msra.mxu0 0.0
        %3484 = vmatprep.subr.mxu0 0.0
        %3485 = vmatpush2.msra.mxu0 0.0
        %3486 = vmatprep.subr.mxu0 0.0
        %3487 = vmatpush2.msra.mxu0 0.0
        %3488 = vmatprep.subr.mxu0 0.0
        %3489 = vmatpush2.msra.mxu0 0.0
        %3490 = vmatprep.subr.mxu0 0.0
        %3491 = vmatpush2.msra.mxu0 0.0
        %3492 = vmatprep.subr.mxu0 0.0
        %3493 = vmatpush2.msra.mxu0 0.0
        %3494 = vmatprep.mubr.f32.mxu0 0.0
        %3495 = vmatmul.mubr.f32.gmra.mxu0 %v3403
        %v3496 = vpop.f32.mrf.mxu0
        %v3497 = vadd.f32 %v3428, %v3496
        %v3498 = vpop.f32.mrf.mxu0
        %3499 = vmatprep.mubr.f32.mxu0 0.0
        %3500 = vmatmul.mubr.f32.gmra.mxu0 %v3404
        %v3501 = vpop.f32.mrf.mxu0
        %v3502 = vadd.f32 %v3428, %v3501
        %v3503 = vpop.f32.mrf.mxu0
        %3504 = vdwg.mxu0
        %v3505 = vadd.f32 %v2354, %v3497
        %v3506 = vadd.f32 %v2355, %v3502
        %s3507 = scalar_lea.vmem %s10, 1
        %v3508 = vld [vmem:[%s3507] sm:$0x1]
        %s3509 = scalar_lea.vmem %s11, 1
        %v3510 = vld [vmem:[%s3509] sm:$0x1]
        %3511 = vadd.xlane.f32.xlu0 %v3505
        %v3512 = vpop.xlane.xlu0 %3511
        %3513 = vadd.xlane.f32.xlu0 %v3506
        %v3514 = vpop.xlane.xlu0 %3513
        %v3515 = vmul.f32 %v3512, %v814
        %v3516 = vmul.f32 %v3514, %v814
        %v3517 = vsub.f32 %v3505, %v3515
        %v3518 = vsub.f32 %v3506, %v3516
        %v3519 = vmul.f32 %v3517, %v3517
        %v3520 = vmul.f32 %v3518, %v3518
        %3521 = vadd.xlane.f32.xlu0 %v3519
        %v3522 = vpop.xlane.xlu0 %3521
        %3523 = vadd.xlane.f32.xlu0 %v3520
        %v3524 = vpop.xlane.xlu0 %3523
        %v3525 = vmul.f32 %v3522, %v814
        %v3526 = vmul.f32 %v3524, %v814
        %v3527 = vadd.f32 %v3525, 1e-05
        %v3528 = vadd.f32 %v3526, 1e-05
        %v3529 = vrsqrt.pop %v3527
        %v3530 = vrsqrt.pop %v3528
        %v3531 = vmul.f32 %v3517, %v3529
        %v3532 = vmul.f32 %v3518, %v3530
        %v3534 = vlaneseq
        %v3535 = vshrl.u32 %v3534, 7
        %v3536 = vsub.s32 0, %v3535
        %v3537 = vrot.slane %v3508, %v3536
        %v3539 = vmul.f32 %v3531, %v3537
        %v3540 = vmul.f32 %v3532, %v3537
        %v3542 = vlaneseq
        %v3543 = vshrl.u32 %v3542, 7
        %v3544 = vsub.s32 0, %v3543
        %v3545 = vrot.slane %v3510, %v3544
        %v3547 = vadd.f32 %v3539, %v3545
        %v3548 = vadd.f32 %v3540, %v3545
        %s3549 = scalar_lea.vmem [#allocation6], 256
        %v3550 = vld [vmem:[%s3549] sm:$0xff]
        %v3551 = vld [vmem:[%s3549 + $0x8] sm:$0xff]
        %v3552 = vld [vmem:[%s3549 + $0x10] sm:$0xff]
        %v3553 = vld [vmem:[%s3549 + $0x18] sm:$0xff]
        %v3554 = vld [vmem:[%s3549 + $0x20] sm:$0xff]
        %v3555 = vld [vmem:[%s3549 + $0x28] sm:$0xff]
        %v3556 = vld [vmem:[%s3549 + $0x30] sm:$0xff]
        %v3557 = vld [vmem:[%s3549 + $0x38] sm:$0xff]
        %v3558 = vld [vmem:[%s3549 + $0x40] sm:$0xff]
        %v3559 = vld [vmem:[%s3549 + $0x48] sm:$0xff]
        %v3560 = vld [vmem:[%s3549 + $0x50] sm:$0xff]
        %v3561 = vld [vmem:[%s3549 + $0x58] sm:$0xff]
        %v3562 = vld [vmem:[%s3549 + $0x60] sm:$0xff]
        %v3563 = vld [vmem:[%s3549 + $0x68] sm:$0xff]
        %v3564 = vld [vmem:[%s3549 + $0x70] sm:$0xff]
        %v3565 = vld [vmem:[%s3549 + $0x78] sm:$0xff]
        %v3566 = vld [vmem:[%s3549 + $0x80] sm:$0xff]
        %v3567 = vld [vmem:[%s3549 + $0x88] sm:$0xff]
        %v3568 = vld [vmem:[%s3549 + $0x90] sm:$0xff]
        %v3569 = vld [vmem:[%s3549 + $0x98] sm:$0xff]
        %v3570 = vld [vmem:[%s3549 + $0xa0] sm:$0xff]
        %v3571 = vld [vmem:[%s3549 + $0xa8] sm:$0xff]
        %v3572 = vld [vmem:[%s3549 + $0xb0] sm:$0xff]
        %v3573 = vld [vmem:[%s3549 + $0xb8] sm:$0xff]
        %v3574 = vld [vmem:[%s3549 + $0xc0] sm:$0xff]
        %v3575 = vld [vmem:[%s3549 + $0xc8] sm:$0xff]
        %v3576 = vld [vmem:[%s3549 + $0xd0] sm:$0xff]
        %v3577 = vld [vmem:[%s3549 + $0xd8] sm:$0xff]
        %v3578 = vld [vmem:[%s3549 + $0xe0] sm:$0xff]
        %v3579 = vld [vmem:[%s3549 + $0xe8] sm:$0xff]
        %v3580 = vld [vmem:[%s3549 + $0xf0] sm:$0xff]
        %v3581 = vld [vmem:[%s3549 + $0xf8] sm:$0xff]
        %s3582 = scalar_lea.vmem %s13, 2
        %v3583 = vld [vmem:[%s3582] sm:$0x3]
        %v3585 = vlaneseq
        %v3586 = vshrl.u32 %v3585, 7
        %v3587 = vsub.s32 0, %v3586
        %v3588 = vrot.slane %v3583, %v3587
        %v3589 = vlaneseq
        %v3590 = vshrl.u32 %v3589, 7
        %v3591 = vsub.s32 1, %v3590
        %v3592 = vrot.slane %v3583, %v3591
        %3595 = vmatprep.subr.mxu0 %v3581
        %3596 = vmatpush1.msra.mxu0 %v3580
        %3597 = vmatprep.subr.mxu0 %v3579
        %3598 = vmatpush1.msra.mxu0 %v3578
        %3599 = vmatprep.subr.mxu0 %v3577
        %3600 = vmatpush1.msra.mxu0 %v3576
        %3601 = vmatprep.subr.mxu0 %v3575
        %3602 = vmatpush1.msra.mxu0 %v3574
        %3603 = vmatprep.subr.mxu0 %v3573
        %3604 = vmatpush1.msra.mxu0 %v3572
        %3605 = vmatprep.subr.mxu0 %v3571
        %3606 = vmatpush1.msra.mxu0 %v3570
        %3607 = vmatprep.subr.mxu0 %v3569
        %3608 = vmatpush1.msra.mxu0 %v3568
        %3609 = vmatprep.subr.mxu0 %v3567
        %3610 = vmatpush1.msra.mxu0 %v3566
        %3611 = vmatprep.subr.mxu0 %v3565
        %3612 = vmatpush1.msra.mxu0 %v3564
        %3613 = vmatprep.subr.mxu0 %v3563
        %3614 = vmatpush1.msra.mxu0 %v3562
        %3615 = vmatprep.subr.mxu0 %v3561
        %3616 = vmatpush1.msra.mxu0 %v3560
        %3617 = vmatprep.subr.mxu0 %v3559
        %3618 = vmatpush1.msra.mxu0 %v3558
        %3619 = vmatprep.subr.mxu0 %v3557
        %3620 = vmatpush1.msra.mxu0 %v3556
        %3621 = vmatprep.subr.mxu0 %v3555
        %3622 = vmatpush1.msra.mxu0 %v3554
        %3623 = vmatprep.subr.mxu0 %v3553
        %3624 = vmatpush1.msra.mxu0 %v3552
        %3625 = vmatprep.subr.mxu0 %v3551
        %3626 = vmatpush1.msra.mxu0 %v3550
        %3627 = vmatprep.subr.mxu0 0.0
        %3628 = vmatpush2.msra.mxu0 0.0
        %3629 = vmatprep.subr.mxu0 0.0
        %3630 = vmatpush2.msra.mxu0 0.0
        %3631 = vmatprep.subr.mxu0 0.0
        %3632 = vmatpush2.msra.mxu0 0.0
        %3633 = vmatprep.subr.mxu0 0.0
        %3634 = vmatpush2.msra.mxu0 0.0
        %3635 = vmatprep.subr.mxu0 0.0
        %3636 = vmatpush2.msra.mxu0 0.0
        %3637 = vmatprep.subr.mxu0 0.0
        %3638 = vmatpush2.msra.mxu0 0.0
        %3639 = vmatprep.subr.mxu0 0.0
        %3640 = vmatpush2.msra.mxu0 0.0
        %3641 = vmatprep.subr.mxu0 0.0
        %3642 = vmatpush2.msra.mxu0 0.0
        %3643 = vmatprep.subr.mxu0 0.0
        %3644 = vmatpush2.msra.mxu0 0.0
        %3645 = vmatprep.subr.mxu0 0.0
        %3646 = vmatpush2.msra.mxu0 0.0
        %3647 = vmatprep.subr.mxu0 0.0
        %3648 = vmatpush2.msra.mxu0 0.0
        %3649 = vmatprep.subr.mxu0 0.0
        %3650 = vmatpush2.msra.mxu0 0.0
        %3651 = vmatprep.subr.mxu0 0.0
        %3652 = vmatpush2.msra.mxu0 0.0
        %3653 = vmatprep.subr.mxu0 0.0
        %3654 = vmatpush2.msra.mxu0 0.0
        %3655 = vmatprep.subr.mxu0 0.0
        %3656 = vmatpush2.msra.mxu0 0.0
        %3657 = vmatprep.subr.mxu0 0.0
        %3658 = vmatpush2.msra.mxu0 0.0
        %3659 = vmatprep.mubr.f32.mxu0 0.0
        %3660 = vmatmul.mubr.f32.gmra.mxu0 %v3547
        %v3661 = vpop.f32.mrf.mxu0
        %v3662 = vadd.f32 %v3588, %v3661
        %v3663 = vpop.f32.mrf.mxu0
        %v3664 = vadd.f32 %v3592, %v3663
        %3665 = vmatprep.mubr.f32.mxu0 0.0
        %3666 = vmatmul.mubr.f32.gmra.mxu0 %v3548
        %v3667 = vpop.f32.mrf.mxu0
        %v3668 = vadd.f32 %v3588, %v3667
        %v3669 = vpop.f32.mrf.mxu0
        %v3670 = vadd.f32 %v3592, %v3669
        %3671 = vdwg.mxu0
        %v3672 = vmul.f32 %v3662, 0.5
        %v3673 = vmul.f32 %v3664, 0.5
        %v3674 = vmul.f32 %v3668, 0.5
        %v3675 = vmul.f32 %v3670, 0.5
        %v3676 = vmul.f32 %v3662, 0.044715
        %v3677 = vmul.f32 %v3664, 0.044715
        %v3678 = vmul.f32 %v3668, 0.044715
        %v3679 = vmul.f32 %v3670, 0.044715
        %v3680 = vmul.f32 %v3676, %v3662
        %v3681 = vmul.f32 %v3677, %v3664
        %v3682 = vmul.f32 %v3678, %v3668
        %v3683 = vmul.f32 %v3679, %v3670
        %v3684 = vmul.f32 %v3680, %v3662
        %v3685 = vmul.f32 %v3681, %v3664
        %v3686 = vmul.f32 %v3682, %v3668
        %v3687 = vmul.f32 %v3683, %v3670
        %v3688 = vadd.f32 %v3662, %v3684
        %v3689 = vadd.f32 %v3664, %v3685
        %v3690 = vadd.f32 %v3668, %v3686
        %v3691 = vadd.f32 %v3670, %v3687
        %v3692 = vmul.f32 %v3688, 0.7978846
        %v3693 = vmul.f32 %v3689, 0.7978846
        %v3694 = vmul.f32 %v3690, 0.7978846
        %v3695 = vmul.f32 %v3691, 0.7978846
        %v3696 = vtanh.pop %v3692
        %v3697 = vtanh.pop %v3693
        %v3698 = vtanh.pop %v3694
        %v3699 = vtanh.pop %v3695
        %v3700 = vadd.f32 %v3696, 1.0
        %v3701 = vadd.f32 %v3697, 1.0
        %v3702 = vadd.f32 %v3698, 1.0
        %v3703 = vadd.f32 %v3699, 1.0
        %v3704 = vmul.f32 %v3672, %v3700
        %v3705 = vmul.f32 %v3673, %v3701
        %v3706 = vmul.f32 %v3674, %v3702
        %v3707 = vmul.f32 %v3675, %v3703
        %s3708 = scalar_lea.vmem [#allocation7], 256
        %v3709 = vld [vmem:[%s3708] sm:$0xff]
        %v3710 = vld [vmem:[%s3708 + $0x8] sm:$0xff]
        %v3711 = vld [vmem:[%s3708 + $0x10] sm:$0xff]
        %v3712 = vld [vmem:[%s3708 + $0x18] sm:$0xff]
        %v3713 = vld [vmem:[%s3708 + $0x20] sm:$0xff]
        %v3714 = vld [vmem:[%s3708 + $0x28] sm:$0xff]
        %v3715 = vld [vmem:[%s3708 + $0x30] sm:$0xff]
        %v3716 = vld [vmem:[%s3708 + $0x38] sm:$0xff]
        %v3717 = vld [vmem:[%s3708 + $0x40] sm:$0xff]
        %v3718 = vld [vmem:[%s3708 + $0x48] sm:$0xff]
        %v3719 = vld [vmem:[%s3708 + $0x50] sm:$0xff]
        %v3720 = vld [vmem:[%s3708 + $0x58] sm:$0xff]
        %v3721 = vld [vmem:[%s3708 + $0x60] sm:$0xff]
        %v3722 = vld [vmem:[%s3708 + $0x68] sm:$0xff]
        %v3723 = vld [vmem:[%s3708 + $0x70] sm:$0xff]
        %v3724 = vld [vmem:[%s3708 + $0x78] sm:$0xff]
        %v3725 = vld [vmem:[%s3708 + $0x80] sm:$0xff]
        %v3726 = vld [vmem:[%s3708 + $0x88] sm:$0xff]
        %v3727 = vld [vmem:[%s3708 + $0x90] sm:$0xff]
        %v3728 = vld [vmem:[%s3708 + $0x98] sm:$0xff]
        %v3729 = vld [vmem:[%s3708 + $0xa0] sm:$0xff]
        %v3730 = vld [vmem:[%s3708 + $0xa8] sm:$0xff]
        %v3731 = vld [vmem:[%s3708 + $0xb0] sm:$0xff]
        %v3732 = vld [vmem:[%s3708 + $0xb8] sm:$0xff]
        %v3733 = vld [vmem:[%s3708 + $0xc0] sm:$0xff]
        %v3734 = vld [vmem:[%s3708 + $0xc8] sm:$0xff]
        %v3735 = vld [vmem:[%s3708 + $0xd0] sm:$0xff]
        %v3736 = vld [vmem:[%s3708 + $0xd8] sm:$0xff]
        %v3737 = vld [vmem:[%s3708 + $0xe0] sm:$0xff]
        %v3738 = vld [vmem:[%s3708 + $0xe8] sm:$0xff]
        %v3739 = vld [vmem:[%s3708 + $0xf0] sm:$0xff]
        %v3740 = vld [vmem:[%s3708 + $0xf8] sm:$0xff]
        %s3741 = scalar_lea.vmem %s15, 1
        %v3742 = vld [vmem:[%s3741] sm:$0x1]
        %v3744 = vlaneseq
        %v3745 = vshrl.u32 %v3744, 7
        %v3746 = vsub.s32 0, %v3745
        %v3747 = vrot.slane %v3742, %v3746
        %3749 = vmatprep.subr.mxu0 0.0
        %3750 = vmatpush1.msra.mxu0 %v3724
        %3751 = vmatprep.subr.mxu0 0.0
        %3752 = vmatpush1.msra.mxu0 %v3723
        %3753 = vmatprep.subr.mxu0 0.0
        %3754 = vmatpush1.msra.mxu0 %v3722
        %3755 = vmatprep.subr.mxu0 0.0
        %3756 = vmatpush1.msra.mxu0 %v3721
        %3757 = vmatprep.subr.mxu0 0.0
        %3758 = vmatpush1.msra.mxu0 %v3720
        %3759 = vmatprep.subr.mxu0 0.0
        %3760 = vmatpush1.msra.mxu0 %v3719
        %3761 = vmatprep.subr.mxu0 0.0
        %3762 = vmatpush1.msra.mxu0 %v3718
        %3763 = vmatprep.subr.mxu0 0.0
        %3764 = vmatpush1.msra.mxu0 %v3717
        %3765 = vmatprep.subr.mxu0 0.0
        %3766 = vmatpush1.msra.mxu0 %v3716
        %3767 = vmatprep.subr.mxu0 0.0
        %3768 = vmatpush1.msra.mxu0 %v3715
        %3769 = vmatprep.subr.mxu0 0.0
        %3770 = vmatpush1.msra.mxu0 %v3714
        %3771 = vmatprep.subr.mxu0 0.0
        %3772 = vmatpush1.msra.mxu0 %v3713
        %3773 = vmatprep.subr.mxu0 0.0
        %3774 = vmatpush1.msra.mxu0 %v3712
        %3775 = vmatprep.subr.mxu0 0.0
        %3776 = vmatpush1.msra.mxu0 %v3711
        %3777 = vmatprep.subr.mxu0 0.0
        %3778 = vmatpush1.msra.mxu0 %v3710
        %3779 = vmatprep.subr.mxu0 0.0
        %3780 = vmatpush1.msra.mxu0 %v3709
        %3781 = vmatprep.subr.mxu0 0.0
        %3782 = vmatpush2.msra.mxu0 %v3740
        %3783 = vmatprep.subr.mxu0 0.0
        %3784 = vmatpush2.msra.mxu0 %v3739
        %3785 = vmatprep.subr.mxu0 0.0
        %3786 = vmatpush2.msra.mxu0 %v3738
        %3787 = vmatprep.subr.mxu0 0.0
        %3788 = vmatpush2.msra.mxu0 %v3737
        %3789 = vmatprep.subr.mxu0 0.0
        %3790 = vmatpush2.msra.mxu0 %v3736
        %3791 = vmatprep.subr.mxu0 0.0
        %3792 = vmatpush2.msra.mxu0 %v3735
        %3793 = vmatprep.subr.mxu0 0.0
        %3794 = vmatpush2.msra.mxu0 %v3734
        %3795 = vmatprep.subr.mxu0 0.0
        %3796 = vmatpush2.msra.mxu0 %v3733
        %3797 = vmatprep.subr.mxu0 0.0
        %3798 = vmatpush2.msra.mxu0 %v3732
        %3799 = vmatprep.subr.mxu0 0.0
        %3800 = vmatpush2.msra.mxu0 %v3731
        %3801 = vmatprep.subr.mxu0 0.0
        %3802 = vmatpush2.msra.mxu0 %v3730
        %3803 = vmatprep.subr.mxu0 0.0
        %3804 = vmatpush2.msra.mxu0 %v3729
        %3805 = vmatprep.subr.mxu0 0.0
        %3806 = vmatpush2.msra.mxu0 %v3728
        %3807 = vmatprep.subr.mxu0 0.0
        %3808 = vmatpush2.msra.mxu0 %v3727
        %3809 = vmatprep.subr.mxu0 0.0
        %3810 = vmatpush2.msra.mxu0 %v3726
        %3811 = vmatprep.subr.mxu0 0.0
        %3812 = vmatpush2.msra.mxu0 %v3725
        %3813 = vmatprep.mubr.f32.mxu0 %v3705
        %3814 = vmatmul.mubr.f32.gmra.mxu0 %v3704
        %v3815 = vpop.f32.mrf.mxu0
        %v3816 = vadd.f32 %v3747, %v3815
        %v3817 = vpop.f32.mrf.mxu0
        %3818 = vmatprep.mubr.f32.mxu0 %v3707
        %3819 = vmatmul.mubr.f32.gmra.mxu0 %v3706
        %v3820 = vpop.f32.mrf.mxu0
        %v3821 = vadd.f32 %v3747, %v3820
        %v3822 = vpop.f32.mrf.mxu0
        %3823 = vdwg.mxu0
        %v3824 = vadd.f32 %v3547, %v3816
        %v3825 = vadd.f32 %v3548, %v3821
        %s3826 = scalar_lea.vmem %s16, 1
        %v3827 = vld [vmem:[%s3826] sm:$0x1]
        %s3828 = scalar_lea.vmem %s17, 1
        %v3829 = vld [vmem:[%s3828] sm:$0x1]
        %3830 = vadd.xlane.f32.xlu0 %v3824
        %v3831 = vpop.xlane.xlu0 %3830
        %3832 = vadd.xlane.f32.xlu0 %v3825
        %v3833 = vpop.xlane.xlu0 %3832
        %v3834 = vmul.f32 %v3831, %v814
        %v3835 = vmul.f32 %v3833, %v814
        %v3836 = vsub.f32 %v3824, %v3834
        %v3837 = vsub.f32 %v3825, %v3835
        %v3838 = vmul.f32 %v3836, %v3836
        %v3839 = vmul.f32 %v3837, %v3837
        %3840 = vadd.xlane.f32.xlu0 %v3838
        %v3841 = vpop.xlane.xlu0 %3840
        %3842 = vadd.xlane.f32.xlu0 %v3839
        %v3843 = vpop.xlane.xlu0 %3842
        %v3844 = vmul.f32 %v3841, %v814
        %v3845 = vmul.f32 %v3843, %v814
        %v3846 = vadd.f32 %v3844, 1e-05
        %v3847 = vadd.f32 %v3845, 1e-05
        %v3848 = vrsqrt.pop %v3846
        %v3849 = vrsqrt.pop %v3847
        %v3850 = vmul.f32 %v3836, %v3848
        %v3851 = vmul.f32 %v3837, %v3849
        %v3853 = vlaneseq
        %v3854 = vshrl.u32 %v3853, 7
        %v3855 = vsub.s32 0, %v3854
        %v3856 = vrot.slane %v3827, %v3855
        %v3858 = vmul.f32 %v3850, %v3856
        %v3859 = vmul.f32 %v3851, %v3856
        %v3861 = vlaneseq
        %v3862 = vshrl.u32 %v3861, 7
        %v3863 = vsub.s32 0, %v3862
        %v3864 = vrot.slane %v3829, %v3863
        %v3866 = vadd.f32 %v3858, %v3864
        %v3867 = vadd.f32 %v3859, %v3864
        %s3868 = scalar_lea.vmem [#allocation2], 768
        %v3869 = vld [vmem:[%s3868] sm:$0xff]
        %v3870 = vld [vmem:[%s3868 + $0x8] sm:$0xff]
        %v3871 = vld [vmem:[%s3868 + $0x10] sm:$0xff]
        %v3872 = vld [vmem:[%s3868 + $0x18] sm:$0xff]
        %v3873 = vld [vmem:[%s3868 + $0x20] sm:$0xff]
        %v3874 = vld [vmem:[%s3868 + $0x28] sm:$0xff]
        %v3875 = vld [vmem:[%s3868 + $0x30] sm:$0xff]
        %v3876 = vld [vmem:[%s3868 + $0x38] sm:$0xff]
        %v3877 = vld [vmem:[%s3868 + $0x40] sm:$0xff]
        %v3878 = vld [vmem:[%s3868 + $0x48] sm:$0xff]
        %v3879 = vld [vmem:[%s3868 + $0x50] sm:$0xff]
        %v3880 = vld [vmem:[%s3868 + $0x58] sm:$0xff]
        %v3881 = vld [vmem:[%s3868 + $0x60] sm:$0xff]
        %v3882 = vld [vmem:[%s3868 + $0x68] sm:$0xff]
        %v3883 = vld [vmem:[%s3868 + $0x70] sm:$0xff]
        %v3884 = vld [vmem:[%s3868 + $0x78] sm:$0xff]
        %v3885 = vld [vmem:[%s3868 + $0x80] sm:$0xff]
        %v3886 = vld [vmem:[%s3868 + $0x88] sm:$0xff]
        %v3887 = vld [vmem:[%s3868 + $0x90] sm:$0xff]
        %v3888 = vld [vmem:[%s3868 + $0x98] sm:$0xff]
        %v3889 = vld [vmem:[%s3868 + $0xa0] sm:$0xff]
        %v3890 = vld [vmem:[%s3868 + $0xa8] sm:$0xff]
        %v3891 = vld [vmem:[%s3868 + $0xb0] sm:$0xff]
        %v3892 = vld [vmem:[%s3868 + $0xb8] sm:$0xff]
        %v3893 = vld [vmem:[%s3868 + $0xc0] sm:$0xff]
        %v3894 = vld [vmem:[%s3868 + $0xc8] sm:$0xff]
        %v3895 = vld [vmem:[%s3868 + $0xd0] sm:$0xff]
        %v3896 = vld [vmem:[%s3868 + $0xd8] sm:$0xff]
        %v3897 = vld [vmem:[%s3868 + $0xe0] sm:$0xff]
        %v3898 = vld [vmem:[%s3868 + $0xe8] sm:$0xff]
        %v3899 = vld [vmem:[%s3868 + $0xf0] sm:$0xff]
        %v3900 = vld [vmem:[%s3868 + $0xf8] sm:$0xff]
        %v3901 = vld [vmem:[%s3868 + $0x100] sm:$0xff]
        %v3902 = vld [vmem:[%s3868 + $0x108] sm:$0xff]
        %v3903 = vld [vmem:[%s3868 + $0x110] sm:$0xff]
        %v3904 = vld [vmem:[%s3868 + $0x118] sm:$0xff]
        %v3905 = vld [vmem:[%s3868 + $0x120] sm:$0xff]
        %v3906 = vld [vmem:[%s3868 + $0x128] sm:$0xff]
        %v3907 = vld [vmem:[%s3868 + $0x130] sm:$0xff]
        %v3908 = vld [vmem:[%s3868 + $0x138] sm:$0xff]
        %v3909 = vld [vmem:[%s3868 + $0x140] sm:$0xff]
        %v3910 = vld [vmem:[%s3868 + $0x148] sm:$0xff]
        %v3911 = vld [vmem:[%s3868 + $0x150] sm:$0xff]
        %v3912 = vld [vmem:[%s3868 + $0x158] sm:$0xff]
        %v3913 = vld [vmem:[%s3868 + $0x160] sm:$0xff]
        %v3914 = vld [vmem:[%s3868 + $0x168] sm:$0xff]
        %v3915 = vld [vmem:[%s3868 + $0x170] sm:$0xff]
        %v3916 = vld [vmem:[%s3868 + $0x178] sm:$0xff]
        %s3917 = scalar_lea.vmem %s7, 6
        %v3918 = vld [vmem:[%s3917] sm:$0x7]
        %v3920 = vlaneseq
        %v3921 = vshrl.u32 %v3920, 7
        %v3922 = vsub.s32 0, %v3921
        %v3923 = vrot.slane %v3918, %v3922
        %v3924 = vlaneseq
        %v3925 = vshrl.u32 %v3924, 7
        %v3926 = vsub.s32 1, %v3925
        %v3927 = vrot.slane %v3918, %v3926
        %v3928 = vlaneseq
        %v3929 = vshrl.u32 %v3928, 7
        %v3930 = vsub.s32 2, %v3929
        %v3931 = vrot.slane %v3918, %v3930
        %3935 = vmatprep.subr.mxu0 %v3915
        %3936 = vmatpush1.msra.mxu0 %v3914
        %3937 = vmatprep.subr.mxu0 %v3912
        %3938 = vmatpush1.msra.mxu0 %v3911
        %3939 = vmatprep.subr.mxu0 %v3909
        %3940 = vmatpush1.msra.mxu0 %v3908
        %3941 = vmatprep.subr.mxu0 %v3906
        %3942 = vmatpush1.msra.mxu0 %v3905
        %3943 = vmatprep.subr.mxu0 %v3903
        %3944 = vmatpush1.msra.mxu0 %v3902
        %3945 = vmatprep.subr.mxu0 %v3900
        %3946 = vmatpush1.msra.mxu0 %v3899
        %3947 = vmatprep.subr.mxu0 %v3897
        %3948 = vmatpush1.msra.mxu0 %v3896
        %3949 = vmatprep.subr.mxu0 %v3894
        %3950 = vmatpush1.msra.mxu0 %v3893
        %3951 = vmatprep.subr.mxu0 %v3891
        %3952 = vmatpush1.msra.mxu0 %v3890
        %3953 = vmatprep.subr.mxu0 %v3888
        %3954 = vmatpush1.msra.mxu0 %v3887
        %3955 = vmatprep.subr.mxu0 %v3885
        %3956 = vmatpush1.msra.mxu0 %v3884
        %3957 = vmatprep.subr.mxu0 %v3882
        %3958 = vmatpush1.msra.mxu0 %v3881
        %3959 = vmatprep.subr.mxu0 %v3879
        %3960 = vmatpush1.msra.mxu0 %v3878
        %3961 = vmatprep.subr.mxu0 %v3876
        %3962 = vmatpush1.msra.mxu0 %v3875
        %3963 = vmatprep.subr.mxu0 %v3873
        %3964 = vmatpush1.msra.mxu0 %v3872
        %3965 = vmatprep.subr.mxu0 %v3870
        %3966 = vmatpush1.msra.mxu0 %v3869
        %3967 = vmatprep.subr.mxu0 0.0
        %3968 = vmatpush2.msra.mxu0 0.0
        %3969 = vmatprep.subr.mxu0 0.0
        %3970 = vmatpush2.msra.mxu0 0.0
        %3971 = vmatprep.subr.mxu0 0.0
        %3972 = vmatpush2.msra.mxu0 0.0
        %3973 = vmatprep.subr.mxu0 0.0
        %3974 = vmatpush2.msra.mxu0 0.0
        %3975 = vmatprep.subr.mxu0 0.0
        %3976 = vmatpush2.msra.mxu0 0.0
        %3977 = vmatprep.subr.mxu0 0.0
        %3978 = vmatpush2.msra.mxu0 0.0
        %3979 = vmatprep.subr.mxu0 0.0
        %3980 = vmatpush2.msra.mxu0 0.0
        %3981 = vmatprep.subr.mxu0 0.0
        %3982 = vmatpush2.msra.mxu0 0.0
        %3983 = vmatprep.subr.mxu0 0.0
        %3984 = vmatpush2.msra.mxu0 0.0
        %3985 = vmatprep.subr.mxu0 0.0
        %3986 = vmatpush2.msra.mxu0 0.0
        %3987 = vmatprep.subr.mxu0 0.0
        %3988 = vmatpush2.msra.mxu0 0.0
        %3989 = vmatprep.subr.mxu0 0.0
        %3990 = vmatpush2.msra.mxu0 0.0
        %3991 = vmatprep.subr.mxu0 0.0
        %3992 = vmatpush2.msra.mxu0 0.0
        %3993 = vmatprep.subr.mxu0 0.0
        %3994 = vmatpush2.msra.mxu0 0.0
        %3995 = vmatprep.subr.mxu0 0.0
        %3996 = vmatpush2.msra.mxu0 0.0
        %3997 = vmatprep.subr.mxu0 0.0
        %3998 = vmatpush2.msra.mxu0 0.0
        %3999 = vmatprep.mubr.f32.mxu0 0.0
        %4000 = vmatmul.mubr.f32.gmra.mxu0 %v3866
        %v4001 = vpop.f32.mrf.mxu0
        %v4002 = vadd.f32 %v3923, %v4001
        %v4003 = vpop.f32.mrf.mxu0
        %v4004 = vadd.f32 %v3927, %v4003
        %4005 = vmatprep.mubr.f32.mxu0 0.0
        %4006 = vmatmul.mubr.f32.gmra.mxu0 %v3867
        %v4007 = vpop.f32.mrf.mxu0
        %v4008 = vadd.f32 %v3923, %v4007
        %v4009 = vpop.f32.mrf.mxu0
        %v4010 = vadd.f32 %v3927, %v4009
        %4011 = vdwg.mxu0
        %4012 = vmatprep.subr.mxu0 0.0
        %4013 = vmatpush1.msra.mxu0 %v3916
        %4014 = vmatprep.subr.mxu0 0.0
        %4015 = vmatpush1.msra.mxu0 %v3913
        %4016 = vmatprep.subr.mxu0 0.0
        %4017 = vmatpush1.msra.mxu0 %v3910
        %4018 = vmatprep.subr.mxu0 0.0
        %4019 = vmatpush1.msra.mxu0 %v3907
        %4020 = vmatprep.subr.mxu0 0.0
        %4021 = vmatpush1.msra.mxu0 %v3904
        %4022 = vmatprep.subr.mxu0 0.0
        %4023 = vmatpush1.msra.mxu0 %v3901
        %4024 = vmatprep.subr.mxu0 0.0
        %4025 = vmatpush1.msra.mxu0 %v3898
        %4026 = vmatprep.subr.mxu0 0.0
        %4027 = vmatpush1.msra.mxu0 %v3895
        %4028 = vmatprep.subr.mxu0 0.0
        %4029 = vmatpush1.msra.mxu0 %v3892
        %4030 = vmatprep.subr.mxu0 0.0
        %4031 = vmatpush1.msra.mxu0 %v3889
        %4032 = vmatprep.subr.mxu0 0.0
        %4033 = vmatpush1.msra.mxu0 %v3886
        %4034 = vmatprep.subr.mxu0 0.0
        %4035 = vmatpush1.msra.mxu0 %v3883
        %4036 = vmatprep.subr.mxu0 0.0
        %4037 = vmatpush1.msra.mxu0 %v3880
        %4038 = vmatprep.subr.mxu0 0.0
        %4039 = vmatpush1.msra.mxu0 %v3877
        %4040 = vmatprep.subr.mxu0 0.0
        %4041 = vmatpush1.msra.mxu0 %v3874
        %4042 = vmatprep.subr.mxu0 0.0
        %4043 = vmatpush1.msra.mxu0 %v3871
        %4044 = vmatprep.subr.mxu0 0.0
        %4045 = vmatpush2.msra.mxu0 0.0
        %4046 = vmatprep.subr.mxu0 0.0
        %4047 = vmatpush2.msra.mxu0 0.0
        %4048 = vmatprep.subr.mxu0 0.0
        %4049 = vmatpush2.msra.mxu0 0.0
        %4050 = vmatprep.subr.mxu0 0.0
        %4051 = vmatpush2.msra.mxu0 0.0
        %4052 = vmatprep.subr.mxu0 0.0
        %4053 = vmatpush2.msra.mxu0 0.0
        %4054 = vmatprep.subr.mxu0 0.0
        %4055 = vmatpush2.msra.mxu0 0.0
        %4056 = vmatprep.subr.mxu0 0.0
        %4057 = vmatpush2.msra.mxu0 0.0
        %4058 = vmatprep.subr.mxu0 0.0
        %4059 = vmatpush2.msra.mxu0 0.0
        %4060 = vmatprep.subr.mxu0 0.0
        %4061 = vmatpush2.msra.mxu0 0.0
        %4062 = vmatprep.subr.mxu0 0.0
        %4063 = vmatpush2.msra.mxu0 0.0
        %4064 = vmatprep.subr.mxu0 0.0
        %4065 = vmatpush2.msra.mxu0 0.0
        %4066 = vmatprep.subr.mxu0 0.0
        %4067 = vmatpush2.msra.mxu0 0.0
        %4068 = vmatprep.subr.mxu0 0.0
        %4069 = vmatpush2.msra.mxu0 0.0
        %4070 = vmatprep.subr.mxu0 0.0
        %4071 = vmatpush2.msra.mxu0 0.0
        %4072 = vmatprep.subr.mxu0 0.0
        %4073 = vmatpush2.msra.mxu0 0.0
        %4074 = vmatprep.subr.mxu0 0.0
        %4075 = vmatpush2.msra.mxu0 0.0
        %4076 = vmatprep.mubr.f32.mxu0 0.0
        %4077 = vmatmul.mubr.f32.gmra.mxu0 %v3866
        %v4078 = vpop.f32.mrf.mxu0
        %v4079 = vadd.f32 %v3931, %v4078
        %v4080 = vpop.f32.mrf.mxu0
        %4081 = vmatprep.mubr.f32.mxu0 0.0
        %4082 = vmatmul.mubr.f32.gmra.mxu0 %v3867
        %v4083 = vpop.f32.mrf.mxu0
        %v4084 = vadd.f32 %v3931, %v4083
        %v4085 = vpop.f32.mrf.mxu0
        %4086 = vdwg.mxu0
        %v4088 = vsel %vm1070, %v4002, 0
        %v4091 = vsel %vm1070, %v4008, 0
        %v4094 = vsel %vm1070, %v4004, 0
        %v4097 = vsel %vm1070, %v4010, 0
        %4099 = vmatprep.subr.mxu0 0.0
        %4100 = vmatpush1.xpose.msra.mxu0 0.0
        %4101 = vmatprep.subr.mxu0 0.0
        %4102 = vmatpush1.xpose.msra.mxu0 0.0
        %4103 = vmatprep.subr.mxu0 0.0
        %4104 = vmatpush1.xpose.msra.mxu0 0.0
        %4105 = vmatprep.subr.mxu0 0.0
        %4106 = vmatpush1.xpose.msra.mxu0 0.0
        %4107 = vmatprep.subr.mxu0 0.0
        %4108 = vmatpush1.xpose.msra.mxu0 0.0
        %4109 = vmatprep.subr.mxu0 0.0
        %4110 = vmatpush1.xpose.msra.mxu0 0.0
        %4111 = vmatprep.subr.mxu0 0.0
        %4112 = vmatpush1.xpose.msra.mxu0 0.0
        %4113 = vmatprep.subr.mxu0 0.0
        %4114 = vmatpush1.xpose.msra.mxu0 0.0
        %4115 = vmatprep.subr.mxu0 0.0
        %4116 = vmatpush1.xpose.msra.mxu0 0.0
        %4117 = vmatprep.subr.mxu0 0.0
        %4118 = vmatpush1.xpose.msra.mxu0 0.0
        %4119 = vmatprep.subr.mxu0 0.0
        %4120 = vmatpush1.xpose.msra.mxu0 0.0
        %4121 = vmatprep.subr.mxu0 0.0
        %4122 = vmatpush1.xpose.msra.mxu0 0.0
        %4123 = vmatprep.subr.mxu0 0.0
        %4124 = vmatpush1.xpose.msra.mxu0 0.0
        %4125 = vmatprep.subr.mxu0 0.0
        %4126 = vmatpush1.xpose.msra.mxu0 0.0
        %4127 = vmatprep.subr.mxu0 0.0
        %4128 = vmatpush1.xpose.msra.mxu0 %v4097
        %4129 = vmatprep.subr.mxu0 0.0
        %4130 = vmatpush1.xpose.msra.mxu0 %v4094
        %4131 = vmatprep.subr.mxu0 0.0
        %4132 = vmatpush2.xpose.msra.mxu0 0.0
        %4133 = vmatprep.subr.mxu0 0.0
        %4134 = vmatpush2.xpose.msra.mxu0 0.0
        %4135 = vmatprep.subr.mxu0 0.0
        %4136 = vmatpush2.xpose.msra.mxu0 0.0
        %4137 = vmatprep.subr.mxu0 0.0
        %4138 = vmatpush2.xpose.msra.mxu0 0.0
        %4139 = vmatprep.subr.mxu0 0.0
        %4140 = vmatpush2.xpose.msra.mxu0 0.0
        %4141 = vmatprep.subr.mxu0 0.0
        %4142 = vmatpush2.xpose.msra.mxu0 0.0
        %4143 = vmatprep.subr.mxu0 0.0
        %4144 = vmatpush2.xpose.msra.mxu0 0.0
        %4145 = vmatprep.subr.mxu0 0.0
        %4146 = vmatpush2.xpose.msra.mxu0 0.0
        %4147 = vmatprep.subr.mxu0 0.0
        %4148 = vmatpush2.xpose.msra.mxu0 0.0
        %4149 = vmatprep.subr.mxu0 0.0
        %4150 = vmatpush2.xpose.msra.mxu0 0.0
        %4151 = vmatprep.subr.mxu0 0.0
        %4152 = vmatpush2.xpose.msra.mxu0 0.0
        %4153 = vmatprep.subr.mxu0 0.0
        %4154 = vmatpush2.xpose.msra.mxu0 0.0
        %4155 = vmatprep.subr.mxu0 0.0
        %4156 = vmatpush2.xpose.msra.mxu0 0.0
        %4157 = vmatprep.subr.mxu0 0.0
        %4158 = vmatpush2.xpose.msra.mxu0 0.0
        %4159 = vmatprep.subr.mxu0 0.0
        %4160 = vmatpush2.xpose.msra.mxu0 0.0
        %4161 = vmatprep.subr.mxu0 0.0
        %4162 = vmatpush2.xpose.msra.mxu0 0.0
        %4163 = vmatprep.mubr.f32.mxu0 0.0
        %4164 = vmatmul.mubr.f32.gmra.mxu0 %v4088
        %v4165 = vpop.f32.mrf.mxu0
        %v4166 = vadd.f32 0.0, %v4165
        %v4167 = vpop.f32.mrf.mxu0
        %4168 = vmatprep.mubr.f32.mxu0 0.0
        %4169 = vmatmul.mubr.f32.gmra.mxu0 %v4091
        %v4170 = vpop.f32.mrf.mxu0
        %v4171 = vadd.f32 0.0, %v4170
        %v4172 = vpop.f32.mrf.mxu0
        %4173 = vdwg.mxu0
        %v4174 = vmul.f32 %v4166, 0.17677669
        %v4175 = vmul.f32 %v4171, 0.17677669
        %v4176 = vsel %vm1160, %v4174, -inf
        %4177 = vmax.xlane.f32.xlu0 %v4176
        %v4178 = vpop.xlane.xlu0 %4177
        %v4179 = vsel %vm1160, %v4175, -inf
        %4180 = vmax.xlane.f32.xlu0 %v4179
        %v4181 = vpop.xlane.xlu0 %4180
        %v4182 = vsub.f32 %v4174, %v4178
        %v4183 = vsub.f32 %v4175, %v4181
        %v4184 = vmul.f32 %v4182, 1.442695
        %v4185 = vpow.pop %v4184
        %v4186 = vmul.f32 %v4183, 1.442695
        %v4187 = vpow.pop %v4186
        %v4188 = vsel %vm1160, %v4185, 0.0
        %4189 = vadd.xlane.f32.xlu0 %v4188
        %v4190 = vpop.xlane.xlu0 %4189
        %v4191 = vsel %vm1160, %v4187, 0.0
        %4192 = vadd.xlane.f32.xlu0 %v4191
        %v4193 = vpop.xlane.xlu0 %4192
        %v4194 = vrcp.pop %v4190
        %v4195 = vrcp.pop %v4193
        %v4196 = vmul.f32 %v4185, %v4194
        %v4197 = vmul.f32 %v4187, %v4195
        %v4199 = vsel %vm1160, %v4196, 0
        %v4202 = vsel %vm1160, %v4197, 0
        %4204 = vmatprep.subr.mxu0 0.0
        %4205 = vmatpush1.msra.mxu0 0.0
        %4206 = vmatprep.subr.mxu0 0.0
        %4207 = vmatpush1.msra.mxu0 0.0
        %4208 = vmatprep.subr.mxu0 0.0
        %4209 = vmatpush1.msra.mxu0 0.0
        %4210 = vmatprep.subr.mxu0 0.0
        %4211 = vmatpush1.msra.mxu0 0.0
        %4212 = vmatprep.subr.mxu0 0.0
        %4213 = vmatpush1.msra.mxu0 0.0
        %4214 = vmatprep.subr.mxu0 0.0
        %4215 = vmatpush1.msra.mxu0 0.0
        %4216 = vmatprep.subr.mxu0 0.0
        %4217 = vmatpush1.msra.mxu0 0.0
        %4218 = vmatprep.subr.mxu0 0.0
        %4219 = vmatpush1.msra.mxu0 0.0
        %4220 = vmatprep.subr.mxu0 0.0
        %4221 = vmatpush1.msra.mxu0 0.0
        %4222 = vmatprep.subr.mxu0 0.0
        %4223 = vmatpush1.msra.mxu0 0.0
        %4224 = vmatprep.subr.mxu0 0.0
        %4225 = vmatpush1.msra.mxu0 0.0
        %4226 = vmatprep.subr.mxu0 0.0
        %4227 = vmatpush1.msra.mxu0 0.0
        %4228 = vmatprep.subr.mxu0 0.0
        %4229 = vmatpush1.msra.mxu0 0.0
        %4230 = vmatprep.subr.mxu0 0.0
        %4231 = vmatpush1.msra.mxu0 0.0
        %4232 = vmatprep.subr.mxu0 0.0
        %4233 = vmatpush1.msra.mxu0 %v4084
        %4234 = vmatprep.subr.mxu0 0.0
        %4235 = vmatpush1.msra.mxu0 %v4079
        %4236 = vmatprep.subr.mxu0 0.0
        %4237 = vmatpush2.msra.mxu0 0.0
        %4238 = vmatprep.subr.mxu0 0.0
        %4239 = vmatpush2.msra.mxu0 0.0
        %4240 = vmatprep.subr.mxu0 0.0
        %4241 = vmatpush2.msra.mxu0 0.0
        %4242 = vmatprep.subr.mxu0 0.0
        %4243 = vmatpush2.msra.mxu0 0.0
        %4244 = vmatprep.subr.mxu0 0.0
        %4245 = vmatpush2.msra.mxu0 0.0
        %4246 = vmatprep.subr.mxu0 0.0
        %4247 = vmatpush2.msra.mxu0 0.0
        %4248 = vmatprep.subr.mxu0 0.0
        %4249 = vmatpush2.msra.mxu0 0.0
        %4250 = vmatprep.subr.mxu0 0.0
        %4251 = vmatpush2.msra.mxu0 0.0
        %4252 = vmatprep.subr.mxu0 0.0
        %4253 = vmatpush2.msra.mxu0 0.0
        %4254 = vmatprep.subr.mxu0 0.0
        %4255 = vmatpush2.msra.mxu0 0.0
        %4256 = vmatprep.subr.mxu0 0.0
        %4257 = vmatpush2.msra.mxu0 0.0
        %4258 = vmatprep.subr.mxu0 0.0
        %4259 = vmatpush2.msra.mxu0 0.0
        %4260 = vmatprep.subr.mxu0 0.0
        %4261 = vmatpush2.msra.mxu0 0.0
        %4262 = vmatprep.subr.mxu0 0.0
        %4263 = vmatpush2.msra.mxu0 0.0
        %4264 = vmatprep.subr.mxu0 0.0
        %4265 = vmatpush2.msra.mxu0 0.0
        %4266 = vmatprep.subr.mxu0 0.0
        %4267 = vmatpush2.msra.mxu0 0.0
        %4268 = vmatprep.mubr.f32.mxu0 0.0
        %4269 = vmatmul.mubr.f32.gmra.mxu0 %v4199
        %v4270 = vpop.f32.mrf.mxu0
        %v4271 = vadd.f32 0.0, %v4270
        %v4272 = vpop.f32.mrf.mxu0
        %4273 = vmatprep.mubr.f32.mxu0 0.0
        %4274 = vmatmul.mubr.f32.gmra.mxu0 %v4202
        %v4275 = vpop.f32.mrf.mxu0
        %v4276 = vadd.f32 0.0, %v4275
        %v4277 = vpop.f32.mrf.mxu0
        %4278 = vdwg.mxu0
        %4279 = vrot.lane.b32.xlu0 %v4002, 96
        %v4280 = vpop.permute.xlu0 %4279
        %4281 = vrot.lane.b32.xlu0 %v4008, 96
        %v4282 = vpop.permute.xlu0 %4281
        %4283 = vrot.lane.b32.xlu0 %v4004, 96
        %v4284 = vpop.permute.xlu0 %4283
        %4285 = vrot.lane.b32.xlu0 %v4010, 96
        %v4286 = vpop.permute.xlu0 %4285
        %v4287 = vsel %vm1070, %v4280, 0
        %v4289 = vsel %vm1070, %v4282, 0
        %v4291 = vsel %vm1070, %v4284, 0
        %v4293 = vsel %vm1070, %v4286, 0
        %4295 = vmatprep.subr.mxu0 0.0
        %4296 = vmatpush1.xpose.msra.mxu0 0.0
        %4297 = vmatprep.subr.mxu0 0.0
        %4298 = vmatpush1.xpose.msra.mxu0 0.0
        %4299 = vmatprep.subr.mxu0 0.0
        %4300 = vmatpush1.xpose.msra.mxu0 0.0
        %4301 = vmatprep.subr.mxu0 0.0
        %4302 = vmatpush1.xpose.msra.mxu0 0.0
        %4303 = vmatprep.subr.mxu0 0.0
        %4304 = vmatpush1.xpose.msra.mxu0 0.0
        %4305 = vmatprep.subr.mxu0 0.0
        %4306 = vmatpush1.xpose.msra.mxu0 0.0
        %4307 = vmatprep.subr.mxu0 0.0
        %4308 = vmatpush1.xpose.msra.mxu0 0.0
        %4309 = vmatprep.subr.mxu0 0.0
        %4310 = vmatpush1.xpose.msra.mxu0 0.0
        %4311 = vmatprep.subr.mxu0 0.0
        %4312 = vmatpush1.xpose.msra.mxu0 0.0
        %4313 = vmatprep.subr.mxu0 0.0
        %4314 = vmatpush1.xpose.msra.mxu0 0.0
        %4315 = vmatprep.subr.mxu0 0.0
        %4316 = vmatpush1.xpose.msra.mxu0 0.0
        %4317 = vmatprep.subr.mxu0 0.0
        %4318 = vmatpush1.xpose.msra.mxu0 0.0
        %4319 = vmatprep.subr.mxu0 0.0
        %4320 = vmatpush1.xpose.msra.mxu0 0.0
        %4321 = vmatprep.subr.mxu0 0.0
        %4322 = vmatpush1.xpose.msra.mxu0 0.0
        %4323 = vmatprep.subr.mxu0 0.0
        %4324 = vmatpush1.xpose.msra.mxu0 %v4293
        %4325 = vmatprep.subr.mxu0 0.0
        %4326 = vmatpush1.xpose.msra.mxu0 %v4291
        %4327 = vmatprep.subr.mxu0 0.0
        %4328 = vmatpush2.xpose.msra.mxu0 0.0
        %4329 = vmatprep.subr.mxu0 0.0
        %4330 = vmatpush2.xpose.msra.mxu0 0.0
        %4331 = vmatprep.subr.mxu0 0.0
        %4332 = vmatpush2.xpose.msra.mxu0 0.0
        %4333 = vmatprep.subr.mxu0 0.0
        %4334 = vmatpush2.xpose.msra.mxu0 0.0
        %4335 = vmatprep.subr.mxu0 0.0
        %4336 = vmatpush2.xpose.msra.mxu0 0.0
        %4337 = vmatprep.subr.mxu0 0.0
        %4338 = vmatpush2.xpose.msra.mxu0 0.0
        %4339 = vmatprep.subr.mxu0 0.0
        %4340 = vmatpush2.xpose.msra.mxu0 0.0
        %4341 = vmatprep.subr.mxu0 0.0
        %4342 = vmatpush2.xpose.msra.mxu0 0.0
        %4343 = vmatprep.subr.mxu0 0.0
        %4344 = vmatpush2.xpose.msra.mxu0 0.0
        %4345 = vmatprep.subr.mxu0 0.0
        %4346 = vmatpush2.xpose.msra.mxu0 0.0
        %4347 = vmatprep.subr.mxu0 0.0
        %4348 = vmatpush2.xpose.msra.mxu0 0.0
        %4349 = vmatprep.subr.mxu0 0.0
        %4350 = vmatpush2.xpose.msra.mxu0 0.0
        %4351 = vmatprep.subr.mxu0 0.0
        %4352 = vmatpush2.xpose.msra.mxu0 0.0
        %4353 = vmatprep.subr.mxu0 0.0
        %4354 = vmatpush2.xpose.msra.mxu0 0.0
        %4355 = vmatprep.subr.mxu0 0.0
        %4356 = vmatpush2.xpose.msra.mxu0 0.0
        %4357 = vmatprep.subr.mxu0 0.0
        %4358 = vmatpush2.xpose.msra.mxu0 0.0
        %4359 = vmatprep.mubr.f32.mxu0 0.0
        %4360 = vmatmul.mubr.f32.gmra.mxu0 %v4287
        %v4361 = vpop.f32.mrf.mxu0
        %v4362 = vadd.f32 0.0, %v4361
        %v4363 = vpop.f32.mrf.mxu0
        %4364 = vmatprep.mubr.f32.mxu0 0.0
        %4365 = vmatmul.mubr.f32.gmra.mxu0 %v4289
        %v4366 = vpop.f32.mrf.mxu0
        %v4367 = vadd.f32 0.0, %v4366
        %v4368 = vpop.f32.mrf.mxu0
        %4369 = vdwg.mxu0
        %v4370 = vmul.f32 %v4362, 0.17677669
        %v4371 = vmul.f32 %v4367, 0.17677669
        %v4372 = vsel %vm1160, %v4370, -inf
        %4373 = vmax.xlane.f32.xlu0 %v4372
        %v4374 = vpop.xlane.xlu0 %4373
        %v4375 = vsel %vm1160, %v4371, -inf
        %4376 = vmax.xlane.f32.xlu0 %v4375
        %v4377 = vpop.xlane.xlu0 %4376
        %v4378 = vsub.f32 %v4370, %v4374
        %v4379 = vsub.f32 %v4371, %v4377
        %v4380 = vmul.f32 %v4378, 1.442695
        %v4381 = vpow.pop %v4380
        %v4382 = vmul.f32 %v4379, 1.442695
        %v4383 = vpow.pop %v4382
        %v4384 = vsel %vm1160, %v4381, 0.0
        %4385 = vadd.xlane.f32.xlu0 %v4384
        %v4386 = vpop.xlane.xlu0 %4385
        %v4387 = vsel %vm1160, %v4383, 0.0
        %4388 = vadd.xlane.f32.xlu0 %v4387
        %v4389 = vpop.xlane.xlu0 %4388
        %v4390 = vrcp.pop %v4386
        %v4391 = vrcp.pop %v4389
        %v4392 = vmul.f32 %v4381, %v4390
        %v4393 = vmul.f32 %v4383, %v4391
        %4396 = vrot.lane.b32.xlu0 %v4079, 96
        %v4397 = vpop.permute.xlu0 %4396
        %4398 = vrot.lane.b32.xlu0 %v4084, 96
        %v4399 = vpop.permute.xlu0 %4398
        %v4403 = vsel %vm1160, %v4392, 0
        %v4406 = vsel %vm1160, %v4393, 0
        %4408 = vmatprep.subr.mxu0 0.0
        %4409 = vmatpush1.msra.mxu0 0.0
        %4410 = vmatprep.subr.mxu0 0.0
        %4411 = vmatpush1.msra.mxu0 0.0
        %4412 = vmatprep.subr.mxu0 0.0
        %4413 = vmatpush1.msra.mxu0 0.0
        %4414 = vmatprep.subr.mxu0 0.0
        %4415 = vmatpush1.msra.mxu0 0.0
        %4416 = vmatprep.subr.mxu0 0.0
        %4417 = vmatpush1.msra.mxu0 0.0
        %4418 = vmatprep.subr.mxu0 0.0
        %4419 = vmatpush1.msra.mxu0 0.0
        %4420 = vmatprep.subr.mxu0 0.0
        %4421 = vmatpush1.msra.mxu0 0.0
        %4422 = vmatprep.subr.mxu0 0.0
        %4423 = vmatpush1.msra.mxu0 0.0
        %4424 = vmatprep.subr.mxu0 0.0
        %4425 = vmatpush1.msra.mxu0 0.0
        %4426 = vmatprep.subr.mxu0 0.0
        %4427 = vmatpush1.msra.mxu0 0.0
        %4428 = vmatprep.subr.mxu0 0.0
        %4429 = vmatpush1.msra.mxu0 0.0
        %4430 = vmatprep.subr.mxu0 0.0
        %4431 = vmatpush1.msra.mxu0 0.0
        %4432 = vmatprep.subr.mxu0 0.0
        %4433 = vmatpush1.msra.mxu0 0.0
        %4434 = vmatprep.subr.mxu0 0.0
        %4435 = vmatpush1.msra.mxu0 0.0
        %4436 = vmatprep.subr.mxu0 0.0
        %4437 = vmatpush1.msra.mxu0 %v4399
        %4438 = vmatprep.subr.mxu0 0.0
        %4439 = vmatpush1.msra.mxu0 %v4397
        %4440 = vmatprep.subr.mxu0 0.0
        %4441 = vmatpush2.msra.mxu0 0.0
        %4442 = vmatprep.subr.mxu0 0.0
        %4443 = vmatpush2.msra.mxu0 0.0
        %4444 = vmatprep.subr.mxu0 0.0
        %4445 = vmatpush2.msra.mxu0 0.0
        %4446 = vmatprep.subr.mxu0 0.0
        %4447 = vmatpush2.msra.mxu0 0.0
        %4448 = vmatprep.subr.mxu0 0.0
        %4449 = vmatpush2.msra.mxu0 0.0
        %4450 = vmatprep.subr.mxu0 0.0
        %4451 = vmatpush2.msra.mxu0 0.0
        %4452 = vmatprep.subr.mxu0 0.0
        %4453 = vmatpush2.msra.mxu0 0.0
        %4454 = vmatprep.subr.mxu0 0.0
        %4455 = vmatpush2.msra.mxu0 0.0
        %4456 = vmatprep.subr.mxu0 0.0
        %4457 = vmatpush2.msra.mxu0 0.0
        %4458 = vmatprep.subr.mxu0 0.0
        %4459 = vmatpush2.msra.mxu0 0.0
        %4460 = vmatprep.subr.mxu0 0.0
        %4461 = vmatpush2.msra.mxu0 0.0
        %4462 = vmatprep.subr.mxu0 0.0
        %4463 = vmatpush2.msra.mxu0 0.0
        %4464 = vmatprep.subr.mxu0 0.0
        %4465 = vmatpush2.msra.mxu0 0.0
        %4466 = vmatprep.subr.mxu0 0.0
        %4467 = vmatpush2.msra.mxu0 0.0
        %4468 = vmatprep.subr.mxu0 0.0
        %4469 = vmatpush2.msra.mxu0 0.0
        %4470 = vmatprep.subr.mxu0 0.0
        %4471 = vmatpush2.msra.mxu0 0.0
        %4472 = vmatprep.mubr.f32.mxu0 0.0
        %4473 = vmatmul.mubr.f32.gmra.mxu0 %v4403
        %v4474 = vpop.f32.mrf.mxu0
        %v4475 = vadd.f32 0.0, %v4474
        %v4476 = vpop.f32.mrf.mxu0
        %4477 = vmatprep.mubr.f32.mxu0 0.0
        %4478 = vmatmul.mubr.f32.gmra.mxu0 %v4406
        %v4479 = vpop.f32.mrf.mxu0
        %v4480 = vadd.f32 0.0, %v4479
        %v4481 = vpop.f32.mrf.mxu0
        %4482 = vdwg.mxu0
        %4483 = vrot.lane.b32.xlu0 %v4002, 64
        %v4484 = vpop.permute.xlu0 %4483
        %4485 = vrot.lane.b32.xlu0 %v4008, 64
        %v4486 = vpop.permute.xlu0 %4485
        %4487 = vrot.lane.b32.xlu0 %v4004, 64
        %v4488 = vpop.permute.xlu0 %4487
        %4489 = vrot.lane.b32.xlu0 %v4010, 64
        %v4490 = vpop.permute.xlu0 %4489
        %v4491 = vsel %vm1070, %v4484, 0
        %v4493 = vsel %vm1070, %v4486, 0
        %v4495 = vsel %vm1070, %v4488, 0
        %v4497 = vsel %vm1070, %v4490, 0
        %4499 = vmatprep.subr.mxu0 0.0
        %4500 = vmatpush1.xpose.msra.mxu0 0.0
        %4501 = vmatprep.subr.mxu0 0.0
        %4502 = vmatpush1.xpose.msra.mxu0 0.0
        %4503 = vmatprep.subr.mxu0 0.0
        %4504 = vmatpush1.xpose.msra.mxu0 0.0
        %4505 = vmatprep.subr.mxu0 0.0
        %4506 = vmatpush1.xpose.msra.mxu0 0.0
        %4507 = vmatprep.subr.mxu0 0.0
        %4508 = vmatpush1.xpose.msra.mxu0 0.0
        %4509 = vmatprep.subr.mxu0 0.0
        %4510 = vmatpush1.xpose.msra.mxu0 0.0
        %4511 = vmatprep.subr.mxu0 0.0
        %4512 = vmatpush1.xpose.msra.mxu0 0.0
        %4513 = vmatprep.subr.mxu0 0.0
        %4514 = vmatpush1.xpose.msra.mxu0 0.0
        %4515 = vmatprep.subr.mxu0 0.0
        %4516 = vmatpush1.xpose.msra.mxu0 0.0
        %4517 = vmatprep.subr.mxu0 0.0
        %4518 = vmatpush1.xpose.msra.mxu0 0.0
        %4519 = vmatprep.subr.mxu0 0.0
        %4520 = vmatpush1.xpose.msra.mxu0 0.0
        %4521 = vmatprep.subr.mxu0 0.0
        %4522 = vmatpush1.xpose.msra.mxu0 0.0
        %4523 = vmatprep.subr.mxu0 0.0
        %4524 = vmatpush1.xpose.msra.mxu0 0.0
        %4525 = vmatprep.subr.mxu0 0.0
        %4526 = vmatpush1.xpose.msra.mxu0 0.0
        %4527 = vmatprep.subr.mxu0 0.0
        %4528 = vmatpush1.xpose.msra.mxu0 %v4497
        %4529 = vmatprep.subr.mxu0 0.0
        %4530 = vmatpush1.xpose.msra.mxu0 %v4495
        %4531 = vmatprep.subr.mxu0 0.0
        %4532 = vmatpush2.xpose.msra.mxu0 0.0
        %4533 = vmatprep.subr.mxu0 0.0
        %4534 = vmatpush2.xpose.msra.mxu0 0.0
        %4535 = vmatprep.subr.mxu0 0.0
        %4536 = vmatpush2.xpose.msra.mxu0 0.0
        %4537 = vmatprep.subr.mxu0 0.0
        %4538 = vmatpush2.xpose.msra.mxu0 0.0
        %4539 = vmatprep.subr.mxu0 0.0
        %4540 = vmatpush2.xpose.msra.mxu0 0.0
        %4541 = vmatprep.subr.mxu0 0.0
        %4542 = vmatpush2.xpose.msra.mxu0 0.0
        %4543 = vmatprep.subr.mxu0 0.0
        %4544 = vmatpush2.xpose.msra.mxu0 0.0
        %4545 = vmatprep.subr.mxu0 0.0
        %4546 = vmatpush2.xpose.msra.mxu0 0.0
        %4547 = vmatprep.subr.mxu0 0.0
        %4548 = vmatpush2.xpose.msra.mxu0 0.0
        %4549 = vmatprep.subr.mxu0 0.0
        %4550 = vmatpush2.xpose.msra.mxu0 0.0
        %4551 = vmatprep.subr.mxu0 0.0
        %4552 = vmatpush2.xpose.msra.mxu0 0.0
        %4553 = vmatprep.subr.mxu0 0.0
        %4554 = vmatpush2.xpose.msra.mxu0 0.0
        %4555 = vmatprep.subr.mxu0 0.0
        %4556 = vmatpush2.xpose.msra.mxu0 0.0
        %4557 = vmatprep.subr.mxu0 0.0
        %4558 = vmatpush2.xpose.msra.mxu0 0.0
        %4559 = vmatprep.subr.mxu0 0.0
        %4560 = vmatpush2.xpose.msra.mxu0 0.0
        %4561 = vmatprep.subr.mxu0 0.0
        %4562 = vmatpush2.xpose.msra.mxu0 0.0
        %4563 = vmatprep.mubr.f32.mxu0 0.0
        %4564 = vmatmul.mubr.f32.gmra.mxu0 %v4491
        %v4565 = vpop.f32.mrf.mxu0
        %v4566 = vadd.f32 0.0, %v4565
        %v4567 = vpop.f32.mrf.mxu0
        %4568 = vmatprep.mubr.f32.mxu0 0.0
        %4569 = vmatmul.mubr.f32.gmra.mxu0 %v4493
        %v4570 = vpop.f32.mrf.mxu0
        %v4571 = vadd.f32 0.0, %v4570
        %v4572 = vpop.f32.mrf.mxu0
        %4573 = vdwg.mxu0
        %v4574 = vmul.f32 %v4566, 0.17677669
        %v4575 = vmul.f32 %v4571, 0.17677669
        %v4576 = vsel %vm1160, %v4574, -inf
        %4577 = vmax.xlane.f32.xlu0 %v4576
        %v4578 = vpop.xlane.xlu0 %4577
        %v4579 = vsel %vm1160, %v4575, -inf
        %4580 = vmax.xlane.f32.xlu0 %v4579
        %v4581 = vpop.xlane.xlu0 %4580
        %v4582 = vsub.f32 %v4574, %v4578
        %v4583 = vsub.f32 %v4575, %v4581
        %v4584 = vmul.f32 %v4582, 1.442695
        %v4585 = vpow.pop %v4584
        %v4586 = vmul.f32 %v4583, 1.442695
        %v4587 = vpow.pop %v4586
        %v4588 = vsel %vm1160, %v4585, 0.0
        %4589 = vadd.xlane.f32.xlu0 %v4588
        %v4590 = vpop.xlane.xlu0 %4589
        %v4591 = vsel %vm1160, %v4587, 0.0
        %4592 = vadd.xlane.f32.xlu0 %v4591
        %v4593 = vpop.xlane.xlu0 %4592
        %v4594 = vrcp.pop %v4590
        %v4595 = vrcp.pop %v4593
        %v4596 = vmul.f32 %v4585, %v4594
        %v4597 = vmul.f32 %v4587, %v4595
        %4598 = vrot.lane.b32.xlu0 %v4079, 64
        %v4599 = vpop.permute.xlu0 %4598
        %4600 = vrot.lane.b32.xlu0 %v4084, 64
        %v4601 = vpop.permute.xlu0 %4600
        %v4605 = vsel %vm1160, %v4596, 0
        %v4608 = vsel %vm1160, %v4597, 0
        %4610 = vmatprep.subr.mxu0 0.0
        %4611 = vmatpush1.msra.mxu0 0.0
        %4612 = vmatprep.subr.mxu0 0.0
        %4613 = vmatpush1.msra.mxu0 0.0
        %4614 = vmatprep.subr.mxu0 0.0
        %4615 = vmatpush1.msra.mxu0 0.0
        %4616 = vmatprep.subr.mxu0 0.0
        %4617 = vmatpush1.msra.mxu0 0.0
        %4618 = vmatprep.subr.mxu0 0.0
        %4619 = vmatpush1.msra.mxu0 0.0
        %4620 = vmatprep.subr.mxu0 0.0
        %4621 = vmatpush1.msra.mxu0 0.0
        %4622 = vmatprep.subr.mxu0 0.0
        %4623 = vmatpush1.msra.mxu0 0.0
        %4624 = vmatprep.subr.mxu0 0.0
        %4625 = vmatpush1.msra.mxu0 0.0
        %4626 = vmatprep.subr.mxu0 0.0
        %4627 = vmatpush1.msra.mxu0 0.0
        %4628 = vmatprep.subr.mxu0 0.0
        %4629 = vmatpush1.msra.mxu0 0.0
        %4630 = vmatprep.subr.mxu0 0.0
        %4631 = vmatpush1.msra.mxu0 0.0
        %4632 = vmatprep.subr.mxu0 0.0
        %4633 = vmatpush1.msra.mxu0 0.0
        %4634 = vmatprep.subr.mxu0 0.0
        %4635 = vmatpush1.msra.mxu0 0.0
        %4636 = vmatprep.subr.mxu0 0.0
        %4637 = vmatpush1.msra.mxu0 0.0
        %4638 = vmatprep.subr.mxu0 0.0
        %4639 = vmatpush1.msra.mxu0 %v4601
        %4640 = vmatprep.subr.mxu0 0.0
        %4641 = vmatpush1.msra.mxu0 %v4599
        %4642 = vmatprep.subr.mxu0 0.0
        %4643 = vmatpush2.msra.mxu0 0.0
        %4644 = vmatprep.subr.mxu0 0.0
        %4645 = vmatpush2.msra.mxu0 0.0
        %4646 = vmatprep.subr.mxu0 0.0
        %4647 = vmatpush2.msra.mxu0 0.0
        %4648 = vmatprep.subr.mxu0 0.0
        %4649 = vmatpush2.msra.mxu0 0.0
        %4650 = vmatprep.subr.mxu0 0.0
        %4651 = vmatpush2.msra.mxu0 0.0
        %4652 = vmatprep.subr.mxu0 0.0
        %4653 = vmatpush2.msra.mxu0 0.0
        %4654 = vmatprep.subr.mxu0 0.0
        %4655 = vmatpush2.msra.mxu0 0.0
        %4656 = vmatprep.subr.mxu0 0.0
        %4657 = vmatpush2.msra.mxu0 0.0
        %4658 = vmatprep.subr.mxu0 0.0
        %4659 = vmatpush2.msra.mxu0 0.0
        %4660 = vmatprep.subr.mxu0 0.0
        %4661 = vmatpush2.msra.mxu0 0.0
        %4662 = vmatprep.subr.mxu0 0.0
        %4663 = vmatpush2.msra.mxu0 0.0
        %4664 = vmatprep.subr.mxu0 0.0
        %4665 = vmatpush2.msra.mxu0 0.0
        %4666 = vmatprep.subr.mxu0 0.0
        %4667 = vmatpush2.msra.mxu0 0.0
        %4668 = vmatprep.subr.mxu0 0.0
        %4669 = vmatpush2.msra.mxu0 0.0
        %4670 = vmatprep.subr.mxu0 0.0
        %4671 = vmatpush2.msra.mxu0 0.0
        %4672 = vmatprep.subr.mxu0 0.0
        %4673 = vmatpush2.msra.mxu0 0.0
        %4674 = vmatprep.mubr.f32.mxu0 0.0
        %4675 = vmatmul.mubr.f32.gmra.mxu0 %v4605
        %v4676 = vpop.f32.mrf.mxu0
        %v4677 = vadd.f32 0.0, %v4676
        %v4678 = vpop.f32.mrf.mxu0
        %4679 = vmatprep.mubr.f32.mxu0 0.0
        %4680 = vmatmul.mubr.f32.gmra.mxu0 %v4608
        %v4681 = vpop.f32.mrf.mxu0
        %v4682 = vadd.f32 0.0, %v4681
        %v4683 = vpop.f32.mrf.mxu0
        %4684 = vdwg.mxu0
        %4685 = vrot.lane.b32.xlu0 %v4002, 32
        %v4686 = vpop.permute.xlu0 %4685
        %4687 = vrot.lane.b32.xlu0 %v4008, 32
        %v4688 = vpop.permute.xlu0 %4687
        %4689 = vrot.lane.b32.xlu0 %v4004, 32
        %v4690 = vpop.permute.xlu0 %4689
        %4691 = vrot.lane.b32.xlu0 %v4010, 32
        %v4692 = vpop.permute.xlu0 %4691
        %v4693 = vsel %vm1070, %v4686, 0
        %v4695 = vsel %vm1070, %v4688, 0
        %v4697 = vsel %vm1070, %v4690, 0
        %v4699 = vsel %vm1070, %v4692, 0
        %4701 = vmatprep.subr.mxu0 0.0
        %4702 = vmatpush1.xpose.msra.mxu0 0.0
        %4703 = vmatprep.subr.mxu0 0.0
        %4704 = vmatpush1.xpose.msra.mxu0 0.0
        %4705 = vmatprep.subr.mxu0 0.0
        %4706 = vmatpush1.xpose.msra.mxu0 0.0
        %4707 = vmatprep.subr.mxu0 0.0
        %4708 = vmatpush1.xpose.msra.mxu0 0.0
        %4709 = vmatprep.subr.mxu0 0.0
        %4710 = vmatpush1.xpose.msra.mxu0 0.0
        %4711 = vmatprep.subr.mxu0 0.0
        %4712 = vmatpush1.xpose.msra.mxu0 0.0
        %4713 = vmatprep.subr.mxu0 0.0
        %4714 = vmatpush1.xpose.msra.mxu0 0.0
        %4715 = vmatprep.subr.mxu0 0.0
        %4716 = vmatpush1.xpose.msra.mxu0 0.0
        %4717 = vmatprep.subr.mxu0 0.0
        %4718 = vmatpush1.xpose.msra.mxu0 0.0
        %4719 = vmatprep.subr.mxu0 0.0
        %4720 = vmatpush1.xpose.msra.mxu0 0.0
        %4721 = vmatprep.subr.mxu0 0.0
        %4722 = vmatpush1.xpose.msra.mxu0 0.0
        %4723 = vmatprep.subr.mxu0 0.0
        %4724 = vmatpush1.xpose.msra.mxu0 0.0
        %4725 = vmatprep.subr.mxu0 0.0
        %4726 = vmatpush1.xpose.msra.mxu0 0.0
        %4727 = vmatprep.subr.mxu0 0.0
        %4728 = vmatpush1.xpose.msra.mxu0 0.0
        %4729 = vmatprep.subr.mxu0 0.0
        %4730 = vmatpush1.xpose.msra.mxu0 %v4699
        %4731 = vmatprep.subr.mxu0 0.0
        %4732 = vmatpush1.xpose.msra.mxu0 %v4697
        %4733 = vmatprep.subr.mxu0 0.0
        %4734 = vmatpush2.xpose.msra.mxu0 0.0
        %4735 = vmatprep.subr.mxu0 0.0
        %4736 = vmatpush2.xpose.msra.mxu0 0.0
        %4737 = vmatprep.subr.mxu0 0.0
        %4738 = vmatpush2.xpose.msra.mxu0 0.0
        %4739 = vmatprep.subr.mxu0 0.0
        %4740 = vmatpush2.xpose.msra.mxu0 0.0
        %4741 = vmatprep.subr.mxu0 0.0
        %4742 = vmatpush2.xpose.msra.mxu0 0.0
        %4743 = vmatprep.subr.mxu0 0.0
        %4744 = vmatpush2.xpose.msra.mxu0 0.0
        %4745 = vmatprep.subr.mxu0 0.0
        %4746 = vmatpush2.xpose.msra.mxu0 0.0
        %4747 = vmatprep.subr.mxu0 0.0
        %4748 = vmatpush2.xpose.msra.mxu0 0.0
        %4749 = vmatprep.subr.mxu0 0.0
        %4750 = vmatpush2.xpose.msra.mxu0 0.0
        %4751 = vmatprep.subr.mxu0 0.0
        %4752 = vmatpush2.xpose.msra.mxu0 0.0
        %4753 = vmatprep.subr.mxu0 0.0
        %4754 = vmatpush2.xpose.msra.mxu0 0.0
        %4755 = vmatprep.subr.mxu0 0.0
        %4756 = vmatpush2.xpose.msra.mxu0 0.0
        %4757 = vmatprep.subr.mxu0 0.0
        %4758 = vmatpush2.xpose.msra.mxu0 0.0
        %4759 = vmatprep.subr.mxu0 0.0
        %4760 = vmatpush2.xpose.msra.mxu0 0.0
        %4761 = vmatprep.subr.mxu0 0.0
        %4762 = vmatpush2.xpose.msra.mxu0 0.0
        %4763 = vmatprep.subr.mxu0 0.0
        %4764 = vmatpush2.xpose.msra.mxu0 0.0
        %4765 = vmatprep.mubr.f32.mxu0 0.0
        %4766 = vmatmul.mubr.f32.gmra.mxu0 %v4693
        %v4767 = vpop.f32.mrf.mxu0
        %v4768 = vadd.f32 0.0, %v4767
        %v4769 = vpop.f32.mrf.mxu0
        %4770 = vmatprep.mubr.f32.mxu0 0.0
        %4771 = vmatmul.mubr.f32.gmra.mxu0 %v4695
        %v4772 = vpop.f32.mrf.mxu0
        %v4773 = vadd.f32 0.0, %v4772
        %v4774 = vpop.f32.mrf.mxu0
        %4775 = vdwg.mxu0
        %v4776 = vmul.f32 %v4768, 0.17677669
        %v4777 = vmul.f32 %v4773, 0.17677669
        %v4778 = vsel %vm1160, %v4776, -inf
        %4779 = vmax.xlane.f32.xlu0 %v4778
        %v4780 = vpop.xlane.xlu0 %4779
        %v4781 = vsel %vm1160, %v4777, -inf
        %4782 = vmax.xlane.f32.xlu0 %v4781
        %v4783 = vpop.xlane.xlu0 %4782
        %v4784 = vsub.f32 %v4776, %v4780
        %v4785 = vsub.f32 %v4777, %v4783
        %v4786 = vmul.f32 %v4784, 1.442695
        %v4787 = vpow.pop %v4786
        %v4788 = vmul.f32 %v4785, 1.442695
        %v4789 = vpow.pop %v4788
        %v4790 = vsel %vm1160, %v4787, 0.0
        %4791 = vadd.xlane.f32.xlu0 %v4790
        %v4792 = vpop.xlane.xlu0 %4791
        %v4793 = vsel %vm1160, %v4789, 0.0
        %4794 = vadd.xlane.f32.xlu0 %v4793
        %v4795 = vpop.xlane.xlu0 %4794
        %v4796 = vrcp.pop %v4792
        %v4797 = vrcp.pop %v4795
        %v4798 = vmul.f32 %v4787, %v4796
        %v4799 = vmul.f32 %v4789, %v4797
        %4800 = vrot.lane.b32.xlu0 %v4079, 32
        %v4801 = vpop.permute.xlu0 %4800
        %4802 = vrot.lane.b32.xlu0 %v4084, 32
        %v4803 = vpop.permute.xlu0 %4802
        %v4807 = vsel %vm1160, %v4798, 0
        %v4810 = vsel %vm1160, %v4799, 0
        %4812 = vmatprep.subr.mxu0 0.0
        %4813 = vmatpush1.msra.mxu0 0.0
        %4814 = vmatprep.subr.mxu0 0.0
        %4815 = vmatpush1.msra.mxu0 0.0
        %4816 = vmatprep.subr.mxu0 0.0
        %4817 = vmatpush1.msra.mxu0 0.0
        %4818 = vmatprep.subr.mxu0 0.0
        %4819 = vmatpush1.msra.mxu0 0.0
        %4820 = vmatprep.subr.mxu0 0.0
        %4821 = vmatpush1.msra.mxu0 0.0
        %4822 = vmatprep.subr.mxu0 0.0
        %4823 = vmatpush1.msra.mxu0 0.0
        %4824 = vmatprep.subr.mxu0 0.0
        %4825 = vmatpush1.msra.mxu0 0.0
        %4826 = vmatprep.subr.mxu0 0.0
        %4827 = vmatpush1.msra.mxu0 0.0
        %4828 = vmatprep.subr.mxu0 0.0
        %4829 = vmatpush1.msra.mxu0 0.0
        %4830 = vmatprep.subr.mxu0 0.0
        %4831 = vmatpush1.msra.mxu0 0.0
        %4832 = vmatprep.subr.mxu0 0.0
        %4833 = vmatpush1.msra.mxu0 0.0
        %4834 = vmatprep.subr.mxu0 0.0
        %4835 = vmatpush1.msra.mxu0 0.0
        %4836 = vmatprep.subr.mxu0 0.0
        %4837 = vmatpush1.msra.mxu0 0.0
        %4838 = vmatprep.subr.mxu0 0.0
        %4839 = vmatpush1.msra.mxu0 0.0
        %4840 = vmatprep.subr.mxu0 0.0
        %4841 = vmatpush1.msra.mxu0 %v4803
        %4842 = vmatprep.subr.mxu0 0.0
        %4843 = vmatpush1.msra.mxu0 %v4801
        %4844 = vmatprep.subr.mxu0 0.0
        %4845 = vmatpush2.msra.mxu0 0.0
        %4846 = vmatprep.subr.mxu0 0.0
        %4847 = vmatpush2.msra.mxu0 0.0
        %4848 = vmatprep.subr.mxu0 0.0
        %4849 = vmatpush2.msra.mxu0 0.0
        %4850 = vmatprep.subr.mxu0 0.0
        %4851 = vmatpush2.msra.mxu0 0.0
        %4852 = vmatprep.subr.mxu0 0.0
        %4853 = vmatpush2.msra.mxu0 0.0
        %4854 = vmatprep.subr.mxu0 0.0
        %4855 = vmatpush2.msra.mxu0 0.0
        %4856 = vmatprep.subr.mxu0 0.0
        %4857 = vmatpush2.msra.mxu0 0.0
        %4858 = vmatprep.subr.mxu0 0.0
        %4859 = vmatpush2.msra.mxu0 0.0
        %4860 = vmatprep.subr.mxu0 0.0
        %4861 = vmatpush2.msra.mxu0 0.0
        %4862 = vmatprep.subr.mxu0 0.0
        %4863 = vmatpush2.msra.mxu0 0.0
        %4864 = vmatprep.subr.mxu0 0.0
        %4865 = vmatpush2.msra.mxu0 0.0
        %4866 = vmatprep.subr.mxu0 0.0
        %4867 = vmatpush2.msra.mxu0 0.0
        %4868 = vmatprep.subr.mxu0 0.0
        %4869 = vmatpush2.msra.mxu0 0.0
        %4870 = vmatprep.subr.mxu0 0.0
        %4871 = vmatpush2.msra.mxu0 0.0
        %4872 = vmatprep.subr.mxu0 0.0
        %4873 = vmatpush2.msra.mxu0 0.0
        %4874 = vmatprep.subr.mxu0 0.0
        %4875 = vmatpush2.msra.mxu0 0.0
        %4876 = vmatprep.mubr.f32.mxu0 0.0
        %4877 = vmatmul.mubr.f32.gmra.mxu0 %v4807
        %v4878 = vpop.f32.mrf.mxu0
        %v4879 = vadd.f32 0.0, %v4878
        %v4880 = vpop.f32.mrf.mxu0
        %4881 = vmatprep.mubr.f32.mxu0 0.0
        %4882 = vmatmul.mubr.f32.gmra.mxu0 %v4810
        %v4883 = vpop.f32.mrf.mxu0
        %v4884 = vadd.f32 0.0, %v4883
        %v4885 = vpop.f32.mrf.mxu0
        %4886 = vdwg.mxu0
        %4889 = vrot.lane.b32.xlu0 %v4475, 32
        %v4890 = vpop.permute.xlu0 %4889
        %4891 = vrot.lane.b32.xlu0 %v4480, 32
        %v4892 = vpop.permute.xlu0 %4891
        %4897 = vrot.lane.b32.xlu0 %v4677, 64
        %v4898 = vpop.permute.xlu0 %4897
        %4899 = vrot.lane.b32.xlu0 %v4682, 64
        %v4900 = vpop.permute.xlu0 %4899
        %4905 = vrot.lane.b32.xlu0 %v4879, 96
        %v4906 = vpop.permute.xlu0 %4905
        %4907 = vrot.lane.b32.xlu0 %v4884, 96
        %v4908 = vpop.permute.xlu0 %4907
        %v4911 = vsel %vm1070, %v4271, %v4890
        %v4912 = vsel %vm1070, %v4276, %v4892
        %v4913 = vsel %vm728, %v4911, %v4898
        %v4914 = vsel %vm728, %v4912, %v4900
        %v4915 = vsel %vm1900, %v4913, %v4906
        %v4916 = vsel %vm1900, %v4914, %v4908
        %s4917 = scalar_lea.vmem [#allocation4], 256
        %v4918 = vld [vmem:[%s4917] sm:$0xff]
        %v4919 = vld [vmem:[%s4917 + $0x8] sm:$0xff]
        %v4920 = vld [vmem:[%s4917 + $0x10] sm:$0xff]
        %v4921 = vld [vmem:[%s4917 + $0x18] sm:$0xff]
        %v4922 = vld [vmem:[%s4917 + $0x20] sm:$0xff]
        %v4923 = vld [vmem:[%s4917 + $0x28] sm:$0xff]
        %v4924 = vld [vmem:[%s4917 + $0x30] sm:$0xff]
        %v4925 = vld [vmem:[%s4917 + $0x38] sm:$0xff]
        %v4926 = vld [vmem:[%s4917 + $0x40] sm:$0xff]
        %v4927 = vld [vmem:[%s4917 + $0x48] sm:$0xff]
        %v4928 = vld [vmem:[%s4917 + $0x50] sm:$0xff]
        %v4929 = vld [vmem:[%s4917 + $0x58] sm:$0xff]
        %v4930 = vld [vmem:[%s4917 + $0x60] sm:$0xff]
        %v4931 = vld [vmem:[%s4917 + $0x68] sm:$0xff]
        %v4932 = vld [vmem:[%s4917 + $0x70] sm:$0xff]
        %v4933 = vld [vmem:[%s4917 + $0x78] sm:$0xff]
        %s4934 = scalar_lea.vmem %s9, 2
        %v4935 = vld [vmem:[%s4934] sm:$0x1]
        %v4937 = vlaneseq
        %v4938 = vshrl.u32 %v4937, 7
        %v4939 = vsub.s32 0, %v4938
        %v4940 = vrot.slane %v4935, %v4939
        %4942 = vmatprep.subr.mxu0 0.0
        %4943 = vmatpush1.msra.mxu0 %v4933
        %4944 = vmatprep.subr.mxu0 0.0
        %4945 = vmatpush1.msra.mxu0 %v4932
        %4946 = vmatprep.subr.mxu0 0.0
        %4947 = vmatpush1.msra.mxu0 %v4931
        %4948 = vmatprep.subr.mxu0 0.0
        %4949 = vmatpush1.msra.mxu0 %v4930
        %4950 = vmatprep.subr.mxu0 0.0
        %4951 = vmatpush1.msra.mxu0 %v4929
        %4952 = vmatprep.subr.mxu0 0.0
        %4953 = vmatpush1.msra.mxu0 %v4928
        %4954 = vmatprep.subr.mxu0 0.0
        %4955 = vmatpush1.msra.mxu0 %v4927
        %4956 = vmatprep.subr.mxu0 0.0
        %4957 = vmatpush1.msra.mxu0 %v4926
        %4958 = vmatprep.subr.mxu0 0.0
        %4959 = vmatpush1.msra.mxu0 %v4925
        %4960 = vmatprep.subr.mxu0 0.0
        %4961 = vmatpush1.msra.mxu0 %v4924
        %4962 = vmatprep.subr.mxu0 0.0
        %4963 = vmatpush1.msra.mxu0 %v4923
        %4964 = vmatprep.subr.mxu0 0.0
        %4965 = vmatpush1.msra.mxu0 %v4922
        %4966 = vmatprep.subr.mxu0 0.0
        %4967 = vmatpush1.msra.mxu0 %v4921
        %4968 = vmatprep.subr.mxu0 0.0
        %4969 = vmatpush1.msra.mxu0 %v4920
        %4970 = vmatprep.subr.mxu0 0.0
        %4971 = vmatpush1.msra.mxu0 %v4919
        %4972 = vmatprep.subr.mxu0 0.0
        %4973 = vmatpush1.msra.mxu0 %v4918
        %4974 = vmatprep.subr.mxu0 0.0
        %4975 = vmatpush2.msra.mxu0 0.0
        %4976 = vmatprep.subr.mxu0 0.0
        %4977 = vmatpush2.msra.mxu0 0.0
        %4978 = vmatprep.subr.mxu0 0.0
        %4979 = vmatpush2.msra.mxu0 0.0
        %4980 = vmatprep.subr.mxu0 0.0
        %4981 = vmatpush2.msra.mxu0 0.0
        %4982 = vmatprep.subr.mxu0 0.0
        %4983 = vmatpush2.msra.mxu0 0.0
        %4984 = vmatprep.subr.mxu0 0.0
        %4985 = vmatpush2.msra.mxu0 0.0
        %4986 = vmatprep.subr.mxu0 0.0
        %4987 = vmatpush2.msra.mxu0 0.0
        %4988 = vmatprep.subr.mxu0 0.0
        %4989 = vmatpush2.msra.mxu0 0.0
        %4990 = vmatprep.subr.mxu0 0.0
        %4991 = vmatpush2.msra.mxu0 0.0
        %4992 = vmatprep.subr.mxu0 0.0
        %4993 = vmatpush2.msra.mxu0 0.0
        %4994 = vmatprep.subr.mxu0 0.0
        %4995 = vmatpush2.msra.mxu0 0.0
        %4996 = vmatprep.subr.mxu0 0.0
        %4997 = vmatpush2.msra.mxu0 0.0
        %4998 = vmatprep.subr.mxu0 0.0
        %4999 = vmatpush2.msra.mxu0 0.0
        %5000 = vmatprep.subr.mxu0 0.0
        %5001 = vmatpush2.msra.mxu0 0.0
        %5002 = vmatprep.subr.mxu0 0.0
        %5003 = vmatpush2.msra.mxu0 0.0
        %5004 = vmatprep.subr.mxu0 0.0
        %5005 = vmatpush2.msra.mxu0 0.0
        %5006 = vmatprep.mubr.f32.mxu0 0.0
        %5007 = vmatmul.mubr.f32.gmra.mxu0 %v4915
        %v5008 = vpop.f32.mrf.mxu0
        %v5009 = vadd.f32 %v4940, %v5008
        %v5010 = vpop.f32.mrf.mxu0
        %5011 = vmatprep.mubr.f32.mxu0 0.0
        %5012 = vmatmul.mubr.f32.gmra.mxu0 %v4916
        %v5013 = vpop.f32.mrf.mxu0
        %v5014 = vadd.f32 %v4940, %v5013
        %v5015 = vpop.f32.mrf.mxu0
        %5016 = vdwg.mxu0
        %v5017 = vadd.f32 %v3866, %v5009
        %v5018 = vadd.f32 %v3867, %v5014
        %s5019 = scalar_lea.vmem %s10, 2
        %v5020 = vld [vmem:[%s5019] sm:$0x1]
        %s5021 = scalar_lea.vmem %s11, 2
        %v5022 = vld [vmem:[%s5021] sm:$0x1]
        %5023 = vadd.xlane.f32.xlu0 %v5017
        %v5024 = vpop.xlane.xlu0 %5023
        %5025 = vadd.xlane.f32.xlu0 %v5018
        %v5026 = vpop.xlane.xlu0 %5025
        %v5027 = vmul.f32 %v5024, %v814
        %v5028 = vmul.f32 %v5026, %v814
        %v5029 = vsub.f32 %v5017, %v5027
        %v5030 = vsub.f32 %v5018, %v5028
        %v5031 = vmul.f32 %v5029, %v5029
        %v5032 = vmul.f32 %v5030, %v5030
        %5033 = vadd.xlane.f32.xlu0 %v5031
        %v5034 = vpop.xlane.xlu0 %5033
        %5035 = vadd.xlane.f32.xlu0 %v5032
        %v5036 = vpop.xlane.xlu0 %5035
        %v5037 = vmul.f32 %v5034, %v814
        %v5038 = vmul.f32 %v5036, %v814
        %v5039 = vadd.f32 %v5037, 1e-05
        %v5040 = vadd.f32 %v5038, 1e-05
        %v5041 = vrsqrt.pop %v5039
        %v5042 = vrsqrt.pop %v5040
        %v5043 = vmul.f32 %v5029, %v5041
        %v5044 = vmul.f32 %v5030, %v5042
        %v5046 = vlaneseq
        %v5047 = vshrl.u32 %v5046, 7
        %v5048 = vsub.s32 0, %v5047
        %v5049 = vrot.slane %v5020, %v5048
        %v5051 = vmul.f32 %v5043, %v5049
        %v5052 = vmul.f32 %v5044, %v5049
        %v5054 = vlaneseq
        %v5055 = vshrl.u32 %v5054, 7
        %v5056 = vsub.s32 0, %v5055
        %v5057 = vrot.slane %v5022, %v5056
        %v5059 = vadd.f32 %v5051, %v5057
        %v5060 = vadd.f32 %v5052, %v5057
        %s5061 = scalar_lea.vmem [#allocation6], 512
        %v5062 = vld [vmem:[%s5061] sm:$0xff]
        %v5063 = vld [vmem:[%s5061 + $0x8] sm:$0xff]
        %v5064 = vld [vmem:[%s5061 + $0x10] sm:$0xff]
        %v5065 = vld [vmem:[%s5061 + $0x18] sm:$0xff]
        %v5066 = vld [vmem:[%s5061 + $0x20] sm:$0xff]
        %v5067 = vld [vmem:[%s5061 + $0x28] sm:$0xff]
        %v5068 = vld [vmem:[%s5061 + $0x30] sm:$0xff]
        %v5069 = vld [vmem:[%s5061 + $0x38] sm:$0xff]
        %v5070 = vld [vmem:[%s5061 + $0x40] sm:$0xff]
        %v5071 = vld [vmem:[%s5061 + $0x48] sm:$0xff]
        %v5072 = vld [vmem:[%s5061 + $0x50] sm:$0xff]
        %v5073 = vld [vmem:[%s5061 + $0x58] sm:$0xff]
        %v5074 = vld [vmem:[%s5061 + $0x60] sm:$0xff]
        %v5075 = vld [vmem:[%s5061 + $0x68] sm:$0xff]
        %v5076 = vld [vmem:[%s5061 + $0x70] sm:$0xff]
        %v5077 = vld [vmem:[%s5061 + $0x78] sm:$0xff]
        %v5078 = vld [vmem:[%s5061 + $0x80] sm:$0xff]
        %v5079 = vld [vmem:[%s5061 + $0x88] sm:$0xff]
        %v5080 = vld [vmem:[%s5061 + $0x90] sm:$0xff]
        %v5081 = vld [vmem:[%s5061 + $0x98] sm:$0xff]
        %v5082 = vld [vmem:[%s5061 + $0xa0] sm:$0xff]
        %v5083 = vld [vmem:[%s5061 + $0xa8] sm:$0xff]
        %v5084 = vld [vmem:[%s5061 + $0xb0] sm:$0xff]
        %v5085 = vld [vmem:[%s5061 + $0xb8] sm:$0xff]
        %v5086 = vld [vmem:[%s5061 + $0xc0] sm:$0xff]
        %v5087 = vld [vmem:[%s5061 + $0xc8] sm:$0xff]
        %v5088 = vld [vmem:[%s5061 + $0xd0] sm:$0xff]
        %v5089 = vld [vmem:[%s5061 + $0xd8] sm:$0xff]
        %v5090 = vld [vmem:[%s5061 + $0xe0] sm:$0xff]
        %v5091 = vld [vmem:[%s5061 + $0xe8] sm:$0xff]
        %v5092 = vld [vmem:[%s5061 + $0xf0] sm:$0xff]
        %v5093 = vld [vmem:[%s5061 + $0xf8] sm:$0xff]
        %s5094 = scalar_lea.vmem %s13, 4
        %v5095 = vld [vmem:[%s5094] sm:$0x3]
        %v5097 = vlaneseq
        %v5098 = vshrl.u32 %v5097, 7
        %v5099 = vsub.s32 0, %v5098
        %v5100 = vrot.slane %v5095, %v5099
        %v5101 = vlaneseq
        %v5102 = vshrl.u32 %v5101, 7
        %v5103 = vsub.s32 1, %v5102
        %v5104 = vrot.slane %v5095, %v5103
        %5107 = vmatprep.subr.mxu0 %v5093
        %5108 = vmatpush1.msra.mxu0 %v5092
        %5109 = vmatprep.subr.mxu0 %v5091
        %5110 = vmatpush1.msra.mxu0 %v5090
        %5111 = vmatprep.subr.mxu0 %v5089
        %5112 = vmatpush1.msra.mxu0 %v5088
        %5113 = vmatprep.subr.mxu0 %v5087
        %5114 = vmatpush1.msra.mxu0 %v5086
        %5115 = vmatprep.subr.mxu0 %v5085
        %5116 = vmatpush1.msra.mxu0 %v5084
        %5117 = vmatprep.subr.mxu0 %v5083
        %5118 = vmatpush1.msra.mxu0 %v5082
        %5119 = vmatprep.subr.mxu0 %v5081
        %5120 = vmatpush1.msra.mxu0 %v5080
        %5121 = vmatprep.subr.mxu0 %v5079
        %5122 = vmatpush1.msra.mxu0 %v5078
        %5123 = vmatprep.subr.mxu0 %v5077
        %5124 = vmatpush1.msra.mxu0 %v5076
        %5125 = vmatprep.subr.mxu0 %v5075
        %5126 = vmatpush1.msra.mxu0 %v5074
        %5127 = vmatprep.subr.mxu0 %v5073
        %5128 = vmatpush1.msra.mxu0 %v5072
        %5129 = vmatprep.subr.mxu0 %v5071
        %5130 = vmatpush1.msra.mxu0 %v5070
        %5131 = vmatprep.subr.mxu0 %v5069
        %5132 = vmatpush1.msra.mxu0 %v5068
        %5133 = vmatprep.subr.mxu0 %v5067
        %5134 = vmatpush1.msra.mxu0 %v5066
        %5135 = vmatprep.subr.mxu0 %v5065
        %5136 = vmatpush1.msra.mxu0 %v5064
        %5137 = vmatprep.subr.mxu0 %v5063
        %5138 = vmatpush1.msra.mxu0 %v5062
        %5139 = vmatprep.subr.mxu0 0.0
        %5140 = vmatpush2.msra.mxu0 0.0
        %5141 = vmatprep.subr.mxu0 0.0
        %5142 = vmatpush2.msra.mxu0 0.0
        %5143 = vmatprep.subr.mxu0 0.0
        %5144 = vmatpush2.msra.mxu0 0.0
        %5145 = vmatprep.subr.mxu0 0.0
        %5146 = vmatpush2.msra.mxu0 0.0
        %5147 = vmatprep.subr.mxu0 0.0
        %5148 = vmatpush2.msra.mxu0 0.0
        %5149 = vmatprep.subr.mxu0 0.0
        %5150 = vmatpush2.msra.mxu0 0.0
        %5151 = vmatprep.subr.mxu0 0.0
        %5152 = vmatpush2.msra.mxu0 0.0
        %5153 = vmatprep.subr.mxu0 0.0
        %5154 = vmatpush2.msra.mxu0 0.0
        %5155 = vmatprep.subr.mxu0 0.0
        %5156 = vmatpush2.msra.mxu0 0.0
        %5157 = vmatprep.subr.mxu0 0.0
        %5158 = vmatpush2.msra.mxu0 0.0
        %5159 = vmatprep.subr.mxu0 0.0
        %5160 = vmatpush2.msra.mxu0 0.0
        %5161 = vmatprep.subr.mxu0 0.0
        %5162 = vmatpush2.msra.mxu0 0.0
        %5163 = vmatprep.subr.mxu0 0.0
        %5164 = vmatpush2.msra.mxu0 0.0
        %5165 = vmatprep.subr.mxu0 0.0
        %5166 = vmatpush2.msra.mxu0 0.0
        %5167 = vmatprep.subr.mxu0 0.0
        %5168 = vmatpush2.msra.mxu0 0.0
        %5169 = vmatprep.subr.mxu0 0.0
        %5170 = vmatpush2.msra.mxu0 0.0
        %5171 = vmatprep.mubr.f32.mxu0 0.0
        %5172 = vmatmul.mubr.f32.gmra.mxu0 %v5059
        %v5173 = vpop.f32.mrf.mxu0
        %v5174 = vadd.f32 %v5100, %v5173
        %v5175 = vpop.f32.mrf.mxu0
        %v5176 = vadd.f32 %v5104, %v5175
        %5177 = vmatprep.mubr.f32.mxu0 0.0
        %5178 = vmatmul.mubr.f32.gmra.mxu0 %v5060
        %v5179 = vpop.f32.mrf.mxu0
        %v5180 = vadd.f32 %v5100, %v5179
        %v5181 = vpop.f32.mrf.mxu0
        %v5182 = vadd.f32 %v5104, %v5181
        %5183 = vdwg.mxu0
        %v5184 = vmul.f32 %v5174, 0.5
        %v5185 = vmul.f32 %v5176, 0.5
        %v5186 = vmul.f32 %v5180, 0.5
        %v5187 = vmul.f32 %v5182, 0.5
        %v5188 = vmul.f32 %v5174, 0.044715
        %v5189 = vmul.f32 %v5176, 0.044715
        %v5190 = vmul.f32 %v5180, 0.044715
        %v5191 = vmul.f32 %v5182, 0.044715
        %v5192 = vmul.f32 %v5188, %v5174
        %v5193 = vmul.f32 %v5189, %v5176
        %v5194 = vmul.f32 %v5190, %v5180
        %v5195 = vmul.f32 %v5191, %v5182
        %v5196 = vmul.f32 %v5192, %v5174
        %v5197 = vmul.f32 %v5193, %v5176
        %v5198 = vmul.f32 %v5194, %v5180
        %v5199 = vmul.f32 %v5195, %v5182
        %v5200 = vadd.f32 %v5174, %v5196
        %v5201 = vadd.f32 %v5176, %v5197
        %v5202 = vadd.f32 %v5180, %v5198
        %v5203 = vadd.f32 %v5182, %v5199
        %v5204 = vmul.f32 %v5200, 0.7978846
        %v5205 = vmul.f32 %v5201, 0.7978846
        %v5206 = vmul.f32 %v5202, 0.7978846
        %v5207 = vmul.f32 %v5203, 0.7978846
        %v5208 = vtanh.pop %v5204
        %v5209 = vtanh.pop %v5205
        %v5210 = vtanh.pop %v5206
        %v5211 = vtanh.pop %v5207
        %v5212 = vadd.f32 %v5208, 1.0
        %v5213 = vadd.f32 %v5209, 1.0
        %v5214 = vadd.f32 %v5210, 1.0
        %v5215 = vadd.f32 %v5211, 1.0
        %v5216 = vmul.f32 %v5184, %v5212
        %v5217 = vmul.f32 %v5185, %v5213
        %v5218 = vmul.f32 %v5186, %v5214
        %v5219 = vmul.f32 %v5187, %v5215
        %s5220 = scalar_lea.vmem [#allocation7], 512
        %v5221 = vld [vmem:[%s5220] sm:$0xff]
        %v5222 = vld [vmem:[%s5220 + $0x8] sm:$0xff]
        %v5223 = vld [vmem:[%s5220 + $0x10] sm:$0xff]
        %v5224 = vld [vmem:[%s5220 + $0x18] sm:$0xff]
        %v5225 = vld [vmem:[%s5220 + $0x20] sm:$0xff]
        %v5226 = vld [vmem:[%s5220 + $0x28] sm:$0xff]
        %v5227 = vld [vmem:[%s5220 + $0x30] sm:$0xff]
        %v5228 = vld [vmem:[%s5220 + $0x38] sm:$0xff]
        %v5229 = vld [vmem:[%s5220 + $0x40] sm:$0xff]
        %v5230 = vld [vmem:[%s5220 + $0x48] sm:$0xff]
        %v5231 = vld [vmem:[%s5220 + $0x50] sm:$0xff]
        %v5232 = vld [vmem:[%s5220 + $0x58] sm:$0xff]
        %v5233 = vld [vmem:[%s5220 + $0x60] sm:$0xff]
        %v5234 = vld [vmem:[%s5220 + $0x68] sm:$0xff]
        %v5235 = vld [vmem:[%s5220 + $0x70] sm:$0xff]
        %v5236 = vld [vmem:[%s5220 + $0x78] sm:$0xff]
        %v5237 = vld [vmem:[%s5220 + $0x80] sm:$0xff]
        %v5238 = vld [vmem:[%s5220 + $0x88] sm:$0xff]
        %v5239 = vld [vmem:[%s5220 + $0x90] sm:$0xff]
        %v5240 = vld [vmem:[%s5220 + $0x98] sm:$0xff]
        %v5241 = vld [vmem:[%s5220 + $0xa0] sm:$0xff]
        %v5242 = vld [vmem:[%s5220 + $0xa8] sm:$0xff]
        %v5243 = vld [vmem:[%s5220 + $0xb0] sm:$0xff]
        %v5244 = vld [vmem:[%s5220 + $0xb8] sm:$0xff]
        %v5245 = vld [vmem:[%s5220 + $0xc0] sm:$0xff]
        %v5246 = vld [vmem:[%s5220 + $0xc8] sm:$0xff]
        %v5247 = vld [vmem:[%s5220 + $0xd0] sm:$0xff]
        %v5248 = vld [vmem:[%s5220 + $0xd8] sm:$0xff]
        %v5249 = vld [vmem:[%s5220 + $0xe0] sm:$0xff]
        %v5250 = vld [vmem:[%s5220 + $0xe8] sm:$0xff]
        %v5251 = vld [vmem:[%s5220 + $0xf0] sm:$0xff]
        %v5252 = vld [vmem:[%s5220 + $0xf8] sm:$0xff]
        %s5253 = scalar_lea.vmem %s15, 2
        %v5254 = vld [vmem:[%s5253] sm:$0x1]
        %v5256 = vlaneseq
        %v5257 = vshrl.u32 %v5256, 7
        %v5258 = vsub.s32 0, %v5257
        %v5259 = vrot.slane %v5254, %v5258
        %5261 = vmatprep.subr.mxu0 0.0
        %5262 = vmatpush1.msra.mxu0 %v5236
        %5263 = vmatprep.subr.mxu0 0.0
        %5264 = vmatpush1.msra.mxu0 %v5235
        %5265 = vmatprep.subr.mxu0 0.0
        %5266 = vmatpush1.msra.mxu0 %v5234
        %5267 = vmatprep.subr.mxu0 0.0
        %5268 = vmatpush1.msra.mxu0 %v5233
        %5269 = vmatprep.subr.mxu0 0.0
        %5270 = vmatpush1.msra.mxu0 %v5232
        %5271 = vmatprep.subr.mxu0 0.0
        %5272 = vmatpush1.msra.mxu0 %v5231
        %5273 = vmatprep.subr.mxu0 0.0
        %5274 = vmatpush1.msra.mxu0 %v5230
        %5275 = vmatprep.subr.mxu0 0.0
        %5276 = vmatpush1.msra.mxu0 %v5229
        %5277 = vmatprep.subr.mxu0 0.0
        %5278 = vmatpush1.msra.mxu0 %v5228
        %5279 = vmatprep.subr.mxu0 0.0
        %5280 = vmatpush1.msra.mxu0 %v5227
        %5281 = vmatprep.subr.mxu0 0.0
        %5282 = vmatpush1.msra.mxu0 %v5226
        %5283 = vmatprep.subr.mxu0 0.0
        %5284 = vmatpush1.msra.mxu0 %v5225
        %5285 = vmatprep.subr.mxu0 0.0
        %5286 = vmatpush1.msra.mxu0 %v5224
        %5287 = vmatprep.subr.mxu0 0.0
        %5288 = vmatpush1.msra.mxu0 %v5223
        %5289 = vmatprep.subr.mxu0 0.0
        %5290 = vmatpush1.msra.mxu0 %v5222
        %5291 = vmatprep.subr.mxu0 0.0
        %5292 = vmatpush1.msra.mxu0 %v5221
        %5293 = vmatprep.subr.mxu0 0.0
        %5294 = vmatpush2.msra.mxu0 %v5252
        %5295 = vmatprep.subr.mxu0 0.0
        %5296 = vmatpush2.msra.mxu0 %v5251
        %5297 = vmatprep.subr.mxu0 0.0
        %5298 = vmatpush2.msra.mxu0 %v5250
        %5299 = vmatprep.subr.mxu0 0.0
        %5300 = vmatpush2.msra.mxu0 %v5249
        %5301 = vmatprep.subr.mxu0 0.0
        %5302 = vmatpush2.msra.mxu0 %v5248
        %5303 = vmatprep.subr.mxu0 0.0
        %5304 = vmatpush2.msra.mxu0 %v5247
        %5305 = vmatprep.subr.mxu0 0.0
        %5306 = vmatpush2.msra.mxu0 %v5246
        %5307 = vmatprep.subr.mxu0 0.0
        %5308 = vmatpush2.msra.mxu0 %v5245
        %5309 = vmatprep.subr.mxu0 0.0
        %5310 = vmatpush2.msra.mxu0 %v5244
        %5311 = vmatprep.subr.mxu0 0.0
        %5312 = vmatpush2.msra.mxu0 %v5243
        %5313 = vmatprep.subr.mxu0 0.0
        %5314 = vmatpush2.msra.mxu0 %v5242
        %5315 = vmatprep.subr.mxu0 0.0
        %5316 = vmatpush2.msra.mxu0 %v5241
        %5317 = vmatprep.subr.mxu0 0.0
        %5318 = vmatpush2.msra.mxu0 %v5240
        %5319 = vmatprep.subr.mxu0 0.0
        %5320 = vmatpush2.msra.mxu0 %v5239
        %5321 = vmatprep.subr.mxu0 0.0
        %5322 = vmatpush2.msra.mxu0 %v5238
        %5323 = vmatprep.subr.mxu0 0.0
        %5324 = vmatpush2.msra.mxu0 %v5237
        %5325 = vmatprep.mubr.f32.mxu0 %v5217
        %5326 = vmatmul.mubr.f32.gmra.mxu0 %v5216
        %v5327 = vpop.f32.mrf.mxu0
        %v5328 = vadd.f32 %v5259, %v5327
        %v5329 = vpop.f32.mrf.mxu0
        %5330 = vmatprep.mubr.f32.mxu0 %v5219
        %5331 = vmatmul.mubr.f32.gmra.mxu0 %v5218
        %v5332 = vpop.f32.mrf.mxu0
        %v5333 = vadd.f32 %v5259, %v5332
        %v5334 = vpop.f32.mrf.mxu0
        %5335 = vdwg.mxu0
        %v5336 = vadd.f32 %v5059, %v5328
        %v5337 = vadd.f32 %v5060, %v5333
        %s5338 = scalar_lea.vmem %s16, 2
        %v5339 = vld [vmem:[%s5338] sm:$0x1]
        %s5340 = scalar_lea.vmem %s17, 2
        %v5341 = vld [vmem:[%s5340] sm:$0x1]
        %5342 = vadd.xlane.f32.xlu0 %v5336
        %v5343 = vpop.xlane.xlu0 %5342
        %5344 = vadd.xlane.f32.xlu0 %v5337
        %v5345 = vpop.xlane.xlu0 %5344
        %v5346 = vmul.f32 %v5343, %v814
        %v5347 = vmul.f32 %v5345, %v814
        %v5348 = vsub.f32 %v5336, %v5346
        %v5349 = vsub.f32 %v5337, %v5347
        %v5350 = vmul.f32 %v5348, %v5348
        %v5351 = vmul.f32 %v5349, %v5349
        %5352 = vadd.xlane.f32.xlu0 %v5350
        %v5353 = vpop.xlane.xlu0 %5352
        %5354 = vadd.xlane.f32.xlu0 %v5351
        %v5355 = vpop.xlane.xlu0 %5354
        %v5356 = vmul.f32 %v5353, %v814
        %v5357 = vmul.f32 %v5355, %v814
        %v5358 = vadd.f32 %v5356, 1e-05
        %v5359 = vadd.f32 %v5357, 1e-05
        %v5360 = vrsqrt.pop %v5358
        %v5361 = vrsqrt.pop %v5359
        %v5362 = vmul.f32 %v5348, %v5360
        %v5363 = vmul.f32 %v5349, %v5361
        %v5365 = vlaneseq
        %v5366 = vshrl.u32 %v5365, 7
        %v5367 = vsub.s32 0, %v5366
        %v5368 = vrot.slane %v5339, %v5367
        %v5370 = vmul.f32 %v5362, %v5368
        %v5371 = vmul.f32 %v5363, %v5368
        %v5373 = vlaneseq
        %v5374 = vshrl.u32 %v5373, 7
        %v5375 = vsub.s32 0, %v5374
        %v5376 = vrot.slane %v5341, %v5375
        %v5378 = vadd.f32 %v5370, %v5376
        %v5379 = vadd.f32 %v5371, %v5376
        %s5380 = scalar_lea.vmem [#allocation2], 1152
        %v5381 = vld [vmem:[%s5380] sm:$0xff]
        %v5382 = vld [vmem:[%s5380 + $0x8] sm:$0xff]
        %v5383 = vld [vmem:[%s5380 + $0x10] sm:$0xff]
        %v5384 = vld [vmem:[%s5380 + $0x18] sm:$0xff]
        %v5385 = vld [vmem:[%s5380 + $0x20] sm:$0xff]
        %v5386 = vld [vmem:[%s5380 + $0x28] sm:$0xff]
        %v5387 = vld [vmem:[%s5380 + $0x30] sm:$0xff]
        %v5388 = vld [vmem:[%s5380 + $0x38] sm:$0xff]
        %v5389 = vld [vmem:[%s5380 + $0x40] sm:$0xff]
        %v5390 = vld [vmem:[%s5380 + $0x48] sm:$0xff]
        %v5391 = vld [vmem:[%s5380 + $0x50] sm:$0xff]
        %v5392 = vld [vmem:[%s5380 + $0x58] sm:$0xff]
        %v5393 = vld [vmem:[%s5380 + $0x60] sm:$0xff]
        %v5394 = vld [vmem:[%s5380 + $0x68] sm:$0xff]
        %v5395 = vld [vmem:[%s5380 + $0x70] sm:$0xff]
        %v5396 = vld [vmem:[%s5380 + $0x78] sm:$0xff]
        %v5397 = vld [vmem:[%s5380 + $0x80] sm:$0xff]
        %v5398 = vld [vmem:[%s5380 + $0x88] sm:$0xff]
        %v5399 = vld [vmem:[%s5380 + $0x90] sm:$0xff]
        %v5400 = vld [vmem:[%s5380 + $0x98] sm:$0xff]
        %v5401 = vld [vmem:[%s5380 + $0xa0] sm:$0xff]
        %v5402 = vld [vmem:[%s5380 + $0xa8] sm:$0xff]
        %v5403 = vld [vmem:[%s5380 + $0xb0] sm:$0xff]
        %v5404 = vld [vmem:[%s5380 + $0xb8] sm:$0xff]
        %v5405 = vld [vmem:[%s5380 + $0xc0] sm:$0xff]
        %v5406 = vld [vmem:[%s5380 + $0xc8] sm:$0xff]
        %v5407 = vld [vmem:[%s5380 + $0xd0] sm:$0xff]
        %v5408 = vld [vmem:[%s5380 + $0xd8] sm:$0xff]
        %v5409 = vld [vmem:[%s5380 + $0xe0] sm:$0xff]
        %v5410 = vld [vmem:[%s5380 + $0xe8] sm:$0xff]
        %v5411 = vld [vmem:[%s5380 + $0xf0] sm:$0xff]
        %v5412 = vld [vmem:[%s5380 + $0xf8] sm:$0xff]
        %v5413 = vld [vmem:[%s5380 + $0x100] sm:$0xff]
        %v5414 = vld [vmem:[%s5380 + $0x108] sm:$0xff]
        %v5415 = vld [vmem:[%s5380 + $0x110] sm:$0xff]
        %v5416 = vld [vmem:[%s5380 + $0x118] sm:$0xff]
        %v5417 = vld [vmem:[%s5380 + $0x120] sm:$0xff]
        %v5418 = vld [vmem:[%s5380 + $0x128] sm:$0xff]
        %v5419 = vld [vmem:[%s5380 + $0x130] sm:$0xff]
        %v5420 = vld [vmem:[%s5380 + $0x138] sm:$0xff]
        %v5421 = vld [vmem:[%s5380 + $0x140] sm:$0xff]
        %v5422 = vld [vmem:[%s5380 + $0x148] sm:$0xff]
        %v5423 = vld [vmem:[%s5380 + $0x150] sm:$0xff]
        %v5424 = vld [vmem:[%s5380 + $0x158] sm:$0xff]
        %v5425 = vld [vmem:[%s5380 + $0x160] sm:$0xff]
        %v5426 = vld [vmem:[%s5380 + $0x168] sm:$0xff]
        %v5427 = vld [vmem:[%s5380 + $0x170] sm:$0xff]
        %v5428 = vld [vmem:[%s5380 + $0x178] sm:$0xff]
        %s5429 = scalar_lea.vmem %s7, 9
        %v5430 = vld [vmem:[%s5429] sm:$0x7]
        %v5432 = vlaneseq
        %v5433 = vshrl.u32 %v5432, 7
        %v5434 = vsub.s32 0, %v5433
        %v5435 = vrot.slane %v5430, %v5434
        %v5436 = vlaneseq
        %v5437 = vshrl.u32 %v5436, 7
        %v5438 = vsub.s32 1, %v5437
        %v5439 = vrot.slane %v5430, %v5438
        %v5440 = vlaneseq
        %v5441 = vshrl.u32 %v5440, 7
        %v5442 = vsub.s32 2, %v5441
        %v5443 = vrot.slane %v5430, %v5442
        %5447 = vmatprep.subr.mxu0 %v5427
        %5448 = vmatpush1.msra.mxu0 %v5426
        %5449 = vmatprep.subr.mxu0 %v5424
        %5450 = vmatpush1.msra.mxu0 %v5423
        %5451 = vmatprep.subr.mxu0 %v5421
        %5452 = vmatpush1.msra.mxu0 %v5420
        %5453 = vmatprep.subr.mxu0 %v5418
        %5454 = vmatpush1.msra.mxu0 %v5417
        %5455 = vmatprep.subr.mxu0 %v5415
        %5456 = vmatpush1.msra.mxu0 %v5414
        %5457 = vmatprep.subr.mxu0 %v5412
        %5458 = vmatpush1.msra.mxu0 %v5411
        %5459 = vmatprep.subr.mxu0 %v5409
        %5460 = vmatpush1.msra.mxu0 %v5408
        %5461 = vmatprep.subr.mxu0 %v5406
        %5462 = vmatpush1.msra.mxu0 %v5405
        %5463 = vmatprep.subr.mxu0 %v5403
        %5464 = vmatpush1.msra.mxu0 %v5402
        %5465 = vmatprep.subr.mxu0 %v5400
        %5466 = vmatpush1.msra.mxu0 %v5399
        %5467 = vmatprep.subr.mxu0 %v5397
        %5468 = vmatpush1.msra.mxu0 %v5396
        %5469 = vmatprep.subr.mxu0 %v5394
        %5470 = vmatpush1.msra.mxu0 %v5393
        %5471 = vmatprep.subr.mxu0 %v5391
        %5472 = vmatpush1.msra.mxu0 %v5390
        %5473 = vmatprep.subr.mxu0 %v5388
        %5474 = vmatpush1.msra.mxu0 %v5387
        %5475 = vmatprep.subr.mxu0 %v5385
        %5476 = vmatpush1.msra.mxu0 %v5384
        %5477 = vmatprep.subr.mxu0 %v5382
        %5478 = vmatpush1.msra.mxu0 %v5381
        %5479 = vmatprep.subr.mxu0 0.0
        %5480 = vmatpush2.msra.mxu0 0.0
        %5481 = vmatprep.subr.mxu0 0.0
        %5482 = vmatpush2.msra.mxu0 0.0
        %5483 = vmatprep.subr.mxu0 0.0
        %5484 = vmatpush2.msra.mxu0 0.0
        %5485 = vmatprep.subr.mxu0 0.0
        %5486 = vmatpush2.msra.mxu0 0.0
        %5487 = vmatprep.subr.mxu0 0.0
        %5488 = vmatpush2.msra.mxu0 0.0
        %5489 = vmatprep.subr.mxu0 0.0
        %5490 = vmatpush2.msra.mxu0 0.0
        %5491 = vmatprep.subr.mxu0 0.0
        %5492 = vmatpush2.msra.mxu0 0.0
        %5493 = vmatprep.subr.mxu0 0.0
        %5494 = vmatpush2.msra.mxu0 0.0
        %5495 = vmatprep.subr.mxu0 0.0
        %5496 = vmatpush2.msra.mxu0 0.0
        %5497 = vmatprep.subr.mxu0 0.0
        %5498 = vmatpush2.msra.mxu0 0.0
        %5499 = vmatprep.subr.mxu0 0.0
        %5500 = vmatpush2.msra.mxu0 0.0
        %5501 = vmatprep.subr.mxu0 0.0
        %5502 = vmatpush2.msra.mxu0 0.0
        %5503 = vmatprep.subr.mxu0 0.0
        %5504 = vmatpush2.msra.mxu0 0.0
        %5505 = vmatprep.subr.mxu0 0.0
        %5506 = vmatpush2.msra.mxu0 0.0
        %5507 = vmatprep.subr.mxu0 0.0
        %5508 = vmatpush2.msra.mxu0 0.0
        %5509 = vmatprep.subr.mxu0 0.0
        %5510 = vmatpush2.msra.mxu0 0.0
        %5511 = vmatprep.mubr.f32.mxu0 0.0
        %5512 = vmatmul.mubr.f32.gmra.mxu0 %v5378
        %v5513 = vpop.f32.mrf.mxu0
        %v5514 = vadd.f32 %v5435, %v5513
        %v5515 = vpop.f32.mrf.mxu0
        %v5516 = vadd.f32 %v5439, %v5515
        %5517 = vmatprep.mubr.f32.mxu0 0.0
        %5518 = vmatmul.mubr.f32.gmra.mxu0 %v5379
        %v5519 = vpop.f32.mrf.mxu0
        %v5520 = vadd.f32 %v5435, %v5519
        %v5521 = vpop.f32.mrf.mxu0
        %v5522 = vadd.f32 %v5439, %v5521
        %5523 = vdwg.mxu0
        %5524 = vmatprep.subr.mxu0 0.0
        %5525 = vmatpush1.msra.mxu0 %v5428
        %5526 = vmatprep.subr.mxu0 0.0
        %5527 = vmatpush1.msra.mxu0 %v5425
        %5528 = vmatprep.subr.mxu0 0.0
        %5529 = vmatpush1.msra.mxu0 %v5422
        %5530 = vmatprep.subr.mxu0 0.0
        %5531 = vmatpush1.msra.mxu0 %v5419
        %5532 = vmatprep.subr.mxu0 0.0
        %5533 = vmatpush1.msra.mxu0 %v5416
        %5534 = vmatprep.subr.mxu0 0.0
        %5535 = vmatpush1.msra.mxu0 %v5413
        %5536 = vmatprep.subr.mxu0 0.0
        %5537 = vmatpush1.msra.mxu0 %v5410
        %5538 = vmatprep.subr.mxu0 0.0
        %5539 = vmatpush1.msra.mxu0 %v5407
        %5540 = vmatprep.subr.mxu0 0.0
        %5541 = vmatpush1.msra.mxu0 %v5404
        %5542 = vmatprep.subr.mxu0 0.0
        %5543 = vmatpush1.msra.mxu0 %v5401
        %5544 = vmatprep.subr.mxu0 0.0
        %5545 = vmatpush1.msra.mxu0 %v5398
        %5546 = vmatprep.subr.mxu0 0.0
        %5547 = vmatpush1.msra.mxu0 %v5395
        %5548 = vmatprep.subr.mxu0 0.0
        %5549 = vmatpush1.msra.mxu0 %v5392
        %5550 = vmatprep.subr.mxu0 0.0
        %5551 = vmatpush1.msra.mxu0 %v5389
        %5552 = vmatprep.subr.mxu0 0.0
        %5553 = vmatpush1.msra.mxu0 %v5386
        %5554 = vmatprep.subr.mxu0 0.0
        %5555 = vmatpush1.msra.mxu0 %v5383
        %5556 = vmatprep.subr.mxu0 0.0
        %5557 = vmatpush2.msra.mxu0 0.0
        %5558 = vmatprep.subr.mxu0 0.0
        %5559 = vmatpush2.msra.mxu0 0.0
        %5560 = vmatprep.subr.mxu0 0.0
        %5561 = vmatpush2.msra.mxu0 0.0
        %5562 = vmatprep.subr.mxu0 0.0
        %5563 = vmatpush2.msra.mxu0 0.0
        %5564 = vmatprep.subr.mxu0 0.0
        %5565 = vmatpush2.msra.mxu0 0.0
        %5566 = vmatprep.subr.mxu0 0.0
        %5567 = vmatpush2.msra.mxu0 0.0
        %5568 = vmatprep.subr.mxu0 0.0
        %5569 = vmatpush2.msra.mxu0 0.0
        %5570 = vmatprep.subr.mxu0 0.0
        %5571 = vmatpush2.msra.mxu0 0.0
        %5572 = vmatprep.subr.mxu0 0.0
        %5573 = vmatpush2.msra.mxu0 0.0
        %5574 = vmatprep.subr.mxu0 0.0
        %5575 = vmatpush2.msra.mxu0 0.0
        %5576 = vmatprep.subr.mxu0 0.0
        %5577 = vmatpush2.msra.mxu0 0.0
        %5578 = vmatprep.subr.mxu0 0.0
        %5579 = vmatpush2.msra.mxu0 0.0
        %5580 = vmatprep.subr.mxu0 0.0
        %5581 = vmatpush2.msra.mxu0 0.0
        %5582 = vmatprep.subr.mxu0 0.0
        %5583 = vmatpush2.msra.mxu0 0.0
        %5584 = vmatprep.subr.mxu0 0.0
        %5585 = vmatpush2.msra.mxu0 0.0
        %5586 = vmatprep.subr.mxu0 0.0
        %5587 = vmatpush2.msra.mxu0 0.0
        %5588 = vmatprep.mubr.f32.mxu0 0.0
        %5589 = vmatmul.mubr.f32.gmra.mxu0 %v5378
        %v5590 = vpop.f32.mrf.mxu0
        %v5591 = vadd.f32 %v5443, %v5590
        %v5592 = vpop.f32.mrf.mxu0
        %5593 = vmatprep.mubr.f32.mxu0 0.0
        %5594 = vmatmul.mubr.f32.gmra.mxu0 %v5379
        %v5595 = vpop.f32.mrf.mxu0
        %v5596 = vadd.f32 %v5443, %v5595
        %v5597 = vpop.f32.mrf.mxu0
        %5598 = vdwg.mxu0
        %v5600 = vsel %vm1070, %v5514, 0
        %v5603 = vsel %vm1070, %v5520, 0
        %v5606 = vsel %vm1070, %v5516, 0
        %v5609 = vsel %vm1070, %v5522, 0
        %5611 = vmatprep.subr.mxu0 0.0
        %5612 = vmatpush1.xpose.msra.mxu0 0.0
        %5613 = vmatprep.subr.mxu0 0.0
        %5614 = vmatpush1.xpose.msra.mxu0 0.0
        %5615 = vmatprep.subr.mxu0 0.0
        %5616 = vmatpush1.xpose.msra.mxu0 0.0
        %5617 = vmatprep.subr.mxu0 0.0
        %5618 = vmatpush1.xpose.msra.mxu0 0.0
        %5619 = vmatprep.subr.mxu0 0.0
        %5620 = vmatpush1.xpose.msra.mxu0 0.0
        %5621 = vmatprep.subr.mxu0 0.0
        %5622 = vmatpush1.xpose.msra.mxu0 0.0
        %5623 = vmatprep.subr.mxu0 0.0
        %5624 = vmatpush1.xpose.msra.mxu0 0.0
        %5625 = vmatprep.subr.mxu0 0.0
        %5626 = vmatpush1.xpose.msra.mxu0 0.0
        %5627 = vmatprep.subr.mxu0 0.0
        %5628 = vmatpush1.xpose.msra.mxu0 0.0
        %5629 = vmatprep.subr.mxu0 0.0
        %5630 = vmatpush1.xpose.msra.mxu0 0.0
        %5631 = vmatprep.subr.mxu0 0.0
        %5632 = vmatpush1.xpose.msra.mxu0 0.0
        %5633 = vmatprep.subr.mxu0 0.0
        %5634 = vmatpush1.xpose.msra.mxu0 0.0
        %5635 = vmatprep.subr.mxu0 0.0
        %5636 = vmatpush1.xpose.msra.mxu0 0.0
        %5637 = vmatprep.subr.mxu0 0.0
        %5638 = vmatpush1.xpose.msra.mxu0 0.0
        %5639 = vmatprep.subr.mxu0 0.0
        %5640 = vmatpush1.xpose.msra.mxu0 %v5609
        %5641 = vmatprep.subr.mxu0 0.0
        %5642 = vmatpush1.xpose.msra.mxu0 %v5606
        %5643 = vmatprep.subr.mxu0 0.0
        %5644 = vmatpush2.xpose.msra.mxu0 0.0
        %5645 = vmatprep.subr.mxu0 0.0
        %5646 = vmatpush2.xpose.msra.mxu0 0.0
        %5647 = vmatprep.subr.mxu0 0.0
        %5648 = vmatpush2.xpose.msra.mxu0 0.0
        %5649 = vmatprep.subr.mxu0 0.0
        %5650 = vmatpush2.xpose.msra.mxu0 0.0
        %5651 = vmatprep.subr.mxu0 0.0
        %5652 = vmatpush2.xpose.msra.mxu0 0.0
        %5653 = vmatprep.subr.mxu0 0.0
        %5654 = vmatpush2.xpose.msra.mxu0 0.0
        %5655 = vmatprep.subr.mxu0 0.0
        %5656 = vmatpush2.xpose.msra.mxu0 0.0
        %5657 = vmatprep.subr.mxu0 0.0
        %5658 = vmatpush2.xpose.msra.mxu0 0.0
        %5659 = vmatprep.subr.mxu0 0.0
        %5660 = vmatpush2.xpose.msra.mxu0 0.0
        %5661 = vmatprep.subr.mxu0 0.0
        %5662 = vmatpush2.xpose.msra.mxu0 0.0
        %5663 = vmatprep.subr.mxu0 0.0
        %5664 = vmatpush2.xpose.msra.mxu0 0.0
        %5665 = vmatprep.subr.mxu0 0.0
        %5666 = vmatpush2.xpose.msra.mxu0 0.0
        %5667 = vmatprep.subr.mxu0 0.0
        %5668 = vmatpush2.xpose.msra.mxu0 0.0
        %5669 = vmatprep.subr.mxu0 0.0
        %5670 = vmatpush2.xpose.msra.mxu0 0.0
        %5671 = vmatprep.subr.mxu0 0.0
        %5672 = vmatpush2.xpose.msra.mxu0 0.0
        %5673 = vmatprep.subr.mxu0 0.0
        %5674 = vmatpush2.xpose.msra.mxu0 0.0
        %5675 = vmatprep.mubr.f32.mxu0 0.0
        %5676 = vmatmul.mubr.f32.gmra.mxu0 %v5600
        %v5677 = vpop.f32.mrf.mxu0
        %v5678 = vadd.f32 0.0, %v5677
        %v5679 = vpop.f32.mrf.mxu0
        %5680 = vmatprep.mubr.f32.mxu0 0.0
        %5681 = vmatmul.mubr.f32.gmra.mxu0 %v5603
        %v5682 = vpop.f32.mrf.mxu0
        %v5683 = vadd.f32 0.0, %v5682
        %v5684 = vpop.f32.mrf.mxu0
        %5685 = vdwg.mxu0
        %v5686 = vmul.f32 %v5678, 0.17677669
        %v5687 = vmul.f32 %v5683, 0.17677669
        %v5688 = vsel %vm1160, %v5686, -inf
        %5689 = vmax.xlane.f32.xlu0 %v5688
        %v5690 = vpop.xlane.xlu0 %5689
        %v5691 = vsel %vm1160, %v5687, -inf
        %5692 = vmax.xlane.f32.xlu0 %v5691
        %v5693 = vpop.xlane.xlu0 %5692
        %v5694 = vsub.f32 %v5686, %v5690
        %v5695 = vsub.f32 %v5687, %v5693
        %v5696 = vmul.f32 %v5694, 1.442695
        %v5697 = vpow.pop %v5696
        %v5698 = vmul.f32 %v5695, 1.442695
        %v5699 = vpow.pop %v5698
        %v5700 = vsel %vm1160, %v5697, 0.0
        %5701 = vadd.xlane.f32.xlu0 %v5700
        %v5702 = vpop.xlane.xlu0 %5701
        %v5703 = vsel %vm1160, %v5699, 0.0
        %5704 = vadd.xlane.f32.xlu0 %v5703
        %v5705 = vpop.xlane.xlu0 %5704
        %v5706 = vrcp.pop %v5702
        %v5707 = vrcp.pop %v5705
        %v5708 = vmul.f32 %v5697, %v5706
        %v5709 = vmul.f32 %v5699, %v5707
        %v5711 = vsel %vm1160, %v5708, 0
        %v5714 = vsel %vm1160, %v5709, 0
        %5716 = vmatprep.subr.mxu0 0.0
        %5717 = vmatpush1.msra.mxu0 0.0
        %5718 = vmatprep.subr.mxu0 0.0
        %5719 = vmatpush1.msra.mxu0 0.0
        %5720 = vmatprep.subr.mxu0 0.0
        %5721 = vmatpush1.msra.mxu0 0.0
        %5722 = vmatprep.subr.mxu0 0.0
        %5723 = vmatpush1.msra.mxu0 0.0
        %5724 = vmatprep.subr.mxu0 0.0
        %5725 = vmatpush1.msra.mxu0 0.0
        %5726 = vmatprep.subr.mxu0 0.0
        %5727 = vmatpush1.msra.mxu0 0.0
        %5728 = vmatprep.subr.mxu0 0.0
        %5729 = vmatpush1.msra.mxu0 0.0
        %5730 = vmatprep.subr.mxu0 0.0
        %5731 = vmatpush1.msra.mxu0 0.0
        %5732 = vmatprep.subr.mxu0 0.0
        %5733 = vmatpush1.msra.mxu0 0.0
        %5734 = vmatprep.subr.mxu0 0.0
        %5735 = vmatpush1.msra.mxu0 0.0
        %5736 = vmatprep.subr.mxu0 0.0
        %5737 = vmatpush1.msra.mxu0 0.0
        %5738 = vmatprep.subr.mxu0 0.0
        %5739 = vmatpush1.msra.mxu0 0.0
        %5740 = vmatprep.subr.mxu0 0.0
        %5741 = vmatpush1.msra.mxu0 0.0
        %5742 = vmatprep.subr.mxu0 0.0
        %5743 = vmatpush1.msra.mxu0 0.0
        %5744 = vmatprep.subr.mxu0 0.0
        %5745 = vmatpush1.msra.mxu0 %v5596
        %5746 = vmatprep.subr.mxu0 0.0
        %5747 = vmatpush1.msra.mxu0 %v5591
        %5748 = vmatprep.subr.mxu0 0.0
        %5749 = vmatpush2.msra.mxu0 0.0
        %5750 = vmatprep.subr.mxu0 0.0
        %5751 = vmatpush2.msra.mxu0 0.0
        %5752 = vmatprep.subr.mxu0 0.0
        %5753 = vmatpush2.msra.mxu0 0.0
        %5754 = vmatprep.subr.mxu0 0.0
        %5755 = vmatpush2.msra.mxu0 0.0
        %5756 = vmatprep.subr.mxu0 0.0
        %5757 = vmatpush2.msra.mxu0 0.0
        %5758 = vmatprep.subr.mxu0 0.0
        %5759 = vmatpush2.msra.mxu0 0.0
        %5760 = vmatprep.subr.mxu0 0.0
        %5761 = vmatpush2.msra.mxu0 0.0
        %5762 = vmatprep.subr.mxu0 0.0
        %5763 = vmatpush2.msra.mxu0 0.0
        %5764 = vmatprep.subr.mxu0 0.0
        %5765 = vmatpush2.msra.mxu0 0.0
        %5766 = vmatprep.subr.mxu0 0.0
        %5767 = vmatpush2.msra.mxu0 0.0
        %5768 = vmatprep.subr.mxu0 0.0
        %5769 = vmatpush2.msra.mxu0 0.0
        %5770 = vmatprep.subr.mxu0 0.0
        %5771 = vmatpush2.msra.mxu0 0.0
        %5772 = vmatprep.subr.mxu0 0.0
        %5773 = vmatpush2.msra.mxu0 0.0
        %5774 = vmatprep.subr.mxu0 0.0
        %5775 = vmatpush2.msra.mxu0 0.0
        %5776 = vmatprep.subr.mxu0 0.0
        %5777 = vmatpush2.msra.mxu0 0.0
        %5778 = vmatprep.subr.mxu0 0.0
        %5779 = vmatpush2.msra.mxu0 0.0
        %5780 = vmatprep.mubr.f32.mxu0 0.0
        %5781 = vmatmul.mubr.f32.gmra.mxu0 %v5711
        %v5782 = vpop.f32.mrf.mxu0
        %v5783 = vadd.f32 0.0, %v5782
        %v5784 = vpop.f32.mrf.mxu0
        %5785 = vmatprep.mubr.f32.mxu0 0.0
        %5786 = vmatmul.mubr.f32.gmra.mxu0 %v5714
        %v5787 = vpop.f32.mrf.mxu0
        %v5788 = vadd.f32 0.0, %v5787
        %v5789 = vpop.f32.mrf.mxu0
        %5790 = vdwg.mxu0
        %5791 = vrot.lane.b32.xlu0 %v5514, 96
        %v5792 = vpop.permute.xlu0 %5791
        %5793 = vrot.lane.b32.xlu0 %v5520, 96
        %v5794 = vpop.permute.xlu0 %5793
        %5795 = vrot.lane.b32.xlu0 %v5516, 96
        %v5796 = vpop.permute.xlu0 %5795
        %5797 = vrot.lane.b32.xlu0 %v5522, 96
        %v5798 = vpop.permute.xlu0 %5797
        %v5799 = vsel %vm1070, %v5792, 0
        %v5801 = vsel %vm1070, %v5794, 0
        %v5803 = vsel %vm1070, %v5796, 0
        %v5805 = vsel %vm1070, %v5798, 0
        %5807 = vmatprep.subr.mxu0 0.0
        %5808 = vmatpush1.xpose.msra.mxu0 0.0
        %5809 = vmatprep.subr.mxu0 0.0
        %5810 = vmatpush1.xpose.msra.mxu0 0.0
        %5811 = vmatprep.subr.mxu0 0.0
        %5812 = vmatpush1.xpose.msra.mxu0 0.0
        %5813 = vmatprep.subr.mxu0 0.0
        %5814 = vmatpush1.xpose.msra.mxu0 0.0
        %5815 = vmatprep.subr.mxu0 0.0
        %5816 = vmatpush1.xpose.msra.mxu0 0.0
        %5817 = vmatprep.subr.mxu0 0.0
        %5818 = vmatpush1.xpose.msra.mxu0 0.0
        %5819 = vmatprep.subr.mxu0 0.0
        %5820 = vmatpush1.xpose.msra.mxu0 0.0
        %5821 = vmatprep.subr.mxu0 0.0
        %5822 = vmatpush1.xpose.msra.mxu0 0.0
        %5823 = vmatprep.subr.mxu0 0.0
        %5824 = vmatpush1.xpose.msra.mxu0 0.0
        %5825 = vmatprep.subr.mxu0 0.0
        %5826 = vmatpush1.xpose.msra.mxu0 0.0
        %5827 = vmatprep.subr.mxu0 0.0
        %5828 = vmatpush1.xpose.msra.mxu0 0.0
        %5829 = vmatprep.subr.mxu0 0.0
        %5830 = vmatpush1.xpose.msra.mxu0 0.0
        %5831 = vmatprep.subr.mxu0 0.0
        %5832 = vmatpush1.xpose.msra.mxu0 0.0
        %5833 = vmatprep.subr.mxu0 0.0
        %5834 = vmatpush1.xpose.msra.mxu0 0.0
        %5835 = vmatprep.subr.mxu0 0.0
        %5836 = vmatpush1.xpose.msra.mxu0 %v5805
        %5837 = vmatprep.subr.mxu0 0.0
        %5838 = vmatpush1.xpose.msra.mxu0 %v5803
        %5839 = vmatprep.subr.mxu0 0.0
        %5840 = vmatpush2.xpose.msra.mxu0 0.0
        %5841 = vmatprep.subr.mxu0 0.0
        %5842 = vmatpush2.xpose.msra.mxu0 0.0
        %5843 = vmatprep.subr.mxu0 0.0
        %5844 = vmatpush2.xpose.msra.mxu0 0.0
        %5845 = vmatprep.subr.mxu0 0.0
        %5846 = vmatpush2.xpose.msra.mxu0 0.0
        %5847 = vmatprep.subr.mxu0 0.0
        %5848 = vmatpush2.xpose.msra.mxu0 0.0
        %5849 = vmatprep.subr.mxu0 0.0
        %5850 = vmatpush2.xpose.msra.mxu0 0.0
        %5851 = vmatprep.subr.mxu0 0.0
        %5852 = vmatpush2.xpose.msra.mxu0 0.0
        %5853 = vmatprep.subr.mxu0 0.0
        %5854 = vmatpush2.xpose.msra.mxu0 0.0
        %5855 = vmatprep.subr.mxu0 0.0
        %5856 = vmatpush2.xpose.msra.mxu0 0.0
        %5857 = vmatprep.subr.mxu0 0.0
        %5858 = vmatpush2.xpose.msra.mxu0 0.0
        %5859 = vmatprep.subr.mxu0 0.0
        %5860 = vmatpush2.xpose.msra.mxu0 0.0
        %5861 = vmatprep.subr.mxu0 0.0
        %5862 = vmatpush2.xpose.msra.mxu0 0.0
        %5863 = vmatprep.subr.mxu0 0.0
        %5864 = vmatpush2.xpose.msra.mxu0 0.0
        %5865 = vmatprep.subr.mxu0 0.0
        %5866 = vmatpush2.xpose.msra.mxu0 0.0
        %5867 = vmatprep.subr.mxu0 0.0
        %5868 = vmatpush2.xpose.msra.mxu0 0.0
        %5869 = vmatprep.subr.mxu0 0.0
        %5870 = vmatpush2.xpose.msra.mxu0 0.0
        %5871 = vmatprep.mubr.f32.mxu0 0.0
        %5872 = vmatmul.mubr.f32.gmra.mxu0 %v5799
        %v5873 = vpop.f32.mrf.mxu0
        %v5874 = vadd.f32 0.0, %v5873
        %v5875 = vpop.f32.mrf.mxu0
        %5876 = vmatprep.mubr.f32.mxu0 0.0
        %5877 = vmatmul.mubr.f32.gmra.mxu0 %v5801
        %v5878 = vpop.f32.mrf.mxu0
        %v5879 = vadd.f32 0.0, %v5878
        %v5880 = vpop.f32.mrf.mxu0
        %5881 = vdwg.mxu0
        %v5882 = vmul.f32 %v5874, 0.17677669
        %v5883 = vmul.f32 %v5879, 0.17677669
        %v5884 = vsel %vm1160, %v5882, -inf
        %5885 = vmax.xlane.f32.xlu0 %v5884
        %v5886 = vpop.xlane.xlu0 %5885
        %v5887 = vsel %vm1160, %v5883, -inf
        %5888 = vmax.xlane.f32.xlu0 %v5887
        %v5889 = vpop.xlane.xlu0 %5888
        %v5890 = vsub.f32 %v5882, %v5886
        %v5891 = vsub.f32 %v5883, %v5889
        %v5892 = vmul.f32 %v5890, 1.442695
        %v5893 = vpow.pop %v5892
        %v5894 = vmul.f32 %v5891, 1.442695
        %v5895 = vpow.pop %v5894
        %v5896 = vsel %vm1160, %v5893, 0.0
        %5897 = vadd.xlane.f32.xlu0 %v5896
        %v5898 = vpop.xlane.xlu0 %5897
        %v5899 = vsel %vm1160, %v5895, 0.0
        %5900 = vadd.xlane.f32.xlu0 %v5899
        %v5901 = vpop.xlane.xlu0 %5900
        %v5902 = vrcp.pop %v5898
        %v5903 = vrcp.pop %v5901
        %v5904 = vmul.f32 %v5893, %v5902
        %v5905 = vmul.f32 %v5895, %v5903
        %5908 = vrot.lane.b32.xlu0 %v5591, 96
        %v5909 = vpop.permute.xlu0 %5908
        %5910 = vrot.lane.b32.xlu0 %v5596, 96
        %v5911 = vpop.permute.xlu0 %5910
        %v5915 = vsel %vm1160, %v5904, 0
        %v5918 = vsel %vm1160, %v5905, 0
        %5920 = vmatprep.subr.mxu0 0.0
        %5921 = vmatpush1.msra.mxu0 0.0
        %5922 = vmatprep.subr.mxu0 0.0
        %5923 = vmatpush1.msra.mxu0 0.0
        %5924 = vmatprep.subr.mxu0 0.0
        %5925 = vmatpush1.msra.mxu0 0.0
        %5926 = vmatprep.subr.mxu0 0.0
        %5927 = vmatpush1.msra.mxu0 0.0
        %5928 = vmatprep.subr.mxu0 0.0
        %5929 = vmatpush1.msra.mxu0 0.0
        %5930 = vmatprep.subr.mxu0 0.0
        %5931 = vmatpush1.msra.mxu0 0.0
        %5932 = vmatprep.subr.mxu0 0.0
        %5933 = vmatpush1.msra.mxu0 0.0
        %5934 = vmatprep.subr.mxu0 0.0
        %5935 = vmatpush1.msra.mxu0 0.0
        %5936 = vmatprep.subr.mxu0 0.0
        %5937 = vmatpush1.msra.mxu0 0.0
        %5938 = vmatprep.subr.mxu0 0.0
        %5939 = vmatpush1.msra.mxu0 0.0
        %5940 = vmatprep.subr.mxu0 0.0
        %5941 = vmatpush1.msra.mxu0 0.0
        %5942 = vmatprep.subr.mxu0 0.0
        %5943 = vmatpush1.msra.mxu0 0.0
        %5944 = vmatprep.subr.mxu0 0.0
        %5945 = vmatpush1.msra.mxu0 0.0
        %5946 = vmatprep.subr.mxu0 0.0
        %5947 = vmatpush1.msra.mxu0 0.0
        %5948 = vmatprep.subr.mxu0 0.0
        %5949 = vmatpush1.msra.mxu0 %v5911
        %5950 = vmatprep.subr.mxu0 0.0
        %5951 = vmatpush1.msra.mxu0 %v5909
        %5952 = vmatprep.subr.mxu0 0.0
        %5953 = vmatpush2.msra.mxu0 0.0
        %5954 = vmatprep.subr.mxu0 0.0
        %5955 = vmatpush2.msra.mxu0 0.0
        %5956 = vmatprep.subr.mxu0 0.0
        %5957 = vmatpush2.msra.mxu0 0.0
        %5958 = vmatprep.subr.mxu0 0.0
        %5959 = vmatpush2.msra.mxu0 0.0
        %5960 = vmatprep.subr.mxu0 0.0
        %5961 = vmatpush2.msra.mxu0 0.0
        %5962 = vmatprep.subr.mxu0 0.0
        %5963 = vmatpush2.msra.mxu0 0.0
        %5964 = vmatprep.subr.mxu0 0.0
        %5965 = vmatpush2.msra.mxu0 0.0
        %5966 = vmatprep.subr.mxu0 0.0
        %5967 = vmatpush2.msra.mxu0 0.0
        %5968 = vmatprep.subr.mxu0 0.0
        %5969 = vmatpush2.msra.mxu0 0.0
        %5970 = vmatprep.subr.mxu0 0.0
        %5971 = vmatpush2.msra.mxu0 0.0
        %5972 = vmatprep.subr.mxu0 0.0
        %5973 = vmatpush2.msra.mxu0 0.0
        %5974 = vmatprep.subr.mxu0 0.0
        %5975 = vmatpush2.msra.mxu0 0.0
        %5976 = vmatprep.subr.mxu0 0.0
        %5977 = vmatpush2.msra.mxu0 0.0
        %5978 = vmatprep.subr.mxu0 0.0
        %5979 = vmatpush2.msra.mxu0 0.0
        %5980 = vmatprep.subr.mxu0 0.0
        %5981 = vmatpush2.msra.mxu0 0.0
        %5982 = vmatprep.subr.mxu0 0.0
        %5983 = vmatpush2.msra.mxu0 0.0
        %5984 = vmatprep.mubr.f32.mxu0 0.0
        %5985 = vmatmul.mubr.f32.gmra.mxu0 %v5915
        %v5986 = vpop.f32.mrf.mxu0
        %v5987 = vadd.f32 0.0, %v5986
        %v5988 = vpop.f32.mrf.mxu0
        %5989 = vmatprep.mubr.f32.mxu0 0.0
        %5990 = vmatmul.mubr.f32.gmra.mxu0 %v5918
        %v5991 = vpop.f32.mrf.mxu0
        %v5992 = vadd.f32 0.0, %v5991
        %v5993 = vpop.f32.mrf.mxu0
        %5994 = vdwg.mxu0
        %5995 = vrot.lane.b32.xlu0 %v5514, 64
        %v5996 = vpop.permute.xlu0 %5995
        %5997 = vrot.lane.b32.xlu0 %v5520, 64
        %v5998 = vpop.permute.xlu0 %5997
        %5999 = vrot.lane.b32.xlu0 %v5516, 64
        %v6000 = vpop.permute.xlu0 %5999
        %6001 = vrot.lane.b32.xlu0 %v5522, 64
        %v6002 = vpop.permute.xlu0 %6001
        %v6003 = vsel %vm1070, %v5996, 0
        %v6005 = vsel %vm1070, %v5998, 0
        %v6007 = vsel %vm1070, %v6000, 0
        %v6009 = vsel %vm1070, %v6002, 0
        %6011 = vmatprep.subr.mxu0 0.0
        %6012 = vmatpush1.xpose.msra.mxu0 0.0
        %6013 = vmatprep.subr.mxu0 0.0
        %6014 = vmatpush1.xpose.msra.mxu0 0.0
        %6015 = vmatprep.subr.mxu0 0.0
        %6016 = vmatpush1.xpose.msra.mxu0 0.0
        %6017 = vmatprep.subr.mxu0 0.0
        %6018 = vmatpush1.xpose.msra.mxu0 0.0
        %6019 = vmatprep.subr.mxu0 0.0
        %6020 = vmatpush1.xpose.msra.mxu0 0.0
        %6021 = vmatprep.subr.mxu0 0.0
        %6022 = vmatpush1.xpose.msra.mxu0 0.0
        %6023 = vmatprep.subr.mxu0 0.0
        %6024 = vmatpush1.xpose.msra.mxu0 0.0
        %6025 = vmatprep.subr.mxu0 0.0
        %6026 = vmatpush1.xpose.msra.mxu0 0.0
        %6027 = vmatprep.subr.mxu0 0.0
        %6028 = vmatpush1.xpose.msra.mxu0 0.0
        %6029 = vmatprep.subr.mxu0 0.0
        %6030 = vmatpush1.xpose.msra.mxu0 0.0
        %6031 = vmatprep.subr.mxu0 0.0
        %6032 = vmatpush1.xpose.msra.mxu0 0.0
        %6033 = vmatprep.subr.mxu0 0.0
        %6034 = vmatpush1.xpose.msra.mxu0 0.0
        %6035 = vmatprep.subr.mxu0 0.0
        %6036 = vmatpush1.xpose.msra.mxu0 0.0
        %6037 = vmatprep.subr.mxu0 0.0
        %6038 = vmatpush1.xpose.msra.mxu0 0.0
        %6039 = vmatprep.subr.mxu0 0.0
        %6040 = vmatpush1.xpose.msra.mxu0 %v6009
        %6041 = vmatprep.subr.mxu0 0.0
        %6042 = vmatpush1.xpose.msra.mxu0 %v6007
        %6043 = vmatprep.subr.mxu0 0.0
        %6044 = vmatpush2.xpose.msra.mxu0 0.0
        %6045 = vmatprep.subr.mxu0 0.0
        %6046 = vmatpush2.xpose.msra.mxu0 0.0
        %6047 = vmatprep.subr.mxu0 0.0
        %6048 = vmatpush2.xpose.msra.mxu0 0.0
        %6049 = vmatprep.subr.mxu0 0.0
        %6050 = vmatpush2.xpose.msra.mxu0 0.0
        %6051 = vmatprep.subr.mxu0 0.0
        %6052 = vmatpush2.xpose.msra.mxu0 0.0
        %6053 = vmatprep.subr.mxu0 0.0
        %6054 = vmatpush2.xpose.msra.mxu0 0.0
        %6055 = vmatprep.subr.mxu0 0.0
        %6056 = vmatpush2.xpose.msra.mxu0 0.0
        %6057 = vmatprep.subr.mxu0 0.0
        %6058 = vmatpush2.xpose.msra.mxu0 0.0
        %6059 = vmatprep.subr.mxu0 0.0
        %6060 = vmatpush2.xpose.msra.mxu0 0.0
        %6061 = vmatprep.subr.mxu0 0.0
        %6062 = vmatpush2.xpose.msra.mxu0 0.0
        %6063 = vmatprep.subr.mxu0 0.0
        %6064 = vmatpush2.xpose.msra.mxu0 0.0
        %6065 = vmatprep.subr.mxu0 0.0
        %6066 = vmatpush2.xpose.msra.mxu0 0.0
        %6067 = vmatprep.subr.mxu0 0.0
        %6068 = vmatpush2.xpose.msra.mxu0 0.0
        %6069 = vmatprep.subr.mxu0 0.0
        %6070 = vmatpush2.xpose.msra.mxu0 0.0
        %6071 = vmatprep.subr.mxu0 0.0
        %6072 = vmatpush2.xpose.msra.mxu0 0.0
        %6073 = vmatprep.subr.mxu0 0.0
        %6074 = vmatpush2.xpose.msra.mxu0 0.0
        %6075 = vmatprep.mubr.f32.mxu0 0.0
        %6076 = vmatmul.mubr.f32.gmra.mxu0 %v6003
        %v6077 = vpop.f32.mrf.mxu0
        %v6078 = vadd.f32 0.0, %v6077
        %v6079 = vpop.f32.mrf.mxu0
        %6080 = vmatprep.mubr.f32.mxu0 0.0
        %6081 = vmatmul.mubr.f32.gmra.mxu0 %v6005
        %v6082 = vpop.f32.mrf.mxu0
        %v6083 = vadd.f32 0.0, %v6082
        %v6084 = vpop.f32.mrf.mxu0
        %6085 = vdwg.mxu0
        %v6086 = vmul.f32 %v6078, 0.17677669
        %v6087 = vmul.f32 %v6083, 0.17677669
        %v6088 = vsel %vm1160, %v6086, -inf
        %6089 = vmax.xlane.f32.xlu0 %v6088
        %v6090 = vpop.xlane.xlu0 %6089
        %v6091 = vsel %vm1160, %v6087, -inf
        %6092 = vmax.xlane.f32.xlu0 %v6091
        %v6093 = vpop.xlane.xlu0 %6092
        %v6094 = vsub.f32 %v6086, %v6090
        %v6095 = vsub.f32 %v6087, %v6093
        %v6096 = vmul.f32 %v6094, 1.442695
        %v6097 = vpow.pop %v6096
        %v6098 = vmul.f32 %v6095, 1.442695
        %v6099 = vpow.pop %v6098
        %v6100 = vsel %vm1160, %v6097, 0.0
        %6101 = vadd.xlane.f32.xlu0 %v6100
        %v6102 = vpop.xlane.xlu0 %6101
        %v6103 = vsel %vm1160, %v6099, 0.0
        %6104 = vadd.xlane.f32.xlu0 %v6103
        %v6105 = vpop.xlane.xlu0 %6104
        %v6106 = vrcp.pop %v6102
        %v6107 = vrcp.pop %v6105
        %v6108 = vmul.f32 %v6097, %v6106
        %v6109 = vmul.f32 %v6099, %v6107
        %6110 = vrot.lane.b32.xlu0 %v5591, 64
        %v6111 = vpop.permute.xlu0 %6110
        %6112 = vrot.lane.b32.xlu0 %v5596, 64
        %v6113 = vpop.permute.xlu0 %6112
        %v6117 = vsel %vm1160, %v6108, 0
        %v6120 = vsel %vm1160, %v6109, 0
        %6122 = vmatprep.subr.mxu0 0.0
        %6123 = vmatpush1.msra.mxu0 0.0
        %6124 = vmatprep.subr.mxu0 0.0
        %6125 = vmatpush1.msra.mxu0 0.0
        %6126 = vmatprep.subr.mxu0 0.0
        %6127 = vmatpush1.msra.mxu0 0.0
        %6128 = vmatprep.subr.mxu0 0.0
        %6129 = vmatpush1.msra.mxu0 0.0
        %6130 = vmatprep.subr.mxu0 0.0
        %6131 = vmatpush1.msra.mxu0 0.0
        %6132 = vmatprep.subr.mxu0 0.0
        %6133 = vmatpush1.msra.mxu0 0.0
        %6134 = vmatprep.subr.mxu0 0.0
        %6135 = vmatpush1.msra.mxu0 0.0
        %6136 = vmatprep.subr.mxu0 0.0
        %6137 = vmatpush1.msra.mxu0 0.0
        %6138 = vmatprep.subr.mxu0 0.0
        %6139 = vmatpush1.msra.mxu0 0.0
        %6140 = vmatprep.subr.mxu0 0.0
        %6141 = vmatpush1.msra.mxu0 0.0
        %6142 = vmatprep.subr.mxu0 0.0
        %6143 = vmatpush1.msra.mxu0 0.0
        %6144 = vmatprep.subr.mxu0 0.0
        %6145 = vmatpush1.msra.mxu0 0.0
        %6146 = vmatprep.subr.mxu0 0.0
        %6147 = vmatpush1.msra.mxu0 0.0
        %6148 = vmatprep.subr.mxu0 0.0
        %6149 = vmatpush1.msra.mxu0 0.0
        %6150 = vmatprep.subr.mxu0 0.0
        %6151 = vmatpush1.msra.mxu0 %v6113
        %6152 = vmatprep.subr.mxu0 0.0
        %6153 = vmatpush1.msra.mxu0 %v6111
        %6154 = vmatprep.subr.mxu0 0.0
        %6155 = vmatpush2.msra.mxu0 0.0
        %6156 = vmatprep.subr.mxu0 0.0
        %6157 = vmatpush2.msra.mxu0 0.0
        %6158 = vmatprep.subr.mxu0 0.0
        %6159 = vmatpush2.msra.mxu0 0.0
        %6160 = vmatprep.subr.mxu0 0.0
        %6161 = vmatpush2.msra.mxu0 0.0
        %6162 = vmatprep.subr.mxu0 0.0
        %6163 = vmatpush2.msra.mxu0 0.0
        %6164 = vmatprep.subr.mxu0 0.0
        %6165 = vmatpush2.msra.mxu0 0.0
        %6166 = vmatprep.subr.mxu0 0.0
        %6167 = vmatpush2.msra.mxu0 0.0
        %6168 = vmatprep.subr.mxu0 0.0
        %6169 = vmatpush2.msra.mxu0 0.0
        %6170 = vmatprep.subr.mxu0 0.0
        %6171 = vmatpush2.msra.mxu0 0.0
        %6172 = vmatprep.subr.mxu0 0.0
        %6173 = vmatpush2.msra.mxu0 0.0
        %6174 = vmatprep.subr.mxu0 0.0
        %6175 = vmatpush2.msra.mxu0 0.0
        %6176 = vmatprep.subr.mxu0 0.0
        %6177 = vmatpush2.msra.mxu0 0.0
        %6178 = vmatprep.subr.mxu0 0.0
        %6179 = vmatpush2.msra.mxu0 0.0
        %6180 = vmatprep.subr.mxu0 0.0
        %6181 = vmatpush2.msra.mxu0 0.0
        %6182 = vmatprep.subr.mxu0 0.0
        %6183 = vmatpush2.msra.mxu0 0.0
        %6184 = vmatprep.subr.mxu0 0.0
        %6185 = vmatpush2.msra.mxu0 0.0
        %6186 = vmatprep.mubr.f32.mxu0 0.0
        %6187 = vmatmul.mubr.f32.gmra.mxu0 %v6117
        %v6188 = vpop.f32.mrf.mxu0
        %v6189 = vadd.f32 0.0, %v6188
        %v6190 = vpop.f32.mrf.mxu0
        %6191 = vmatprep.mubr.f32.mxu0 0.0
        %6192 = vmatmul.mubr.f32.gmra.mxu0 %v6120
        %v6193 = vpop.f32.mrf.mxu0
        %v6194 = vadd.f32 0.0, %v6193
        %v6195 = vpop.f32.mrf.mxu0
        %6196 = vdwg.mxu0
        %6197 = vrot.lane.b32.xlu0 %v5514, 32
        %v6198 = vpop.permute.xlu0 %6197
        %6199 = vrot.lane.b32.xlu0 %v5520, 32
        %v6200 = vpop.permute.xlu0 %6199
        %6201 = vrot.lane.b32.xlu0 %v5516, 32
        %v6202 = vpop.permute.xlu0 %6201
        %6203 = vrot.lane.b32.xlu0 %v5522, 32
        %v6204 = vpop.permute.xlu0 %6203
        %v6205 = vsel %vm1070, %v6198, 0
        %v6207 = vsel %vm1070, %v6200, 0
        %v6209 = vsel %vm1070, %v6202, 0
        %v6211 = vsel %vm1070, %v6204, 0
        %6213 = vmatprep.subr.mxu0 0.0
        %6214 = vmatpush1.xpose.msra.mxu0 0.0
        %6215 = vmatprep.subr.mxu0 0.0
        %6216 = vmatpush1.xpose.msra.mxu0 0.0
        %6217 = vmatprep.subr.mxu0 0.0
        %6218 = vmatpush1.xpose.msra.mxu0 0.0
        %6219 = vmatprep.subr.mxu0 0.0
        %6220 = vmatpush1.xpose.msra.mxu0 0.0
        %6221 = vmatprep.subr.mxu0 0.0
        %6222 = vmatpush1.xpose.msra.mxu0 0.0
        %6223 = vmatprep.subr.mxu0 0.0
        %6224 = vmatpush1.xpose.msra.mxu0 0.0
        %6225 = vmatprep.subr.mxu0 0.0
        %6226 = vmatpush1.xpose.msra.mxu0 0.0
        %6227 = vmatprep.subr.mxu0 0.0
        %6228 = vmatpush1.xpose.msra.mxu0 0.0
        %6229 = vmatprep.subr.mxu0 0.0
        %6230 = vmatpush1.xpose.msra.mxu0 0.0
        %6231 = vmatprep.subr.mxu0 0.0
        %6232 = vmatpush1.xpose.msra.mxu0 0.0
        %6233 = vmatprep.subr.mxu0 0.0
        %6234 = vmatpush1.xpose.msra.mxu0 0.0
        %6235 = vmatprep.subr.mxu0 0.0
        %6236 = vmatpush1.xpose.msra.mxu0 0.0
        %6237 = vmatprep.subr.mxu0 0.0
        %6238 = vmatpush1.xpose.msra.mxu0 0.0
        %6239 = vmatprep.subr.mxu0 0.0
        %6240 = vmatpush1.xpose.msra.mxu0 0.0
        %6241 = vmatprep.subr.mxu0 0.0
        %6242 = vmatpush1.xpose.msra.mxu0 %v6211
        %6243 = vmatprep.subr.mxu0 0.0
        %6244 = vmatpush1.xpose.msra.mxu0 %v6209
        %6245 = vmatprep.subr.mxu0 0.0
        %6246 = vmatpush2.xpose.msra.mxu0 0.0
        %6247 = vmatprep.subr.mxu0 0.0
        %6248 = vmatpush2.xpose.msra.mxu0 0.0
        %6249 = vmatprep.subr.mxu0 0.0
        %6250 = vmatpush2.xpose.msra.mxu0 0.0
        %6251 = vmatprep.subr.mxu0 0.0
        %6252 = vmatpush2.xpose.msra.mxu0 0.0
        %6253 = vmatprep.subr.mxu0 0.0
        %6254 = vmatpush2.xpose.msra.mxu0 0.0
        %6255 = vmatprep.subr.mxu0 0.0
        %6256 = vmatpush2.xpose.msra.mxu0 0.0
        %6257 = vmatprep.subr.mxu0 0.0
        %6258 = vmatpush2.xpose.msra.mxu0 0.0
        %6259 = vmatprep.subr.mxu0 0.0
        %6260 = vmatpush2.xpose.msra.mxu0 0.0
        %6261 = vmatprep.subr.mxu0 0.0
        %6262 = vmatpush2.xpose.msra.mxu0 0.0
        %6263 = vmatprep.subr.mxu0 0.0
        %6264 = vmatpush2.xpose.msra.mxu0 0.0
        %6265 = vmatprep.subr.mxu0 0.0
        %6266 = vmatpush2.xpose.msra.mxu0 0.0
        %6267 = vmatprep.subr.mxu0 0.0
        %6268 = vmatpush2.xpose.msra.mxu0 0.0
        %6269 = vmatprep.subr.mxu0 0.0
        %6270 = vmatpush2.xpose.msra.mxu0 0.0
        %6271 = vmatprep.subr.mxu0 0.0
        %6272 = vmatpush2.xpose.msra.mxu0 0.0
        %6273 = vmatprep.subr.mxu0 0.0
        %6274 = vmatpush2.xpose.msra.mxu0 0.0
        %6275 = vmatprep.subr.mxu0 0.0
        %6276 = vmatpush2.xpose.msra.mxu0 0.0
        %6277 = vmatprep.mubr.f32.mxu0 0.0
        %6278 = vmatmul.mubr.f32.gmra.mxu0 %v6205
        %v6279 = vpop.f32.mrf.mxu0
        %v6280 = vadd.f32 0.0, %v6279
        %v6281 = vpop.f32.mrf.mxu0
        %6282 = vmatprep.mubr.f32.mxu0 0.0
        %6283 = vmatmul.mubr.f32.gmra.mxu0 %v6207
        %v6284 = vpop.f32.mrf.mxu0
        %v6285 = vadd.f32 0.0, %v6284
        %v6286 = vpop.f32.mrf.mxu0
        %6287 = vdwg.mxu0
        %v6288 = vmul.f32 %v6280, 0.17677669
        %v6289 = vmul.f32 %v6285, 0.17677669
        %v6290 = vsel %vm1160, %v6288, -inf
        %6291 = vmax.xlane.f32.xlu0 %v6290
        %v6292 = vpop.xlane.xlu0 %6291
        %v6293 = vsel %vm1160, %v6289, -inf
        %6294 = vmax.xlane.f32.xlu0 %v6293
        %v6295 = vpop.xlane.xlu0 %6294
        %v6296 = vsub.f32 %v6288, %v6292
        %v6297 = vsub.f32 %v6289, %v6295
        %v6298 = vmul.f32 %v6296, 1.442695
        %v6299 = vpow.pop %v6298
        %v6300 = vmul.f32 %v6297, 1.442695
        %v6301 = vpow.pop %v6300
        %v6302 = vsel %vm1160, %v6299, 0.0
        %6303 = vadd.xlane.f32.xlu0 %v6302
        %v6304 = vpop.xlane.xlu0 %6303
        %v6305 = vsel %vm1160, %v6301, 0.0
        %6306 = vadd.xlane.f32.xlu0 %v6305
        %v6307 = vpop.xlane.xlu0 %6306
        %v6308 = vrcp.pop %v6304
        %v6309 = vrcp.pop %v6307
        %v6310 = vmul.f32 %v6299, %v6308
        %v6311 = vmul.f32 %v6301, %v6309
        %6312 = vrot.lane.b32.xlu0 %v5591, 32
        %v6313 = vpop.permute.xlu0 %6312
        %6314 = vrot.lane.b32.xlu0 %v5596, 32
        %v6315 = vpop.permute.xlu0 %6314
        %v6319 = vsel %vm1160, %v6310, 0
        %v6322 = vsel %vm1160, %v6311, 0
        %6324 = vmatprep.subr.mxu0 0.0
        %6325 = vmatpush1.msra.mxu0 0.0
        %6326 = vmatprep.subr.mxu0 0.0
        %6327 = vmatpush1.msra.mxu0 0.0
        %6328 = vmatprep.subr.mxu0 0.0
        %6329 = vmatpush1.msra.mxu0 0.0
        %6330 = vmatprep.subr.mxu0 0.0
        %6331 = vmatpush1.msra.mxu0 0.0
        %6332 = vmatprep.subr.mxu0 0.0
        %6333 = vmatpush1.msra.mxu0 0.0
        %6334 = vmatprep.subr.mxu0 0.0
        %6335 = vmatpush1.msra.mxu0 0.0
        %6336 = vmatprep.subr.mxu0 0.0
        %6337 = vmatpush1.msra.mxu0 0.0
        %6338 = vmatprep.subr.mxu0 0.0
        %6339 = vmatpush1.msra.mxu0 0.0
        %6340 = vmatprep.subr.mxu0 0.0
        %6341 = vmatpush1.msra.mxu0 0.0
        %6342 = vmatprep.subr.mxu0 0.0
        %6343 = vmatpush1.msra.mxu0 0.0
        %6344 = vmatprep.subr.mxu0 0.0
        %6345 = vmatpush1.msra.mxu0 0.0
        %6346 = vmatprep.subr.mxu0 0.0
        %6347 = vmatpush1.msra.mxu0 0.0
        %6348 = vmatprep.subr.mxu0 0.0
        %6349 = vmatpush1.msra.mxu0 0.0
        %6350 = vmatprep.subr.mxu0 0.0
        %6351 = vmatpush1.msra.mxu0 0.0
        %6352 = vmatprep.subr.mxu0 0.0
        %6353 = vmatpush1.msra.mxu0 %v6315
        %6354 = vmatprep.subr.mxu0 0.0
        %6355 = vmatpush1.msra.mxu0 %v6313
        %6356 = vmatprep.subr.mxu0 0.0
        %6357 = vmatpush2.msra.mxu0 0.0
        %6358 = vmatprep.subr.mxu0 0.0
        %6359 = vmatpush2.msra.mxu0 0.0
        %6360 = vmatprep.subr.mxu0 0.0
        %6361 = vmatpush2.msra.mxu0 0.0
        %6362 = vmatprep.subr.mxu0 0.0
        %6363 = vmatpush2.msra.mxu0 0.0
        %6364 = vmatprep.subr.mxu0 0.0
        %6365 = vmatpush2.msra.mxu0 0.0
        %6366 = vmatprep.subr.mxu0 0.0
        %6367 = vmatpush2.msra.mxu0 0.0
        %6368 = vmatprep.subr.mxu0 0.0
        %6369 = vmatpush2.msra.mxu0 0.0
        %6370 = vmatprep.subr.mxu0 0.0
        %6371 = vmatpush2.msra.mxu0 0.0
        %6372 = vmatprep.subr.mxu0 0.0
        %6373 = vmatpush2.msra.mxu0 0.0
        %6374 = vmatprep.subr.mxu0 0.0
        %6375 = vmatpush2.msra.mxu0 0.0
        %6376 = vmatprep.subr.mxu0 0.0
        %6377 = vmatpush2.msra.mxu0 0.0
        %6378 = vmatprep.subr.mxu0 0.0
        %6379 = vmatpush2.msra.mxu0 0.0
        %6380 = vmatprep.subr.mxu0 0.0
        %6381 = vmatpush2.msra.mxu0 0.0
        %6382 = vmatprep.subr.mxu0 0.0
        %6383 = vmatpush2.msra.mxu0 0.0
        %6384 = vmatprep.subr.mxu0 0.0
        %6385 = vmatpush2.msra.mxu0 0.0
        %6386 = vmatprep.subr.mxu0 0.0
        %6387 = vmatpush2.msra.mxu0 0.0
        %6388 = vmatprep.mubr.f32.mxu0 0.0
        %6389 = vmatmul.mubr.f32.gmra.mxu0 %v6319
        %v6390 = vpop.f32.mrf.mxu0
        %v6391 = vadd.f32 0.0, %v6390
        %v6392 = vpop.f32.mrf.mxu0
        %6393 = vmatprep.mubr.f32.mxu0 0.0
        %6394 = vmatmul.mubr.f32.gmra.mxu0 %v6322
        %v6395 = vpop.f32.mrf.mxu0
        %v6396 = vadd.f32 0.0, %v6395
        %v6397 = vpop.f32.mrf.mxu0
        %6398 = vdwg.mxu0
        %6401 = vrot.lane.b32.xlu0 %v5987, 32
        %v6402 = vpop.permute.xlu0 %6401
        %6403 = vrot.lane.b32.xlu0 %v5992, 32
        %v6404 = vpop.permute.xlu0 %6403
        %6409 = vrot.lane.b32.xlu0 %v6189, 64
        %v6410 = vpop.permute.xlu0 %6409
        %6411 = vrot.lane.b32.xlu0 %v6194, 64
        %v6412 = vpop.permute.xlu0 %6411
        %6417 = vrot.lane.b32.xlu0 %v6391, 96
        %v6418 = vpop.permute.xlu0 %6417
        %6419 = vrot.lane.b32.xlu0 %v6396, 96
        %v6420 = vpop.permute.xlu0 %6419
        %v6423 = vsel %vm1070, %v5783, %v6402
        %v6424 = vsel %vm1070, %v5788, %v6404
        %v6425 = vsel %vm728, %v6423, %v6410
        %v6426 = vsel %vm728, %v6424, %v6412
        %v6427 = vsel %vm1900, %v6425, %v6418
        %v6428 = vsel %vm1900, %v6426, %v6420
        %s6429 = scalar_lea.vmem [#allocation4], 384
        %v6430 = vld [vmem:[%s6429] sm:$0xff]
        %v6431 = vld [vmem:[%s6429 + $0x8] sm:$0xff]
        %v6432 = vld [vmem:[%s6429 + $0x10] sm:$0xff]
        %v6433 = vld [vmem:[%s6429 + $0x18] sm:$0xff]
        %v6434 = vld [vmem:[%s6429 + $0x20] sm:$0xff]
        %v6435 = vld [vmem:[%s6429 + $0x28] sm:$0xff]
        %v6436 = vld [vmem:[%s6429 + $0x30] sm:$0xff]
        %v6437 = vld [vmem:[%s6429 + $0x38] sm:$0xff]
        %v6438 = vld [vmem:[%s6429 + $0x40] sm:$0xff]
        %v6439 = vld [vmem:[%s6429 + $0x48] sm:$0xff]
        %v6440 = vld [vmem:[%s6429 + $0x50] sm:$0xff]
        %v6441 = vld [vmem:[%s6429 + $0x58] sm:$0xff]
        %v6442 = vld [vmem:[%s6429 + $0x60] sm:$0xff]
        %v6443 = vld [vmem:[%s6429 + $0x68] sm:$0xff]
        %v6444 = vld [vmem:[%s6429 + $0x70] sm:$0xff]
        %v6445 = vld [vmem:[%s6429 + $0x78] sm:$0xff]
        %s6446 = scalar_lea.vmem %s9, 3
        %v6447 = vld [vmem:[%s6446] sm:$0x1]
        %v6449 = vlaneseq
        %v6450 = vshrl.u32 %v6449, 7
        %v6451 = vsub.s32 0, %v6450
        %v6452 = vrot.slane %v6447, %v6451
        %6454 = vmatprep.subr.mxu0 0.0
        %6455 = vmatpush1.msra.mxu0 %v6445
        %6456 = vmatprep.subr.mxu0 0.0
        %6457 = vmatpush1.msra.mxu0 %v6444
        %6458 = vmatprep.subr.mxu0 0.0
        %6459 = vmatpush1.msra.mxu0 %v6443
        %6460 = vmatprep.subr.mxu0 0.0
        %6461 = vmatpush1.msra.mxu0 %v6442
        %6462 = vmatprep.subr.mxu0 0.0
        %6463 = vmatpush1.msra.mxu0 %v6441
        %6464 = vmatprep.subr.mxu0 0.0
        %6465 = vmatpush1.msra.mxu0 %v6440
        %6466 = vmatprep.subr.mxu0 0.0
        %6467 = vmatpush1.msra.mxu0 %v6439
        %6468 = vmatprep.subr.mxu0 0.0
        %6469 = vmatpush1.msra.mxu0 %v6438
        %6470 = vmatprep.subr.mxu0 0.0
        %6471 = vmatpush1.msra.mxu0 %v6437
        %6472 = vmatprep.subr.mxu0 0.0
        %6473 = vmatpush1.msra.mxu0 %v6436
        %6474 = vmatprep.subr.mxu0 0.0
        %6475 = vmatpush1.msra.mxu0 %v6435
        %6476 = vmatprep.subr.mxu0 0.0
        %6477 = vmatpush1.msra.mxu0 %v6434
        %6478 = vmatprep.subr.mxu0 0.0
        %6479 = vmatpush1.msra.mxu0 %v6433
        %6480 = vmatprep.subr.mxu0 0.0
        %6481 = vmatpush1.msra.mxu0 %v6432
        %6482 = vmatprep.subr.mxu0 0.0
        %6483 = vmatpush1.msra.mxu0 %v6431
        %6484 = vmatprep.subr.mxu0 0.0
        %6485 = vmatpush1.msra.mxu0 %v6430
        %6486 = vmatprep.subr.mxu0 0.0
        %6487 = vmatpush2.msra.mxu0 0.0
        %6488 = vmatprep.subr.mxu0 0.0
        %6489 = vmatpush2.msra.mxu0 0.0
        %6490 = vmatprep.subr.mxu0 0.0
        %6491 = vmatpush2.msra.mxu0 0.0
        %6492 = vmatprep.subr.mxu0 0.0
        %6493 = vmatpush2.msra.mxu0 0.0
        %6494 = vmatprep.subr.mxu0 0.0
        %6495 = vmatpush2.msra.mxu0 0.0
        %6496 = vmatprep.subr.mxu0 0.0
        %6497 = vmatpush2.msra.mxu0 0.0
        %6498 = vmatprep.subr.mxu0 0.0
        %6499 = vmatpush2.msra.mxu0 0.0
        %6500 = vmatprep.subr.mxu0 0.0
        %6501 = vmatpush2.msra.mxu0 0.0
        %6502 = vmatprep.subr.mxu0 0.0
        %6503 = vmatpush2.msra.mxu0 0.0
        %6504 = vmatprep.subr.mxu0 0.0
        %6505 = vmatpush2.msra.mxu0 0.0
        %6506 = vmatprep.subr.mxu0 0.0
        %6507 = vmatpush2.msra.mxu0 0.0
        %6508 = vmatprep.subr.mxu0 0.0
        %6509 = vmatpush2.msra.mxu0 0.0
        %6510 = vmatprep.subr.mxu0 0.0
        %6511 = vmatpush2.msra.mxu0 0.0
        %6512 = vmatprep.subr.mxu0 0.0
        %6513 = vmatpush2.msra.mxu0 0.0
        %6514 = vmatprep.subr.mxu0 0.0
        %6515 = vmatpush2.msra.mxu0 0.0
        %6516 = vmatprep.subr.mxu0 0.0
        %6517 = vmatpush2.msra.mxu0 0.0
        %6518 = vmatprep.mubr.f32.mxu0 0.0
        %6519 = vmatmul.mubr.f32.gmra.mxu0 %v6427
        %v6520 = vpop.f32.mrf.mxu0
        %v6521 = vadd.f32 %v6452, %v6520
        %v6522 = vpop.f32.mrf.mxu0
        %6523 = vmatprep.mubr.f32.mxu0 0.0
        %6524 = vmatmul.mubr.f32.gmra.mxu0 %v6428
        %v6525 = vpop.f32.mrf.mxu0
        %v6526 = vadd.f32 %v6452, %v6525
        %v6527 = vpop.f32.mrf.mxu0
        %6528 = vdwg.mxu0
        %v6529 = vadd.f32 %v5378, %v6521
        %v6530 = vadd.f32 %v5379, %v6526
        %s6531 = scalar_lea.vmem %s10, 3
        %v6532 = vld [vmem:[%s6531] sm:$0x1]
        %s6533 = scalar_lea.vmem %s11, 3
        %v6534 = vld [vmem:[%s6533] sm:$0x1]
        %6535 = vadd.xlane.f32.xlu0 %v6529
        %v6536 = vpop.xlane.xlu0 %6535
        %6537 = vadd.xlane.f32.xlu0 %v6530
        %v6538 = vpop.xlane.xlu0 %6537
        %v6539 = vmul.f32 %v6536, %v814
        %v6540 = vmul.f32 %v6538, %v814
        %v6541 = vsub.f32 %v6529, %v6539
        %v6542 = vsub.f32 %v6530, %v6540
        %v6543 = vmul.f32 %v6541, %v6541
        %v6544 = vmul.f32 %v6542, %v6542
        %6545 = vadd.xlane.f32.xlu0 %v6543
        %v6546 = vpop.xlane.xlu0 %6545
        %6547 = vadd.xlane.f32.xlu0 %v6544
        %v6548 = vpop.xlane.xlu0 %6547
        %v6549 = vmul.f32 %v6546, %v814
        %v6550 = vmul.f32 %v6548, %v814
        %v6551 = vadd.f32 %v6549, 1e-05
        %v6552 = vadd.f32 %v6550, 1e-05
        %v6553 = vrsqrt.pop %v6551
        %v6554 = vrsqrt.pop %v6552
        %v6555 = vmul.f32 %v6541, %v6553
        %v6556 = vmul.f32 %v6542, %v6554
        %v6558 = vlaneseq
        %v6559 = vshrl.u32 %v6558, 7
        %v6560 = vsub.s32 0, %v6559
        %v6561 = vrot.slane %v6532, %v6560
        %v6563 = vmul.f32 %v6555, %v6561
        %v6564 = vmul.f32 %v6556, %v6561
        %v6566 = vlaneseq
        %v6567 = vshrl.u32 %v6566, 7
        %v6568 = vsub.s32 0, %v6567
        %v6569 = vrot.slane %v6534, %v6568
        %v6571 = vadd.f32 %v6563, %v6569
        %v6572 = vadd.f32 %v6564, %v6569
        %s6573 = scalar_lea.vmem [#allocation6], 768
        %v6574 = vld [vmem:[%s6573] sm:$0xff]
        %v6575 = vld [vmem:[%s6573 + $0x8] sm:$0xff]
        %v6576 = vld [vmem:[%s6573 + $0x10] sm:$0xff]
        %v6577 = vld [vmem:[%s6573 + $0x18] sm:$0xff]
        %v6578 = vld [vmem:[%s6573 + $0x20] sm:$0xff]
        %v6579 = vld [vmem:[%s6573 + $0x28] sm:$0xff]
        %v6580 = vld [vmem:[%s6573 + $0x30] sm:$0xff]
        %v6581 = vld [vmem:[%s6573 + $0x38] sm:$0xff]
        %v6582 = vld [vmem:[%s6573 + $0x40] sm:$0xff]
        %v6583 = vld [vmem:[%s6573 + $0x48] sm:$0xff]
        %v6584 = vld [vmem:[%s6573 + $0x50] sm:$0xff]
        %v6585 = vld [vmem:[%s6573 + $0x58] sm:$0xff]
        %v6586 = vld [vmem:[%s6573 + $0x60] sm:$0xff]
        %v6587 = vld [vmem:[%s6573 + $0x68] sm:$0xff]
        %v6588 = vld [vmem:[%s6573 + $0x70] sm:$0xff]
        %v6589 = vld [vmem:[%s6573 + $0x78] sm:$0xff]
        %v6590 = vld [vmem:[%s6573 + $0x80] sm:$0xff]
        %v6591 = vld [vmem:[%s6573 + $0x88] sm:$0xff]
        %v6592 = vld [vmem:[%s6573 + $0x90] sm:$0xff]
        %v6593 = vld [vmem:[%s6573 + $0x98] sm:$0xff]
        %v6594 = vld [vmem:[%s6573 + $0xa0] sm:$0xff]
        %v6595 = vld [vmem:[%s6573 + $0xa8] sm:$0xff]
        %v6596 = vld [vmem:[%s6573 + $0xb0] sm:$0xff]
        %v6597 = vld [vmem:[%s6573 + $0xb8] sm:$0xff]
        %v6598 = vld [vmem:[%s6573 + $0xc0] sm:$0xff]
        %v6599 = vld [vmem:[%s6573 + $0xc8] sm:$0xff]
        %v6600 = vld [vmem:[%s6573 + $0xd0] sm:$0xff]
        %v6601 = vld [vmem:[%s6573 + $0xd8] sm:$0xff]
        %v6602 = vld [vmem:[%s6573 + $0xe0] sm:$0xff]
        %v6603 = vld [vmem:[%s6573 + $0xe8] sm:$0xff]
        %v6604 = vld [vmem:[%s6573 + $0xf0] sm:$0xff]
        %v6605 = vld [vmem:[%s6573 + $0xf8] sm:$0xff]
        %s6606 = scalar_lea.vmem %s13, 6
        %v6607 = vld [vmem:[%s6606] sm:$0x3]
        %v6609 = vlaneseq
        %v6610 = vshrl.u32 %v6609, 7
        %v6611 = vsub.s32 0, %v6610
        %v6612 = vrot.slane %v6607, %v6611
        %v6613 = vlaneseq
        %v6614 = vshrl.u32 %v6613, 7
        %v6615 = vsub.s32 1, %v6614
        %v6616 = vrot.slane %v6607, %v6615
        %6619 = vmatprep.subr.mxu0 %v6605
        %6620 = vmatpush1.msra.mxu0 %v6604
        %6621 = vmatprep.subr.mxu0 %v6603
        %6622 = vmatpush1.msra.mxu0 %v6602
        %6623 = vmatprep.subr.mxu0 %v6601
        %6624 = vmatpush1.msra.mxu0 %v6600
        %6625 = vmatprep.subr.mxu0 %v6599
        %6626 = vmatpush1.msra.mxu0 %v6598
        %6627 = vmatprep.subr.mxu0 %v6597
        %6628 = vmatpush1.msra.mxu0 %v6596
        %6629 = vmatprep.subr.mxu0 %v6595
        %6630 = vmatpush1.msra.mxu0 %v6594
        %6631 = vmatprep.subr.mxu0 %v6593
        %6632 = vmatpush1.msra.mxu0 %v6592
        %6633 = vmatprep.subr.mxu0 %v6591
        %6634 = vmatpush1.msra.mxu0 %v6590
        %6635 = vmatprep.subr.mxu0 %v6589
        %6636 = vmatpush1.msra.mxu0 %v6588
        %6637 = vmatprep.subr.mxu0 %v6587
        %6638 = vmatpush1.msra.mxu0 %v6586
        %6639 = vmatprep.subr.mxu0 %v6585
        %6640 = vmatpush1.msra.mxu0 %v6584
        %6641 = vmatprep.subr.mxu0 %v6583
        %6642 = vmatpush1.msra.mxu0 %v6582
        %6643 = vmatprep.subr.mxu0 %v6581
        %6644 = vmatpush1.msra.mxu0 %v6580
        %6645 = vmatprep.subr.mxu0 %v6579
        %6646 = vmatpush1.msra.mxu0 %v6578
        %6647 = vmatprep.subr.mxu0 %v6577
        %6648 = vmatpush1.msra.mxu0 %v6576
        %6649 = vmatprep.subr.mxu0 %v6575
        %6650 = vmatpush1.msra.mxu0 %v6574
        %6651 = vmatprep.subr.mxu0 0.0
        %6652 = vmatpush2.msra.mxu0 0.0
        %6653 = vmatprep.subr.mxu0 0.0
        %6654 = vmatpush2.msra.mxu0 0.0
        %6655 = vmatprep.subr.mxu0 0.0
        %6656 = vmatpush2.msra.mxu0 0.0
        %6657 = vmatprep.subr.mxu0 0.0
        %6658 = vmatpush2.msra.mxu0 0.0
        %6659 = vmatprep.subr.mxu0 0.0
        %6660 = vmatpush2.msra.mxu0 0.0
        %6661 = vmatprep.subr.mxu0 0.0
        %6662 = vmatpush2.msra.mxu0 0.0
        %6663 = vmatprep.subr.mxu0 0.0
        %6664 = vmatpush2.msra.mxu0 0.0
        %6665 = vmatprep.subr.mxu0 0.0
        %6666 = vmatpush2.msra.mxu0 0.0
        %6667 = vmatprep.subr.mxu0 0.0
        %6668 = vmatpush2.msra.mxu0 0.0
        %6669 = vmatprep.subr.mxu0 0.0
        %6670 = vmatpush2.msra.mxu0 0.0
        %6671 = vmatprep.subr.mxu0 0.0
        %6672 = vmatpush2.msra.mxu0 0.0
        %6673 = vmatprep.subr.mxu0 0.0
        %6674 = vmatpush2.msra.mxu0 0.0
        %6675 = vmatprep.subr.mxu0 0.0
        %6676 = vmatpush2.msra.mxu0 0.0
        %6677 = vmatprep.subr.mxu0 0.0
        %6678 = vmatpush2.msra.mxu0 0.0
        %6679 = vmatprep.subr.mxu0 0.0
        %6680 = vmatpush2.msra.mxu0 0.0
        %6681 = vmatprep.subr.mxu0 0.0
        %6682 = vmatpush2.msra.mxu0 0.0
        %6683 = vmatprep.mubr.f32.mxu0 0.0
        %6684 = vmatmul.mubr.f32.gmra.mxu0 %v6571
        %v6685 = vpop.f32.mrf.mxu0
        %v6686 = vadd.f32 %v6612, %v6685
        %v6687 = vpop.f32.mrf.mxu0
        %v6688 = vadd.f32 %v6616, %v6687
        %6689 = vmatprep.mubr.f32.mxu0 0.0
        %6690 = vmatmul.mubr.f32.gmra.mxu0 %v6572
        %v6691 = vpop.f32.mrf.mxu0
        %v6692 = vadd.f32 %v6612, %v6691
        %v6693 = vpop.f32.mrf.mxu0
        %v6694 = vadd.f32 %v6616, %v6693
        %6695 = vdwg.mxu0
        %v6696 = vmul.f32 %v6686, 0.5
        %v6697 = vmul.f32 %v6688, 0.5
        %v6698 = vmul.f32 %v6692, 0.5
        %v6699 = vmul.f32 %v6694, 0.5
        %v6700 = vmul.f32 %v6686, 0.044715
        %v6701 = vmul.f32 %v6688, 0.044715
        %v6702 = vmul.f32 %v6692, 0.044715
        %v6703 = vmul.f32 %v6694, 0.044715
        %v6704 = vmul.f32 %v6700, %v6686
        %v6705 = vmul.f32 %v6701, %v6688
        %v6706 = vmul.f32 %v6702, %v6692
        %v6707 = vmul.f32 %v6703, %v6694
        %v6708 = vmul.f32 %v6704, %v6686
        %v6709 = vmul.f32 %v6705, %v6688
        %v6710 = vmul.f32 %v6706, %v6692
        %v6711 = vmul.f32 %v6707, %v6694
        %v6712 = vadd.f32 %v6686, %v6708
        %v6713 = vadd.f32 %v6688, %v6709
        %v6714 = vadd.f32 %v6692, %v6710
        %v6715 = vadd.f32 %v6694, %v6711
        %v6716 = vmul.f32 %v6712, 0.7978846
        %v6717 = vmul.f32 %v6713, 0.7978846
        %v6718 = vmul.f32 %v6714, 0.7978846
        %v6719 = vmul.f32 %v6715, 0.7978846
        %v6720 = vtanh.pop %v6716
        %v6721 = vtanh.pop %v6717
        %v6722 = vtanh.pop %v6718
        %v6723 = vtanh.pop %v6719
        %v6724 = vadd.f32 %v6720, 1.0
        %v6725 = vadd.f32 %v6721, 1.0
        %v6726 = vadd.f32 %v6722, 1.0
        %v6727 = vadd.f32 %v6723, 1.0
        %v6728 = vmul.f32 %v6696, %v6724
        %v6729 = vmul.f32 %v6697, %v6725
        %v6730 = vmul.f32 %v6698, %v6726
        %v6731 = vmul.f32 %v6699, %v6727
        %s6732 = scalar_lea.vmem [#allocation7], 768
        %v6733 = vld [vmem:[%s6732] sm:$0xff]
        %v6734 = vld [vmem:[%s6732 + $0x8] sm:$0xff]
        %v6735 = vld [vmem:[%s6732 + $0x10] sm:$0xff]
        %v6736 = vld [vmem:[%s6732 + $0x18] sm:$0xff]
        %v6737 = vld [vmem:[%s6732 + $0x20] sm:$0xff]
        %v6738 = vld [vmem:[%s6732 + $0x28] sm:$0xff]
        %v6739 = vld [vmem:[%s6732 + $0x30] sm:$0xff]
        %v6740 = vld [vmem:[%s6732 + $0x38] sm:$0xff]
        %v6741 = vld [vmem:[%s6732 + $0x40] sm:$0xff]
        %v6742 = vld [vmem:[%s6732 + $0x48] sm:$0xff]
        %v6743 = vld [vmem:[%s6732 + $0x50] sm:$0xff]
        %v6744 = vld [vmem:[%s6732 + $0x58] sm:$0xff]
        %v6745 = vld [vmem:[%s6732 + $0x60] sm:$0xff]
        %v6746 = vld [vmem:[%s6732 + $0x68] sm:$0xff]
        %v6747 = vld [vmem:[%s6732 + $0x70] sm:$0xff]
        %v6748 = vld [vmem:[%s6732 + $0x78] sm:$0xff]
        %v6749 = vld [vmem:[%s6732 + $0x80] sm:$0xff]
        %v6750 = vld [vmem:[%s6732 + $0x88] sm:$0xff]
        %v6751 = vld [vmem:[%s6732 + $0x90] sm:$0xff]
        %v6752 = vld [vmem:[%s6732 + $0x98] sm:$0xff]
        %v6753 = vld [vmem:[%s6732 + $0xa0] sm:$0xff]
        %v6754 = vld [vmem:[%s6732 + $0xa8] sm:$0xff]
        %v6755 = vld [vmem:[%s6732 + $0xb0] sm:$0xff]
        %v6756 = vld [vmem:[%s6732 + $0xb8] sm:$0xff]
        %v6757 = vld [vmem:[%s6732 + $0xc0] sm:$0xff]
        %v6758 = vld [vmem:[%s6732 + $0xc8] sm:$0xff]
        %v6759 = vld [vmem:[%s6732 + $0xd0] sm:$0xff]
        %v6760 = vld [vmem:[%s6732 + $0xd8] sm:$0xff]
        %v6761 = vld [vmem:[%s6732 + $0xe0] sm:$0xff]
        %v6762 = vld [vmem:[%s6732 + $0xe8] sm:$0xff]
        %v6763 = vld [vmem:[%s6732 + $0xf0] sm:$0xff]
        %v6764 = vld [vmem:[%s6732 + $0xf8] sm:$0xff]
        %s6765 = scalar_lea.vmem %s15, 3
        %v6766 = vld [vmem:[%s6765] sm:$0x1]
        %v6768 = vlaneseq
        %v6769 = vshrl.u32 %v6768, 7
        %v6770 = vsub.s32 0, %v6769
        %v6771 = vrot.slane %v6766, %v6770
        %6773 = vmatprep.subr.mxu0 0.0
        %6774 = vmatpush1.msra.mxu0 %v6748
        %6775 = vmatprep.subr.mxu0 0.0
        %6776 = vmatpush1.msra.mxu0 %v6747
        %6777 = vmatprep.subr.mxu0 0.0
        %6778 = vmatpush1.msra.mxu0 %v6746
        %6779 = vmatprep.subr.mxu0 0.0
        %6780 = vmatpush1.msra.mxu0 %v6745
        %6781 = vmatprep.subr.mxu0 0.0
        %6782 = vmatpush1.msra.mxu0 %v6744
        %6783 = vmatprep.subr.mxu0 0.0
        %6784 = vmatpush1.msra.mxu0 %v6743
        %6785 = vmatprep.subr.mxu0 0.0
        %6786 = vmatpush1.msra.mxu0 %v6742
        %6787 = vmatprep.subr.mxu0 0.0
        %6788 = vmatpush1.msra.mxu0 %v6741
        %6789 = vmatprep.subr.mxu0 0.0
        %6790 = vmatpush1.msra.mxu0 %v6740
        %6791 = vmatprep.subr.mxu0 0.0
        %6792 = vmatpush1.msra.mxu0 %v6739
        %6793 = vmatprep.subr.mxu0 0.0
        %6794 = vmatpush1.msra.mxu0 %v6738
        %6795 = vmatprep.subr.mxu0 0.0
        %6796 = vmatpush1.msra.mxu0 %v6737
        %6797 = vmatprep.subr.mxu0 0.0
        %6798 = vmatpush1.msra.mxu0 %v6736
        %6799 = vmatprep.subr.mxu0 0.0
        %6800 = vmatpush1.msra.mxu0 %v6735
        %6801 = vmatprep.subr.mxu0 0.0
        %6802 = vmatpush1.msra.mxu0 %v6734
        %6803 = vmatprep.subr.mxu0 0.0
        %6804 = vmatpush1.msra.mxu0 %v6733
        %6805 = vmatprep.subr.mxu0 0.0
        %6806 = vmatpush2.msra.mxu0 %v6764
        %6807 = vmatprep.subr.mxu0 0.0
        %6808 = vmatpush2.msra.mxu0 %v6763
        %6809 = vmatprep.subr.mxu0 0.0
        %6810 = vmatpush2.msra.mxu0 %v6762
        %6811 = vmatprep.subr.mxu0 0.0
        %6812 = vmatpush2.msra.mxu0 %v6761
        %6813 = vmatprep.subr.mxu0 0.0
        %6814 = vmatpush2.msra.mxu0 %v6760
        %6815 = vmatprep.subr.mxu0 0.0
        %6816 = vmatpush2.msra.mxu0 %v6759
        %6817 = vmatprep.subr.mxu0 0.0
        %6818 = vmatpush2.msra.mxu0 %v6758
        %6819 = vmatprep.subr.mxu0 0.0
        %6820 = vmatpush2.msra.mxu0 %v6757
        %6821 = vmatprep.subr.mxu0 0.0
        %6822 = vmatpush2.msra.mxu0 %v6756
        %6823 = vmatprep.subr.mxu0 0.0
        %6824 = vmatpush2.msra.mxu0 %v6755
        %6825 = vmatprep.subr.mxu0 0.0
        %6826 = vmatpush2.msra.mxu0 %v6754
        %6827 = vmatprep.subr.mxu0 0.0
        %6828 = vmatpush2.msra.mxu0 %v6753
        %6829 = vmatprep.subr.mxu0 0.0
        %6830 = vmatpush2.msra.mxu0 %v6752
        %6831 = vmatprep.subr.mxu0 0.0
        %6832 = vmatpush2.msra.mxu0 %v6751
        %6833 = vmatprep.subr.mxu0 0.0
        %6834 = vmatpush2.msra.mxu0 %v6750
        %6835 = vmatprep.subr.mxu0 0.0
        %6836 = vmatpush2.msra.mxu0 %v6749
        %6837 = vmatprep.mubr.f32.mxu0 %v6729
        %6838 = vmatmul.mubr.f32.gmra.mxu0 %v6728
        %v6839 = vpop.f32.mrf.mxu0
        %v6840 = vadd.f32 %v6771, %v6839
        %v6841 = vpop.f32.mrf.mxu0
        %6842 = vmatprep.mubr.f32.mxu0 %v6731
        %6843 = vmatmul.mubr.f32.gmra.mxu0 %v6730
        %v6844 = vpop.f32.mrf.mxu0
        %v6845 = vadd.f32 %v6771, %v6844
        %v6846 = vpop.f32.mrf.mxu0
        %6847 = vdwg.mxu0
        %v6848 = vadd.f32 %v6571, %v6840
        %v6849 = vadd.f32 %v6572, %v6845
        %s6850 = scalar_lea.vmem %s16, 3
        %v6851 = vld [vmem:[%s6850] sm:$0x1]
        %s6852 = scalar_lea.vmem %s17, 3
        %v6853 = vld [vmem:[%s6852] sm:$0x1]
        %6854 = vadd.xlane.f32.xlu0 %v6848
        %v6855 = vpop.xlane.xlu0 %6854
        %6856 = vadd.xlane.f32.xlu0 %v6849
        %v6857 = vpop.xlane.xlu0 %6856
        %v6858 = vmul.f32 %v6855, %v814
        %v6859 = vmul.f32 %v6857, %v814
        %v6860 = vsub.f32 %v6848, %v6858
        %v6861 = vsub.f32 %v6849, %v6859
        %v6862 = vmul.f32 %v6860, %v6860
        %v6863 = vmul.f32 %v6861, %v6861
        %6864 = vadd.xlane.f32.xlu0 %v6862
        %v6865 = vpop.xlane.xlu0 %6864
        %6866 = vadd.xlane.f32.xlu0 %v6863
        %v6867 = vpop.xlane.xlu0 %6866
        %v6868 = vmul.f32 %v6865, %v814
        %v6869 = vmul.f32 %v6867, %v814
        %v6870 = vadd.f32 %v6868, 1e-05
        %v6871 = vadd.f32 %v6869, 1e-05
        %v6872 = vrsqrt.pop %v6870
        %v6873 = vrsqrt.pop %v6871
        %v6874 = vmul.f32 %v6860, %v6872
        %v6875 = vmul.f32 %v6861, %v6873
        %v6877 = vlaneseq
        %v6878 = vshrl.u32 %v6877, 7
        %v6879 = vsub.s32 0, %v6878
        %v6880 = vrot.slane %v6851, %v6879
        %v6882 = vmul.f32 %v6874, %v6880
        %v6883 = vmul.f32 %v6875, %v6880
        %v6885 = vlaneseq
        %v6886 = vshrl.u32 %v6885, 7
        %v6887 = vsub.s32 0, %v6886
        %v6888 = vrot.slane %v6853, %v6887
        %v6890 = vadd.f32 %v6882, %v6888
        %v6891 = vadd.f32 %v6883, %v6888
        %v6892 = vld [vmem:[%s18] sm:$0xff]
        %v6893 = vld [vmem:[%s18 + $0x8] sm:$0xff]
        %v6894 = vld [vmem:[%s18 + $0x10] sm:$0xff]
        %v6895 = vld [vmem:[%s18 + $0x18] sm:$0xff]
        %v6896 = vld [vmem:[%s18 + $0x20] sm:$0xff]
        %v6897 = vld [vmem:[%s18 + $0x28] sm:$0xff]
        %v6898 = vld [vmem:[%s18 + $0x30] sm:$0xff]
        %v6899 = vld [vmem:[%s18 + $0x38] sm:$0xff]
        %v6900 = vld [vmem:[%s18 + $0x40] sm:$0xff]
        %v6901 = vld [vmem:[%s18 + $0x48] sm:$0xff]
        %v6902 = vld [vmem:[%s18 + $0x50] sm:$0xff]
        %v6903 = vld [vmem:[%s18 + $0x58] sm:$0xff]
        %v6904 = vld [vmem:[%s18 + $0x60] sm:$0xff]
        %v6905 = vld [vmem:[%s18 + $0x68] sm:$0xff]
        %v6906 = vld [vmem:[%s18 + $0x70] sm:$0xff]
        %v6907 = vld [vmem:[%s18 + $0x78] sm:$0xff]
        %v6908 = vld [vmem:[%s19] sm:$0x1]
        %v6910 = vlaneseq
        %v6911 = vshrl.u32 %v6910, 7
        %v6912 = vsub.s32 0, %v6911
        %v6913 = vrot.slane %v6908, %v6912
        %6915 = vmatprep.subr.mxu0 0.0
        %6916 = vmatpush1.msra.mxu0 %v6907
        %6917 = vmatprep.subr.mxu0 0.0
        %6918 = vmatpush1.msra.mxu0 %v6906
        %6919 = vmatprep.subr.mxu0 0.0
        %6920 = vmatpush1.msra.mxu0 %v6905
        %6921 = vmatprep.subr.mxu0 0.0
        %6922 = vmatpush1.msra.mxu0 %v6904
        %6923 = vmatprep.subr.mxu0 0.0
        %6924 = vmatpush1.msra.mxu0 %v6903
        %6925 = vmatprep.subr.mxu0 0.0
        %6926 = vmatpush1.msra.mxu0 %v6902
        %6927 = vmatprep.subr.mxu0 0.0
        %6928 = vmatpush1.msra.mxu0 %v6901
        %6929 = vmatprep.subr.mxu0 0.0
        %6930 = vmatpush1.msra.mxu0 %v6900
        %6931 = vmatprep.subr.mxu0 0.0
        %6932 = vmatpush1.msra.mxu0 %v6899
        %6933 = vmatprep.subr.mxu0 0.0
        %6934 = vmatpush1.msra.mxu0 %v6898
        %6935 = vmatprep.subr.mxu0 0.0
        %6936 = vmatpush1.msra.mxu0 %v6897
        %6937 = vmatprep.subr.mxu0 0.0
        %6938 = vmatpush1.msra.mxu0 %v6896
        %6939 = vmatprep.subr.mxu0 0.0
        %6940 = vmatpush1.msra.mxu0 %v6895
        %6941 = vmatprep.subr.mxu0 0.0
        %6942 = vmatpush1.msra.mxu0 %v6894
        %6943 = vmatprep.subr.mxu0 0.0
        %6944 = vmatpush1.msra.mxu0 %v6893
        %6945 = vmatprep.subr.mxu0 0.0
        %6946 = vmatpush1.msra.mxu0 %v6892
        %6947 = vmatprep.subr.mxu0 0.0
        %6948 = vmatpush2.msra.mxu0 0.0
        %6949 = vmatprep.subr.mxu0 0.0
        %6950 = vmatpush2.msra.mxu0 0.0
        %6951 = vmatprep.subr.mxu0 0.0
        %6952 = vmatpush2.msra.mxu0 0.0
        %6953 = vmatprep.subr.mxu0 0.0
        %6954 = vmatpush2.msra.mxu0 0.0
        %6955 = vmatprep.subr.mxu0 0.0
        %6956 = vmatpush2.msra.mxu0 0.0
        %6957 = vmatprep.subr.mxu0 0.0
        %6958 = vmatpush2.msra.mxu0 0.0
        %6959 = vmatprep.subr.mxu0 0.0
        %6960 = vmatpush2.msra.mxu0 0.0
        %6961 = vmatprep.subr.mxu0 0.0
        %6962 = vmatpush2.msra.mxu0 0.0
        %6963 = vmatprep.subr.mxu0 0.0
        %6964 = vmatpush2.msra.mxu0 0.0
        %6965 = vmatprep.subr.mxu0 0.0
        %6966 = vmatpush2.msra.mxu0 0.0
        %6967 = vmatprep.subr.mxu0 0.0
        %6968 = vmatpush2.msra.mxu0 0.0
        %6969 = vmatprep.subr.mxu0 0.0
        %6970 = vmatpush2.msra.mxu0 0.0
        %6971 = vmatprep.subr.mxu0 0.0
        %6972 = vmatpush2.msra.mxu0 0.0
        %6973 = vmatprep.subr.mxu0 0.0
        %6974 = vmatpush2.msra.mxu0 0.0
        %6975 = vmatprep.subr.mxu0 0.0
        %6976 = vmatpush2.msra.mxu0 0.0
        %6977 = vmatprep.subr.mxu0 0.0
        %6978 = vmatpush2.msra.mxu0 0.0
        %6979 = vmatprep.mubr.f32.mxu0 0.0
        %6980 = vmatmul.mubr.f32.gmra.mxu0 %v6890
        %v6981 = vpop.f32.mrf.mxu0
        %v6982 = vadd.f32 %v6913, %v6981
        %v6983 = vpop.f32.mrf.mxu0
        %6984 = vmatprep.mubr.f32.mxu0 0.0
        %6985 = vmatmul.mubr.f32.gmra.mxu0 %v6891
        %v6986 = vpop.f32.mrf.mxu0
        %v6987 = vadd.f32 %v6913, %v6986
        %v6988 = vpop.f32.mrf.mxu0
        %6989 = vdwg.mxu0
        %v6992 = vrot.slane %v6982, 7
        %v6993 = vrot.slane %v6987, 7
        %v6994 = vsel %vm694, %v6992, %v6993
        %v6998 = vsel %vm694, 0.0, %v6992
        %vm6999 = vcmask 48128
        %7000 = vst.msk [vmem:[%s688] sm:$0xff] %vm6999, %v6998
        %7001 = vst.msk [vmem:[%s688 + $0x8] sm:$0xff] %vm6999, %v6994
        %vm7002 = vcmask 40960
        %7003 = vst.msk [vmem:[%s688 + $0x10] sm:$0x1] %vm7002, %v6993
        %p7004 = scmp.lt.s32.totalorder %s34, 1
        %s7005 = scalar_select %p7004, %s34, 1
        %s7006 = smul.addr %s7005, 3
        %s7007 = smul.addr %s7006, 8
        %s7008 = scalar_lea.vmem %s20, %s7007
        // Predicated region
        $region117: #{vel_orien_decoder_forward.1} parent=99 // pred_check
          %p7009 = pneg %p477
        $region118: #{vel_orien_decoder_forward.1} parent=99 // pred_check_branch
          %7011 = sbr.rel (%p7009) target = $region120
        $region119: #{vel_orien_decoder_forward.1} parent=99 // pred_region
          _
        $region120: #{vel_orien_decoder_forward.1} parent=99 // pred_fallthru
          _
      $region100: #{vel_orien_decoder_forward.1} parent=5 // pred_fallthru
        _
      %p7012 = scmp.le.s32.totalorder 2, %s29
      // Predicated region
      $region121: #{vel_orien_decoder_forward.1} parent=5 // pred_check
        %p7013 = pneg %p7012
      $region122: #{vel_orien_decoder_forward.1} parent=5 // pred_check_branch
        %7015 = sbr.rel (%p7013) target = $region124
      $region123: #{vel_orien_decoder_forward.1} parent=5 // pred_region
        %s7016 = ssub.s32 %s29, 2
        // Predicated region
        $region125: #{vel_orien_decoder_forward.1} parent=123 // pred_check
          %p7017 = pneg %p483
        $region126: #{vel_orien_decoder_forward.1} parent=123 // pred_check_branch
          %7019 = sbr.rel (%p7017) target = $region128
        $region127: #{vel_orien_decoder_forward.1} parent=123 // pred_region
          %p7020 = scmp.lt.s32.totalorder %s35, 1
          %s7021 = scalar_select %p7020, %s35, 1
          %s7022 = smul.addr %s7021, 3
          %s7023 = smul.addr %s7022, 8
          %s7024 = scalar_lea.vmem %s20, %s7023
        $region128: #{vel_orien_decoder_forward.1} parent=123 // pred_fallthru
          _
      $region124: #{vel_orien_decoder_forward.1} parent=5 // pred_fallthru
        _
    $region6: #{vel_orien_decoder_forward.1} parent=1 // loop_footer
      %s33 = sadd.s32 1, %s29
    $region7: #{vel_orien_decoder_forward.1} parent=1 // loop_footer_branch
      %28 = sbr.rel target = $region3
    $region8: #{vel_orien_decoder_forward.1} parent=1 // loop_exit
      _
    %7025 = vsyncpa [#allocation3], 1
    %s7026 = scalar_lea.sflag [#allocation3], 1
    %7027 = vsyncpa %s7026, 1
    %7028 = vsyncpa [#allocation5], 1
    %7029 = vsyncpa [#allocation8], 1

</llo_original>
